<compile_context>
chip_gen: v5e
topology: v5e:2x2
jax: 0.10.0
libtpu: 0.0.40
codegen_flags: <defaults>
</compile_context>

<pallas_src>
import functools

import jax
import jax.numpy as jnp
from jax import lax
from jax.experimental import pallas as pl
from jax.experimental.pallas import tpu as pltpu


_NEG = -1e30  # "minus infinity" for padded vocab columns (exp -> 0 exactly)


def _round_up(x, m):
    return ((x + m - 1) // m) * m


def _w2v_kernel(ids_ref, tbl_ref, w1_ref, b1_ref, w2_ref, b2_ref, out_ref,
                h_ref, m_ref, l_ref, *, nv, use_bf16_exp):
    # ids_ref: (tb, 1) i32     tbl_ref: (V, E) bf16 (pre-relu'd, resident)
    # w1_ref:  (E, hp) bf16    b1_ref: (1, hp) f32      (resident)
    # w2_ref:  (hp, tv) bf16   b2_ref: (1, tv) f32      (vocab tile j % nv)
    # out_ref: (tb, tv)        scratch: h (tb, hp) bf16, m/l (tb, 1) f32
    j = pl.program_id(1)

    @pl.when(j == 0)
    def _():
        # Embedding gather as a one-hot matmul against the resident table
        # (exact: a single 1.0 per row); relu was pre-applied to the table.
        tb = ids_ref.shape[0]
        vocab = tbl_ref.shape[0]
        onehot = (lax.broadcasted_iota(jnp.int32, (tb, vocab), 1)
                  == ids_ref[...]).astype(jnp.bfloat16)
        emb = jnp.dot(onehot, tbl_ref[...],
                      preferred_element_type=jnp.float32).astype(jnp.bfloat16)
        h = jnp.dot(emb, w1_ref[...],
                    preferred_element_type=jnp.float32) + b1_ref[...]
        h_ref[...] = jnp.maximum(h, 0.0).astype(jnp.bfloat16)
        m_ref[...] = jnp.full(m_ref.shape, -jnp.inf, jnp.float32)
        l_ref[...] = jnp.zeros(l_ref.shape, jnp.float32)

    # Logits for this vocab tile (recomputed in phase 1; K = hp = 128 so the
    # extra MXU work is essentially free next to the EUP/DMA work).
    logits = jnp.dot(h_ref[...], w2_ref[...],
                     preferred_element_type=jnp.float32) + b2_ref[...]

    @pl.when(j < nv)
    def _():  # phase 0: online max / log-sum-exp accumulation
        m_new = jnp.maximum(m_ref[...], jnp.max(logits, axis=-1, keepdims=True))
        shifted = logits - m_new
        if use_bf16_exp:  # bf16 EUP path (v6e/v7x); keep f32 on v5e
            p_sum = jnp.sum(jnp.exp(shifted.astype(jnp.bfloat16)),
                            axis=-1, keepdims=True, dtype=jnp.float32)
        else:
            p_sum = jnp.sum(jnp.exp(shifted), axis=-1, keepdims=True)
        l_ref[...] = l_ref[...] * jnp.exp(m_ref[...] - m_new) + p_sum
        m_ref[...] = m_new

    @pl.when(j >= nv)
    def _():  # phase 1: full LSE is known -> emit log-probs for this tile
        lse = m_ref[...] + jnp.log(l_ref[...])
        out_ref[...] = (logits - lse).astype(out_ref.dtype)


def prepare_word2vec_params(emb_table, w1, b1, w2, b2, *, tile_v=2048):
    """One-time (init) weight prep, hoisted out of the forward hot path.

    * relu is pre-applied to the embedding table (gather(relu(T)) == relu(gather(T)))
    * hidden dim (32) is zero-padded to a lane-dense 128 (numerically exact)
    * vocab (output) dim is padded to a multiple of the vocab tile `tv`;
      padded columns get bias -1e30 so exp() of them is exactly 0
    * matmul operands are cast to bf16 (kernels accumulate in f32)
    """
    V, E = emb_table.shape
    H = w1.shape[1]
    hp = _round_up(H, 128)
    tv = _round_up(min(int(tile_v), V), 128)
    vp = _round_up(V, tv)

    table = jnp.maximum(emb_table.astype(jnp.float32), 0.0).astype(jnp.bfloat16)
    w1p = jnp.zeros((E, hp), jnp.bfloat16).at[:, :H].set(w1.astype(jnp.bfloat16))
    b1p = jnp.zeros((1, hp), jnp.float32).at[0, :H].set(b1.astype(jnp.float32))
    w2p = jnp.zeros((hp, vp), jnp.bfloat16).at[:H, :V].set(w2.astype(jnp.bfloat16))
    b2p = jnp.full((1, vp), _NEG, jnp.float32).at[0, :V].set(b2.astype(jnp.float32))
    return dict(table=table, w1=w1p, b1=b1p, w2=w2p, b2=b2p,
                V=V, E=E, hp=hp, tv=tv, vp=vp)


def word2vec_forward(token_ids, params, *, tile_b=256, use_bf16_exp=True,
                     out_dtype=jnp.float32):
    """token_ids: int (B,) or (B, 1).  Returns log-probs (B, V).

    tile_b: batch tile (use 128 on v5e: native MXU M, 16 MiB scoped VMEM).
    use_bf16_exp: bf16 exp on the EUP (v6e/v7x); set False on v5e.
    out_dtype: float32 (default) or bfloat16 to halve the output VMEM/HBM cost.
    """
    ids = token_ids.reshape(-1).astype(jnp.int32)        # .squeeze()
    B = ids.shape[0]
    V, E, hp, tv, vp = (params[k] for k in ("V", "E", "hp", "tv", "vp"))
    nv = vp // tv

    # Batch tile: multiple of 16 (native bf16 sublane packing) and capped so a
    # batch bigger than one tile yields >= 2 "parallel" grid steps (v7x 2 TCs).
    tb = min(int(tile_b), _round_up(B, 16), _round_up((B + 1) // 2, 128))
    tb = _round_up(tb, 16)
    bp = _round_up(B, tb)
    nb = bp // tb

    ids_pad = jnp.zeros((bp, 1), jnp.int32).at[:B, 0].set(ids)

    out_bytes = jnp.dtype(out_dtype).itemsize
    # VMEM budget: resident table/w1/b1 (single buffer), double-buffered moving
    # blocks (ids, w2/b2 tiles, out tiles) and the h/m/l scratch.
    vmem_est = (V * E * 2 + E * hp * 2 + hp * 4           # resident table/w1/b1
                + 2 * tb * 4                               # ids tiles
                + 2 * (hp * tv * 2 + tv * 4)               # w2 / b2 tiles
                + 2 * tb * tv * out_bytes                  # out tiles
                + tb * hp * 2 + 2 * tb * 4)                # h / m / l scratch
    vmem_limit = int(min(64 * 1024 * 1024,
                         max(16 * 1024 * 1024, 2 * vmem_est + (2 << 20))))

    kernel = functools.partial(_w2v_kernel, nv=nv, use_bf16_exp=use_bf16_exp)
    cost = pl.CostEstimate(
        flops=int(2 * bp * (V * E + E * hp) + 4 * bp * hp * vp),
        transcendentals=int(bp * vp + 2 * bp * nv),
        bytes_accessed=int(bp * 4 + V * E * 2 + E * hp * 2 + hp * 4
                           + 2 * nb * (hp * vp * 2 + vp * 4)
                           + bp * vp * out_bytes))

    def _run(single_buffer_residents):
        # Constant-index (resident) operands don't need double buffering:
        # Buffered(1) halves their VMEM footprint (matters most for the table).
        res_kw = (dict(pipeline_mode=pl.Buffered(1))
                  if single_buffer_residents else {})
        call = pl.pallas_call(
            kernel,
            out_shape=jax.ShapeDtypeStruct((bp, vp), out_dtype),
            grid=(nb, 2 * nv),
            in_specs=[
                pl.BlockSpec((tb, 1), lambda i, j: (i, 0)),             # ids
                pl.BlockSpec((V, E), lambda i, j: (0, 0), **res_kw),    # table
                pl.BlockSpec((E, hp), lambda i, j: (0, 0), **res_kw),   # w1
                pl.BlockSpec((1, hp), lambda i, j: (0, 0), **res_kw),   # b1
                pl.BlockSpec((hp, tv), lambda i, j: (0, j % nv)),       # w2 tile
                pl.BlockSpec((1, tv), lambda i, j: (0, j % nv)),        # b2 tile
            ],
            # Phase 0 parks on block (i, 0) (never written there); phase 1
            # writes blocks (i, 0..nv-1) exactly once -> no garbage write-backs.
            out_specs=pl.BlockSpec(
                (tb, tv), lambda i, j: (i, jnp.maximum(j - nv, 0))),
            scratch_shapes=[pltpu.VMEM((tb, hp), jnp.bfloat16),   # h
                            pltpu.VMEM((tb, 1), jnp.float32),     # running max
                            pltpu.VMEM((tb, 1), jnp.float32)],    # running sum
            compiler_params=pltpu.CompilerParams(
                dimension_semantics=("parallel", "arbitrary"),
                vmem_limit_bytes=vmem_limit),
            cost_estimate=cost,
        )
        return call(ids_pad, params["table"], params["w1"], params["b1"],
                    params["w2"], params["b2"])

    try:
        out = _run(True)
    except Exception:   # Pallas build without BlockSpec.pipeline_mode support
        out = _run(False)
    return out[:B, :V]


if __name__ == "__main__":
    # Small, TPU-tile-friendly shapes consistent with the module
    # (embedding_dims / vocab are constructor params; hidden=32 is fixed).
    VOCAB = 256       # vocabulary_size (multiple of 128 -> lane-dense)
    EMB = 128         # embedding_dims
    HID = 32          # l1 output dim (fixed in the module)
    BATCH = 300       # not a tile multiple -> exercises padding + 2 batch steps

    key = jax.random.PRNGKey(0)
    k_emb, k_w1, k_b1, k_w2, k_b2, k_tok = jax.random.split(key, 6)

    emb_table = jax.random.normal(k_emb, (VOCAB, EMB), dtype=jnp.float32) * 0.1
    w1 = jax.random.normal(k_w1, (EMB, HID), dtype=jnp.float32) * 0.1   # (in, out)
    b1 = jax.random.normal(k_b1, (HID,), dtype=jnp.float32) * 0.1
    w2 = jax.random.normal(k_w2, (HID, VOCAB), dtype=jnp.float32) * 0.1  # (in, out)
    b2 = jax.random.normal(k_b2, (VOCAB,), dtype=jnp.float32) * 0.1
    token_ids = jax.random.randint(k_tok, (BATCH, 1), 0, VOCAB, dtype=jnp.int32)

    # tile_v=128 -> 2 vocab tiles, exercising the online (flash-style) LSE path.
    params = prepare_word2vec_params(emb_table, w1, b1, w2, b2, tile_v=128)
    log_probs = word2vec_forward(token_ids, params)
    log_probs = jax.block_until_ready(log_probs)

    # Pure-JAX reference with matching bf16 matmul operands / f32 accumulation.
    ids = token_ids.reshape(-1)
    x = jnp.maximum(jnp.take(emb_table, ids, axis=0), 0.0).astype(jnp.bfloat16)
    h = jnp.dot(x, w1.astype(jnp.bfloat16),
                preferred_element_type=jnp.float32) + b1
    h = jnp.maximum(h, 0.0).astype(jnp.bfloat16)
    logits = jnp.dot(h, w2.astype(jnp.bfloat16),
                     preferred_element_type=jnp.float32) + b2
    ref = jax.nn.log_softmax(logits, axis=1)

    assert log_probs.shape == (BATCH, VOCAB)
    max_err = float(jnp.max(jnp.abs(log_probs - ref)))
    assert jnp.allclose(log_probs, ref, atol=1e-2, rtol=1e-2), max_err

    print("KERNEL_OK")
</pallas_src>

<mosaic_0001>
module attributes {stable_mosaic.version = 11 : i64} {
  func.func @_w2v_kernel(%arg0: i32, %arg1: i32, %arg2: memref<256x1xi32, #tpu.memory_space<vmem>>, %arg3: memref<256x128xbf16, #tpu.memory_space<vmem>>, %arg4: memref<128x128xbf16, #tpu.memory_space<vmem>>, %arg5: memref<1x128xf32, #tpu.memory_space<vmem>>, %arg6: memref<128x128xbf16, #tpu.memory_space<vmem>>, %arg7: memref<1x128xf32, #tpu.memory_space<vmem>>, %arg8: memref<256x128xf32, #tpu.memory_space<vmem>>, %arg9: memref<256x128xbf16, #tpu.memory_space<vmem>>, %arg10: memref<256x1xf32, #tpu.memory_space<vmem>>, %arg11: memref<256x1xf32, #tpu.memory_space<vmem>>) attributes {dimension_semantics = [#tpu.dimension_semantics<parallel>, #tpu.dimension_semantics<arbitrary>], iteration_bounds = array<i64: 2, 4>, scalar_prefetch = 0 : i64, scratch_operands = 3 : i64, tpu.core_type = #tpu.core_type<tc>, window_params = [{transform_indices = @transform_0, window_bounds = array<i64: 256, 1>}, {pipeline_mode = #tpu.pipeline_mode<synchronous>, transform_indices = @transform_1, window_bounds = array<i64: 256, 128>}, {pipeline_mode = #tpu.pipeline_mode<synchronous>, transform_indices = @transform_2, window_bounds = array<i64: 128, 128>}, {pipeline_mode = #tpu.pipeline_mode<synchronous>, transform_indices = @transform_3, window_bounds = array<i64: 1, 128>}, {transform_indices = @transform_4, window_bounds = array<i64: 128, 128>}, {transform_indices = @transform_5, window_bounds = array<i64: 1, 128>}, {transform_indices = @transform_6, window_bounds = array<i64: 256, 128>}]} {
    %c0_i32 = arith.constant 0 : i32
    %0 = arith.cmpi eq, %arg1, %c0_i32 : i32
    %1 = arith.extui %0 : i1 to i32
    %c0_i32_0 = arith.constant 0 : i32
    %2 = arith.cmpi ne, %1, %c0_i32_0 : i32
    scf.if %2 {
      %15 = tpu.iota {dimensions = array<i32: 1>} : vector<256x256xi32>
      %c0_9 = arith.constant 0 : index
      %c0_10 = arith.constant 0 : index
      %16 = vector.load %arg2[%c0_9, %c0_10] : memref<256x1xi32, #tpu.memory_space<vmem>>, vector<256x1xi32>
      %17 = vector.broadcast %16 : vector<256x1xi32> to vector<256x256xi32>
      %18 = arith.cmpi eq, %15, %17 : vector<256x256xi32>
      %19 = arith.extui %18 : vector<256x256xi1> to vector<256x256xi32>
      %20 = arith.sitofp %19 : vector<256x256xi32> to vector<256x256xf32>
      %21 = arith.truncf %20 : vector<256x256xf32> to vector<256x256xbf16>
      %c0_11 = arith.constant 0 : index
      %c0_12 = arith.constant 0 : index
      %22 = vector.load %arg3[%c0_11, %c0_12] : memref<256x128xbf16, #tpu.memory_space<vmem>>, vector<256x128xbf16>
      %cst_13 = arith.constant dense<0.000000e+00> : vector<256x128xf32>
      %23 = tpu.matmul %21, %22, %cst_13 {dimension_numbers = #tpu.dot_dimension_numbers<[1], [0], [0], [1], [0, 0, 1, 1], [], []>} : vector<256x256xbf16>, vector<256x128xbf16>, vector<256x128xf32> -> vector<256x128xf32>
      %24 = arith.truncf %23 : vector<256x128xf32> to vector<256x128xbf16>
      %c0_14 = arith.constant 0 : index
      %c0_15 = arith.constant 0 : index
      %25 = vector.load %arg4[%c0_14, %c0_15] : memref<128x128xbf16, #tpu.memory_space<vmem>>, vector<128x128xbf16>
      %cst_16 = arith.constant dense<0.000000e+00> : vector<256x128xf32>
      %26 = tpu.matmul %24, %25, %cst_16 {dimension_numbers = #tpu.dot_dimension_numbers<[1], [0], [0], [1], [0, 0, 1, 1], [], []>} : vector<256x128xbf16>, vector<128x128xbf16>, vector<256x128xf32> -> vector<256x128xf32>
      %c0_17 = arith.constant 0 : index
      %c0_18 = arith.constant 0 : index
      %27 = vector.load %arg5[%c0_17, %c0_18] : memref<1x128xf32, #tpu.memory_space<vmem>>, vector<1x128xf32>
      %28 = vector.broadcast %27 : vector<1x128xf32> to vector<256x128xf32>
      %29 = arith.addf %26, %28 : vector<256x128xf32>
      %cst_19 = arith.constant 0.000000e+00 : f32
      %30 = vector.broadcast %cst_19 : f32 to vector<256x128xf32>
      %31 = arith.maximumf %29, %30 : vector<256x128xf32>
      %32 = arith.truncf %31 : vector<256x128xf32> to vector<256x128xbf16>
      %c0_20 = arith.constant 0 : index
      %c0_21 = arith.constant 0 : index
      %33 = vector.load %arg9[%c0_20, %c0_21] : memref<256x128xbf16, #tpu.memory_space<vmem>>, vector<256x128xbf16>
      tpu.vector_store %arg9[%c0_20, %c0_21], %32 {strides = array<i32>} : memref<256x128xbf16, #tpu.memory_space<vmem>>, vector<256x128xbf16>,
      %cst_22 = arith.constant 0xFF800000 : f32
      %34 = vector.broadcast %cst_22 : f32 to vector<256x1xf32>
      %c0_23 = arith.constant 0 : index
      %c0_24 = arith.constant 0 : index
      %35 = vector.load %arg10[%c0_23, %c0_24] : memref<256x1xf32, #tpu.memory_space<vmem>>, vector<256x1xf32>
      tpu.vector_store %arg10[%c0_23, %c0_24], %34 {strides = array<i32>} : memref<256x1xf32, #tpu.memory_space<vmem>>, vector<256x1xf32>,
      %cst_25 = arith.constant 0.000000e+00 : f32
      %36 = vector.broadcast %cst_25 : f32 to vector<256x1xf32>
      %c0_26 = arith.constant 0 : index
      %c0_27 = arith.constant 0 : index
      %37 = vector.load %arg11[%c0_26, %c0_27] : memref<256x1xf32, #tpu.memory_space<vmem>>, vector<256x1xf32>
      tpu.vector_store %arg11[%c0_26, %c0_27], %36 {strides = array<i32>} : memref<256x1xf32, #tpu.memory_space<vmem>>, vector<256x1xf32>,
    } else {
    }
    %c0 = arith.constant 0 : index
    %c0_1 = arith.constant 0 : index
    %3 = vector.load %arg9[%c0, %c0_1] : memref<256x128xbf16, #tpu.memory_space<vmem>>, vector<256x128xbf16>
    %c0_2 = arith.constant 0 : index
    %c0_3 = arith.constant 0 : index
    %4 = vector.load %arg6[%c0_2, %c0_3] : memref<128x128xbf16, #tpu.memory_space<vmem>>, vector<128x128xbf16>
    %cst = arith.constant dense<0.000000e+00> : vector<256x128xf32>
    %5 = tpu.matmul %3, %4, %cst {dimension_numbers = #tpu.dot_dimension_numbers<[1], [0], [0], [1], [0, 0, 1, 1], [], []>} : vector<256x128xbf16>, vector<128x128xbf16>, vector<256x128xf32> -> vector<256x128xf32>
    %c0_4 = arith.constant 0 : index
    %c0_5 = arith.constant 0 : index
    %6 = vector.load %arg7[%c0_4, %c0_5] : memref<1x128xf32, #tpu.memory_space<vmem>>, vector<1x128xf32>
    %7 = vector.broadcast %6 : vector<1x128xf32> to vector<256x128xf32>
    %8 = arith.addf %5, %7 : vector<256x128xf32>
    %c2_i32 = arith.constant 2 : i32
    %9 = arith.cmpi slt, %arg1, %c2_i32 : i32
    %10 = arith.extui %9 : i1 to i32
    %c0_i32_6 = arith.constant 0 : i32
    %11 = arith.cmpi ne, %10, %c0_i32_6 : i32
    scf.if %11 {
      %c0_9 = arith.constant 0 : index
      %c0_10 = arith.constant 0 : index
      %15 = vector.load %arg10[%c0_9, %c0_10] : memref<256x1xf32, #tpu.memory_space<vmem>>, vector<256x1xf32>
      %cst_11 = arith.constant dense<0xFF800000> : vector<256xf32>
      %16 = vector.multi_reduction <maximumf>, %8, %cst_11 [1] : vector<256x128xf32> to vector<256xf32>
      %17 = vector.shape_cast %16 : vector<256xf32> to vector<256x1xf32>
      %18 = arith.maximumf %15, %17 : vector<256x1xf32>
      %19 = vector.broadcast %18 : vector<256x1xf32> to vector<256x128xf32>
      %20 = arith.subf %8, %19 : vector<256x128xf32>
      %21 = arith.truncf %20 : vector<256x128xf32> to vector<256x128xbf16>
      %22 = math.exp %21 : vector<256x128xbf16>
      %23 = arith.extf %22 : vector<256x128xbf16> to vector<256x128xf32>
      %cst_12 = arith.constant dense<0.000000e+00> : vector<256xf32>
      %24 = vector.multi_reduction <add>, %23, %cst_12 [1] : vector<256x128xf32> to vector<256xf32>
      %25 = vector.shape_cast %24 : vector<256xf32> to vector<256x1xf32>
      %c0_13 = arith.constant 0 : index
      %c0_14 = arith.constant 0 : index
      %26 = vector.load %arg11[%c0_13, %c0_14] : memref<256x1xf32, #tpu.memory_space<vmem>>, vector<256x1xf32>
      %c0_15 = arith.constant 0 : index
      %c0_16 = arith.constant 0 : index
      %27 = vector.load %arg10[%c0_15, %c0_16] : memref<256x1xf32, #tpu.memory_space<vmem>>, vector<256x1xf32>
      %28 = arith.subf %27, %18 : vector<256x1xf32>
      %29 = math.exp %28 : vector<256x1xf32>
      %30 = arith.mulf %26, %29 : vector<256x1xf32>
      %31 = arith.addf %30, %25 : vector<256x1xf32>
      %c0_17 = arith.constant 0 : index
      %c0_18 = arith.constant 0 : index
      %32 = vector.load %arg11[%c0_17, %c0_18] : memref<256x1xf32, #tpu.memory_space<vmem>>, vector<256x1xf32>
      tpu.vector_store %arg11[%c0_17, %c0_18], %31 {strides = array<i32>} : memref<256x1xf32, #tpu.memory_space<vmem>>, vector<256x1xf32>,
      %c0_19 = arith.constant 0 : index
      %c0_20 = arith.constant 0 : index
      %33 = vector.load %arg10[%c0_19, %c0_20] : memref<256x1xf32, #tpu.memory_space<vmem>>, vector<256x1xf32>
      tpu.vector_store %arg10[%c0_19, %c0_20], %18 {strides = array<i32>} : memref<256x1xf32, #tpu.memory_space<vmem>>, vector<256x1xf32>,
    } else {
    }
    %c2_i32_7 = arith.constant 2 : i32
    %12 = arith.cmpi sge, %arg1, %c2_i32_7 : i32
    %13 = arith.extui %12 : i1 to i32
    %c0_i32_8 = arith.constant 0 : i32
    %14 = arith.cmpi ne, %13, %c0_i32_8 : i32
    scf.if %14 {
      %c0_9 = arith.constant 0 : index
      %c0_10 = arith.constant 0 : index
      %15 = vector.load %arg10[%c0_9, %c0_10] : memref<256x1xf32, #tpu.memory_space<vmem>>, vector<256x1xf32>
      %c0_11 = arith.constant 0 : index
      %c0_12 = arith.constant 0 : index
      %16 = vector.load %arg11[%c0_11, %c0_12] : memref<256x1xf32, #tpu.memory_space<vmem>>, vector<256x1xf32>
      %17 = math.log %16 : vector<256x1xf32>
      %18 = arith.addf %15, %17 : vector<256x1xf32>
      %19 = vector.broadcast %18 : vector<256x1xf32> to vector<256x128xf32>
      %20 = arith.subf %8, %19 : vector<256x128xf32>
      %c0_13 = arith.constant 0 : index
      %c0_14 = arith.constant 0 : index
      %21 = vector.load %arg8[%c0_13, %c0_14] : memref<256x128xf32, #tpu.memory_space<vmem>>, vector<256x128xf32>
      tpu.vector_store %arg8[%c0_13, %c0_14], %20 {strides = array<i32>} : memref<256x128xf32, #tpu.memory_space<vmem>>, vector<256x128xf32>,
    } else {
    }
    return
  }
  func.func @transform_0(%arg0: i32, %arg1: i32) -> (i32, i32) {
    %c0_i32 = arith.constant 0 : i32
    %c0_i32_0 = arith.constant 0 : i32
    return %arg0, %c0_i32 : i32, i32
  }
  func.func @transform_1(%arg0: i32, %arg1: i32) -> (i32, i32) {
    %c0_i32 = arith.constant 0 : i32
    %c0_i32_0 = arith.constant 0 : i32
    %c0_i32_1 = arith.constant 0 : i32
    return %c0_i32, %c0_i32_0 : i32, i32
  }
  func.func @transform_2(%arg0: i32, %arg1: i32) -> (i32, i32) {
    %c0_i32 = arith.constant 0 : i32
    %c0_i32_0 = arith.constant 0 : i32
    %c0_i32_1 = arith.constant 0 : i32
    return %c0_i32, %c0_i32_0 : i32, i32
  }
  func.func @transform_3(%arg0: i32, %arg1: i32) -> (i32, i32) {
    %c0_i32 = arith.constant 0 : i32
    %c0_i32_0 = arith.constant 0 : i32
    %c0_i32_1 = arith.constant 0 : i32
    return %c0_i32, %c0_i32_0 : i32, i32
  }
  func.func @transform_4(%arg0: i32, %arg1: i32) -> (i32, i32) {
    %c2_i32 = arith.constant 2 : i32
    %c0_i32 = arith.constant 0 : i32
    %0 = arith.cmpi eq, %c2_i32, %c0_i32 : i32
    %c1_i32 = arith.constant 1 : i32
    %1 = arith.select %0, %c1_i32, %c2_i32 : i32
    %2 = arith.remsi %arg1, %1 : i32
    %c0_i32_0 = arith.constant 0 : i32
    %3 = arith.cmpi ne, %2, %c0_i32_0 : i32
    %c0_i32_1 = arith.constant 0 : i32
    %4 = arith.cmpi slt, %2, %c0_i32_1 : i32
    %c0_i32_2 = arith.constant 0 : i32
    %5 = arith.cmpi slt, %1, %c0_i32_2 : i32
    %6 = arith.xori %4, %5 : i1
    %7 = arith.andi %6, %3 : i1
    %8 = arith.addi %2, %1 : i32
    %9 = arith.select %7, %8, %2 : i32
    %c0_i32_3 = arith.constant 0 : i32
    %c0_i32_4 = arith.constant 0 : i32
    return %c0_i32_3, %9 : i32, i32
  }
  func.func @transform_5(%arg0: i32, %arg1: i32) -> (i32, i32) {
    %c2_i32 = arith.constant 2 : i32
    %c0_i32 = arith.constant 0 : i32
    %0 = arith.cmpi eq, %c2_i32, %c0_i32 : i32
    %c1_i32 = arith.constant 1 : i32
    %1 = arith.select %0, %c1_i32, %c2_i32 : i32
    %2 = arith.remsi %arg1, %1 : i32
    %c0_i32_0 = arith.constant 0 : i32
    %3 = arith.cmpi ne, %2, %c0_i32_0 : i32
    %c0_i32_1 = arith.constant 0 : i32
    %4 = arith.cmpi slt, %2, %c0_i32_1 : i32
    %c0_i32_2 = arith.constant 0 : i32
    %5 = arith.cmpi slt, %1, %c0_i32_2 : i32
    %6 = arith.xori %4, %5 : i1
    %7 = arith.andi %6, %3 : i1
    %8 = arith.addi %2, %1 : i32
    %9 = arith.select %7, %8, %2 : i32
    %c0_i32_3 = arith.constant 0 : i32
    %c0_i32_4 = arith.constant 0 : i32
    return %c0_i32_3, %9 : i32, i32
  }
  func.func @transform_6(%arg0: i32, %arg1: i32) -> (i32, i32) {
    %c2_i32 = arith.constant 2 : i32
    %0 = arith.subi %arg1, %c2_i32 : i32
    %c0_i32 = arith.constant 0 : i32
    %1 = arith.maxsi %0, %c0_i32 : i32
    %c0_i32_0 = arith.constant 0 : i32
    return %arg0, %1 : i32, i32
  }
}

module attributes {stable_mosaic.version = 11 : i64} {
  func.func @_w2v_kernel(%arg0: i32, %arg1: i32, %arg2: memref<256x1xi32, #tpu.memory_space<vmem>>, %arg3: memref<256x128xbf16, #tpu.memory_space<vmem>>, %arg4: memref<128x128xbf16, #tpu.memory_space<vmem>>, %arg5: memref<1x128xf32, #tpu.memory_space<vmem>>, %arg6: memref<128x128xbf16, #tpu.memory_space<vmem>>, %arg7: memref<1x128xf32, #tpu.memory_space<vmem>>, %arg8: memref<256x128xf32, #tpu.memory_space<vmem>>, %arg9: memref<256x128xbf16, #tpu.memory_space<vmem>>, %arg10: memref<256x1xf32, #tpu.memory_space<vmem>>, %arg11: memref<256x1xf32, #tpu.memory_space<vmem>>) attributes {dimension_semantics = [#tpu.dimension_semantics<parallel>, #tpu.dimension_semantics<arbitrary>], iteration_bounds = array<i64: 2, 4>, scalar_prefetch = 0 : i64, scratch_operands = 3 : i64, tpu.core_type = #tpu.core_type<tc>, window_params = [{transform_indices = @transform_0, window_bounds = array<i64: 256, 1>}, {pipeline_mode = #tpu.pipeline_mode<synchronous>, transform_indices = @transform_1, window_bounds = array<i64: 256, 128>}, {pipeline_mode = #tpu.pipeline_mode<synchronous>, transform_indices = @transform_2, window_bounds = array<i64: 128, 128>}, {pipeline_mode = #tpu.pipeline_mode<synchronous>, transform_indices = @transform_3, window_bounds = array<i64: 1, 128>}, {transform_indices = @transform_4, window_bounds = array<i64: 128, 128>}, {transform_indices = @transform_5, window_bounds = array<i64: 1, 128>}, {transform_indices = @transform_6, window_bounds = array<i64: 256, 128>}]} {
    %c0_i32 = arith.constant 0 : i32
    %0 = arith.cmpi eq, %arg1, %c0_i32 : i32
    %1 = arith.extui %0 : i1 to i32
    %c0_i32_0 = arith.constant 0 : i32
    %2 = arith.cmpi ne, %1, %c0_i32_0 : i32
    scf.if %2 {
      %15 = tpu.iota {dimensions = array<i32: 1>} : vector<256x256xi32>
      %c0_9 = arith.constant 0 : index
      %c0_10 = arith.constant 0 : index
      %16 = vector.load %arg2[%c0_9, %c0_10] : memref<256x1xi32, #tpu.memory_space<vmem>>, vector<256x1xi32>
      %17 = vector.broadcast %16 : vector<256x1xi32> to vector<256x256xi32>
      %18 = arith.cmpi eq, %15, %17 : vector<256x256xi32>
      %19 = arith.extui %18 : vector<256x256xi1> to vector<256x256xi32>
      %20 = arith.sitofp %19 : vector<256x256xi32> to vector<256x256xf32>
      %21 = arith.truncf %20 : vector<256x256xf32> to vector<256x256xbf16>
      %c0_11 = arith.constant 0 : index
      %c0_12 = arith.constant 0 : index
      %22 = vector.load %arg3[%c0_11, %c0_12] : memref<256x128xbf16, #tpu.memory_space<vmem>>, vector<256x128xbf16>
      %cst_13 = arith.constant dense<0.000000e+00> : vector<256x128xf32>
      %23 = tpu.matmul %21, %22, %cst_13 {dimension_numbers = #tpu.dot_dimension_numbers<[1], [0], [0], [1], [0, 0, 1, 1], [], []>} : vector<256x256xbf16>, vector<256x128xbf16>, vector<256x128xf32> -> vector<256x128xf32>
      %24 = arith.truncf %23 : vector<256x128xf32> to vector<256x128xbf16>
      %c0_14 = arith.constant 0 : index
      %c0_15 = arith.constant 0 : index
      %25 = vector.load %arg4[%c0_14, %c0_15] : memref<128x128xbf16, #tpu.memory_space<vmem>>, vector<128x128xbf16>
      %cst_16 = arith.constant dense<0.000000e+00> : vector<256x128xf32>
      %26 = tpu.matmul %24, %25, %cst_16 {dimension_numbers = #tpu.dot_dimension_numbers<[1], [0], [0], [1], [0, 0, 1, 1], [], []>} : vector<256x128xbf16>, vector<128x128xbf16>, vector<256x128xf32> -> vector<256x128xf32>
      %c0_17 = arith.constant 0 : index
      %c0_18 = arith.constant 0 : index
      %27 = vector.load %arg5[%c0_17, %c0_18] : memref<1x128xf32, #tpu.memory_space<vmem>>, vector<1x128xf32>
      %28 = vector.broadcast %27 : vector<1x128xf32> to vector<256x128xf32>
      %29 = arith.addf %26, %28 : vector<256x128xf32>
      %cst_19 = arith.constant 0.000000e+00 : f32
      %30 = vector.broadcast %cst_19 : f32 to vector<256x128xf32>
      %31 = arith.maximumf %29, %30 : vector<256x128xf32>
      %32 = arith.truncf %31 : vector<256x128xf32> to vector<256x128xbf16>
      %c0_20 = arith.constant 0 : index
      %c0_21 = arith.constant 0 : index
      %33 = vector.load %arg9[%c0_20, %c0_21] : memref<256x128xbf16, #tpu.memory_space<vmem>>, vector<256x128xbf16>
      tpu.vector_store %arg9[%c0_20, %c0_21], %32 {strides = array<i32>} : memref<256x128xbf16, #tpu.memory_space<vmem>>, vector<256x128xbf16>,
      %cst_22 = arith.constant 0xFF800000 : f32
      %34 = vector.broadcast %cst_22 : f32 to vector<256x1xf32>
      %c0_23 = arith.constant 0 : index
      %c0_24 = arith.constant 0 : index
      %35 = vector.load %arg10[%c0_23, %c0_24] : memref<256x1xf32, #tpu.memory_space<vmem>>, vector<256x1xf32>
      tpu.vector_store %arg10[%c0_23, %c0_24], %34 {strides = array<i32>} : memref<256x1xf32, #tpu.memory_space<vmem>>, vector<256x1xf32>,
      %cst_25 = arith.constant 0.000000e+00 : f32
      %36 = vector.broadcast %cst_25 : f32 to vector<256x1xf32>
      %c0_26 = arith.constant 0 : index
      %c0_27 = arith.constant 0 : index
      %37 = vector.load %arg11[%c0_26, %c0_27] : memref<256x1xf32, #tpu.memory_space<vmem>>, vector<256x1xf32>
      tpu.vector_store %arg11[%c0_26, %c0_27], %36 {strides = array<i32>} : memref<256x1xf32, #tpu.memory_space<vmem>>, vector<256x1xf32>,
    } else {
    }
    %c0 = arith.constant 0 : index
    %c0_1 = arith.constant 0 : index
    %3 = vector.load %arg9[%c0, %c0_1] : memref<256x128xbf16, #tpu.memory_space<vmem>>, vector<256x128xbf16>
    %c0_2 = arith.constant 0 : index
    %c0_3 = arith.constant 0 : index
    %4 = vector.load %arg6[%c0_2, %c0_3] : memref<128x128xbf16, #tpu.memory_space<vmem>>, vector<128x128xbf16>
    %cst = arith.constant dense<0.000000e+00> : vector<256x128xf32>
    %5 = tpu.matmul %3, %4, %cst {dimension_numbers = #tpu.dot_dimension_numbers<[1], [0], [0], [1], [0, 0, 1, 1], [], []>} : vector<256x128xbf16>, vector<128x128xbf16>, vector<256x128xf32> -> vector<256x128xf32>
    %c0_4 = arith.constant 0 : index
    %c0_5 = arith.constant 0 : index
    %6 = vector.load %arg7[%c0_4, %c0_5] : memref<1x128xf32, #tpu.memory_space<vmem>>, vector<1x128xf32>
    %7 = vector.broadcast %6 : vector<1x128xf32> to vector<256x128xf32>
    %8 = arith.addf %5, %7 : vector<256x128xf32>
    %c2_i32 = arith.constant 2 : i32
    %9 = arith.cmpi slt, %arg1, %c2_i32 : i32
    %10 = arith.extui %9 : i1 to i32
    %c0_i32_6 = arith.constant 0 : i32
    %11 = arith.cmpi ne, %10, %c0_i32_6 : i32
    scf.if %11 {
      %c0_9 = arith.constant 0 : index
      %c0_10 = arith.constant 0 : index
      %15 = vector.load %arg10[%c0_9, %c0_10] : memref<256x1xf32, #tpu.memory_space<vmem>>, vector<256x1xf32>
      %cst_11 = arith.constant dense<0xFF800000> : vector<256xf32>
      %16 = vector.multi_reduction <maximumf>, %8, %cst_11 [1] : vector<256x128xf32> to vector<256xf32>
      %17 = vector.shape_cast %16 : vector<256xf32> to vector<256x1xf32>
      %18 = arith.maximumf %15, %17 : vector<256x1xf32>
      %19 = vector.broadcast %18 : vector<256x1xf32> to vector<256x128xf32>
      %20 = arith.subf %8, %19 : vector<256x128xf32>
      %21 = arith.truncf %20 : vector<256x128xf32> to vector<256x128xbf16>
      %22 = math.exp %21 : vector<256x128xbf16>
      %23 = arith.extf %22 : vector<256x128xbf16> to vector<256x128xf32>
      %cst_12 = arith.constant dense<0.000000e+00> : vector<256xf32>
      %24 = vector.multi_reduction <add>, %23, %cst_12 [1] : vector<256x128xf32> to vector<256xf32>
      %25 = vector.shape_cast %24 : vector<256xf32> to vector<256x1xf32>
      %c0_13 = arith.constant 0 : index
      %c0_14 = arith.constant 0 : index
      %26 = vector.load %arg11[%c0_13, %c0_14] : memref<256x1xf32, #tpu.memory_space<vmem>>, vector<256x1xf32>
      %c0_15 = arith.constant 0 : index
      %c0_16 = arith.constant 0 : index
      %27 = vector.load %arg10[%c0_15, %c0_16] : memref<256x1xf32, #tpu.memory_space<vmem>>, vector<256x1xf32>
      %28 = arith.subf %27, %18 : vector<256x1xf32>
      %29 = math.exp %28 : vector<256x1xf32>
      %30 = arith.mulf %26, %29 : vector<256x1xf32>
      %31 = arith.addf %30, %25 : vector<256x1xf32>
      %c0_17 = arith.constant 0 : index
      %c0_18 = arith.constant 0 : index
      %32 = vector.load %arg11[%c0_17, %c0_18] : memref<256x1xf32, #tpu.memory_space<vmem>>, vector<256x1xf32>
      tpu.vector_store %arg11[%c0_17, %c0_18], %31 {strides = array<i32>} : memref<256x1xf32, #tpu.memory_space<vmem>>, vector<256x1xf32>,
      %c0_19 = arith.constant 0 : index
      %c0_20 = arith.constant 0 : index
      %33 = vector.load %arg10[%c0_19, %c0_20] : memref<256x1xf32, #tpu.memory_space<vmem>>, vector<256x1xf32>
      tpu.vector_store %arg10[%c0_19, %c0_20], %18 {strides = array<i32>} : memref<256x1xf32, #tpu.memory_space<vmem>>, vector<256x1xf32>,
    } else {
    }
    %c2_i32_7 = arith.constant 2 : i32
    %12 = arith.cmpi sge, %arg1, %c2_i32_7 : i32
    %13 = arith.extui %12 : i1 to i32
    %c0_i32_8 = arith.constant 0 : i32
    %14 = arith.cmpi ne, %13, %c0_i32_8 : i32
    scf.if %14 {
      %c0_9 = arith.constant 0 : index
      %c0_10 = arith.constant 0 : index
      %15 = vector.load %arg10[%c0_9, %c0_10] : memref<256x1xf32, #tpu.memory_space<vmem>>, vector<256x1xf32>
      %c0_11 = arith.constant 0 : index
      %c0_12 = arith.constant 0 : index
      %16 = vector.load %arg11[%c0_11, %c0_12] : memref<256x1xf32, #tpu.memory_space<vmem>>, vector<256x1xf32>
      %17 = math.log %16 : vector<256x1xf32>
      %18 = arith.addf %15, %17 : vector<256x1xf32>
      %19 = vector.broadcast %18 : vector<256x1xf32> to vector<256x128xf32>
      %20 = arith.subf %8, %19 : vector<256x128xf32>
      %c0_13 = arith.constant 0 : index
      %c0_14 = arith.constant 0 : index
      %21 = vector.load %arg8[%c0_13, %c0_14] : memref<256x128xf32, #tpu.memory_space<vmem>>, vector<256x128xf32>
      tpu.vector_store %arg8[%c0_13, %c0_14], %20 {strides = array<i32>} : memref<256x128xf32, #tpu.memory_space<vmem>>, vector<256x128xf32>,
    } else {
    }
    return
  }
  func.func @transform_0(%arg0: i32, %arg1: i32) -> (i32, i32) {
    %c0_i32 = arith.constant 0 : i32
    %c0_i32_0 = arith.constant 0 : i32
    return %arg0, %c0_i32 : i32, i32
  }
  func.func @transform_1(%arg0: i32, %arg1: i32) -> (i32, i32) {
    %c0_i32 = arith.constant 0 : i32
    %c0_i32_0 = arith.constant 0 : i32
    %c0_i32_1 = arith.constant 0 : i32
    return %c0_i32, %c0_i32_0 : i32, i32
  }
  func.func @transform_2(%arg0: i32, %arg1: i32) -> (i32, i32) {
    %c0_i32 = arith.constant 0 : i32
    %c0_i32_0 = arith.constant 0 : i32
    %c0_i32_1 = arith.constant 0 : i32
    return %c0_i32, %c0_i32_0 : i32, i32
  }
  func.func @transform_3(%arg0: i32, %arg1: i32) -> (i32, i32) {
    %c0_i32 = arith.constant 0 : i32
    %c0_i32_0 = arith.constant 0 : i32
    %c0_i32_1 = arith.constant 0 : i32
    return %c0_i32, %c0_i32_0 : i32, i32
  }
  func.func @transform_4(%arg0: i32, %arg1: i32) -> (i32, i32) {
    %c2_i32 = arith.constant 2 : i32
    %c0_i32 = arith.constant 0 : i32
    %0 = arith.cmpi eq, %c2_i32, %c0_i32 : i32
    %c1_i32 = arith.constant 1 : i32
    %1 = arith.select %0, %c1_i32, %c2_i32 : i32
    %2 = arith.remsi %arg1, %1 : i32
    %c0_i32_0 = arith.constant 0 : i32
    %3 = arith.cmpi ne, %2, %c0_i32_0 : i32
    %c0_i32_1 = arith.constant 0 : i32
    %4 = arith.cmpi slt, %2, %c0_i32_1 : i32
    %c0_i32_2 = arith.constant 0 : i32
    %5 = arith.cmpi slt, %1, %c0_i32_2 : i32
    %6 = arith.xori %4, %5 : i1
    %7 = arith.andi %6, %3 : i1
    %8 = arith.addi %2, %1 : i32
    %9 = arith.select %7, %8, %2 : i32
    %c0_i32_3 = arith.constant 0 : i32
    %c0_i32_4 = arith.constant 0 : i32
    return %c0_i32_3, %9 : i32, i32
  }
  func.func @transform_5(%arg0: i32, %arg1: i32) -> (i32, i32) {
    %c2_i32 = arith.constant 2 : i32
    %c0_i32 = arith.constant 0 : i32
    %0 = arith.cmpi eq, %c2_i32, %c0_i32 : i32
    %c1_i32 = arith.constant 1 : i32
    %1 = arith.select %0, %c1_i32, %c2_i32 : i32
    %2 = arith.remsi %arg1, %1 : i32
    %c0_i32_0 = arith.constant 0 : i32
    %3 = arith.cmpi ne, %2, %c0_i32_0 : i32
    %c0_i32_1 = arith.constant 0 : i32
    %4 = arith.cmpi slt, %2, %c0_i32_1 : i32
    %c0_i32_2 = arith.constant 0 : i32
    %5 = arith.cmpi slt, %1, %c0_i32_2 : i32
    %6 = arith.xori %4, %5 : i1
    %7 = arith.andi %6, %3 : i1
    %8 = arith.addi %2, %1 : i32
    %9 = arith.select %7, %8, %2 : i32
    %c0_i32_3 = arith.constant 0 : i32
    %c0_i32_4 = arith.constant 0 : i32
    return %c0_i32_3, %9 : i32, i32
  }
  func.func @transform_6(%arg0: i32, %arg1: i32) -> (i32, i32) {
    %c2_i32 = arith.constant 2 : i32
    %0 = arith.subi %arg1, %c2_i32 : i32
    %c0_i32 = arith.constant 0 : i32
    %1 = arith.maxsi %0, %c0_i32 : i32
    %c0_i32_0 = arith.constant 0 : i32
    return %arg0, %1 : i32, i32
  }
}

</mosaic_0001>

<llo_original>
// kernel: tpu_custom_call.1
$region0: #{tpu_custom_call.1}
  #allocation0 [shape = 'u32[]', space=smem, size = 0x4, offset = 0x4, fixed_abs, tag = 'smem constant byte address 0x4 - core index']
  #allocation1 [shape = 'u32[72,128]{1,0:T(1,128)}', space=vmem, size = 0x9000, scoped, tag = 'internal scratch']
  #allocation2 [shape = 'bf16[256,128]{1,0:T(8,128)(2,1)}', space=vmem, size = 0x10000, scoped, tag = 'scratch operand']
  #allocation3 [shape = 'f32[256,1]{1,0:T(8,128)}', space=vmem, size = 0x20000, scoped, tag = 'scratch operand']
  #allocation4 [shape = 'f32[256,1]{1,0:T(8,128)}', space=vmem, size = 0x20000, scoped, tag = 'scratch operand']
  %s0 = inlined_call_operand.vmem [shape: s32[512,1], index: 0, kind: input, shape index: {}]
  %s1 = inlined_call_operand.vmem [shape: bf16[256,128], index: 1, kind: input, shape index: {}]
  %s2 = inlined_call_operand.vmem [shape: bf16[128,128], index: 2, kind: input, shape index: {}]
  %s3 = inlined_call_operand.vmem [shape: f32[1,128], index: 3, kind: input, shape index: {}]
  %s4 = inlined_call_operand.vmem [shape: bf16[128,256], index: 4, kind: input, shape index: {}]
  %s5 = inlined_call_operand.vmem [shape: f32[1,256], index: 5, kind: input, shape index: {}]
  %s6 = inlined_call_operand.hbm [shape: f32[512,256], index: 6, kind: output, shape index: {}]
  %s7 = sld [smem:[#allocation0]]
  $region110: #{tpu_custom_call.1} parent=0
    _
  %s9 = ssub.s32 1, %s7
  %s10 = scalar_select 0, %s9, %s7
  $region1: #{tpu_custom_call.1} parent=0
    #allocation5 [shape = 'u8[65536]{0}', space=vmem, size = 0x10000, scoped, tag = 'input window, operand 4']
    #allocation6 [shape = 'u8[262144]{0}', space=vmem, size = 0x40000, scoped, tag = 'output window, operand 0']
    #allocation7 [shape = 's32[2]{0}', space=sflag, size = 0x8, scoped, tag = 'scoped memory for tpu_custom_call.1']
    %11 = vsyncpa [#allocation7], 0
    %s12 = scalar_lea.sflag [#allocation7], 1
    %13 = vsyncpa %s12, 0
    loop: start=0, step=1, limit=10
    $region2: #{tpu_custom_call.1} parent=1 // loop_pre_header
      _
    $region3: #{tpu_custom_call.1} parent=1 // loop_header
      %s15 = sphi 0, %s19
      %p16 = scmp.ge.s32.totalorder %s15, 10
      %s22 = sphi 0, %s34
      %s23 = sphi 0, %s30
      %s24 = sphi 0, %s22
      %s25 = sphi 0, %s23
      %s26 = sphi 0, %s24
      %s27 = sphi 0, %s25
      %s37 = sphi 0, %s39
      %s40 = sphi 0, %s37
      %s41 = sphi 0, %s40
      %s57 = sphi 0, %s41
      %s61 = sphi 0, %s61
      %s63 = sphi 0, %s61
      %s64 = sphi 0, %s63
      %s78 = sphi 0, %s64
      %s82 = sphi 0, %s82
      %s84 = sphi 0, %s82
      %s85 = sphi 0, %s84
      %s99 = sphi 0, %s85
      %s103 = sphi 0, %s103
      %s105 = sphi 0, %s103
      %s106 = sphi 0, %s105
      %s120 = sphi 0, %s106
      %s150 = sphi 0, %s152
      %s153 = sphi 0, %s150
      %s154 = sphi 0, %s153
      %s170 = sphi 0, %s154
      %s200 = sphi 0, %s202
      %s203 = sphi 0, %s200
      %s204 = sphi 0, %s203
      %s220 = sphi 0, %s204
      %s234 = sphi 0, %s236
      %s237 = sphi 0, %s234
      %s238 = sphi 0, %s237
      %s254 = sphi 0, %s238
    $region4: #{tpu_custom_call.1} parent=1 // loop_header_branch
      %18 = sbr.rel (%p16) target = $region8
    $region5: #{tpu_custom_call.1} parent=1 // loop_body
      %s20 = ssub.s32 %s15, 1
      %s21 = ssub.s32 %s15, 2
      %s28 = sadd.s32 1, %s23
      %p29 = scmp.ge.s32.totalorder %s28, 4
      %s30 = scalar_select %p29, 0, %s28
      %s31 = sadd.s32 1, %s22
      %s32 = scalar_select %p29, %s31, %s22
      %p33 = scmp.ge.s32.totalorder %s32, 2
      %s34 = scalar_select %p33, 0, %s32
      %s35 = ssub.s32 %s22, %s34
      %p36 = scmp.eq.s32.totalorder %s35, 0
      %s38 = sadd.s32 %s37, 1
      %s39 = scalar_select %p36, %s37, %s38
      %p42 = pneg %p36
      %p43 = scmp.eq.s32.totalorder %s15, 7
      %p44 = por %p42, %p43
      %p45 = scmp.ne.s32.totalorder %s37, %s40
      %p46 = scmp.eq.s32.totalorder %s15, 0
      %p47 = por %p45, %p46
      %p48 = scmp.ne.s32.totalorder %s37, %s40
      %p49 = scmp.eq.s32.totalorder %s20, 7
      %p50 = por %p48, %p49
      %p51 = scmp.ne.s32.totalorder %s40, %s41
      %p52 = scmp.eq.s32.totalorder %s20, 0
      %p53 = por %p51, %p52
      %p54 = scmp.ne.s32.totalorder %s40, %s41
      %p55 = scmp.eq.s32.totalorder %s21, 7
      %p56 = por %p54, %p55
      %p58 = scmp.ne.s32.totalorder %s41, %s57
      %p59 = scmp.eq.s32.totalorder %s21, 0
      %p60 = por %p58, %p59
      %s62 = sadd.s32 %s61, 1
      %p65 = scmp.eq.s32.totalorder %s15, 7
      %p66 = scmp.ne.s32.totalorder %s61, %s63
      %p67 = scmp.eq.s32.totalorder %s15, 0
      %p68 = por %p66, %p67
      %p69 = scmp.ne.s32.totalorder %s61, %s63
      %p70 = scmp.eq.s32.totalorder %s20, 7
      %p71 = por %p69, %p70
      %p72 = scmp.ne.s32.totalorder %s63, %s64
      %p73 = scmp.eq.s32.totalorder %s20, 0
      %p74 = por %p72, %p73
      %p75 = scmp.ne.s32.totalorder %s63, %s64
      %p76 = scmp.eq.s32.totalorder %s21, 7
      %p77 = por %p75, %p76
      %p79 = scmp.ne.s32.totalorder %s64, %s78
      %p80 = scmp.eq.s32.totalorder %s21, 0
      %p81 = por %p79, %p80
      %s83 = sadd.s32 %s82, 1
      %p86 = scmp.eq.s32.totalorder %s15, 7
      %p87 = scmp.ne.s32.totalorder %s82, %s84
      %p88 = scmp.eq.s32.totalorder %s15, 0
      %p89 = por %p87, %p88
      %p90 = scmp.ne.s32.totalorder %s82, %s84
      %p91 = scmp.eq.s32.totalorder %s20, 7
      %p92 = por %p90, %p91
      %p93 = scmp.ne.s32.totalorder %s84, %s85
      %p94 = scmp.eq.s32.totalorder %s20, 0
      %p95 = por %p93, %p94
      %p96 = scmp.ne.s32.totalorder %s84, %s85
      %p97 = scmp.eq.s32.totalorder %s21, 7
      %p98 = por %p96, %p97
      %p100 = scmp.ne.s32.totalorder %s85, %s99
      %p101 = scmp.eq.s32.totalorder %s21, 0
      %p102 = por %p100, %p101
      %s104 = sadd.s32 %s103, 1
      %p107 = scmp.eq.s32.totalorder %s15, 7
      %p108 = scmp.ne.s32.totalorder %s103, %s105
      %p109 = scmp.eq.s32.totalorder %s15, 0
      %p110 = por %p108, %p109
      %p111 = scmp.ne.s32.totalorder %s103, %s105
      %p112 = scmp.eq.s32.totalorder %s20, 7
      %p113 = por %p111, %p112
      %p114 = scmp.ne.s32.totalorder %s105, %s106
      %p115 = scmp.eq.s32.totalorder %s20, 0
      %p116 = por %p114, %p115
      %p117 = scmp.ne.s32.totalorder %s105, %s106
      %p118 = scmp.eq.s32.totalorder %s21, 7
      %p119 = por %p117, %p118
      %p121 = scmp.ne.s32.totalorder %s106, %s120
      %p122 = scmp.eq.s32.totalorder %s21, 0
      %p123 = por %p121, %p122
      %p124 = scmp.lt.s32.totalorder %s23, 0
      %s125 = ssub.s32 0, %s23
      %s126 = scalar_select %p124, %s125, %s23
      %s127 = sand.u32 %s126, 1
      %s128 = ssub.s32 0, %s127
      %s129 = scalar_select %p124, %s128, %s127
      %p130 = scmp.ne.s32.totalorder %s129, 0
      %p131 = scmp.lt.s32.totalorder %s129, 0
      %p132 = pnand %p131, %p130
      %p133 = pneg %p132
      %s134 = sadd.s32 %s129, 2
      %s135 = scalar_select %p133, %s134, %s129
      %p136 = scmp.lt.s32.totalorder %s30, 0
      %s137 = ssub.s32 0, %s30
      %s138 = scalar_select %p136, %s137, %s30
      %s139 = sand.u32 %s138, 1
      %s140 = ssub.s32 0, %s139
      %s141 = scalar_select %p136, %s140, %s139
      %p142 = scmp.ne.s32.totalorder %s141, 0
      %p143 = scmp.lt.s32.totalorder %s141, 0
      %p144 = pnand %p143, %p142
      %p145 = pneg %p144
      %s146 = sadd.s32 %s141, 2
      %s147 = scalar_select %p145, %s146, %s141
      %s148 = ssub.s32 %s135, %s147
      %p149 = scmp.eq.s32.totalorder %s148, 0
      %s151 = sadd.s32 %s150, 1
      %s152 = scalar_select %p149, %s150, %s151
      %p155 = pneg %p149
      %p156 = scmp.eq.s32.totalorder %s15, 7
      %p157 = por %p155, %p156
      %p158 = scmp.ne.s32.totalorder %s150, %s153
      %p159 = scmp.eq.s32.totalorder %s15, 0
      %p160 = por %p158, %p159
      %p161 = scmp.ne.s32.totalorder %s150, %s153
      %p162 = scmp.eq.s32.totalorder %s20, 7
      %p163 = por %p161, %p162
      %p164 = scmp.ne.s32.totalorder %s153, %s154
      %p165 = scmp.eq.s32.totalorder %s20, 0
      %p166 = por %p164, %p165
      %p167 = scmp.ne.s32.totalorder %s153, %s154
      %p168 = scmp.eq.s32.totalorder %s21, 7
      %p169 = por %p167, %p168
      %p171 = scmp.ne.s32.totalorder %s154, %s170
      %p172 = scmp.eq.s32.totalorder %s21, 0
      %p173 = por %p171, %p172
      %p174 = scmp.lt.s32.totalorder %s23, 0
      %s175 = ssub.s32 0, %s23
      %s176 = scalar_select %p174, %s175, %s23
      %s177 = sand.u32 %s176, 1
      %s178 = ssub.s32 0, %s177
      %s179 = scalar_select %p174, %s178, %s177
      %p180 = scmp.ne.s32.totalorder %s179, 0
      %p181 = scmp.lt.s32.totalorder %s179, 0
      %p182 = pnand %p181, %p180
      %p183 = pneg %p182
      %s184 = sadd.s32 %s179, 2
      %s185 = scalar_select %p183, %s184, %s179
      %p186 = scmp.lt.s32.totalorder %s30, 0
      %s187 = ssub.s32 0, %s30
      %s188 = scalar_select %p186, %s187, %s30
      %s189 = sand.u32 %s188, 1
      %s190 = ssub.s32 0, %s189
      %s191 = scalar_select %p186, %s190, %s189
      %p192 = scmp.ne.s32.totalorder %s191, 0
      %p193 = scmp.lt.s32.totalorder %s191, 0
      %p194 = pnand %p193, %p192
      %p195 = pneg %p194
      %s196 = sadd.s32 %s191, 2
      %s197 = scalar_select %p195, %s196, %s191
      %s198 = ssub.s32 %s185, %s197
      %p199 = scmp.eq.s32.totalorder %s198, 0
      %s201 = sadd.s32 %s200, 1
      %s202 = scalar_select %p199, %s200, %s201
      %p205 = pneg %p199
      %p206 = scmp.eq.s32.totalorder %s15, 7
      %p207 = por %p205, %p206
      %p208 = scmp.ne.s32.totalorder %s200, %s203
      %p209 = scmp.eq.s32.totalorder %s15, 0
      %p210 = por %p208, %p209
      %p211 = scmp.ne.s32.totalorder %s200, %s203
      %p212 = scmp.eq.s32.totalorder %s20, 7
      %p213 = por %p211, %p212
      %p214 = scmp.ne.s32.totalorder %s203, %s204
      %p215 = scmp.eq.s32.totalorder %s20, 0
      %p216 = por %p214, %p215
      %p217 = scmp.ne.s32.totalorder %s203, %s204
      %p218 = scmp.eq.s32.totalorder %s21, 7
      %p219 = por %p217, %p218
      %p221 = scmp.ne.s32.totalorder %s204, %s220
      %p222 = scmp.eq.s32.totalorder %s21, 0
      %p223 = por %p221, %p222
      %s224 = ssub.s32 %s23, 2
      %p225 = scmp.gt.s32.totalorder %s224, 0
      %s226 = scalar_select %p225, %s224, 0
      %s227 = ssub.s32 %s30, 2
      %p228 = scmp.gt.s32.totalorder %s227, 0
      %s229 = scalar_select %p228, %s227, 0
      %s230 = ssub.s32 %s22, %s34
      %s231 = ssub.s32 %s226, %s229
      %s232 = sor.u32 %s230, %s231
      %p233 = scmp.eq.s32.totalorder %s232, 0
      %s235 = sadd.s32 %s234, 1
      %s236 = scalar_select %p233, %s234, %s235
      %p239 = pneg %p233
      %p240 = scmp.eq.s32.totalorder %s15, 7
      %p241 = por %p239, %p240
      %p242 = scmp.ne.s32.totalorder %s234, %s237
      %p243 = scmp.eq.s32.totalorder %s15, 0
      %p244 = por %p242, %p243
      %p245 = scmp.ne.s32.totalorder %s234, %s237
      %p246 = scmp.eq.s32.totalorder %s20, 7
      %p247 = por %p245, %p246
      %p248 = scmp.ne.s32.totalorder %s237, %s238
      %p249 = scmp.eq.s32.totalorder %s20, 0
      %p250 = por %p248, %p249
      %p251 = scmp.ne.s32.totalorder %s237, %s238
      %p252 = scmp.eq.s32.totalorder %s21, 7
      %p253 = por %p251, %p252
      %p255 = scmp.ne.s32.totalorder %s238, %s254
      %p256 = scmp.eq.s32.totalorder %s21, 0
      %p257 = por %p255, %p256
      %p258 = scmp.le.s32.totalorder 1, %s15
      %p259 = scmp.lt.s32.totalorder %s15, 9
      %p260 = pnand %p258, %p259
      %p261 = pneg %p260
      // Predicated region
      $region9: #{tpu_custom_call.1} parent=5 // pred_check
        _
      $region10: #{tpu_custom_call.1} parent=5 // pred_check_branch
        %263 = sbr.rel (%p260) target = $region12
      $region11: #{tpu_custom_call.1} parent=5 // pred_region
        %s264 = ssub.s32 %s15, 1
        // Predicated region
        $region13: #{tpu_custom_call.1} parent=11 // pred_check
          %p265 = pneg %p74
        $region14: #{tpu_custom_call.1} parent=11 // pred_check_branch
          %267 = sbr.rel (%p265) target = $region16
        $region15: #{tpu_custom_call.1} parent=11 // pred_region
          _
        $region16: #{tpu_custom_call.1} parent=11 // pred_fallthru
          _
        // Predicated region
        $region17: #{tpu_custom_call.1} parent=11 // pred_check
          %p268 = pneg %p95
        $region18: #{tpu_custom_call.1} parent=11 // pred_check_branch
          %270 = sbr.rel (%p268) target = $region20
        $region19: #{tpu_custom_call.1} parent=11 // pred_region
          _
        $region20: #{tpu_custom_call.1} parent=11 // pred_fallthru
          _
        // Predicated region
        $region21: #{tpu_custom_call.1} parent=11 // pred_check
          %p271 = pneg %p116
        $region22: #{tpu_custom_call.1} parent=11 // pred_check_branch
          %273 = sbr.rel (%p271) target = $region24
        $region23: #{tpu_custom_call.1} parent=11 // pred_region
          _
        $region24: #{tpu_custom_call.1} parent=11 // pred_fallthru
          _
      $region12: #{tpu_custom_call.1} parent=5 // pred_fallthru
        _
      %p274 = scmp.lt.s32.totalorder %s15, 8
      // Predicated region
      $region25: #{tpu_custom_call.1} parent=5 // pred_check
        %p275 = pneg %p274
      $region26: #{tpu_custom_call.1} parent=5 // pred_check_branch
        %277 = sbr.rel (%p275) target = $region28
      $region27: #{tpu_custom_call.1} parent=5 // pred_region
        // Predicated region
        $region29: #{tpu_custom_call.1} parent=27 // pred_check
          %p278 = pneg %p47
        $region30: #{tpu_custom_call.1} parent=27 // pred_check_branch
          %280 = sbr.rel (%p278) target = $region32
        $region31: #{tpu_custom_call.1} parent=27 // pred_region
          %s281 = smul.u32 32, %s22
          %p282 = scmp.lt.s32.totalorder %s281, 63
          %s283 = scalar_select %p282, %s281, 63
          %s284 = smul.addr %s283, 8
          %s285 = scalar_lea.vmem %s0, %s284
          %s286 = smul.u32 32, %s22
        $region32: #{tpu_custom_call.1} parent=27 // pred_fallthru
          _
        // Predicated region
        $region33: #{tpu_custom_call.1} parent=27 // pred_check
          %p287 = pneg %p160
        $region34: #{tpu_custom_call.1} parent=27 // pred_check_branch
          %289 = sbr.rel (%p287) target = $region36
        $region35: #{tpu_custom_call.1} parent=27 // pred_region
          %s290 = sand.u32 %s150, 1
          %s291 = sand.u32 %s150, 1
          %s292 = smul.addr %s291, 64
          %s293 = scalar_lea.vmem [#allocation5], %s292
          %p294 = scmp.lt.s32.totalorder %s23, 0
          %s295 = ssub.s32 0, %s23
          %s296 = scalar_select %p294, %s295, %s23
          %s297 = sand.u32 %s296, 1
          %s298 = ssub.s32 0, %s297
          %s299 = scalar_select %p294, %s298, %s297
          %p300 = scmp.ne.s32.totalorder %s299, 0
          %p301 = scmp.lt.s32.totalorder %s299, 0
          %p302 = pnand %p301, %p300
          %p303 = pneg %p302
          %s304 = sadd.s32 %s299, 2
          %s305 = scalar_select %p303, %s304, %s299
          %s306 = smul.addr %s305, 4
          %s307 = scalar_lea.vmem %s4, %s306
          // Predicated region
          $region37: #{tpu_custom_call.1} parent=35 // pred_check
            _
          $region38: #{tpu_custom_call.1} parent=35 // pred_check_branch
            %309 = sbr.rel (0) target = $region40
          $region39: #{tpu_custom_call.1} parent=35 // pred_region
            // Predicated region
            $region41: #{tpu_custom_call.1} parent=39 // pred_check
              _
            $region42: #{tpu_custom_call.1} parent=39 // pred_check_branch
              %311 = sbr.rel target = $region44
            $region43: #{tpu_custom_call.1} parent=39 // pred_region
              // Predicated region
              $region56: #{tpu_custom_call.1} parent=43 // pred_check
                _
              $region57: #{tpu_custom_call.1} parent=43 // pred_check_branch
                %357 = sbr.rel (0) target = $region59
              $region58: #{tpu_custom_call.1} parent=43 // pred_region
                loop: start=0, step=1, limit=1
                $region60: #{tpu_custom_call.1} parent=58 // loop_pre_header
                  _
                $region61: #{tpu_custom_call.1} parent=58 // loop_header
                  %s359 = sphi 0, %s363
                  %p360 = scmp.ge.s32.totalorder %s359, 1
                  %s364 = sphi %s307, %s307
                  %s365 = sphi %s293, %s293
                $region62: #{tpu_custom_call.1} parent=58 // loop_header_branch
                  %362 = sbr.rel (%p360) target = $region66
                $region63: #{tpu_custom_call.1} parent=58 // loop_body
                  _
                $region64: #{tpu_custom_call.1} parent=58 // loop_footer
                  %s363 = sadd.s32 1, %s359
                $region65: #{tpu_custom_call.1} parent=58 // loop_footer_branch
                  %358 = sbr.rel target = $region61
                $region66: #{tpu_custom_call.1} parent=58 // loop_exit
                  _
                %s367 = ssub.s32 16, 1
                loop: start=0, step=1, limit=1
                $region67: #{tpu_custom_call.1} parent=58 // loop_pre_header
                  _
                $region68: #{tpu_custom_call.1} parent=58 // loop_header
                  %s369 = sphi 0, %s373
                  %p370 = scmp.ge.s32.totalorder %s369, 1
                  %s374 = sphi %s307, %s307
                  %s375 = sphi %s293, %s293
                $region69: #{tpu_custom_call.1} parent=58 // loop_header_branch
                  %372 = sbr.rel (%p370) target = $region73
                $region70: #{tpu_custom_call.1} parent=58 // loop_body
                  %v376 = vld [vmem:[%s374] sm:%s367]
                  %377 = vst [vmem:[%s375] sm:%s367] %v376
                  %v378 = vld [vmem:[%s374 + $0x8] sm:%s367]
                  %379 = vst [vmem:[%s375 + $0x4] sm:%s367] %v378
                  %v380 = vld [vmem:[%s374 + $0x10] sm:%s367]
                  %381 = vst [vmem:[%s375 + $0x8] sm:%s367] %v380
                  %v382 = vld [vmem:[%s374 + $0x18] sm:%s367]
                  %383 = vst [vmem:[%s375 + $0xc] sm:%s367] %v382
                  %v384 = vld [vmem:[%s374 + $0x20] sm:%s367]
                  %385 = vst [vmem:[%s375 + $0x10] sm:%s367] %v384
                  %v386 = vld [vmem:[%s374 + $0x28] sm:%s367]
                  %387 = vst [vmem:[%s375 + $0x14] sm:%s367] %v386
                  %v388 = vld [vmem:[%s374 + $0x30] sm:%s367]
                  %389 = vst [vmem:[%s375 + $0x18] sm:%s367] %v388
                  %v390 = vld [vmem:[%s374 + $0x38] sm:%s367]
                  %391 = vst [vmem:[%s375 + $0x1c] sm:%s367] %v390
                  %v392 = vld [vmem:[%s374 + $0x40] sm:%s367]
                  %393 = vst [vmem:[%s375 + $0x20] sm:%s367] %v392
                  %v394 = vld [vmem:[%s374 + $0x48] sm:%s367]
                  %395 = vst [vmem:[%s375 + $0x24] sm:%s367] %v394
                  %v396 = vld [vmem:[%s374 + $0x50] sm:%s367]
                  %397 = vst [vmem:[%s375 + $0x28] sm:%s367] %v396
                  %v398 = vld [vmem:[%s374 + $0x58] sm:%s367]
                  %399 = vst [vmem:[%s375 + $0x2c] sm:%s367] %v398
                  %v400 = vld [vmem:[%s374 + $0x60] sm:%s367]
                  %401 = vst [vmem:[%s375 + $0x30] sm:%s367] %v400
                  %v402 = vld [vmem:[%s374 + $0x68] sm:%s367]
                  %403 = vst [vmem:[%s375 + $0x34] sm:%s367] %v402
                  %v404 = vld [vmem:[%s374 + $0x70] sm:%s367]
                  %405 = vst [vmem:[%s375 + $0x38] sm:%s367] %v404
                  %v406 = vld [vmem:[%s374 + $0x78] sm:%s367]
                  %407 = vst [vmem:[%s375 + $0x3c] sm:%s367] %v406
                $region71: #{tpu_custom_call.1} parent=58 // loop_footer
                  %s373 = sadd.s32 1, %s369
                $region72: #{tpu_custom_call.1} parent=58 // loop_footer_branch
                  %368 = sbr.rel target = $region68
                $region73: #{tpu_custom_call.1} parent=58 // loop_exit
                  _
              $region59: #{tpu_custom_call.1} parent=43 // pred_fallthru
                _
            $region44: #{tpu_custom_call.1} parent=39 // pred_fallthru
              _
            // Predicated region
            $region45: #{tpu_custom_call.1} parent=39 // pred_check
              _
            $region46: #{tpu_custom_call.1} parent=39 // pred_check_branch
              %313 = sbr.rel (0) target = $region48
            $region47: #{tpu_custom_call.1} parent=39 // pred_region
              %s315 = ssub.s32 16, 1
              loop: start=0, step=1, limit=1
              $region49: #{tpu_custom_call.1} parent=47 // loop_pre_header
                _
              $region50: #{tpu_custom_call.1} parent=47 // loop_header
                %s317 = sphi 0, %s321
                %p318 = scmp.ge.s32.totalorder %s317, 1
                %s322 = sphi %s307, %s307
                %s323 = sphi %s293, %s293
              $region51: #{tpu_custom_call.1} parent=47 // loop_header_branch
                %320 = sbr.rel (%p318) target = $region55
              $region52: #{tpu_custom_call.1} parent=47 // loop_body
                %v324 = vld [vmem:[%s322] sm:%s315]
                %325 = vst [vmem:[%s323] sm:%s315] %v324
                %v326 = vld [vmem:[%s322 + $0x8] sm:%s315]
                %327 = vst [vmem:[%s323 + $0x4] sm:%s315] %v326
                %v328 = vld [vmem:[%s322 + $0x10] sm:%s315]
                %329 = vst [vmem:[%s323 + $0x8] sm:%s315] %v328
                %v330 = vld [vmem:[%s322 + $0x18] sm:%s315]
                %331 = vst [vmem:[%s323 + $0xc] sm:%s315] %v330
                %v332 = vld [vmem:[%s322 + $0x20] sm:%s315]
                %333 = vst [vmem:[%s323 + $0x10] sm:%s315] %v332
                %v334 = vld [vmem:[%s322 + $0x28] sm:%s315]
                %335 = vst [vmem:[%s323 + $0x14] sm:%s315] %v334
                %v336 = vld [vmem:[%s322 + $0x30] sm:%s315]
                %337 = vst [vmem:[%s323 + $0x18] sm:%s315] %v336
                %v338 = vld [vmem:[%s322 + $0x38] sm:%s315]
                %339 = vst [vmem:[%s323 + $0x1c] sm:%s315] %v338
                %v340 = vld [vmem:[%s322 + $0x40] sm:%s315]
                %341 = vst [vmem:[%s323 + $0x20] sm:%s315] %v340
                %v342 = vld [vmem:[%s322 + $0x48] sm:%s315]
                %343 = vst [vmem:[%s323 + $0x24] sm:%s315] %v342
                %v344 = vld [vmem:[%s322 + $0x50] sm:%s315]
                %345 = vst [vmem:[%s323 + $0x28] sm:%s315] %v344
                %v346 = vld [vmem:[%s322 + $0x58] sm:%s315]
                %347 = vst [vmem:[%s323 + $0x2c] sm:%s315] %v346
                %v348 = vld [vmem:[%s322 + $0x60] sm:%s315]
                %349 = vst [vmem:[%s323 + $0x30] sm:%s315] %v348
                %v350 = vld [vmem:[%s322 + $0x68] sm:%s315]
                %351 = vst [vmem:[%s323 + $0x34] sm:%s315] %v350
                %v352 = vld [vmem:[%s322 + $0x70] sm:%s315]
                %353 = vst [vmem:[%s323 + $0x38] sm:%s315] %v352
                %v354 = vld [vmem:[%s322 + $0x78] sm:%s315]
                %355 = vst [vmem:[%s323 + $0x3c] sm:%s315] %v354
              $region53: #{tpu_custom_call.1} parent=47 // loop_footer
                %s321 = sadd.s32 1, %s317
              $region54: #{tpu_custom_call.1} parent=47 // loop_footer_branch
                %316 = sbr.rel target = $region50
              $region55: #{tpu_custom_call.1} parent=47 // loop_exit
                _
            $region48: #{tpu_custom_call.1} parent=39 // pred_fallthru
              _
          $region40: #{tpu_custom_call.1} parent=35 // pred_fallthru
            _
          %408 = vnop
        $region36: #{tpu_custom_call.1} parent=27 // pred_fallthru
          _
        // Predicated region
        $region74: #{tpu_custom_call.1} parent=27 // pred_check
          %p409 = pneg %p210
        $region75: #{tpu_custom_call.1} parent=27 // pred_check_branch
          %411 = sbr.rel (%p409) target = $region77
        $region76: #{tpu_custom_call.1} parent=27 // pred_region
          %p412 = scmp.lt.s32.totalorder %s23, 0
          %s413 = ssub.s32 0, %s23
          %s414 = scalar_select %p412, %s413, %s23
          %s415 = sand.u32 %s414, 1
          %s416 = ssub.s32 0, %s415
          %s417 = scalar_select %p412, %s416, %s415
          %p418 = scmp.ne.s32.totalorder %s417, 0
          %p419 = scmp.lt.s32.totalorder %s417, 0
          %p420 = pnand %p419, %p418
          %p421 = pneg %p420
          %s422 = sadd.s32 %s417, 2
          %s423 = scalar_select %p421, %s422, %s417
          %p424 = scmp.lt.s32.totalorder %s423, 1
          %s425 = scalar_select %p424, %s423, 1
          %s426 = scalar_lea.vmem %s5, %s425
          %p427 = scmp.lt.s32.totalorder %s23, 0
          %s428 = ssub.s32 0, %s23
          %s429 = scalar_select %p427, %s428, %s23
          %s430 = sand.u32 %s429, 1
          %s431 = ssub.s32 0, %s430
          %s432 = scalar_select %p427, %s431, %s430
          %p433 = scmp.ne.s32.totalorder %s432, 0
          %p434 = scmp.lt.s32.totalorder %s432, 0
          %p435 = pnand %p434, %p433
          %p436 = pneg %p435
          %s437 = sadd.s32 %s432, 2
          %s438 = scalar_select %p436, %s437, %s432
        $region77: #{tpu_custom_call.1} parent=27 // pred_fallthru
          _
      $region28: #{tpu_custom_call.1} parent=5 // pred_fallthru
        _
      %p439 = scmp.le.s32.totalorder 1, %s15
      %p440 = scmp.lt.s32.totalorder %s15, 9
      %p441 = pnand %p439, %p440
      %p442 = pneg %p441
      // Predicated region
      $region78: #{tpu_custom_call.1} parent=5 // pred_check
        _
      $region79: #{tpu_custom_call.1} parent=5 // pred_check_branch
        %444 = sbr.rel (%p441) target = $region81
      $region80: #{tpu_custom_call.1} parent=5 // pred_region
        %s445 = ssub.s32 %s15, 1
        %s446 = sand.u32 %s153, 1
        %s447 = sand.u32 %s153, 1
        %s448 = smul.addr %s447, 64
        %s449 = scalar_lea.vmem [#allocation5], %s448
        // Predicated region
        $region82: #{tpu_custom_call.1} parent=80 // pred_check
          %p450 = pneg %p166
        $region83: #{tpu_custom_call.1} parent=80 // pred_check_branch
          %452 = sbr.rel (%p450) target = $region85
        $region84: #{tpu_custom_call.1} parent=80 // pred_region
          _
        $region85: #{tpu_custom_call.1} parent=80 // pred_fallthru
          _
        %s453 = smul.u32 32, %s24
        %p454 = scmp.lt.s32.totalorder %s453, 63
        %s455 = scalar_select %p454, %s453, 63
        %s456 = smul.addr %s455, 8
        %s457 = scalar_lea.vmem %s0, %s456
        %p458 = pneg %p53
        %p459 = pneg %p50
        %p460 = pneg %p74
        %p461 = pneg %p71
        %p462 = pneg %p95
        %p463 = pneg %p92
        %p464 = pneg %p116
        %p465 = pneg %p113
        %s466 = sand.u32 %s153, 1
        %s467 = sand.u32 %s153, 1
        %s468 = smul.addr %s467, 64
        %s469 = scalar_lea.vmem [#allocation5], %s468
        %p470 = pneg %p166
        %p471 = pneg %p163
        %p472 = scmp.lt.s32.totalorder %s25, 0
        %s473 = ssub.s32 0, %s25
        %s474 = scalar_select %p472, %s473, %s25
        %s475 = sand.u32 %s474, 1
        %s476 = ssub.s32 0, %s475
        %s477 = scalar_select %p472, %s476, %s475
        %p478 = scmp.ne.s32.totalorder %s477, 0
        %p479 = scmp.lt.s32.totalorder %s477, 0
        %p480 = pnand %p479, %p478
        %p481 = pneg %p480
        %s482 = sadd.s32 %s477, 2
        %s483 = scalar_select %p481, %s482, %s477
        %p484 = scmp.lt.s32.totalorder %s483, 1
        %s485 = scalar_select %p484, %s483, 1
        %s486 = scalar_lea.vmem %s5, %s485
        %p487 = pneg %p216
        %p488 = pneg %p213
        %p489 = pneg %p250
        %p490 = pneg %p247
        %s491 = sand.u32 %s237, 1
        %s492 = scalar_lea.sflag [#allocation7], %s491
        %s493 = sand.u32 %s237, 1
        %s494 = smul.addr %s493, 256
        %s495 = scalar_lea.vmem [#allocation6], %s494
        %s496 = smul.u32 32, %s24
        %p497 = scmp.lt.s32.totalorder %s496, 63
        %s498 = scalar_select %p497, %s496, 63
        %s499 = smul.addr %s498, 8
        %s500 = scalar_lea.vmem %s0, %s499
        %s501 = smul.u32 32, %s24
        %p502 = scmp.lt.s32.totalorder %s25, 0
        %s503 = ssub.s32 0, %s25
        %s504 = scalar_select %p502, %s503, %s25
        %s505 = sand.u32 %s504, 1
        %s506 = ssub.s32 0, %s505
        %s507 = scalar_select %p502, %s506, %s505
        %p508 = scmp.ne.s32.totalorder %s507, 0
        %p509 = scmp.lt.s32.totalorder %s507, 0
        %p510 = pnand %p509, %p508
        %p511 = pneg %p510
        %s512 = sadd.s32 %s507, 2
        %s513 = scalar_select %p511, %s512, %s507
        %p514 = scmp.lt.s32.totalorder %s25, 0
        %s515 = ssub.s32 0, %s25
        %s516 = scalar_select %p514, %s515, %s25
        %s517 = sand.u32 %s516, 1
        %s518 = ssub.s32 0, %s517
        %s519 = scalar_select %p514, %s518, %s517
        %p520 = scmp.ne.s32.totalorder %s519, 0
        %p521 = scmp.lt.s32.totalorder %s519, 0
        %p522 = pnand %p521, %p520
        %p523 = pneg %p522
        %s524 = sadd.s32 %s519, 2
        %s525 = scalar_select %p523, %s524, %s519
        %p526 = scmp.lt.s32.totalorder %s525, 1
        %s527 = scalar_select %p526, %s525, 1
        %s528 = scalar_lea.vmem %s5, %s527
        %p529 = scmp.lt.s32.totalorder %s25, 0
        %s530 = ssub.s32 0, %s25
        %s531 = scalar_select %p529, %s530, %s25
        %s532 = sand.u32 %s531, 1
        %s533 = ssub.s32 0, %s532
        %s534 = scalar_select %p529, %s533, %s532
        %p535 = scmp.ne.s32.totalorder %s534, 0
        %p536 = scmp.lt.s32.totalorder %s534, 0
        %p537 = pnand %p536, %p535
        %p538 = pneg %p537
        %s539 = sadd.s32 %s534, 2
        %s540 = scalar_select %p538, %s539, %s534
        %s541 = ssub.s32 %s25, 2
        %p542 = scmp.gt.s32.totalorder %s541, 0
        %s543 = scalar_select %p542, %s541, 0
        %s544 = smul.u32 32, %s24
        %p545 = scmp.eq.s32.totalorder %s25, 0
        // Predicated region
        $region86: #{tpu_custom_call.1} parent=80 // pred_check
          %p546 = pneg %p545
        $region87: #{tpu_custom_call.1} parent=80 // pred_check_branch
          %548 = sbr.rel (%p546) target = $region89
        $region88: #{tpu_custom_call.1} parent=80 // pred_region
          %v549 = vlaneseq
          %v550 = vand.u32 %v549, 127
          %v551 = vadd.s32 %v550, 128
          %v552 = vld [vmem:[%s500] sm:$0xff]
          %v553 = vld [vmem:[%s500 + $0x8] sm:$0xff]
          %v554 = vld [vmem:[%s500 + $0x10] sm:$0xff]
          %v555 = vld [vmem:[%s500 + $0x18] sm:$0xff]
          %v556 = vld [vmem:[%s500 + $0x20] sm:$0xff]
          %v557 = vld [vmem:[%s500 + $0x28] sm:$0xff]
          %v558 = vld [vmem:[%s500 + $0x30] sm:$0xff]
          %v559 = vld [vmem:[%s500 + $0x38] sm:$0xff]
          %v560 = vld [vmem:[%s500 + $0x40] sm:$0xff]
          %v561 = vld [vmem:[%s500 + $0x48] sm:$0xff]
          %v562 = vld [vmem:[%s500 + $0x50] sm:$0xff]
          %v563 = vld [vmem:[%s500 + $0x58] sm:$0xff]
          %v564 = vld [vmem:[%s500 + $0x60] sm:$0xff]
          %v565 = vld [vmem:[%s500 + $0x68] sm:$0xff]
          %v566 = vld [vmem:[%s500 + $0x70] sm:$0xff]
          %v567 = vld [vmem:[%s500 + $0x78] sm:$0xff]
          %v568 = vld [vmem:[%s500 + $0x80] sm:$0xff]
          %v569 = vld [vmem:[%s500 + $0x88] sm:$0xff]
          %v570 = vld [vmem:[%s500 + $0x90] sm:$0xff]
          %v571 = vld [vmem:[%s500 + $0x98] sm:$0xff]
          %v572 = vld [vmem:[%s500 + $0xa0] sm:$0xff]
          %v573 = vld [vmem:[%s500 + $0xa8] sm:$0xff]
          %v574 = vld [vmem:[%s500 + $0xb0] sm:$0xff]
          %v575 = vld [vmem:[%s500 + $0xb8] sm:$0xff]
          %v576 = vld [vmem:[%s500 + $0xc0] sm:$0xff]
          %v577 = vld [vmem:[%s500 + $0xc8] sm:$0xff]
          %v578 = vld [vmem:[%s500 + $0xd0] sm:$0xff]
          %v579 = vld [vmem:[%s500 + $0xd8] sm:$0xff]
          %v580 = vld [vmem:[%s500 + $0xe0] sm:$0xff]
          %v581 = vld [vmem:[%s500 + $0xe8] sm:$0xff]
          %v582 = vld [vmem:[%s500 + $0xf0] sm:$0xff]
          %v583 = vld [vmem:[%s500 + $0xf8] sm:$0xff]
          %584 = vset.pattern.permute.xlu0 0
          %585 = vperm.xlu0 %584, %v552
          %v586 = vpop.permute.xlu0 %585
          %587 = vset.pattern.permute.xlu0 0
          %588 = vperm.xlu0 %587, %v553
          %v589 = vpop.permute.xlu0 %588
          %590 = vset.pattern.permute.xlu0 0
          %591 = vperm.xlu0 %590, %v554
          %v592 = vpop.permute.xlu0 %591
          %593 = vset.pattern.permute.xlu0 0
          %594 = vperm.xlu0 %593, %v555
          %v595 = vpop.permute.xlu0 %594
          %596 = vset.pattern.permute.xlu0 0
          %597 = vperm.xlu0 %596, %v556
          %v598 = vpop.permute.xlu0 %597
          %599 = vset.pattern.permute.xlu0 0
          %600 = vperm.xlu0 %599, %v557
          %v601 = vpop.permute.xlu0 %600
          %602 = vset.pattern.permute.xlu0 0
          %603 = vperm.xlu0 %602, %v558
          %v604 = vpop.permute.xlu0 %603
          %605 = vset.pattern.permute.xlu0 0
          %606 = vperm.xlu0 %605, %v559
          %v607 = vpop.permute.xlu0 %606
          %608 = vset.pattern.permute.xlu0 0
          %609 = vperm.xlu0 %608, %v560
          %v610 = vpop.permute.xlu0 %609
          %611 = vset.pattern.permute.xlu0 0
          %612 = vperm.xlu0 %611, %v561
          %v613 = vpop.permute.xlu0 %612
          %614 = vset.pattern.permute.xlu0 0
          %615 = vperm.xlu0 %614, %v562
          %v616 = vpop.permute.xlu0 %615
          %617 = vset.pattern.permute.xlu0 0
          %618 = vperm.xlu0 %617, %v563
          %v619 = vpop.permute.xlu0 %618
          %620 = vset.pattern.permute.xlu0 0
          %621 = vperm.xlu0 %620, %v564
          %v622 = vpop.permute.xlu0 %621
          %623 = vset.pattern.permute.xlu0 0
          %624 = vperm.xlu0 %623, %v565
          %v625 = vpop.permute.xlu0 %624
          %626 = vset.pattern.permute.xlu0 0
          %627 = vperm.xlu0 %626, %v566
          %v628 = vpop.permute.xlu0 %627
          %629 = vset.pattern.permute.xlu0 0
          %630 = vperm.xlu0 %629, %v567
          %v631 = vpop.permute.xlu0 %630
          %632 = vset.pattern.permute.xlu0 0
          %633 = vperm.xlu0 %632, %v568
          %v634 = vpop.permute.xlu0 %633
          %635 = vset.pattern.permute.xlu0 0
          %636 = vperm.xlu0 %635, %v569
          %v637 = vpop.permute.xlu0 %636
          %638 = vset.pattern.permute.xlu0 0
          %639 = vperm.xlu0 %638, %v570
          %v640 = vpop.permute.xlu0 %639
          %641 = vset.pattern.permute.xlu0 0
          %642 = vperm.xlu0 %641, %v571
          %v643 = vpop.permute.xlu0 %642
          %644 = vset.pattern.permute.xlu0 0
          %645 = vperm.xlu0 %644, %v572
          %v646 = vpop.permute.xlu0 %645
          %647 = vset.pattern.permute.xlu0 0
          %648 = vperm.xlu0 %647, %v573
          %v649 = vpop.permute.xlu0 %648
          %650 = vset.pattern.permute.xlu0 0
          %651 = vperm.xlu0 %650, %v574
          %v652 = vpop.permute.xlu0 %651
          %653 = vset.pattern.permute.xlu0 0
          %654 = vperm.xlu0 %653, %v575
          %v655 = vpop.permute.xlu0 %654
          %656 = vset.pattern.permute.xlu0 0
          %657 = vperm.xlu0 %656, %v576
          %v658 = vpop.permute.xlu0 %657
          %659 = vset.pattern.permute.xlu0 0
          %660 = vperm.xlu0 %659, %v577
          %v661 = vpop.permute.xlu0 %660
          %662 = vset.pattern.permute.xlu0 0
          %663 = vperm.xlu0 %662, %v578
          %v664 = vpop.permute.xlu0 %663
          %665 = vset.pattern.permute.xlu0 0
          %666 = vperm.xlu0 %665, %v579
          %v667 = vpop.permute.xlu0 %666
          %668 = vset.pattern.permute.xlu0 0
          %669 = vperm.xlu0 %668, %v580
          %v670 = vpop.permute.xlu0 %669
          %671 = vset.pattern.permute.xlu0 0
          %672 = vperm.xlu0 %671, %v581
          %v673 = vpop.permute.xlu0 %672
          %674 = vset.pattern.permute.xlu0 0
          %675 = vperm.xlu0 %674, %v582
          %v676 = vpop.permute.xlu0 %675
          %677 = vset.pattern.permute.xlu0 0
          %678 = vperm.xlu0 %677, %v583
          %v679 = vpop.permute.xlu0 %678
          %vm680 = vcmp.eq.s32.totalorder %v550, %v586
          %vm681 = vcmp.eq.s32.totalorder %v551, %v586
          %vm682 = vcmp.eq.s32.totalorder %v550, %v589
          %vm683 = vcmp.eq.s32.totalorder %v551, %v589
          %vm684 = vcmp.eq.s32.totalorder %v550, %v592
          %vm685 = vcmp.eq.s32.totalorder %v551, %v592
          %vm686 = vcmp.eq.s32.totalorder %v550, %v595
          %vm687 = vcmp.eq.s32.totalorder %v551, %v595
          %vm688 = vcmp.eq.s32.totalorder %v550, %v598
          %vm689 = vcmp.eq.s32.totalorder %v551, %v598
          %vm690 = vcmp.eq.s32.totalorder %v550, %v601
          %vm691 = vcmp.eq.s32.totalorder %v551, %v601
          %vm692 = vcmp.eq.s32.totalorder %v550, %v604
          %vm693 = vcmp.eq.s32.totalorder %v551, %v604
          %vm694 = vcmp.eq.s32.totalorder %v550, %v607
          %vm695 = vcmp.eq.s32.totalorder %v551, %v607
          %vm696 = vcmp.eq.s32.totalorder %v550, %v610
          %vm697 = vcmp.eq.s32.totalorder %v551, %v610
          %vm698 = vcmp.eq.s32.totalorder %v550, %v613
          %vm699 = vcmp.eq.s32.totalorder %v551, %v613
          %vm700 = vcmp.eq.s32.totalorder %v550, %v616
          %vm701 = vcmp.eq.s32.totalorder %v551, %v616
          %vm702 = vcmp.eq.s32.totalorder %v550, %v619
          %vm703 = vcmp.eq.s32.totalorder %v551, %v619
          %vm704 = vcmp.eq.s32.totalorder %v550, %v622
          %vm705 = vcmp.eq.s32.totalorder %v551, %v622
          %vm706 = vcmp.eq.s32.totalorder %v550, %v625
          %vm707 = vcmp.eq.s32.totalorder %v551, %v625
          %vm708 = vcmp.eq.s32.totalorder %v550, %v628
          %vm709 = vcmp.eq.s32.totalorder %v551, %v628
          %vm710 = vcmp.eq.s32.totalorder %v550, %v631
          %vm711 = vcmp.eq.s32.totalorder %v551, %v631
          %vm712 = vcmp.eq.s32.totalorder %v550, %v634
          %vm713 = vcmp.eq.s32.totalorder %v551, %v634
          %vm714 = vcmp.eq.s32.totalorder %v550, %v637
          %vm715 = vcmp.eq.s32.totalorder %v551, %v637
          %vm716 = vcmp.eq.s32.totalorder %v550, %v640
          %vm717 = vcmp.eq.s32.totalorder %v551, %v640
          %vm718 = vcmp.eq.s32.totalorder %v550, %v643
          %vm719 = vcmp.eq.s32.totalorder %v551, %v643
          %vm720 = vcmp.eq.s32.totalorder %v550, %v646
          %vm721 = vcmp.eq.s32.totalorder %v551, %v646
          %vm722 = vcmp.eq.s32.totalorder %v550, %v649
          %vm723 = vcmp.eq.s32.totalorder %v551, %v649
          %vm724 = vcmp.eq.s32.totalorder %v550, %v652
          %vm725 = vcmp.eq.s32.totalorder %v551, %v652
          %vm726 = vcmp.eq.s32.totalorder %v550, %v655
          %vm727 = vcmp.eq.s32.totalorder %v551, %v655
          %vm728 = vcmp.eq.s32.totalorder %v550, %v658
          %vm729 = vcmp.eq.s32.totalorder %v551, %v658
          %vm730 = vcmp.eq.s32.totalorder %v550, %v661
          %vm731 = vcmp.eq.s32.totalorder %v551, %v661
          %vm732 = vcmp.eq.s32.totalorder %v550, %v664
          %vm733 = vcmp.eq.s32.totalorder %v551, %v664
          %vm734 = vcmp.eq.s32.totalorder %v550, %v667
          %vm735 = vcmp.eq.s32.totalorder %v551, %v667
          %vm736 = vcmp.eq.s32.totalorder %v550, %v670
          %vm737 = vcmp.eq.s32.totalorder %v551, %v670
          %vm738 = vcmp.eq.s32.totalorder %v550, %v673
          %vm739 = vcmp.eq.s32.totalorder %v551, %v673
          %vm740 = vcmp.eq.s32.totalorder %v550, %v676
          %vm741 = vcmp.eq.s32.totalorder %v551, %v676
          %vm742 = vcmp.eq.s32.totalorder %v550, %v679
          %vm743 = vcmp.eq.s32.totalorder %v551, %v679
          %v744 = vsel %vm680, 1, 0
          %v745 = vsel %vm681, 1, 0
          %v746 = vsel %vm682, 1, 0
          %v747 = vsel %vm683, 1, 0
          %v748 = vsel %vm684, 1, 0
          %v749 = vsel %vm685, 1, 0
          %v750 = vsel %vm686, 1, 0
          %v751 = vsel %vm687, 1, 0
          %v752 = vsel %vm688, 1, 0
          %v753 = vsel %vm689, 1, 0
          %v754 = vsel %vm690, 1, 0
          %v755 = vsel %vm691, 1, 0
          %v756 = vsel %vm692, 1, 0
          %v757 = vsel %vm693, 1, 0
          %v758 = vsel %vm694, 1, 0
          %v759 = vsel %vm695, 1, 0
          %v760 = vsel %vm696, 1, 0
          %v761 = vsel %vm697, 1, 0
          %v762 = vsel %vm698, 1, 0
          %v763 = vsel %vm699, 1, 0
          %v764 = vsel %vm700, 1, 0
          %v765 = vsel %vm701, 1, 0
          %v766 = vsel %vm702, 1, 0
          %v767 = vsel %vm703, 1, 0
          %v768 = vsel %vm704, 1, 0
          %v769 = vsel %vm705, 1, 0
          %v770 = vsel %vm706, 1, 0
          %v771 = vsel %vm707, 1, 0
          %v772 = vsel %vm708, 1, 0
          %v773 = vsel %vm709, 1, 0
          %v774 = vsel %vm710, 1, 0
          %v775 = vsel %vm711, 1, 0
          %v776 = vsel %vm712, 1, 0
          %v777 = vsel %vm713, 1, 0
          %v778 = vsel %vm714, 1, 0
          %v779 = vsel %vm715, 1, 0
          %v780 = vsel %vm716, 1, 0
          %v781 = vsel %vm717, 1, 0
          %v782 = vsel %vm718, 1, 0
          %v783 = vsel %vm719, 1, 0
          %v784 = vsel %vm720, 1, 0
          %v785 = vsel %vm721, 1, 0
          %v786 = vsel %vm722, 1, 0
          %v787 = vsel %vm723, 1, 0
          %v788 = vsel %vm724, 1, 0
          %v789 = vsel %vm725, 1, 0
          %v790 = vsel %vm726, 1, 0
          %v791 = vsel %vm727, 1, 0
          %v792 = vsel %vm728, 1, 0
          %v793 = vsel %vm729, 1, 0
          %v794 = vsel %vm730, 1, 0
          %v795 = vsel %vm731, 1, 0
          %v796 = vsel %vm732, 1, 0
          %v797 = vsel %vm733, 1, 0
          %v798 = vsel %vm734, 1, 0
          %v799 = vsel %vm735, 1, 0
          %v800 = vsel %vm736, 1, 0
          %v801 = vsel %vm737, 1, 0
          %v802 = vsel %vm738, 1, 0
          %v803 = vsel %vm739, 1, 0
          %v804 = vsel %vm740, 1, 0
          %v805 = vsel %vm741, 1, 0
          %v806 = vsel %vm742, 1, 0
          %v807 = vsel %vm743, 1, 0
          %v808 = vcvt.s32.f32 %v744
          %v809 = vcvt.s32.f32 %v745
          %v810 = vcvt.s32.f32 %v746
          %v811 = vcvt.s32.f32 %v747
          %v812 = vcvt.s32.f32 %v748
          %v813 = vcvt.s32.f32 %v749
          %v814 = vcvt.s32.f32 %v750
          %v815 = vcvt.s32.f32 %v751
          %v816 = vcvt.s32.f32 %v752
          %v817 = vcvt.s32.f32 %v753
          %v818 = vcvt.s32.f32 %v754
          %v819 = vcvt.s32.f32 %v755
          %v820 = vcvt.s32.f32 %v756
          %v821 = vcvt.s32.f32 %v757
          %v822 = vcvt.s32.f32 %v758
          %v823 = vcvt.s32.f32 %v759
          %v824 = vcvt.s32.f32 %v760
          %v825 = vcvt.s32.f32 %v761
          %v826 = vcvt.s32.f32 %v762
          %v827 = vcvt.s32.f32 %v763
          %v828 = vcvt.s32.f32 %v764
          %v829 = vcvt.s32.f32 %v765
          %v830 = vcvt.s32.f32 %v766
          %v831 = vcvt.s32.f32 %v767
          %v832 = vcvt.s32.f32 %v768
          %v833 = vcvt.s32.f32 %v769
          %v834 = vcvt.s32.f32 %v770
          %v835 = vcvt.s32.f32 %v771
          %v836 = vcvt.s32.f32 %v772
          %v837 = vcvt.s32.f32 %v773
          %v838 = vcvt.s32.f32 %v774
          %v839 = vcvt.s32.f32 %v775
          %v840 = vcvt.s32.f32 %v776
          %v841 = vcvt.s32.f32 %v777
          %v842 = vcvt.s32.f32 %v778
          %v843 = vcvt.s32.f32 %v779
          %v844 = vcvt.s32.f32 %v780
          %v845 = vcvt.s32.f32 %v781
          %v846 = vcvt.s32.f32 %v782
          %v847 = vcvt.s32.f32 %v783
          %v848 = vcvt.s32.f32 %v784
          %v849 = vcvt.s32.f32 %v785
          %v850 = vcvt.s32.f32 %v786
          %v851 = vcvt.s32.f32 %v787
          %v852 = vcvt.s32.f32 %v788
          %v853 = vcvt.s32.f32 %v789
          %v854 = vcvt.s32.f32 %v790
          %v855 = vcvt.s32.f32 %v791
          %v856 = vcvt.s32.f32 %v792
          %v857 = vcvt.s32.f32 %v793
          %v858 = vcvt.s32.f32 %v794
          %v859 = vcvt.s32.f32 %v795
          %v860 = vcvt.s32.f32 %v796
          %v861 = vcvt.s32.f32 %v797
          %v862 = vcvt.s32.f32 %v798
          %v863 = vcvt.s32.f32 %v799
          %v864 = vcvt.s32.f32 %v800
          %v865 = vcvt.s32.f32 %v801
          %v866 = vcvt.s32.f32 %v802
          %v867 = vcvt.s32.f32 %v803
          %v868 = vcvt.s32.f32 %v804
          %v869 = vcvt.s32.f32 %v805
          %v870 = vcvt.s32.f32 %v806
          %v871 = vcvt.s32.f32 %v807
          %v872 = vpack.c.bf16 %v810, %v808
          %v873 = vpack.c.bf16 %v811, %v809
          %v874 = vpack.c.bf16 %v814, %v812
          %v875 = vpack.c.bf16 %v815, %v813
          %v876 = vpack.c.bf16 %v818, %v816
          %v877 = vpack.c.bf16 %v819, %v817
          %v878 = vpack.c.bf16 %v822, %v820
          %v879 = vpack.c.bf16 %v823, %v821
          %v880 = vpack.c.bf16 %v826, %v824
          %v881 = vpack.c.bf16 %v827, %v825
          %v882 = vpack.c.bf16 %v830, %v828
          %v883 = vpack.c.bf16 %v831, %v829
          %v884 = vpack.c.bf16 %v834, %v832
          %v885 = vpack.c.bf16 %v835, %v833
          %v886 = vpack.c.bf16 %v838, %v836
          %v887 = vpack.c.bf16 %v839, %v837
          %v888 = vpack.c.bf16 %v842, %v840
          %v889 = vpack.c.bf16 %v843, %v841
          %v890 = vpack.c.bf16 %v846, %v844
          %v891 = vpack.c.bf16 %v847, %v845
          %v892 = vpack.c.bf16 %v850, %v848
          %v893 = vpack.c.bf16 %v851, %v849
          %v894 = vpack.c.bf16 %v854, %v852
          %v895 = vpack.c.bf16 %v855, %v853
          %v896 = vpack.c.bf16 %v858, %v856
          %v897 = vpack.c.bf16 %v859, %v857
          %v898 = vpack.c.bf16 %v862, %v860
          %v899 = vpack.c.bf16 %v863, %v861
          %v900 = vpack.c.bf16 %v866, %v864
          %v901 = vpack.c.bf16 %v867, %v865
          %v902 = vpack.c.bf16 %v870, %v868
          %v903 = vpack.c.bf16 %v871, %v869
          %v904 = vld [vmem:[%s1] sm:$0xf]
          %v905 = vld [vmem:[%s1 + $0x4] sm:$0xf]
          %v906 = vld [vmem:[%s1 + $0x8] sm:$0xf]
          %v907 = vld [vmem:[%s1 + $0xc] sm:$0xf]
          %v908 = vld [vmem:[%s1 + $0x10] sm:$0xf]
          %v909 = vld [vmem:[%s1 + $0x14] sm:$0xf]
          %v910 = vld [vmem:[%s1 + $0x18] sm:$0xf]
          %v911 = vld [vmem:[%s1 + $0x1c] sm:$0xf]
          %v912 = vld [vmem:[%s1 + $0x20] sm:$0xf]
          %v913 = vld [vmem:[%s1 + $0x24] sm:$0xf]
          %v914 = vld [vmem:[%s1 + $0x28] sm:$0xf]
          %v915 = vld [vmem:[%s1 + $0x2c] sm:$0xf]
          %v916 = vld [vmem:[%s1 + $0x30] sm:$0xf]
          %v917 = vld [vmem:[%s1 + $0x34] sm:$0xf]
          %v918 = vld [vmem:[%s1 + $0x38] sm:$0xf]
          %v919 = vld [vmem:[%s1 + $0x3c] sm:$0xf]
          %v920 = vld [vmem:[%s1 + $0x40] sm:$0xf]
          %v921 = vld [vmem:[%s1 + $0x44] sm:$0xf]
          %v922 = vld [vmem:[%s1 + $0x48] sm:$0xf]
          %v923 = vld [vmem:[%s1 + $0x4c] sm:$0xf]
          %v924 = vld [vmem:[%s1 + $0x50] sm:$0xf]
          %v925 = vld [vmem:[%s1 + $0x54] sm:$0xf]
          %v926 = vld [vmem:[%s1 + $0x58] sm:$0xf]
          %v927 = vld [vmem:[%s1 + $0x5c] sm:$0xf]
          %v928 = vld [vmem:[%s1 + $0x60] sm:$0xf]
          %v929 = vld [vmem:[%s1 + $0x64] sm:$0xf]
          %v930 = vld [vmem:[%s1 + $0x68] sm:$0xf]
          %v931 = vld [vmem:[%s1 + $0x6c] sm:$0xf]
          %v932 = vld [vmem:[%s1 + $0x70] sm:$0xf]
          %v933 = vld [vmem:[%s1 + $0x74] sm:$0xf]
          %v934 = vld [vmem:[%s1 + $0x78] sm:$0xf]
          %v935 = vld [vmem:[%s1 + $0x7c] sm:$0xf]
          %v968 = vunpack.c.l.b16 %v904
          %v969 = vunpack.c.l.b16 %v905
          %v970 = vunpack.c.l.b16 %v906
          %v971 = vunpack.c.l.b16 %v907
          %v972 = vunpack.c.l.b16 %v908
          %v973 = vunpack.c.l.b16 %v909
          %v974 = vunpack.c.l.b16 %v910
          %v975 = vunpack.c.l.b16 %v911
          %v976 = vunpack.c.l.b16 %v912
          %v977 = vunpack.c.l.b16 %v913
          %v978 = vunpack.c.l.b16 %v914
          %v979 = vunpack.c.l.b16 %v915
          %v980 = vunpack.c.l.b16 %v916
          %v981 = vunpack.c.l.b16 %v917
          %v982 = vunpack.c.l.b16 %v918
          %v983 = vunpack.c.l.b16 %v919
          %v984 = vunpack.c.l.b16 %v920
          %v985 = vunpack.c.l.b16 %v921
          %v986 = vunpack.c.l.b16 %v922
          %v987 = vunpack.c.l.b16 %v923
          %v988 = vunpack.c.l.b16 %v924
          %v989 = vunpack.c.l.b16 %v925
          %v990 = vunpack.c.l.b16 %v926
          %v991 = vunpack.c.l.b16 %v927
          %v992 = vunpack.c.l.b16 %v928
          %v993 = vunpack.c.l.b16 %v929
          %v994 = vunpack.c.l.b16 %v930
          %v995 = vunpack.c.l.b16 %v931
          %v996 = vunpack.c.l.b16 %v932
          %v997 = vunpack.c.l.b16 %v933
          %v998 = vunpack.c.l.b16 %v934
          %v999 = vunpack.c.l.b16 %v935
          %v1000 = vpack.c.b16 %v969, %v968
          %v1001 = vpack.c.b16 %v971, %v970
          %v1002 = vpack.c.b16 %v973, %v972
          %v1003 = vpack.c.b16 %v975, %v974
          %v1004 = vpack.c.b16 %v977, %v976
          %v1005 = vpack.c.b16 %v979, %v978
          %v1006 = vpack.c.b16 %v981, %v980
          %v1007 = vpack.c.b16 %v983, %v982
          %v1008 = vpack.c.b16 %v985, %v984
          %v1009 = vpack.c.b16 %v987, %v986
          %v1010 = vpack.c.b16 %v989, %v988
          %v1011 = vpack.c.b16 %v991, %v990
          %v1012 = vpack.c.b16 %v993, %v992
          %v1013 = vpack.c.b16 %v995, %v994
          %v1014 = vpack.c.b16 %v997, %v996
          %v1015 = vpack.c.b16 %v999, %v998
          %1032 = vmatpush.bf16.msra.mxu0 %v1007
          %1033 = vmatpush.bf16.msra.mxu0 %v1006
          %1034 = vmatpush.bf16.msra.mxu0 %v1005
          %1035 = vmatpush.bf16.msra.mxu0 %v1004
          %1036 = vmatpush.bf16.msra.mxu0 %v1003
          %1037 = vmatpush.bf16.msra.mxu0 %v1002
          %1038 = vmatpush.bf16.msra.mxu0 %v1001
          %1039 = vmatpush.bf16.msra.mxu0 %v1000
          %1040 = vmatmul.bf16.gmra.mxu0 %v872
          %v1041 = vpop.f32.mrf.mxu0
          %v1042 = vadd.f32 0.0, %v1041
          %v1043 = vpop.f32.mrf.mxu0
          %v1044 = vadd.f32 0.0, %v1043
          %1045 = vmatmul.bf16.gmra.mxu0 %v874
          %v1046 = vpop.f32.mrf.mxu0
          %v1047 = vadd.f32 0.0, %v1046
          %v1048 = vpop.f32.mrf.mxu0
          %v1049 = vadd.f32 0.0, %v1048
          %1050 = vmatmul.bf16.gmra.mxu0 %v876
          %v1051 = vpop.f32.mrf.mxu0
          %v1052 = vadd.f32 0.0, %v1051
          %v1053 = vpop.f32.mrf.mxu0
          %v1054 = vadd.f32 0.0, %v1053
          %1055 = vmatmul.bf16.gmra.mxu0 %v878
          %v1056 = vpop.f32.mrf.mxu0
          %v1057 = vadd.f32 0.0, %v1056
          %v1058 = vpop.f32.mrf.mxu0
          %v1059 = vadd.f32 0.0, %v1058
          %1060 = vmatmul.bf16.gmra.mxu0 %v880
          %v1061 = vpop.f32.mrf.mxu0
          %v1062 = vadd.f32 0.0, %v1061
          %v1063 = vpop.f32.mrf.mxu0
          %v1064 = vadd.f32 0.0, %v1063
          %1065 = vmatmul.bf16.gmra.mxu0 %v882
          %v1066 = vpop.f32.mrf.mxu0
          %v1067 = vadd.f32 0.0, %v1066
          %v1068 = vpop.f32.mrf.mxu0
          %v1069 = vadd.f32 0.0, %v1068
          %1070 = vmatmul.bf16.gmra.mxu0 %v884
          %v1071 = vpop.f32.mrf.mxu0
          %v1072 = vadd.f32 0.0, %v1071
          %v1073 = vpop.f32.mrf.mxu0
          %v1074 = vadd.f32 0.0, %v1073
          %1075 = vmatmul.bf16.gmra.mxu0 %v886
          %v1076 = vpop.f32.mrf.mxu0
          %v1077 = vadd.f32 0.0, %v1076
          %v1078 = vpop.f32.mrf.mxu0
          %v1079 = vadd.f32 0.0, %v1078
          %1080 = vmatmul.bf16.gmra.mxu0 %v888
          %v1081 = vpop.f32.mrf.mxu0
          %v1082 = vadd.f32 0.0, %v1081
          %v1083 = vpop.f32.mrf.mxu0
          %v1084 = vadd.f32 0.0, %v1083
          %1085 = vmatmul.bf16.gmra.mxu0 %v890
          %v1086 = vpop.f32.mrf.mxu0
          %v1087 = vadd.f32 0.0, %v1086
          %v1088 = vpop.f32.mrf.mxu0
          %v1089 = vadd.f32 0.0, %v1088
          %1090 = vmatmul.bf16.gmra.mxu0 %v892
          %v1091 = vpop.f32.mrf.mxu0
          %v1092 = vadd.f32 0.0, %v1091
          %v1093 = vpop.f32.mrf.mxu0
          %v1094 = vadd.f32 0.0, %v1093
          %1095 = vmatmul.bf16.gmra.mxu0 %v894
          %v1096 = vpop.f32.mrf.mxu0
          %v1097 = vadd.f32 0.0, %v1096
          %v1098 = vpop.f32.mrf.mxu0
          %v1099 = vadd.f32 0.0, %v1098
          %1100 = vmatmul.bf16.gmra.mxu0 %v896
          %v1101 = vpop.f32.mrf.mxu0
          %v1102 = vadd.f32 0.0, %v1101
          %v1103 = vpop.f32.mrf.mxu0
          %v1104 = vadd.f32 0.0, %v1103
          %1105 = vmatmul.bf16.gmra.mxu0 %v898
          %v1106 = vpop.f32.mrf.mxu0
          %v1107 = vadd.f32 0.0, %v1106
          %v1108 = vpop.f32.mrf.mxu0
          %v1109 = vadd.f32 0.0, %v1108
          %1110 = vmatmul.bf16.gmra.mxu0 %v900
          %v1111 = vpop.f32.mrf.mxu0
          %v1112 = vadd.f32 0.0, %v1111
          %v1113 = vpop.f32.mrf.mxu0
          %v1114 = vadd.f32 0.0, %v1113
          %1115 = vmatmul.bf16.gmra.mxu0 %v902
          %v1116 = vpop.f32.mrf.mxu0
          %v1117 = vadd.f32 0.0, %v1116
          %v1118 = vpop.f32.mrf.mxu0
          %v1119 = vadd.f32 0.0, %v1118
          %1120 = vdwg.mxu0
          %1121 = vmatpush.bf16.msra.mxu0 %v1015
          %1122 = vmatpush.bf16.msra.mxu0 %v1014
          %1123 = vmatpush.bf16.msra.mxu0 %v1013
          %1124 = vmatpush.bf16.msra.mxu0 %v1012
          %1125 = vmatpush.bf16.msra.mxu0 %v1011
          %1126 = vmatpush.bf16.msra.mxu0 %v1010
          %1127 = vmatpush.bf16.msra.mxu0 %v1009
          %1128 = vmatpush.bf16.msra.mxu0 %v1008
          %1129 = vmatmul.bf16.gmra.mxu0 %v873
          %v1130 = vpop.f32.mrf.mxu0
          %v1131 = vadd.f32 %v1042, %v1130
          %v1132 = vpop.f32.mrf.mxu0
          %v1133 = vadd.f32 %v1044, %v1132
          %1134 = vmatmul.bf16.gmra.mxu0 %v875
          %v1135 = vpop.f32.mrf.mxu0
          %v1136 = vadd.f32 %v1047, %v1135
          %v1137 = vpop.f32.mrf.mxu0
          %v1138 = vadd.f32 %v1049, %v1137
          %1139 = vmatmul.bf16.gmra.mxu0 %v877
          %v1140 = vpop.f32.mrf.mxu0
          %v1141 = vadd.f32 %v1052, %v1140
          %v1142 = vpop.f32.mrf.mxu0
          %v1143 = vadd.f32 %v1054, %v1142
          %1144 = vmatmul.bf16.gmra.mxu0 %v879
          %v1145 = vpop.f32.mrf.mxu0
          %v1146 = vadd.f32 %v1057, %v1145
          %v1147 = vpop.f32.mrf.mxu0
          %v1148 = vadd.f32 %v1059, %v1147
          %1149 = vmatmul.bf16.gmra.mxu0 %v881
          %v1150 = vpop.f32.mrf.mxu0
          %v1151 = vadd.f32 %v1062, %v1150
          %v1152 = vpop.f32.mrf.mxu0
          %v1153 = vadd.f32 %v1064, %v1152
          %1154 = vmatmul.bf16.gmra.mxu0 %v883
          %v1155 = vpop.f32.mrf.mxu0
          %v1156 = vadd.f32 %v1067, %v1155
          %v1157 = vpop.f32.mrf.mxu0
          %v1158 = vadd.f32 %v1069, %v1157
          %1159 = vmatmul.bf16.gmra.mxu0 %v885
          %v1160 = vpop.f32.mrf.mxu0
          %v1161 = vadd.f32 %v1072, %v1160
          %v1162 = vpop.f32.mrf.mxu0
          %v1163 = vadd.f32 %v1074, %v1162
          %1164 = vmatmul.bf16.gmra.mxu0 %v887
          %v1165 = vpop.f32.mrf.mxu0
          %v1166 = vadd.f32 %v1077, %v1165
          %v1167 = vpop.f32.mrf.mxu0
          %v1168 = vadd.f32 %v1079, %v1167
          %1169 = vmatmul.bf16.gmra.mxu0 %v889
          %v1170 = vpop.f32.mrf.mxu0
          %v1171 = vadd.f32 %v1082, %v1170
          %v1172 = vpop.f32.mrf.mxu0
          %v1173 = vadd.f32 %v1084, %v1172
          %1174 = vmatmul.bf16.gmra.mxu0 %v891
          %v1175 = vpop.f32.mrf.mxu0
          %v1176 = vadd.f32 %v1087, %v1175
          %v1177 = vpop.f32.mrf.mxu0
          %v1178 = vadd.f32 %v1089, %v1177
          %1179 = vmatmul.bf16.gmra.mxu0 %v893
          %v1180 = vpop.f32.mrf.mxu0
          %v1181 = vadd.f32 %v1092, %v1180
          %v1182 = vpop.f32.mrf.mxu0
          %v1183 = vadd.f32 %v1094, %v1182
          %1184 = vmatmul.bf16.gmra.mxu0 %v895
          %v1185 = vpop.f32.mrf.mxu0
          %v1186 = vadd.f32 %v1097, %v1185
          %v1187 = vpop.f32.mrf.mxu0
          %v1188 = vadd.f32 %v1099, %v1187
          %1189 = vmatmul.bf16.gmra.mxu0 %v897
          %v1190 = vpop.f32.mrf.mxu0
          %v1191 = vadd.f32 %v1102, %v1190
          %v1192 = vpop.f32.mrf.mxu0
          %v1193 = vadd.f32 %v1104, %v1192
          %1194 = vmatmul.bf16.gmra.mxu0 %v899
          %v1195 = vpop.f32.mrf.mxu0
          %v1196 = vadd.f32 %v1107, %v1195
          %v1197 = vpop.f32.mrf.mxu0
          %v1198 = vadd.f32 %v1109, %v1197
          %1199 = vmatmul.bf16.gmra.mxu0 %v901
          %v1200 = vpop.f32.mrf.mxu0
          %v1201 = vadd.f32 %v1112, %v1200
          %v1202 = vpop.f32.mrf.mxu0
          %v1203 = vadd.f32 %v1114, %v1202
          %1204 = vmatmul.bf16.gmra.mxu0 %v903
          %v1205 = vpop.f32.mrf.mxu0
          %v1206 = vadd.f32 %v1117, %v1205
          %v1207 = vpop.f32.mrf.mxu0
          %v1208 = vadd.f32 %v1119, %v1207
          %1209 = vdwg.mxu0
          %v1210 = vpack.c.bf16 %v1133, %v1131
          %v1211 = vpack.c.bf16 %v1138, %v1136
          %v1212 = vpack.c.bf16 %v1143, %v1141
          %v1213 = vpack.c.bf16 %v1148, %v1146
          %v1214 = vpack.c.bf16 %v1153, %v1151
          %v1215 = vpack.c.bf16 %v1158, %v1156
          %v1216 = vpack.c.bf16 %v1163, %v1161
          %v1217 = vpack.c.bf16 %v1168, %v1166
          %v1218 = vpack.c.bf16 %v1173, %v1171
          %v1219 = vpack.c.bf16 %v1178, %v1176
          %v1220 = vpack.c.bf16 %v1183, %v1181
          %v1221 = vpack.c.bf16 %v1188, %v1186
          %v1222 = vpack.c.bf16 %v1193, %v1191
          %v1223 = vpack.c.bf16 %v1198, %v1196
          %v1224 = vpack.c.bf16 %v1203, %v1201
          %v1225 = vpack.c.bf16 %v1208, %v1206
          %v1226 = vld [vmem:[%s2] sm:$0xf]
          %v1227 = vld [vmem:[%s2 + $0x4] sm:$0xf]
          %v1228 = vld [vmem:[%s2 + $0x8] sm:$0xf]
          %v1229 = vld [vmem:[%s2 + $0xc] sm:$0xf]
          %v1230 = vld [vmem:[%s2 + $0x10] sm:$0xf]
          %v1231 = vld [vmem:[%s2 + $0x14] sm:$0xf]
          %v1232 = vld [vmem:[%s2 + $0x18] sm:$0xf]
          %v1233 = vld [vmem:[%s2 + $0x1c] sm:$0xf]
          %v1234 = vld [vmem:[%s2 + $0x20] sm:$0xf]
          %v1235 = vld [vmem:[%s2 + $0x24] sm:$0xf]
          %v1236 = vld [vmem:[%s2 + $0x28] sm:$0xf]
          %v1237 = vld [vmem:[%s2 + $0x2c] sm:$0xf]
          %v1238 = vld [vmem:[%s2 + $0x30] sm:$0xf]
          %v1239 = vld [vmem:[%s2 + $0x34] sm:$0xf]
          %v1240 = vld [vmem:[%s2 + $0x38] sm:$0xf]
          %v1241 = vld [vmem:[%s2 + $0x3c] sm:$0xf]
          %v1242 = vld [vmem:[%s3] sm:$0x1]
          %v1244 = vperm.slane %v1242, 0
          %v1262 = vunpack.c.l.b16 %v1226
          %v1263 = vunpack.c.l.b16 %v1227
          %v1264 = vunpack.c.l.b16 %v1228
          %v1265 = vunpack.c.l.b16 %v1229
          %v1266 = vunpack.c.l.b16 %v1230
          %v1267 = vunpack.c.l.b16 %v1231
          %v1268 = vunpack.c.l.b16 %v1232
          %v1269 = vunpack.c.l.b16 %v1233
          %v1270 = vunpack.c.l.b16 %v1234
          %v1271 = vunpack.c.l.b16 %v1235
          %v1272 = vunpack.c.l.b16 %v1236
          %v1273 = vunpack.c.l.b16 %v1237
          %v1274 = vunpack.c.l.b16 %v1238
          %v1275 = vunpack.c.l.b16 %v1239
          %v1276 = vunpack.c.l.b16 %v1240
          %v1277 = vunpack.c.l.b16 %v1241
          %v1278 = vpack.c.b16 %v1263, %v1262
          %v1279 = vpack.c.b16 %v1265, %v1264
          %v1280 = vpack.c.b16 %v1267, %v1266
          %v1281 = vpack.c.b16 %v1269, %v1268
          %v1282 = vpack.c.b16 %v1271, %v1270
          %v1283 = vpack.c.b16 %v1273, %v1272
          %v1284 = vpack.c.b16 %v1275, %v1274
          %v1285 = vpack.c.b16 %v1277, %v1276
          %1294 = vmatpush.bf16.msra.mxu0 %v1285
          %1295 = vmatpush.bf16.msra.mxu0 %v1284
          %1296 = vmatpush.bf16.msra.mxu0 %v1283
          %1297 = vmatpush.bf16.msra.mxu0 %v1282
          %1298 = vmatpush.bf16.msra.mxu0 %v1281
          %1299 = vmatpush.bf16.msra.mxu0 %v1280
          %1300 = vmatpush.bf16.msra.mxu0 %v1279
          %1301 = vmatpush.bf16.msra.mxu0 %v1278
          %1302 = vmatmul.bf16.gmra.mxu0 %v1210
          %v1303 = vpop.f32.mrf.mxu0
          %v1304 = vadd.f32 %v1244, %v1303
          %v1305 = vpop.f32.mrf.mxu0
          %v1306 = vadd.f32 %v1244, %v1305
          %1307 = vmatmul.bf16.gmra.mxu0 %v1211
          %v1308 = vpop.f32.mrf.mxu0
          %v1309 = vadd.f32 %v1244, %v1308
          %v1310 = vpop.f32.mrf.mxu0
          %v1311 = vadd.f32 %v1244, %v1310
          %1312 = vmatmul.bf16.gmra.mxu0 %v1212
          %v1313 = vpop.f32.mrf.mxu0
          %v1314 = vadd.f32 %v1244, %v1313
          %v1315 = vpop.f32.mrf.mxu0
          %v1316 = vadd.f32 %v1244, %v1315
          %1317 = vmatmul.bf16.gmra.mxu0 %v1213
          %v1318 = vpop.f32.mrf.mxu0
          %v1319 = vadd.f32 %v1244, %v1318
          %v1320 = vpop.f32.mrf.mxu0
          %v1321 = vadd.f32 %v1244, %v1320
          %1322 = vmatmul.bf16.gmra.mxu0 %v1214
          %v1323 = vpop.f32.mrf.mxu0
          %v1324 = vadd.f32 %v1244, %v1323
          %v1325 = vpop.f32.mrf.mxu0
          %v1326 = vadd.f32 %v1244, %v1325
          %1327 = vmatmul.bf16.gmra.mxu0 %v1215
          %v1328 = vpop.f32.mrf.mxu0
          %v1329 = vadd.f32 %v1244, %v1328
          %v1330 = vpop.f32.mrf.mxu0
          %v1331 = vadd.f32 %v1244, %v1330
          %1332 = vmatmul.bf16.gmra.mxu0 %v1216
          %v1333 = vpop.f32.mrf.mxu0
          %v1334 = vadd.f32 %v1244, %v1333
          %v1335 = vpop.f32.mrf.mxu0
          %v1336 = vadd.f32 %v1244, %v1335
          %1337 = vmatmul.bf16.gmra.mxu0 %v1217
          %v1338 = vpop.f32.mrf.mxu0
          %v1339 = vadd.f32 %v1244, %v1338
          %v1340 = vpop.f32.mrf.mxu0
          %v1341 = vadd.f32 %v1244, %v1340
          %1342 = vmatmul.bf16.gmra.mxu0 %v1218
          %v1343 = vpop.f32.mrf.mxu0
          %v1344 = vadd.f32 %v1244, %v1343
          %v1345 = vpop.f32.mrf.mxu0
          %v1346 = vadd.f32 %v1244, %v1345
          %1347 = vmatmul.bf16.gmra.mxu0 %v1219
          %v1348 = vpop.f32.mrf.mxu0
          %v1349 = vadd.f32 %v1244, %v1348
          %v1350 = vpop.f32.mrf.mxu0
          %v1351 = vadd.f32 %v1244, %v1350
          %1352 = vmatmul.bf16.gmra.mxu0 %v1220
          %v1353 = vpop.f32.mrf.mxu0
          %v1354 = vadd.f32 %v1244, %v1353
          %v1355 = vpop.f32.mrf.mxu0
          %v1356 = vadd.f32 %v1244, %v1355
          %1357 = vmatmul.bf16.gmra.mxu0 %v1221
          %v1358 = vpop.f32.mrf.mxu0
          %v1359 = vadd.f32 %v1244, %v1358
          %v1360 = vpop.f32.mrf.mxu0
          %v1361 = vadd.f32 %v1244, %v1360
          %1362 = vmatmul.bf16.gmra.mxu0 %v1222
          %v1363 = vpop.f32.mrf.mxu0
          %v1364 = vadd.f32 %v1244, %v1363
          %v1365 = vpop.f32.mrf.mxu0
          %v1366 = vadd.f32 %v1244, %v1365
          %1367 = vmatmul.bf16.gmra.mxu0 %v1223
          %v1368 = vpop.f32.mrf.mxu0
          %v1369 = vadd.f32 %v1244, %v1368
          %v1370 = vpop.f32.mrf.mxu0
          %v1371 = vadd.f32 %v1244, %v1370
          %1372 = vmatmul.bf16.gmra.mxu0 %v1224
          %v1373 = vpop.f32.mrf.mxu0
          %v1374 = vadd.f32 %v1244, %v1373
          %v1375 = vpop.f32.mrf.mxu0
          %v1376 = vadd.f32 %v1244, %v1375
          %1377 = vmatmul.bf16.gmra.mxu0 %v1225
          %v1378 = vpop.f32.mrf.mxu0
          %v1379 = vadd.f32 %v1244, %v1378
          %v1380 = vpop.f32.mrf.mxu0
          %v1381 = vadd.f32 %v1244, %v1380
          %1382 = vdwg.mxu0
          %v1383 = vmax.f32 %v1304, 0.0
          %v1384 = vmax.f32 %v1306, 0.0
          %v1385 = vmax.f32 %v1309, 0.0
          %v1386 = vmax.f32 %v1311, 0.0
          %v1387 = vmax.f32 %v1314, 0.0
          %v1388 = vmax.f32 %v1316, 0.0
          %v1389 = vmax.f32 %v1319, 0.0
          %v1390 = vmax.f32 %v1321, 0.0
          %v1391 = vmax.f32 %v1324, 0.0
          %v1392 = vmax.f32 %v1326, 0.0
          %v1393 = vmax.f32 %v1329, 0.0
          %v1394 = vmax.f32 %v1331, 0.0
          %v1395 = vmax.f32 %v1334, 0.0
          %v1396 = vmax.f32 %v1336, 0.0
          %v1397 = vmax.f32 %v1339, 0.0
          %v1398 = vmax.f32 %v1341, 0.0
          %v1399 = vmax.f32 %v1344, 0.0
          %v1400 = vmax.f32 %v1346, 0.0
          %v1401 = vmax.f32 %v1349, 0.0
          %v1402 = vmax.f32 %v1351, 0.0
          %v1403 = vmax.f32 %v1354, 0.0
          %v1404 = vmax.f32 %v1356, 0.0
          %v1405 = vmax.f32 %v1359, 0.0
          %v1406 = vmax.f32 %v1361, 0.0
          %v1407 = vmax.f32 %v1364, 0.0
          %v1408 = vmax.f32 %v1366, 0.0
          %v1409 = vmax.f32 %v1369, 0.0
          %v1410 = vmax.f32 %v1371, 0.0
          %v1411 = vmax.f32 %v1374, 0.0
          %v1412 = vmax.f32 %v1376, 0.0
          %v1413 = vmax.f32 %v1379, 0.0
          %v1414 = vmax.f32 %v1381, 0.0
          %v1415 = vpack.c.bf16 %v1383, %v1383
          %v1416 = vpack.c.bf16 %v1384, %v1384
          %v1417 = vpack.c.bf16 %v1385, %v1385
          %v1418 = vpack.c.bf16 %v1386, %v1386
          %v1419 = vpack.c.bf16 %v1387, %v1387
          %v1420 = vpack.c.bf16 %v1388, %v1388
          %v1421 = vpack.c.bf16 %v1389, %v1389
          %v1422 = vpack.c.bf16 %v1390, %v1390
          %v1423 = vpack.c.bf16 %v1391, %v1391
          %v1424 = vpack.c.bf16 %v1392, %v1392
          %v1425 = vpack.c.bf16 %v1393, %v1393
          %v1426 = vpack.c.bf16 %v1394, %v1394
          %v1427 = vpack.c.bf16 %v1395, %v1395
          %v1428 = vpack.c.bf16 %v1396, %v1396
          %v1429 = vpack.c.bf16 %v1397, %v1397
          %v1430 = vpack.c.bf16 %v1398, %v1398
          %v1431 = vpack.c.bf16 %v1399, %v1399
          %v1432 = vpack.c.bf16 %v1400, %v1400
          %v1433 = vpack.c.bf16 %v1401, %v1401
          %v1434 = vpack.c.bf16 %v1402, %v1402
          %v1435 = vpack.c.bf16 %v1403, %v1403
          %v1436 = vpack.c.bf16 %v1404, %v1404
          %v1437 = vpack.c.bf16 %v1405, %v1405
          %v1438 = vpack.c.bf16 %v1406, %v1406
          %v1439 = vpack.c.bf16 %v1407, %v1407
          %v1440 = vpack.c.bf16 %v1408, %v1408
          %v1441 = vpack.c.bf16 %v1409, %v1409
          %v1442 = vpack.c.bf16 %v1410, %v1410
          %v1443 = vpack.c.bf16 %v1411, %v1411
          %v1444 = vpack.c.bf16 %v1412, %v1412
          %v1445 = vpack.c.bf16 %v1413, %v1413
          %v1446 = vpack.c.bf16 %v1414, %v1414
          %1447 = vst [vmem:[#allocation2] sm:$0xf] %v1415
          %1448 = vst [vmem:[#allocation2 + $0x4] sm:$0xf] %v1416
          %1449 = vst [vmem:[#allocation2 + $0x8] sm:$0xf] %v1417
          %1450 = vst [vmem:[#allocation2 + $0xc] sm:$0xf] %v1418
          %1451 = vst [vmem:[#allocation2 + $0x10] sm:$0xf] %v1419
          %1452 = vst [vmem:[#allocation2 + $0x14] sm:$0xf] %v1420
          %1453 = vst [vmem:[#allocation2 + $0x18] sm:$0xf] %v1421
          %1454 = vst [vmem:[#allocation2 + $0x1c] sm:$0xf] %v1422
          %1455 = vst [vmem:[#allocation2 + $0x20] sm:$0xf] %v1423
          %1456 = vst [vmem:[#allocation2 + $0x24] sm:$0xf] %v1424
          %1457 = vst [vmem:[#allocation2 + $0x28] sm:$0xf] %v1425
          %1458 = vst [vmem:[#allocation2 + $0x2c] sm:$0xf] %v1426
          %1459 = vst [vmem:[#allocation2 + $0x30] sm:$0xf] %v1427
          %1460 = vst [vmem:[#allocation2 + $0x34] sm:$0xf] %v1428
          %1461 = vst [vmem:[#allocation2 + $0x38] sm:$0xf] %v1429
          %1462 = vst [vmem:[#allocation2 + $0x3c] sm:$0xf] %v1430
          %1463 = vst [vmem:[#allocation2 + $0x40] sm:$0xf] %v1431
          %1464 = vst [vmem:[#allocation2 + $0x44] sm:$0xf] %v1432
          %1465 = vst [vmem:[#allocation2 + $0x48] sm:$0xf] %v1433
          %1466 = vst [vmem:[#allocation2 + $0x4c] sm:$0xf] %v1434
          %1467 = vst [vmem:[#allocation2 + $0x50] sm:$0xf] %v1435
          %1468 = vst [vmem:[#allocation2 + $0x54] sm:$0xf] %v1436
          %1469 = vst [vmem:[#allocation2 + $0x58] sm:$0xf] %v1437
          %1470 = vst [vmem:[#allocation2 + $0x5c] sm:$0xf] %v1438
          %1471 = vst [vmem:[#allocation2 + $0x60] sm:$0xf] %v1439
          %1472 = vst [vmem:[#allocation2 + $0x64] sm:$0xf] %v1440
          %1473 = vst [vmem:[#allocation2 + $0x68] sm:$0xf] %v1441
          %1474 = vst [vmem:[#allocation2 + $0x6c] sm:$0xf] %v1442
          %1475 = vst [vmem:[#allocation2 + $0x70] sm:$0xf] %v1443
          %1476 = vst [vmem:[#allocation2 + $0x74] sm:$0xf] %v1444
          %1477 = vst [vmem:[#allocation2 + $0x78] sm:$0xf] %v1445
          %1478 = vst [vmem:[#allocation2 + $0x7c] sm:$0xf] %v1446
          %vm1479 = vcmask 7168
          %1480 = vst.msk [vmem:[#allocation3] sm:$0xff] %vm1479, -inf
          %1481 = vst.msk [vmem:[#allocation3 + $0x8] sm:$0xff] %vm1479, -inf
          %1482 = vst.msk [vmem:[#allocation3 + $0x10] sm:$0xff] %vm1479, -inf
          %1483 = vst.msk [vmem:[#allocation3 + $0x18] sm:$0xff] %vm1479, -inf
          %1484 = vst.msk [vmem:[#allocation3 + $0x20] sm:$0xff] %vm1479, -inf
          %1485 = vst.msk [vmem:[#allocation3 + $0x28] sm:$0xff] %vm1479, -inf
          %1486 = vst.msk [vmem:[#allocation3 + $0x30] sm:$0xff] %vm1479, -inf
          %1487 = vst.msk [vmem:[#allocation3 + $0x38] sm:$0xff] %vm1479, -inf
          %1488 = vst.msk [vmem:[#allocation3 + $0x40] sm:$0xff] %vm1479, -inf
          %1489 = vst.msk [vmem:[#allocation3 + $0x48] sm:$0xff] %vm1479, -inf
          %1490 = vst.msk [vmem:[#allocation3 + $0x50] sm:$0xff] %vm1479, -inf
          %1491 = vst.msk [vmem:[#allocation3 + $0x58] sm:$0xff] %vm1479, -inf
          %1492 = vst.msk [vmem:[#allocation3 + $0x60] sm:$0xff] %vm1479, -inf
          %1493 = vst.msk [vmem:[#allocation3 + $0x68] sm:$0xff] %vm1479, -inf
          %1494 = vst.msk [vmem:[#allocation3 + $0x70] sm:$0xff] %vm1479, -inf
          %1495 = vst.msk [vmem:[#allocation3 + $0x78] sm:$0xff] %vm1479, -inf
          %1496 = vst.msk [vmem:[#allocation3 + $0x80] sm:$0xff] %vm1479, -inf
          %1497 = vst.msk [vmem:[#allocation3 + $0x88] sm:$0xff] %vm1479, -inf
          %1498 = vst.msk [vmem:[#allocation3 + $0x90] sm:$0xff] %vm1479, -inf
          %1499 = vst.msk [vmem:[#allocation3 + $0x98] sm:$0xff] %vm1479, -inf
          %1500 = vst.msk [vmem:[#allocation3 + $0xa0] sm:$0xff] %vm1479, -inf
          %1501 = vst.msk [vmem:[#allocation3 + $0xa8] sm:$0xff] %vm1479, -inf
          %1502 = vst.msk [vmem:[#allocation3 + $0xb0] sm:$0xff] %vm1479, -inf
          %1503 = vst.msk [vmem:[#allocation3 + $0xb8] sm:$0xff] %vm1479, -inf
          %1504 = vst.msk [vmem:[#allocation3 + $0xc0] sm:$0xff] %vm1479, -inf
          %1505 = vst.msk [vmem:[#allocation3 + $0xc8] sm:$0xff] %vm1479, -inf
          %1506 = vst.msk [vmem:[#allocation3 + $0xd0] sm:$0xff] %vm1479, -inf
          %1507 = vst.msk [vmem:[#allocation3 + $0xd8] sm:$0xff] %vm1479, -inf
          %1508 = vst.msk [vmem:[#allocation3 + $0xe0] sm:$0xff] %vm1479, -inf
          %1509 = vst.msk [vmem:[#allocation3 + $0xe8] sm:$0xff] %vm1479, -inf
          %1510 = vst.msk [vmem:[#allocation3 + $0xf0] sm:$0xff] %vm1479, -inf
          %1511 = vst.msk [vmem:[#allocation3 + $0xf8] sm:$0xff] %vm1479, -inf
          %1512 = vst.msk [vmem:[#allocation4] sm:$0xff] %vm1479, 0.0
          %1513 = vst.msk [vmem:[#allocation4 + $0x8] sm:$0xff] %vm1479, 0.0
          %1514 = vst.msk [vmem:[#allocation4 + $0x10] sm:$0xff] %vm1479, 0.0
          %1515 = vst.msk [vmem:[#allocation4 + $0x18] sm:$0xff] %vm1479, 0.0
          %1516 = vst.msk [vmem:[#allocation4 + $0x20] sm:$0xff] %vm1479, 0.0
          %1517 = vst.msk [vmem:[#allocation4 + $0x28] sm:$0xff] %vm1479, 0.0
          %1518 = vst.msk [vmem:[#allocation4 + $0x30] sm:$0xff] %vm1479, 0.0
          %1519 = vst.msk [vmem:[#allocation4 + $0x38] sm:$0xff] %vm1479, 0.0
          %1520 = vst.msk [vmem:[#allocation4 + $0x40] sm:$0xff] %vm1479, 0.0
          %1521 = vst.msk [vmem:[#allocation4 + $0x48] sm:$0xff] %vm1479, 0.0
          %1522 = vst.msk [vmem:[#allocation4 + $0x50] sm:$0xff] %vm1479, 0.0
          %1523 = vst.msk [vmem:[#allocation4 + $0x58] sm:$0xff] %vm1479, 0.0
          %1524 = vst.msk [vmem:[#allocation4 + $0x60] sm:$0xff] %vm1479, 0.0
          %1525 = vst.msk [vmem:[#allocation4 + $0x68] sm:$0xff] %vm1479, 0.0
          %1526 = vst.msk [vmem:[#allocation4 + $0x70] sm:$0xff] %vm1479, 0.0
          %1527 = vst.msk [vmem:[#allocation4 + $0x78] sm:$0xff] %vm1479, 0.0
          %1528 = vst.msk [vmem:[#allocation4 + $0x80] sm:$0xff] %vm1479, 0.0
          %1529 = vst.msk [vmem:[#allocation4 + $0x88] sm:$0xff] %vm1479, 0.0
          %1530 = vst.msk [vmem:[#allocation4 + $0x90] sm:$0xff] %vm1479, 0.0
          %1531 = vst.msk [vmem:[#allocation4 + $0x98] sm:$0xff] %vm1479, 0.0
          %1532 = vst.msk [vmem:[#allocation4 + $0xa0] sm:$0xff] %vm1479, 0.0
          %1533 = vst.msk [vmem:[#allocation4 + $0xa8] sm:$0xff] %vm1479, 0.0
          %1534 = vst.msk [vmem:[#allocation4 + $0xb0] sm:$0xff] %vm1479, 0.0
          %1535 = vst.msk [vmem:[#allocation4 + $0xb8] sm:$0xff] %vm1479, 0.0
          %1536 = vst.msk [vmem:[#allocation4 + $0xc0] sm:$0xff] %vm1479, 0.0
          %1537 = vst.msk [vmem:[#allocation4 + $0xc8] sm:$0xff] %vm1479, 0.0
          %1538 = vst.msk [vmem:[#allocation4 + $0xd0] sm:$0xff] %vm1479, 0.0
          %1539 = vst.msk [vmem:[#allocation4 + $0xd8] sm:$0xff] %vm1479, 0.0
          %1540 = vst.msk [vmem:[#allocation4 + $0xe0] sm:$0xff] %vm1479, 0.0
          %1541 = vst.msk [vmem:[#allocation4 + $0xe8] sm:$0xff] %vm1479, 0.0
          %1542 = vst.msk [vmem:[#allocation4 + $0xf0] sm:$0xff] %vm1479, 0.0
          %1543 = vst.msk [vmem:[#allocation4 + $0xf8] sm:$0xff] %vm1479, 0.0
        $region89: #{tpu_custom_call.1} parent=80 // pred_fallthru
          _
        %v1544 = vld [vmem:[#allocation2] sm:$0xf]
        %v1545 = vld [vmem:[#allocation2 + $0x4] sm:$0xf]
        %v1546 = vld [vmem:[#allocation2 + $0x8] sm:$0xf]
        %v1547 = vld [vmem:[#allocation2 + $0xc] sm:$0xf]
        %v1548 = vld [vmem:[#allocation2 + $0x10] sm:$0xf]
        %v1549 = vld [vmem:[#allocation2 + $0x14] sm:$0xf]
        %v1550 = vld [vmem:[#allocation2 + $0x18] sm:$0xf]
        %v1551 = vld [vmem:[#allocation2 + $0x1c] sm:$0xf]
        %v1552 = vld [vmem:[#allocation2 + $0x20] sm:$0xf]
        %v1553 = vld [vmem:[#allocation2 + $0x24] sm:$0xf]
        %v1554 = vld [vmem:[#allocation2 + $0x28] sm:$0xf]
        %v1555 = vld [vmem:[#allocation2 + $0x2c] sm:$0xf]
        %v1556 = vld [vmem:[#allocation2 + $0x30] sm:$0xf]
        %v1557 = vld [vmem:[#allocation2 + $0x34] sm:$0xf]
        %v1558 = vld [vmem:[#allocation2 + $0x38] sm:$0xf]
        %v1559 = vld [vmem:[#allocation2 + $0x3c] sm:$0xf]
        %v1560 = vld [vmem:[#allocation2 + $0x40] sm:$0xf]
        %v1561 = vld [vmem:[#allocation2 + $0x44] sm:$0xf]
        %v1562 = vld [vmem:[#allocation2 + $0x48] sm:$0xf]
        %v1563 = vld [vmem:[#allocation2 + $0x4c] sm:$0xf]
        %v1564 = vld [vmem:[#allocation2 + $0x50] sm:$0xf]
        %v1565 = vld [vmem:[#allocation2 + $0x54] sm:$0xf]
        %v1566 = vld [vmem:[#allocation2 + $0x58] sm:$0xf]
        %v1567 = vld [vmem:[#allocation2 + $0x5c] sm:$0xf]
        %v1568 = vld [vmem:[#allocation2 + $0x60] sm:$0xf]
        %v1569 = vld [vmem:[#allocation2 + $0x64] sm:$0xf]
        %v1570 = vld [vmem:[#allocation2 + $0x68] sm:$0xf]
        %v1571 = vld [vmem:[#allocation2 + $0x6c] sm:$0xf]
        %v1572 = vld [vmem:[#allocation2 + $0x70] sm:$0xf]
        %v1573 = vld [vmem:[#allocation2 + $0x74] sm:$0xf]
        %v1574 = vld [vmem:[#allocation2 + $0x78] sm:$0xf]
        %v1575 = vld [vmem:[#allocation2 + $0x7c] sm:$0xf]
        %v1576 = vld [vmem:[%s449] sm:$0xf]
        %v1577 = vld [vmem:[%s449 + $0x4] sm:$0xf]
        %v1578 = vld [vmem:[%s449 + $0x8] sm:$0xf]
        %v1579 = vld [vmem:[%s449 + $0xc] sm:$0xf]
        %v1580 = vld [vmem:[%s449 + $0x10] sm:$0xf]
        %v1581 = vld [vmem:[%s449 + $0x14] sm:$0xf]
        %v1582 = vld [vmem:[%s449 + $0x18] sm:$0xf]
        %v1583 = vld [vmem:[%s449 + $0x1c] sm:$0xf]
        %v1584 = vld [vmem:[%s449 + $0x20] sm:$0xf]
        %v1585 = vld [vmem:[%s449 + $0x24] sm:$0xf]
        %v1586 = vld [vmem:[%s449 + $0x28] sm:$0xf]
        %v1587 = vld [vmem:[%s449 + $0x2c] sm:$0xf]
        %v1588 = vld [vmem:[%s449 + $0x30] sm:$0xf]
        %v1589 = vld [vmem:[%s449 + $0x34] sm:$0xf]
        %v1590 = vld [vmem:[%s449 + $0x38] sm:$0xf]
        %v1591 = vld [vmem:[%s449 + $0x3c] sm:$0xf]
        %v1592 = vld [vmem:[%s528] sm:$0x1]
        %v1594 = vperm.slane %v1592, 0
        %v1628 = vunpack.c.l.b16 %v1544
        %v1629 = vunpack.c.l.b16 %v1545
        %v1630 = vunpack.c.l.b16 %v1546
        %v1631 = vunpack.c.l.b16 %v1547
        %v1632 = vunpack.c.l.b16 %v1548
        %v1633 = vunpack.c.l.b16 %v1549
        %v1634 = vunpack.c.l.b16 %v1550
        %v1635 = vunpack.c.l.b16 %v1551
        %v1636 = vunpack.c.l.b16 %v1552
        %v1637 = vunpack.c.l.b16 %v1553
        %v1638 = vunpack.c.l.b16 %v1554
        %v1639 = vunpack.c.l.b16 %v1555
        %v1640 = vunpack.c.l.b16 %v1556
        %v1641 = vunpack.c.l.b16 %v1557
        %v1642 = vunpack.c.l.b16 %v1558
        %v1643 = vunpack.c.l.b16 %v1559
        %v1644 = vunpack.c.l.b16 %v1560
        %v1645 = vunpack.c.l.b16 %v1561
        %v1646 = vunpack.c.l.b16 %v1562
        %v1647 = vunpack.c.l.b16 %v1563
        %v1648 = vunpack.c.l.b16 %v1564
        %v1649 = vunpack.c.l.b16 %v1565
        %v1650 = vunpack.c.l.b16 %v1566
        %v1651 = vunpack.c.l.b16 %v1567
        %v1652 = vunpack.c.l.b16 %v1568
        %v1653 = vunpack.c.l.b16 %v1569
        %v1654 = vunpack.c.l.b16 %v1570
        %v1655 = vunpack.c.l.b16 %v1571
        %v1656 = vunpack.c.l.b16 %v1572
        %v1657 = vunpack.c.l.b16 %v1573
        %v1658 = vunpack.c.l.b16 %v1574
        %v1659 = vunpack.c.l.b16 %v1575
        %v1660 = vpack.c.b16 %v1629, %v1628
        %v1661 = vpack.c.b16 %v1631, %v1630
        %v1662 = vpack.c.b16 %v1633, %v1632
        %v1663 = vpack.c.b16 %v1635, %v1634
        %v1664 = vpack.c.b16 %v1637, %v1636
        %v1665 = vpack.c.b16 %v1639, %v1638
        %v1666 = vpack.c.b16 %v1641, %v1640
        %v1667 = vpack.c.b16 %v1643, %v1642
        %v1668 = vpack.c.b16 %v1645, %v1644
        %v1669 = vpack.c.b16 %v1647, %v1646
        %v1670 = vpack.c.b16 %v1649, %v1648
        %v1671 = vpack.c.b16 %v1651, %v1650
        %v1672 = vpack.c.b16 %v1653, %v1652
        %v1673 = vpack.c.b16 %v1655, %v1654
        %v1674 = vpack.c.b16 %v1657, %v1656
        %v1675 = vpack.c.b16 %v1659, %v1658
        %v1708 = vunpack.c.l.b16 %v1576
        %v1709 = vunpack.c.l.b16 %v1577
        %v1710 = vunpack.c.l.b16 %v1578
        %v1711 = vunpack.c.l.b16 %v1579
        %v1712 = vunpack.c.l.b16 %v1580
        %v1713 = vunpack.c.l.b16 %v1581
        %v1714 = vunpack.c.l.b16 %v1582
        %v1715 = vunpack.c.l.b16 %v1583
        %v1716 = vunpack.c.l.b16 %v1584
        %v1717 = vunpack.c.l.b16 %v1585
        %v1718 = vunpack.c.l.b16 %v1586
        %v1719 = vunpack.c.l.b16 %v1587
        %v1720 = vunpack.c.l.b16 %v1588
        %v1721 = vunpack.c.l.b16 %v1589
        %v1722 = vunpack.c.l.b16 %v1590
        %v1723 = vunpack.c.l.b16 %v1591
        %v1724 = vpack.c.b16 %v1709, %v1708
        %v1725 = vpack.c.b16 %v1711, %v1710
        %v1726 = vpack.c.b16 %v1713, %v1712
        %v1727 = vpack.c.b16 %v1715, %v1714
        %v1728 = vpack.c.b16 %v1717, %v1716
        %v1729 = vpack.c.b16 %v1719, %v1718
        %v1730 = vpack.c.b16 %v1721, %v1720
        %v1731 = vpack.c.b16 %v1723, %v1722
        %1740 = vmatpush.bf16.msra.mxu0 %v1731
        %1741 = vmatpush.bf16.msra.mxu0 %v1730
        %1742 = vmatpush.bf16.msra.mxu0 %v1729
        %1743 = vmatpush.bf16.msra.mxu0 %v1728
        %1744 = vmatpush.bf16.msra.mxu0 %v1727
        %1745 = vmatpush.bf16.msra.mxu0 %v1726
        %1746 = vmatpush.bf16.msra.mxu0 %v1725
        %1747 = vmatpush.bf16.msra.mxu0 %v1724
        %1748 = vmatmul.bf16.gmra.mxu0 %v1660
        %v1749 = vpop.f32.mrf.mxu0
        %v1750 = vadd.f32 %v1594, %v1749
        %v1751 = vpop.f32.mrf.mxu0
        %v1752 = vadd.f32 %v1594, %v1751
        %1753 = vmatmul.bf16.gmra.mxu0 %v1661
        %v1754 = vpop.f32.mrf.mxu0
        %v1755 = vadd.f32 %v1594, %v1754
        %v1756 = vpop.f32.mrf.mxu0
        %v1757 = vadd.f32 %v1594, %v1756
        %1758 = vmatmul.bf16.gmra.mxu0 %v1662
        %v1759 = vpop.f32.mrf.mxu0
        %v1760 = vadd.f32 %v1594, %v1759
        %v1761 = vpop.f32.mrf.mxu0
        %v1762 = vadd.f32 %v1594, %v1761
        %1763 = vmatmul.bf16.gmra.mxu0 %v1663
        %v1764 = vpop.f32.mrf.mxu0
        %v1765 = vadd.f32 %v1594, %v1764
        %v1766 = vpop.f32.mrf.mxu0
        %v1767 = vadd.f32 %v1594, %v1766
        %1768 = vmatmul.bf16.gmra.mxu0 %v1664
        %v1769 = vpop.f32.mrf.mxu0
        %v1770 = vadd.f32 %v1594, %v1769
        %v1771 = vpop.f32.mrf.mxu0
        %v1772 = vadd.f32 %v1594, %v1771
        %1773 = vmatmul.bf16.gmra.mxu0 %v1665
        %v1774 = vpop.f32.mrf.mxu0
        %v1775 = vadd.f32 %v1594, %v1774
        %v1776 = vpop.f32.mrf.mxu0
        %v1777 = vadd.f32 %v1594, %v1776
        %1778 = vmatmul.bf16.gmra.mxu0 %v1666
        %v1779 = vpop.f32.mrf.mxu0
        %v1780 = vadd.f32 %v1594, %v1779
        %v1781 = vpop.f32.mrf.mxu0
        %v1782 = vadd.f32 %v1594, %v1781
        %1783 = vmatmul.bf16.gmra.mxu0 %v1667
        %v1784 = vpop.f32.mrf.mxu0
        %v1785 = vadd.f32 %v1594, %v1784
        %v1786 = vpop.f32.mrf.mxu0
        %v1787 = vadd.f32 %v1594, %v1786
        %1788 = vmatmul.bf16.gmra.mxu0 %v1668
        %v1789 = vpop.f32.mrf.mxu0
        %v1790 = vadd.f32 %v1594, %v1789
        %v1791 = vpop.f32.mrf.mxu0
        %v1792 = vadd.f32 %v1594, %v1791
        %1793 = vmatmul.bf16.gmra.mxu0 %v1669
        %v1794 = vpop.f32.mrf.mxu0
        %v1795 = vadd.f32 %v1594, %v1794
        %v1796 = vpop.f32.mrf.mxu0
        %v1797 = vadd.f32 %v1594, %v1796
        %1798 = vmatmul.bf16.gmra.mxu0 %v1670
        %v1799 = vpop.f32.mrf.mxu0
        %v1800 = vadd.f32 %v1594, %v1799
        %v1801 = vpop.f32.mrf.mxu0
        %v1802 = vadd.f32 %v1594, %v1801
        %1803 = vmatmul.bf16.gmra.mxu0 %v1671
        %v1804 = vpop.f32.mrf.mxu0
        %v1805 = vadd.f32 %v1594, %v1804
        %v1806 = vpop.f32.mrf.mxu0
        %v1807 = vadd.f32 %v1594, %v1806
        %1808 = vmatmul.bf16.gmra.mxu0 %v1672
        %v1809 = vpop.f32.mrf.mxu0
        %v1810 = vadd.f32 %v1594, %v1809
        %v1811 = vpop.f32.mrf.mxu0
        %v1812 = vadd.f32 %v1594, %v1811
        %1813 = vmatmul.bf16.gmra.mxu0 %v1673
        %v1814 = vpop.f32.mrf.mxu0
        %v1815 = vadd.f32 %v1594, %v1814
        %v1816 = vpop.f32.mrf.mxu0
        %v1817 = vadd.f32 %v1594, %v1816
        %1818 = vmatmul.bf16.gmra.mxu0 %v1674
        %v1819 = vpop.f32.mrf.mxu0
        %v1820 = vadd.f32 %v1594, %v1819
        %v1821 = vpop.f32.mrf.mxu0
        %v1822 = vadd.f32 %v1594, %v1821
        %1823 = vmatmul.bf16.gmra.mxu0 %v1675
        %v1824 = vpop.f32.mrf.mxu0
        %v1825 = vadd.f32 %v1594, %v1824
        %v1826 = vpop.f32.mrf.mxu0
        %v1827 = vadd.f32 %v1594, %v1826
        %1828 = vdwg.mxu0
        %p1829 = scmp.lt.s32.totalorder %s25, 2
        // Predicated region
        $region90: #{tpu_custom_call.1} parent=80 // pred_check
          %p1830 = pneg %p1829
        $region91: #{tpu_custom_call.1} parent=80 // pred_check_branch
          %1832 = sbr.rel (%p1830) target = $region93
        $region92: #{tpu_custom_call.1} parent=80 // pred_region
          %v1833 = vld [vmem:[#allocation3] sm:$0xff]
          %v1834 = vld [vmem:[#allocation3 + $0x8] sm:$0xff]
          %v1835 = vld [vmem:[#allocation3 + $0x10] sm:$0xff]
          %v1836 = vld [vmem:[#allocation3 + $0x18] sm:$0xff]
          %v1837 = vld [vmem:[#allocation3 + $0x20] sm:$0xff]
          %v1838 = vld [vmem:[#allocation3 + $0x28] sm:$0xff]
          %v1839 = vld [vmem:[#allocation3 + $0x30] sm:$0xff]
          %v1840 = vld [vmem:[#allocation3 + $0x38] sm:$0xff]
          %v1841 = vld [vmem:[#allocation3 + $0x40] sm:$0xff]
          %v1842 = vld [vmem:[#allocation3 + $0x48] sm:$0xff]
          %v1843 = vld [vmem:[#allocation3 + $0x50] sm:$0xff]
          %v1844 = vld [vmem:[#allocation3 + $0x58] sm:$0xff]
          %v1845 = vld [vmem:[#allocation3 + $0x60] sm:$0xff]
          %v1846 = vld [vmem:[#allocation3 + $0x68] sm:$0xff]
          %v1847 = vld [vmem:[#allocation3 + $0x70] sm:$0xff]
          %v1848 = vld [vmem:[#allocation3 + $0x78] sm:$0xff]
          %v1849 = vld [vmem:[#allocation3 + $0x80] sm:$0xff]
          %v1850 = vld [vmem:[#allocation3 + $0x88] sm:$0xff]
          %v1851 = vld [vmem:[#allocation3 + $0x90] sm:$0xff]
          %v1852 = vld [vmem:[#allocation3 + $0x98] sm:$0xff]
          %v1853 = vld [vmem:[#allocation3 + $0xa0] sm:$0xff]
          %v1854 = vld [vmem:[#allocation3 + $0xa8] sm:$0xff]
          %v1855 = vld [vmem:[#allocation3 + $0xb0] sm:$0xff]
          %v1856 = vld [vmem:[#allocation3 + $0xb8] sm:$0xff]
          %v1857 = vld [vmem:[#allocation3 + $0xc0] sm:$0xff]
          %v1858 = vld [vmem:[#allocation3 + $0xc8] sm:$0xff]
          %v1859 = vld [vmem:[#allocation3 + $0xd0] sm:$0xff]
          %v1860 = vld [vmem:[#allocation3 + $0xd8] sm:$0xff]
          %v1861 = vld [vmem:[#allocation3 + $0xe0] sm:$0xff]
          %v1862 = vld [vmem:[#allocation3 + $0xe8] sm:$0xff]
          %v1863 = vld [vmem:[#allocation3 + $0xf0] sm:$0xff]
          %v1864 = vld [vmem:[#allocation3 + $0xf8] sm:$0xff]
          %1865 = vmax.xlane.f32.xlu0 %v1750
          %v1866 = vpop.xlane.xlu0 %1865
          %1867 = vmax.xlane.f32.xlu0 %v1752
          %v1868 = vpop.xlane.xlu0 %1867
          %1869 = vmax.xlane.f32.xlu0 %v1755
          %v1870 = vpop.xlane.xlu0 %1869
          %1871 = vmax.xlane.f32.xlu0 %v1757
          %v1872 = vpop.xlane.xlu0 %1871
          %1873 = vmax.xlane.f32.xlu0 %v1760
          %v1874 = vpop.xlane.xlu0 %1873
          %1875 = vmax.xlane.f32.xlu0 %v1762
          %v1876 = vpop.xlane.xlu0 %1875
          %1877 = vmax.xlane.f32.xlu0 %v1765
          %v1878 = vpop.xlane.xlu0 %1877
          %1879 = vmax.xlane.f32.xlu0 %v1767
          %v1880 = vpop.xlane.xlu0 %1879
          %1881 = vmax.xlane.f32.xlu0 %v1770
          %v1882 = vpop.xlane.xlu0 %1881
          %1883 = vmax.xlane.f32.xlu0 %v1772
          %v1884 = vpop.xlane.xlu0 %1883
          %1885 = vmax.xlane.f32.xlu0 %v1775
          %v1886 = vpop.xlane.xlu0 %1885
          %1887 = vmax.xlane.f32.xlu0 %v1777
          %v1888 = vpop.xlane.xlu0 %1887
          %1889 = vmax.xlane.f32.xlu0 %v1780
          %v1890 = vpop.xlane.xlu0 %1889
          %1891 = vmax.xlane.f32.xlu0 %v1782
          %v1892 = vpop.xlane.xlu0 %1891
          %1893 = vmax.xlane.f32.xlu0 %v1785
          %v1894 = vpop.xlane.xlu0 %1893
          %1895 = vmax.xlane.f32.xlu0 %v1787
          %v1896 = vpop.xlane.xlu0 %1895
          %1897 = vmax.xlane.f32.xlu0 %v1790
          %v1898 = vpop.xlane.xlu0 %1897
          %1899 = vmax.xlane.f32.xlu0 %v1792
          %v1900 = vpop.xlane.xlu0 %1899
          %1901 = vmax.xlane.f32.xlu0 %v1795
          %v1902 = vpop.xlane.xlu0 %1901
          %1903 = vmax.xlane.f32.xlu0 %v1797
          %v1904 = vpop.xlane.xlu0 %1903
          %1905 = vmax.xlane.f32.xlu0 %v1800
          %v1906 = vpop.xlane.xlu0 %1905
          %1907 = vmax.xlane.f32.xlu0 %v1802
          %v1908 = vpop.xlane.xlu0 %1907
          %1909 = vmax.xlane.f32.xlu0 %v1805
          %v1910 = vpop.xlane.xlu0 %1909
          %1911 = vmax.xlane.f32.xlu0 %v1807
          %v1912 = vpop.xlane.xlu0 %1911
          %1913 = vmax.xlane.f32.xlu0 %v1810
          %v1914 = vpop.xlane.xlu0 %1913
          %1915 = vmax.xlane.f32.xlu0 %v1812
          %v1916 = vpop.xlane.xlu0 %1915
          %1917 = vmax.xlane.f32.xlu0 %v1815
          %v1918 = vpop.xlane.xlu0 %1917
          %1919 = vmax.xlane.f32.xlu0 %v1817
          %v1920 = vpop.xlane.xlu0 %1919
          %1921 = vmax.xlane.f32.xlu0 %v1820
          %v1922 = vpop.xlane.xlu0 %1921
          %1923 = vmax.xlane.f32.xlu0 %v1822
          %v1924 = vpop.xlane.xlu0 %1923
          %1925 = vmax.xlane.f32.xlu0 %v1825
          %v1926 = vpop.xlane.xlu0 %1925
          %1927 = vmax.xlane.f32.xlu0 %v1827
          %v1928 = vpop.xlane.xlu0 %1927
          %v1929 = vmax.f32 %v1833, %v1866
          %v1930 = vmax.f32 %v1834, %v1868
          %v1931 = vmax.f32 %v1835, %v1870
          %v1932 = vmax.f32 %v1836, %v1872
          %v1933 = vmax.f32 %v1837, %v1874
          %v1934 = vmax.f32 %v1838, %v1876
          %v1935 = vmax.f32 %v1839, %v1878
          %v1936 = vmax.f32 %v1840, %v1880
          %v1937 = vmax.f32 %v1841, %v1882
          %v1938 = vmax.f32 %v1842, %v1884
          %v1939 = vmax.f32 %v1843, %v1886
          %v1940 = vmax.f32 %v1844, %v1888
          %v1941 = vmax.f32 %v1845, %v1890
          %v1942 = vmax.f32 %v1846, %v1892
          %v1943 = vmax.f32 %v1847, %v1894
          %v1944 = vmax.f32 %v1848, %v1896
          %v1945 = vmax.f32 %v1849, %v1898
          %v1946 = vmax.f32 %v1850, %v1900
          %v1947 = vmax.f32 %v1851, %v1902
          %v1948 = vmax.f32 %v1852, %v1904
          %v1949 = vmax.f32 %v1853, %v1906
          %v1950 = vmax.f32 %v1854, %v1908
          %v1951 = vmax.f32 %v1855, %v1910
          %v1952 = vmax.f32 %v1856, %v1912
          %v1953 = vmax.f32 %v1857, %v1914
          %v1954 = vmax.f32 %v1858, %v1916
          %v1955 = vmax.f32 %v1859, %v1918
          %v1956 = vmax.f32 %v1860, %v1920
          %v1957 = vmax.f32 %v1861, %v1922
          %v1958 = vmax.f32 %v1862, %v1924
          %v1959 = vmax.f32 %v1863, %v1926
          %v1960 = vmax.f32 %v1864, %v1928
          %1962 = vset.pattern.permute.xlu0 0
          %1963 = vperm.xlu0 %1962, %v1929
          %v1964 = vpop.permute.xlu0 %1963
          %1967 = vset.pattern.permute.xlu0 0
          %1968 = vperm.xlu0 %1967, %v1930
          %v1969 = vpop.permute.xlu0 %1968
          %1972 = vset.pattern.permute.xlu0 0
          %1973 = vperm.xlu0 %1972, %v1931
          %v1974 = vpop.permute.xlu0 %1973
          %1977 = vset.pattern.permute.xlu0 0
          %1978 = vperm.xlu0 %1977, %v1932
          %v1979 = vpop.permute.xlu0 %1978
          %1982 = vset.pattern.permute.xlu0 0
          %1983 = vperm.xlu0 %1982, %v1933
          %v1984 = vpop.permute.xlu0 %1983
          %1987 = vset.pattern.permute.xlu0 0
          %1988 = vperm.xlu0 %1987, %v1934
          %v1989 = vpop.permute.xlu0 %1988
          %1992 = vset.pattern.permute.xlu0 0
          %1993 = vperm.xlu0 %1992, %v1935
          %v1994 = vpop.permute.xlu0 %1993
          %1997 = vset.pattern.permute.xlu0 0
          %1998 = vperm.xlu0 %1997, %v1936
          %v1999 = vpop.permute.xlu0 %1998
          %2002 = vset.pattern.permute.xlu0 0
          %2003 = vperm.xlu0 %2002, %v1937
          %v2004 = vpop.permute.xlu0 %2003
          %2007 = vset.pattern.permute.xlu0 0
          %2008 = vperm.xlu0 %2007, %v1938
          %v2009 = vpop.permute.xlu0 %2008
          %2012 = vset.pattern.permute.xlu0 0
          %2013 = vperm.xlu0 %2012, %v1939
          %v2014 = vpop.permute.xlu0 %2013
          %2017 = vset.pattern.permute.xlu0 0
          %2018 = vperm.xlu0 %2017, %v1940
          %v2019 = vpop.permute.xlu0 %2018
          %2022 = vset.pattern.permute.xlu0 0
          %2023 = vperm.xlu0 %2022, %v1941
          %v2024 = vpop.permute.xlu0 %2023
          %2027 = vset.pattern.permute.xlu0 0
          %2028 = vperm.xlu0 %2027, %v1942
          %v2029 = vpop.permute.xlu0 %2028
          %2032 = vset.pattern.permute.xlu0 0
          %2033 = vperm.xlu0 %2032, %v1943
          %v2034 = vpop.permute.xlu0 %2033
          %2037 = vset.pattern.permute.xlu0 0
          %2038 = vperm.xlu0 %2037, %v1944
          %v2039 = vpop.permute.xlu0 %2038
          %2042 = vset.pattern.permute.xlu0 0
          %2043 = vperm.xlu0 %2042, %v1945
          %v2044 = vpop.permute.xlu0 %2043
          %2047 = vset.pattern.permute.xlu0 0
          %2048 = vperm.xlu0 %2047, %v1946
          %v2049 = vpop.permute.xlu0 %2048
          %2052 = vset.pattern.permute.xlu0 0
          %2053 = vperm.xlu0 %2052, %v1947
          %v2054 = vpop.permute.xlu0 %2053
          %2057 = vset.pattern.permute.xlu0 0
          %2058 = vperm.xlu0 %2057, %v1948
          %v2059 = vpop.permute.xlu0 %2058
          %2062 = vset.pattern.permute.xlu0 0
          %2063 = vperm.xlu0 %2062, %v1949
          %v2064 = vpop.permute.xlu0 %2063
          %2067 = vset.pattern.permute.xlu0 0
          %2068 = vperm.xlu0 %2067, %v1950
          %v2069 = vpop.permute.xlu0 %2068
          %2072 = vset.pattern.permute.xlu0 0
          %2073 = vperm.xlu0 %2072, %v1951
          %v2074 = vpop.permute.xlu0 %2073
          %2077 = vset.pattern.permute.xlu0 0
          %2078 = vperm.xlu0 %2077, %v1952
          %v2079 = vpop.permute.xlu0 %2078
          %2082 = vset.pattern.permute.xlu0 0
          %2083 = vperm.xlu0 %2082, %v1953
          %v2084 = vpop.permute.xlu0 %2083
          %2087 = vset.pattern.permute.xlu0 0
          %2088 = vperm.xlu0 %2087, %v1954
          %v2089 = vpop.permute.xlu0 %2088
          %2092 = vset.pattern.permute.xlu0 0
          %2093 = vperm.xlu0 %2092, %v1955
          %v2094 = vpop.permute.xlu0 %2093
          %2097 = vset.pattern.permute.xlu0 0
          %2098 = vperm.xlu0 %2097, %v1956
          %v2099 = vpop.permute.xlu0 %2098
          %2102 = vset.pattern.permute.xlu0 0
          %2103 = vperm.xlu0 %2102, %v1957
          %v2104 = vpop.permute.xlu0 %2103
          %2107 = vset.pattern.permute.xlu0 0
          %2108 = vperm.xlu0 %2107, %v1958
          %v2109 = vpop.permute.xlu0 %2108
          %2112 = vset.pattern.permute.xlu0 0
          %2113 = vperm.xlu0 %2112, %v1959
          %v2114 = vpop.permute.xlu0 %2113
          %2117 = vset.pattern.permute.xlu0 0
          %2118 = vperm.xlu0 %2117, %v1960
          %v2119 = vpop.permute.xlu0 %2118
          %v2121 = vsub.f32 %v1750, %v1964
          %v2122 = vsub.f32 %v1752, %v1969
          %v2123 = vsub.f32 %v1755, %v1974
          %v2124 = vsub.f32 %v1757, %v1979
          %v2125 = vsub.f32 %v1760, %v1984
          %v2126 = vsub.f32 %v1762, %v1989
          %v2127 = vsub.f32 %v1765, %v1994
          %v2128 = vsub.f32 %v1767, %v1999
          %v2129 = vsub.f32 %v1770, %v2004
          %v2130 = vsub.f32 %v1772, %v2009
          %v2131 = vsub.f32 %v1775, %v2014
          %v2132 = vsub.f32 %v1777, %v2019
          %v2133 = vsub.f32 %v1780, %v2024
          %v2134 = vsub.f32 %v1782, %v2029
          %v2135 = vsub.f32 %v1785, %v2034
          %v2136 = vsub.f32 %v1787, %v2039
          %v2137 = vsub.f32 %v1790, %v2044
          %v2138 = vsub.f32 %v1792, %v2049
          %v2139 = vsub.f32 %v1795, %v2054
          %v2140 = vsub.f32 %v1797, %v2059
          %v2141 = vsub.f32 %v1800, %v2064
          %v2142 = vsub.f32 %v1802, %v2069
          %v2143 = vsub.f32 %v1805, %v2074
          %v2144 = vsub.f32 %v1807, %v2079
          %v2145 = vsub.f32 %v1810, %v2084
          %v2146 = vsub.f32 %v1812, %v2089
          %v2147 = vsub.f32 %v1815, %v2094
          %v2148 = vsub.f32 %v1817, %v2099
          %v2149 = vsub.f32 %v1820, %v2104
          %v2150 = vsub.f32 %v1822, %v2109
          %v2151 = vsub.f32 %v1825, %v2114
          %v2152 = vsub.f32 %v1827, %v2119
          %v2153 = vpack.c.bf16 %v2122, %v2121
          %v2154 = vpack.c.bf16 %v2124, %v2123
          %v2155 = vpack.c.bf16 %v2126, %v2125
          %v2156 = vpack.c.bf16 %v2128, %v2127
          %v2157 = vpack.c.bf16 %v2130, %v2129
          %v2158 = vpack.c.bf16 %v2132, %v2131
          %v2159 = vpack.c.bf16 %v2134, %v2133
          %v2160 = vpack.c.bf16 %v2136, %v2135
          %v2161 = vpack.c.bf16 %v2138, %v2137
          %v2162 = vpack.c.bf16 %v2140, %v2139
          %v2163 = vpack.c.bf16 %v2142, %v2141
          %v2164 = vpack.c.bf16 %v2144, %v2143
          %v2165 = vpack.c.bf16 %v2146, %v2145
          %v2166 = vpack.c.bf16 %v2148, %v2147
          %v2167 = vpack.c.bf16 %v2150, %v2149
          %v2168 = vpack.c.bf16 %v2152, %v2151
          %v2169 = vunpack.c.l.bf16 %v2153
          %v2170 = vunpack.c.h.bf16 %v2153
          %v2171 = vunpack.c.l.bf16 %v2154
          %v2172 = vunpack.c.h.bf16 %v2154
          %v2173 = vunpack.c.l.bf16 %v2155
          %v2174 = vunpack.c.h.bf16 %v2155
          %v2175 = vunpack.c.l.bf16 %v2156
          %v2176 = vunpack.c.h.bf16 %v2156
          %v2177 = vunpack.c.l.bf16 %v2157
          %v2178 = vunpack.c.h.bf16 %v2157
          %v2179 = vunpack.c.l.bf16 %v2158
          %v2180 = vunpack.c.h.bf16 %v2158
          %v2181 = vunpack.c.l.bf16 %v2159
          %v2182 = vunpack.c.h.bf16 %v2159
          %v2183 = vunpack.c.l.bf16 %v2160
          %v2184 = vunpack.c.h.bf16 %v2160
          %v2185 = vunpack.c.l.bf16 %v2161
          %v2186 = vunpack.c.h.bf16 %v2161
          %v2187 = vunpack.c.l.bf16 %v2162
          %v2188 = vunpack.c.h.bf16 %v2162
          %v2189 = vunpack.c.l.bf16 %v2163
          %v2190 = vunpack.c.h.bf16 %v2163
          %v2191 = vunpack.c.l.bf16 %v2164
          %v2192 = vunpack.c.h.bf16 %v2164
          %v2193 = vunpack.c.l.bf16 %v2165
          %v2194 = vunpack.c.h.bf16 %v2165
          %v2195 = vunpack.c.l.bf16 %v2166
          %v2196 = vunpack.c.h.bf16 %v2166
          %v2197 = vunpack.c.l.bf16 %v2167
          %v2198 = vunpack.c.h.bf16 %v2167
          %v2199 = vunpack.c.l.bf16 %v2168
          %v2200 = vunpack.c.h.bf16 %v2168
          %v2201 = vmul.f32 %v2169, 1.442695
          %v2202 = vpow.pop %v2201
          %v2203 = vmul.f32 %v2170, 1.442695
          %v2204 = vpow.pop %v2203
          %v2205 = vmul.f32 %v2171, 1.442695
          %v2206 = vpow.pop %v2205
          %v2207 = vmul.f32 %v2172, 1.442695
          %v2208 = vpow.pop %v2207
          %v2209 = vmul.f32 %v2173, 1.442695
          %v2210 = vpow.pop %v2209
          %v2211 = vmul.f32 %v2174, 1.442695
          %v2212 = vpow.pop %v2211
          %v2213 = vmul.f32 %v2175, 1.442695
          %v2214 = vpow.pop %v2213
          %v2215 = vmul.f32 %v2176, 1.442695
          %v2216 = vpow.pop %v2215
          %v2217 = vmul.f32 %v2177, 1.442695
          %v2218 = vpow.pop %v2217
          %v2219 = vmul.f32 %v2178, 1.442695
          %v2220 = vpow.pop %v2219
          %v2221 = vmul.f32 %v2179, 1.442695
          %v2222 = vpow.pop %v2221
          %v2223 = vmul.f32 %v2180, 1.442695
          %v2224 = vpow.pop %v2223
          %v2225 = vmul.f32 %v2181, 1.442695
          %v2226 = vpow.pop %v2225
          %v2227 = vmul.f32 %v2182, 1.442695
          %v2228 = vpow.pop %v2227
          %v2229 = vmul.f32 %v2183, 1.442695
          %v2230 = vpow.pop %v2229
          %v2231 = vmul.f32 %v2184, 1.442695
          %v2232 = vpow.pop %v2231
          %v2233 = vmul.f32 %v2185, 1.442695
          %v2234 = vpow.pop %v2233
          %v2235 = vmul.f32 %v2186, 1.442695
          %v2236 = vpow.pop %v2235
          %v2237 = vmul.f32 %v2187, 1.442695
          %v2238 = vpow.pop %v2237
          %v2239 = vmul.f32 %v2188, 1.442695
          %v2240 = vpow.pop %v2239
          %v2241 = vmul.f32 %v2189, 1.442695
          %v2242 = vpow.pop %v2241
          %v2243 = vmul.f32 %v2190, 1.442695
          %v2244 = vpow.pop %v2243
          %v2245 = vmul.f32 %v2191, 1.442695
          %v2246 = vpow.pop %v2245
          %v2247 = vmul.f32 %v2192, 1.442695
          %v2248 = vpow.pop %v2247
          %v2249 = vmul.f32 %v2193, 1.442695
          %v2250 = vpow.pop %v2249
          %v2251 = vmul.f32 %v2194, 1.442695
          %v2252 = vpow.pop %v2251
          %v2253 = vmul.f32 %v2195, 1.442695
          %v2254 = vpow.pop %v2253
          %v2255 = vmul.f32 %v2196, 1.442695
          %v2256 = vpow.pop %v2255
          %v2257 = vmul.f32 %v2197, 1.442695
          %v2258 = vpow.pop %v2257
          %v2259 = vmul.f32 %v2198, 1.442695
          %v2260 = vpow.pop %v2259
          %v2261 = vmul.f32 %v2199, 1.442695
          %v2262 = vpow.pop %v2261
          %v2263 = vmul.f32 %v2200, 1.442695
          %v2264 = vpow.pop %v2263
          %v2265 = vpack.c.bf16 %v2204, %v2202
          %v2266 = vpack.c.bf16 %v2208, %v2206
          %v2267 = vpack.c.bf16 %v2212, %v2210
          %v2268 = vpack.c.bf16 %v2216, %v2214
          %v2269 = vpack.c.bf16 %v2220, %v2218
          %v2270 = vpack.c.bf16 %v2224, %v2222
          %v2271 = vpack.c.bf16 %v2228, %v2226
          %v2272 = vpack.c.bf16 %v2232, %v2230
          %v2273 = vpack.c.bf16 %v2236, %v2234
          %v2274 = vpack.c.bf16 %v2240, %v2238
          %v2275 = vpack.c.bf16 %v2244, %v2242
          %v2276 = vpack.c.bf16 %v2248, %v2246
          %v2277 = vpack.c.bf16 %v2252, %v2250
          %v2278 = vpack.c.bf16 %v2256, %v2254
          %v2279 = vpack.c.bf16 %v2260, %v2258
          %v2280 = vpack.c.bf16 %v2264, %v2262
          %v2281 = vunpack.c.l.bf16 %v2265
          %v2282 = vunpack.c.h.bf16 %v2265
          %v2283 = vunpack.c.l.bf16 %v2266
          %v2284 = vunpack.c.h.bf16 %v2266
          %v2285 = vunpack.c.l.bf16 %v2267
          %v2286 = vunpack.c.h.bf16 %v2267
          %v2287 = vunpack.c.l.bf16 %v2268
          %v2288 = vunpack.c.h.bf16 %v2268
          %v2289 = vunpack.c.l.bf16 %v2269
          %v2290 = vunpack.c.h.bf16 %v2269
          %v2291 = vunpack.c.l.bf16 %v2270
          %v2292 = vunpack.c.h.bf16 %v2270
          %v2293 = vunpack.c.l.bf16 %v2271
          %v2294 = vunpack.c.h.bf16 %v2271
          %v2295 = vunpack.c.l.bf16 %v2272
          %v2296 = vunpack.c.h.bf16 %v2272
          %v2297 = vunpack.c.l.bf16 %v2273
          %v2298 = vunpack.c.h.bf16 %v2273
          %v2299 = vunpack.c.l.bf16 %v2274
          %v2300 = vunpack.c.h.bf16 %v2274
          %v2301 = vunpack.c.l.bf16 %v2275
          %v2302 = vunpack.c.h.bf16 %v2275
          %v2303 = vunpack.c.l.bf16 %v2276
          %v2304 = vunpack.c.h.bf16 %v2276
          %v2305 = vunpack.c.l.bf16 %v2277
          %v2306 = vunpack.c.h.bf16 %v2277
          %v2307 = vunpack.c.l.bf16 %v2278
          %v2308 = vunpack.c.h.bf16 %v2278
          %v2309 = vunpack.c.l.bf16 %v2279
          %v2310 = vunpack.c.h.bf16 %v2279
          %v2311 = vunpack.c.l.bf16 %v2280
          %v2312 = vunpack.c.h.bf16 %v2280
          %2313 = vadd.xlane.f32.xlu0 %v2281
          %v2314 = vpop.xlane.xlu0 %2313
          %2315 = vadd.xlane.f32.xlu0 %v2282
          %v2316 = vpop.xlane.xlu0 %2315
          %2317 = vadd.xlane.f32.xlu0 %v2283
          %v2318 = vpop.xlane.xlu0 %2317
          %2319 = vadd.xlane.f32.xlu0 %v2284
          %v2320 = vpop.xlane.xlu0 %2319
          %2321 = vadd.xlane.f32.xlu0 %v2285
          %v2322 = vpop.xlane.xlu0 %2321
          %2323 = vadd.xlane.f32.xlu0 %v2286
          %v2324 = vpop.xlane.xlu0 %2323
          %2325 = vadd.xlane.f32.xlu0 %v2287
          %v2326 = vpop.xlane.xlu0 %2325
          %2327 = vadd.xlane.f32.xlu0 %v2288
          %v2328 = vpop.xlane.xlu0 %2327
          %2329 = vadd.xlane.f32.xlu0 %v2289
          %v2330 = vpop.xlane.xlu0 %2329
          %2331 = vadd.xlane.f32.xlu0 %v2290
          %v2332 = vpop.xlane.xlu0 %2331
          %2333 = vadd.xlane.f32.xlu0 %v2291
          %v2334 = vpop.xlane.xlu0 %2333
          %2335 = vadd.xlane.f32.xlu0 %v2292
          %v2336 = vpop.xlane.xlu0 %2335
          %2337 = vadd.xlane.f32.xlu0 %v2293
          %v2338 = vpop.xlane.xlu0 %2337
          %2339 = vadd.xlane.f32.xlu0 %v2294
          %v2340 = vpop.xlane.xlu0 %2339
          %2341 = vadd.xlane.f32.xlu0 %v2295
          %v2342 = vpop.xlane.xlu0 %2341
          %2343 = vadd.xlane.f32.xlu0 %v2296
          %v2344 = vpop.xlane.xlu0 %2343
          %2345 = vadd.xlane.f32.xlu0 %v2297
          %v2346 = vpop.xlane.xlu0 %2345
          %2347 = vadd.xlane.f32.xlu0 %v2298
          %v2348 = vpop.xlane.xlu0 %2347
          %2349 = vadd.xlane.f32.xlu0 %v2299
          %v2350 = vpop.xlane.xlu0 %2349
          %2351 = vadd.xlane.f32.xlu0 %v2300
          %v2352 = vpop.xlane.xlu0 %2351
          %2353 = vadd.xlane.f32.xlu0 %v2301
          %v2354 = vpop.xlane.xlu0 %2353
          %2355 = vadd.xlane.f32.xlu0 %v2302
          %v2356 = vpop.xlane.xlu0 %2355
          %2357 = vadd.xlane.f32.xlu0 %v2303
          %v2358 = vpop.xlane.xlu0 %2357
          %2359 = vadd.xlane.f32.xlu0 %v2304
          %v2360 = vpop.xlane.xlu0 %2359
          %2361 = vadd.xlane.f32.xlu0 %v2305
          %v2362 = vpop.xlane.xlu0 %2361
          %2363 = vadd.xlane.f32.xlu0 %v2306
          %v2364 = vpop.xlane.xlu0 %2363
          %2365 = vadd.xlane.f32.xlu0 %v2307
          %v2366 = vpop.xlane.xlu0 %2365
          %2367 = vadd.xlane.f32.xlu0 %v2308
          %v2368 = vpop.xlane.xlu0 %2367
          %2369 = vadd.xlane.f32.xlu0 %v2309
          %v2370 = vpop.xlane.xlu0 %2369
          %2371 = vadd.xlane.f32.xlu0 %v2310
          %v2372 = vpop.xlane.xlu0 %2371
          %2373 = vadd.xlane.f32.xlu0 %v2311
          %v2374 = vpop.xlane.xlu0 %2373
          %2375 = vadd.xlane.f32.xlu0 %v2312
          %v2376 = vpop.xlane.xlu0 %2375
          %v2377 = vld [vmem:[#allocation4] sm:$0xff]
          %v2378 = vld [vmem:[#allocation4 + $0x8] sm:$0xff]
          %v2379 = vld [vmem:[#allocation4 + $0x10] sm:$0xff]
          %v2380 = vld [vmem:[#allocation4 + $0x18] sm:$0xff]
          %v2381 = vld [vmem:[#allocation4 + $0x20] sm:$0xff]
          %v2382 = vld [vmem:[#allocation4 + $0x28] sm:$0xff]
          %v2383 = vld [vmem:[#allocation4 + $0x30] sm:$0xff]
          %v2384 = vld [vmem:[#allocation4 + $0x38] sm:$0xff]
          %v2385 = vld [vmem:[#allocation4 + $0x40] sm:$0xff]
          %v2386 = vld [vmem:[#allocation4 + $0x48] sm:$0xff]
          %v2387 = vld [vmem:[#allocation4 + $0x50] sm:$0xff]
          %v2388 = vld [vmem:[#allocation4 + $0x58] sm:$0xff]
          %v2389 = vld [vmem:[#allocation4 + $0x60] sm:$0xff]
          %v2390 = vld [vmem:[#allocation4 + $0x68] sm:$0xff]
          %v2391 = vld [vmem:[#allocation4 + $0x70] sm:$0xff]
          %v2392 = vld [vmem:[#allocation4 + $0x78] sm:$0xff]
          %v2393 = vld [vmem:[#allocation4 + $0x80] sm:$0xff]
          %v2394 = vld [vmem:[#allocation4 + $0x88] sm:$0xff]
          %v2395 = vld [vmem:[#allocation4 + $0x90] sm:$0xff]
          %v2396 = vld [vmem:[#allocation4 + $0x98] sm:$0xff]
          %v2397 = vld [vmem:[#allocation4 + $0xa0] sm:$0xff]
          %v2398 = vld [vmem:[#allocation4 + $0xa8] sm:$0xff]
          %v2399 = vld [vmem:[#allocation4 + $0xb0] sm:$0xff]
          %v2400 = vld [vmem:[#allocation4 + $0xb8] sm:$0xff]
          %v2401 = vld [vmem:[#allocation4 + $0xc0] sm:$0xff]
          %v2402 = vld [vmem:[#allocation4 + $0xc8] sm:$0xff]
          %v2403 = vld [vmem:[#allocation4 + $0xd0] sm:$0xff]
          %v2404 = vld [vmem:[#allocation4 + $0xd8] sm:$0xff]
          %v2405 = vld [vmem:[#allocation4 + $0xe0] sm:$0xff]
          %v2406 = vld [vmem:[#allocation4 + $0xe8] sm:$0xff]
          %v2407 = vld [vmem:[#allocation4 + $0xf0] sm:$0xff]
          %v2408 = vld [vmem:[#allocation4 + $0xf8] sm:$0xff]
          %v2409 = vsub.f32 %v1833, %v1929
          %v2410 = vsub.f32 %v1834, %v1930
          %v2411 = vsub.f32 %v1835, %v1931
          %v2412 = vsub.f32 %v1836, %v1932
          %v2413 = vsub.f32 %v1837, %v1933
          %v2414 = vsub.f32 %v1838, %v1934
          %v2415 = vsub.f32 %v1839, %v1935
          %v2416 = vsub.f32 %v1840, %v1936
          %v2417 = vsub.f32 %v1841, %v1937
          %v2418 = vsub.f32 %v1842, %v1938
          %v2419 = vsub.f32 %v1843, %v1939
          %v2420 = vsub.f32 %v1844, %v1940
          %v2421 = vsub.f32 %v1845, %v1941
          %v2422 = vsub.f32 %v1846, %v1942
          %v2423 = vsub.f32 %v1847, %v1943
          %v2424 = vsub.f32 %v1848, %v1944
          %v2425 = vsub.f32 %v1849, %v1945
          %v2426 = vsub.f32 %v1850, %v1946
          %v2427 = vsub.f32 %v1851, %v1947
          %v2428 = vsub.f32 %v1852, %v1948
          %v2429 = vsub.f32 %v1853, %v1949
          %v2430 = vsub.f32 %v1854, %v1950
          %v2431 = vsub.f32 %v1855, %v1951
          %v2432 = vsub.f32 %v1856, %v1952
          %v2433 = vsub.f32 %v1857, %v1953
          %v2434 = vsub.f32 %v1858, %v1954
          %v2435 = vsub.f32 %v1859, %v1955
          %v2436 = vsub.f32 %v1860, %v1956
          %v2437 = vsub.f32 %v1861, %v1957
          %v2438 = vsub.f32 %v1862, %v1958
          %v2439 = vsub.f32 %v1863, %v1959
          %v2440 = vsub.f32 %v1864, %v1960
          %v2441 = vmul.f32 %v2409, 1.442695
          %v2442 = vpow.pop %v2441
          %v2443 = vmul.f32 %v2410, 1.442695
          %v2444 = vpow.pop %v2443
          %v2445 = vmul.f32 %v2411, 1.442695
          %v2446 = vpow.pop %v2445
          %v2447 = vmul.f32 %v2412, 1.442695
          %v2448 = vpow.pop %v2447
          %v2449 = vmul.f32 %v2413, 1.442695
          %v2450 = vpow.pop %v2449
          %v2451 = vmul.f32 %v2414, 1.442695
          %v2452 = vpow.pop %v2451
          %v2453 = vmul.f32 %v2415, 1.442695
          %v2454 = vpow.pop %v2453
          %v2455 = vmul.f32 %v2416, 1.442695
          %v2456 = vpow.pop %v2455
          %v2457 = vmul.f32 %v2417, 1.442695
          %v2458 = vpow.pop %v2457
          %v2459 = vmul.f32 %v2418, 1.442695
          %v2460 = vpow.pop %v2459
          %v2461 = vmul.f32 %v2419, 1.442695
          %v2462 = vpow.pop %v2461
          %v2463 = vmul.f32 %v2420, 1.442695
          %v2464 = vpow.pop %v2463
          %v2465 = vmul.f32 %v2421, 1.442695
          %v2466 = vpow.pop %v2465
          %v2467 = vmul.f32 %v2422, 1.442695
          %v2468 = vpow.pop %v2467
          %v2469 = vmul.f32 %v2423, 1.442695
          %v2470 = vpow.pop %v2469
          %v2471 = vmul.f32 %v2424, 1.442695
          %v2472 = vpow.pop %v2471
          %v2473 = vmul.f32 %v2425, 1.442695
          %v2474 = vpow.pop %v2473
          %v2475 = vmul.f32 %v2426, 1.442695
          %v2476 = vpow.pop %v2475
          %v2477 = vmul.f32 %v2427, 1.442695
          %v2478 = vpow.pop %v2477
          %v2479 = vmul.f32 %v2428, 1.442695
          %v2480 = vpow.pop %v2479
          %v2481 = vmul.f32 %v2429, 1.442695
          %v2482 = vpow.pop %v2481
          %v2483 = vmul.f32 %v2430, 1.442695
          %v2484 = vpow.pop %v2483
          %v2485 = vmul.f32 %v2431, 1.442695
          %v2486 = vpow.pop %v2485
          %v2487 = vmul.f32 %v2432, 1.442695
          %v2488 = vpow.pop %v2487
          %v2489 = vmul.f32 %v2433, 1.442695
          %v2490 = vpow.pop %v2489
          %v2491 = vmul.f32 %v2434, 1.442695
          %v2492 = vpow.pop %v2491
          %v2493 = vmul.f32 %v2435, 1.442695
          %v2494 = vpow.pop %v2493
          %v2495 = vmul.f32 %v2436, 1.442695
          %v2496 = vpow.pop %v2495
          %v2497 = vmul.f32 %v2437, 1.442695
          %v2498 = vpow.pop %v2497
          %v2499 = vmul.f32 %v2438, 1.442695
          %v2500 = vpow.pop %v2499
          %v2501 = vmul.f32 %v2439, 1.442695
          %v2502 = vpow.pop %v2501
          %v2503 = vmul.f32 %v2440, 1.442695
          %v2504 = vpow.pop %v2503
          %v2505 = vmul.f32 %v2377, %v2442
          %v2506 = vmul.f32 %v2378, %v2444
          %v2507 = vmul.f32 %v2379, %v2446
          %v2508 = vmul.f32 %v2380, %v2448
          %v2509 = vmul.f32 %v2381, %v2450
          %v2510 = vmul.f32 %v2382, %v2452
          %v2511 = vmul.f32 %v2383, %v2454
          %v2512 = vmul.f32 %v2384, %v2456
          %v2513 = vmul.f32 %v2385, %v2458
          %v2514 = vmul.f32 %v2386, %v2460
          %v2515 = vmul.f32 %v2387, %v2462
          %v2516 = vmul.f32 %v2388, %v2464
          %v2517 = vmul.f32 %v2389, %v2466
          %v2518 = vmul.f32 %v2390, %v2468
          %v2519 = vmul.f32 %v2391, %v2470
          %v2520 = vmul.f32 %v2392, %v2472
          %v2521 = vmul.f32 %v2393, %v2474
          %v2522 = vmul.f32 %v2394, %v2476
          %v2523 = vmul.f32 %v2395, %v2478
          %v2524 = vmul.f32 %v2396, %v2480
          %v2525 = vmul.f32 %v2397, %v2482
          %v2526 = vmul.f32 %v2398, %v2484
          %v2527 = vmul.f32 %v2399, %v2486
          %v2528 = vmul.f32 %v2400, %v2488
          %v2529 = vmul.f32 %v2401, %v2490
          %v2530 = vmul.f32 %v2402, %v2492
          %v2531 = vmul.f32 %v2403, %v2494
          %v2532 = vmul.f32 %v2404, %v2496
          %v2533 = vmul.f32 %v2405, %v2498
          %v2534 = vmul.f32 %v2406, %v2500
          %v2535 = vmul.f32 %v2407, %v2502
          %v2536 = vmul.f32 %v2408, %v2504
          %v2537 = vadd.f32 %v2505, %v2314
          %v2538 = vadd.f32 %v2506, %v2316
          %v2539 = vadd.f32 %v2507, %v2318
          %v2540 = vadd.f32 %v2508, %v2320
          %v2541 = vadd.f32 %v2509, %v2322
          %v2542 = vadd.f32 %v2510, %v2324
          %v2543 = vadd.f32 %v2511, %v2326
          %v2544 = vadd.f32 %v2512, %v2328
          %v2545 = vadd.f32 %v2513, %v2330
          %v2546 = vadd.f32 %v2514, %v2332
          %v2547 = vadd.f32 %v2515, %v2334
          %v2548 = vadd.f32 %v2516, %v2336
          %v2549 = vadd.f32 %v2517, %v2338
          %v2550 = vadd.f32 %v2518, %v2340
          %v2551 = vadd.f32 %v2519, %v2342
          %v2552 = vadd.f32 %v2520, %v2344
          %v2553 = vadd.f32 %v2521, %v2346
          %v2554 = vadd.f32 %v2522, %v2348
          %v2555 = vadd.f32 %v2523, %v2350
          %v2556 = vadd.f32 %v2524, %v2352
          %v2557 = vadd.f32 %v2525, %v2354
          %v2558 = vadd.f32 %v2526, %v2356
          %v2559 = vadd.f32 %v2527, %v2358
          %v2560 = vadd.f32 %v2528, %v2360
          %v2561 = vadd.f32 %v2529, %v2362
          %v2562 = vadd.f32 %v2530, %v2364
          %v2563 = vadd.f32 %v2531, %v2366
          %v2564 = vadd.f32 %v2532, %v2368
          %v2565 = vadd.f32 %v2533, %v2370
          %v2566 = vadd.f32 %v2534, %v2372
          %v2567 = vadd.f32 %v2535, %v2374
          %v2568 = vadd.f32 %v2536, %v2376
          %vm2569 = vcmask 7168
          %2570 = vst.msk [vmem:[#allocation4] sm:$0xff] %vm2569, %v2537
          %2571 = vst.msk [vmem:[#allocation4 + $0x8] sm:$0xff] %vm2569, %v2538
          %2572 = vst.msk [vmem:[#allocation4 + $0x10] sm:$0xff] %vm2569, %v2539
          %2573 = vst.msk [vmem:[#allocation4 + $0x18] sm:$0xff] %vm2569, %v2540
          %2574 = vst.msk [vmem:[#allocation4 + $0x20] sm:$0xff] %vm2569, %v2541
          %2575 = vst.msk [vmem:[#allocation4 + $0x28] sm:$0xff] %vm2569, %v2542
          %2576 = vst.msk [vmem:[#allocation4 + $0x30] sm:$0xff] %vm2569, %v2543
          %2577 = vst.msk [vmem:[#allocation4 + $0x38] sm:$0xff] %vm2569, %v2544
          %2578 = vst.msk [vmem:[#allocation4 + $0x40] sm:$0xff] %vm2569, %v2545
          %2579 = vst.msk [vmem:[#allocation4 + $0x48] sm:$0xff] %vm2569, %v2546
          %2580 = vst.msk [vmem:[#allocation4 + $0x50] sm:$0xff] %vm2569, %v2547
          %2581 = vst.msk [vmem:[#allocation4 + $0x58] sm:$0xff] %vm2569, %v2548
          %2582 = vst.msk [vmem:[#allocation4 + $0x60] sm:$0xff] %vm2569, %v2549
          %2583 = vst.msk [vmem:[#allocation4 + $0x68] sm:$0xff] %vm2569, %v2550
          %2584 = vst.msk [vmem:[#allocation4 + $0x70] sm:$0xff] %vm2569, %v2551
          %2585 = vst.msk [vmem:[#allocation4 + $0x78] sm:$0xff] %vm2569, %v2552
          %2586 = vst.msk [vmem:[#allocation4 + $0x80] sm:$0xff] %vm2569, %v2553
          %2587 = vst.msk [vmem:[#allocation4 + $0x88] sm:$0xff] %vm2569, %v2554
          %2588 = vst.msk [vmem:[#allocation4 + $0x90] sm:$0xff] %vm2569, %v2555
          %2589 = vst.msk [vmem:[#allocation4 + $0x98] sm:$0xff] %vm2569, %v2556
          %2590 = vst.msk [vmem:[#allocation4 + $0xa0] sm:$0xff] %vm2569, %v2557
          %2591 = vst.msk [vmem:[#allocation4 + $0xa8] sm:$0xff] %vm2569, %v2558
          %2592 = vst.msk [vmem:[#allocation4 + $0xb0] sm:$0xff] %vm2569, %v2559
          %2593 = vst.msk [vmem:[#allocation4 + $0xb8] sm:$0xff] %vm2569, %v2560
          %2594 = vst.msk [vmem:[#allocation4 + $0xc0] sm:$0xff] %vm2569, %v2561
          %2595 = vst.msk [vmem:[#allocation4 + $0xc8] sm:$0xff] %vm2569, %v2562
          %2596 = vst.msk [vmem:[#allocation4 + $0xd0] sm:$0xff] %vm2569, %v2563
          %2597 = vst.msk [vmem:[#allocation4 + $0xd8] sm:$0xff] %vm2569, %v2564
          %2598 = vst.msk [vmem:[#allocation4 + $0xe0] sm:$0xff] %vm2569, %v2565
          %2599 = vst.msk [vmem:[#allocation4 + $0xe8] sm:$0xff] %vm2569, %v2566
          %2600 = vst.msk [vmem:[#allocation4 + $0xf0] sm:$0xff] %vm2569, %v2567
          %2601 = vst.msk [vmem:[#allocation4 + $0xf8] sm:$0xff] %vm2569, %v2568
          %2602 = vst.msk [vmem:[#allocation3] sm:$0xff] %vm2569, %v1929
          %2603 = vst.msk [vmem:[#allocation3 + $0x8] sm:$0xff] %vm2569, %v1930
          %2604 = vst.msk [vmem:[#allocation3 + $0x10] sm:$0xff] %vm2569, %v1931
          %2605 = vst.msk [vmem:[#allocation3 + $0x18] sm:$0xff] %vm2569, %v1932
          %2606 = vst.msk [vmem:[#allocation3 + $0x20] sm:$0xff] %vm2569, %v1933
          %2607 = vst.msk [vmem:[#allocation3 + $0x28] sm:$0xff] %vm2569, %v1934
          %2608 = vst.msk [vmem:[#allocation3 + $0x30] sm:$0xff] %vm2569, %v1935
          %2609 = vst.msk [vmem:[#allocation3 + $0x38] sm:$0xff] %vm2569, %v1936
          %2610 = vst.msk [vmem:[#allocation3 + $0x40] sm:$0xff] %vm2569, %v1937
          %2611 = vst.msk [vmem:[#allocation3 + $0x48] sm:$0xff] %vm2569, %v1938
          %2612 = vst.msk [vmem:[#allocation3 + $0x50] sm:$0xff] %vm2569, %v1939
          %2613 = vst.msk [vmem:[#allocation3 + $0x58] sm:$0xff] %vm2569, %v1940
          %2614 = vst.msk [vmem:[#allocation3 + $0x60] sm:$0xff] %vm2569, %v1941
          %2615 = vst.msk [vmem:[#allocation3 + $0x68] sm:$0xff] %vm2569, %v1942
          %2616 = vst.msk [vmem:[#allocation3 + $0x70] sm:$0xff] %vm2569, %v1943
          %2617 = vst.msk [vmem:[#allocation3 + $0x78] sm:$0xff] %vm2569, %v1944
          %2618 = vst.msk [vmem:[#allocation3 + $0x80] sm:$0xff] %vm2569, %v1945
          %2619 = vst.msk [vmem:[#allocation3 + $0x88] sm:$0xff] %vm2569, %v1946
          %2620 = vst.msk [vmem:[#allocation3 + $0x90] sm:$0xff] %vm2569, %v1947
          %2621 = vst.msk [vmem:[#allocation3 + $0x98] sm:$0xff] %vm2569, %v1948
          %2622 = vst.msk [vmem:[#allocation3 + $0xa0] sm:$0xff] %vm2569, %v1949
          %2623 = vst.msk [vmem:[#allocation3 + $0xa8] sm:$0xff] %vm2569, %v1950
          %2624 = vst.msk [vmem:[#allocation3 + $0xb0] sm:$0xff] %vm2569, %v1951
          %2625 = vst.msk [vmem:[#allocation3 + $0xb8] sm:$0xff] %vm2569, %v1952
          %2626 = vst.msk [vmem:[#allocation3 + $0xc0] sm:$0xff] %vm2569, %v1953
          %2627 = vst.msk [vmem:[#allocation3 + $0xc8] sm:$0xff] %vm2569, %v1954
          %2628 = vst.msk [vmem:[#allocation3 + $0xd0] sm:$0xff] %vm2569, %v1955
          %2629 = vst.msk [vmem:[#allocation3 + $0xd8] sm:$0xff] %vm2569, %v1956
          %2630 = vst.msk [vmem:[#allocation3 + $0xe0] sm:$0xff] %vm2569, %v1957
          %2631 = vst.msk [vmem:[#allocation3 + $0xe8] sm:$0xff] %vm2569, %v1958
          %2632 = vst.msk [vmem:[#allocation3 + $0xf0] sm:$0xff] %vm2569, %v1959
          %2633 = vst.msk [vmem:[#allocation3 + $0xf8] sm:$0xff] %vm2569, %v1960
        $region93: #{tpu_custom_call.1} parent=80 // pred_fallthru
          _
        %p2634 = scmp.ge.s32.totalorder %s25, 2
        // Predicated region
        $region94: #{tpu_custom_call.1} parent=80 // pred_check
          %p2635 = pneg %p2634
        $region95: #{tpu_custom_call.1} parent=80 // pred_check_branch
          %2637 = sbr.rel (%p2635) target = $region97
        $region96: #{tpu_custom_call.1} parent=80 // pred_region
          %v2638 = vld [vmem:[#allocation3] sm:$0xff]
          %v2639 = vld [vmem:[#allocation3 + $0x8] sm:$0xff]
          %v2640 = vld [vmem:[#allocation3 + $0x10] sm:$0xff]
          %v2641 = vld [vmem:[#allocation3 + $0x18] sm:$0xff]
          %v2642 = vld [vmem:[#allocation3 + $0x20] sm:$0xff]
          %v2643 = vld [vmem:[#allocation3 + $0x28] sm:$0xff]
          %v2644 = vld [vmem:[#allocation3 + $0x30] sm:$0xff]
          %v2645 = vld [vmem:[#allocation3 + $0x38] sm:$0xff]
          %v2646 = vld [vmem:[#allocation3 + $0x40] sm:$0xff]
          %v2647 = vld [vmem:[#allocation3 + $0x48] sm:$0xff]
          %v2648 = vld [vmem:[#allocation3 + $0x50] sm:$0xff]
          %v2649 = vld [vmem:[#allocation3 + $0x58] sm:$0xff]
          %v2650 = vld [vmem:[#allocation3 + $0x60] sm:$0xff]
          %v2651 = vld [vmem:[#allocation3 + $0x68] sm:$0xff]
          %v2652 = vld [vmem:[#allocation3 + $0x70] sm:$0xff]
          %v2653 = vld [vmem:[#allocation3 + $0x78] sm:$0xff]
          %v2654 = vld [vmem:[#allocation3 + $0x80] sm:$0xff]
          %v2655 = vld [vmem:[#allocation3 + $0x88] sm:$0xff]
          %v2656 = vld [vmem:[#allocation3 + $0x90] sm:$0xff]
          %v2657 = vld [vmem:[#allocation3 + $0x98] sm:$0xff]
          %v2658 = vld [vmem:[#allocation3 + $0xa0] sm:$0xff]
          %v2659 = vld [vmem:[#allocation3 + $0xa8] sm:$0xff]
          %v2660 = vld [vmem:[#allocation3 + $0xb0] sm:$0xff]
          %v2661 = vld [vmem:[#allocation3 + $0xb8] sm:$0xff]
          %v2662 = vld [vmem:[#allocation3 + $0xc0] sm:$0xff]
          %v2663 = vld [vmem:[#allocation3 + $0xc8] sm:$0xff]
          %v2664 = vld [vmem:[#allocation3 + $0xd0] sm:$0xff]
          %v2665 = vld [vmem:[#allocation3 + $0xd8] sm:$0xff]
          %v2666 = vld [vmem:[#allocation3 + $0xe0] sm:$0xff]
          %v2667 = vld [vmem:[#allocation3 + $0xe8] sm:$0xff]
          %v2668 = vld [vmem:[#allocation3 + $0xf0] sm:$0xff]
          %v2669 = vld [vmem:[#allocation3 + $0xf8] sm:$0xff]
          %v2670 = vld [vmem:[#allocation4] sm:$0xff]
          %v2671 = vld [vmem:[#allocation4 + $0x8] sm:$0xff]
          %v2672 = vld [vmem:[#allocation4 + $0x10] sm:$0xff]
          %v2673 = vld [vmem:[#allocation4 + $0x18] sm:$0xff]
          %v2674 = vld [vmem:[#allocation4 + $0x20] sm:$0xff]
          %v2675 = vld [vmem:[#allocation4 + $0x28] sm:$0xff]
          %v2676 = vld [vmem:[#allocation4 + $0x30] sm:$0xff]
          %v2677 = vld [vmem:[#allocation4 + $0x38] sm:$0xff]
          %v2678 = vld [vmem:[#allocation4 + $0x40] sm:$0xff]
          %v2679 = vld [vmem:[#allocation4 + $0x48] sm:$0xff]
          %v2680 = vld [vmem:[#allocation4 + $0x50] sm:$0xff]
          %v2681 = vld [vmem:[#allocation4 + $0x58] sm:$0xff]
          %v2682 = vld [vmem:[#allocation4 + $0x60] sm:$0xff]
          %v2683 = vld [vmem:[#allocation4 + $0x68] sm:$0xff]
          %v2684 = vld [vmem:[#allocation4 + $0x70] sm:$0xff]
          %v2685 = vld [vmem:[#allocation4 + $0x78] sm:$0xff]
          %v2686 = vld [vmem:[#allocation4 + $0x80] sm:$0xff]
          %v2687 = vld [vmem:[#allocation4 + $0x88] sm:$0xff]
          %v2688 = vld [vmem:[#allocation4 + $0x90] sm:$0xff]
          %v2689 = vld [vmem:[#allocation4 + $0x98] sm:$0xff]
          %v2690 = vld [vmem:[#allocation4 + $0xa0] sm:$0xff]
          %v2691 = vld [vmem:[#allocation4 + $0xa8] sm:$0xff]
          %v2692 = vld [vmem:[#allocation4 + $0xb0] sm:$0xff]
          %v2693 = vld [vmem:[#allocation4 + $0xb8] sm:$0xff]
          %v2694 = vld [vmem:[#allocation4 + $0xc0] sm:$0xff]
          %v2695 = vld [vmem:[#allocation4 + $0xc8] sm:$0xff]
          %v2696 = vld [vmem:[#allocation4 + $0xd0] sm:$0xff]
          %v2697 = vld [vmem:[#allocation4 + $0xd8] sm:$0xff]
          %v2698 = vld [vmem:[#allocation4 + $0xe0] sm:$0xff]
          %v2699 = vld [vmem:[#allocation4 + $0xe8] sm:$0xff]
          %v2700 = vld [vmem:[#allocation4 + $0xf0] sm:$0xff]
          %v2701 = vld [vmem:[#allocation4 + $0xf8] sm:$0xff]
          %v2702 = vlog2.pop %v2670
          %v2703 = vmul.f32 %v2702, 0.6931472
          %v2704 = vlog2.pop %v2671
          %v2705 = vmul.f32 %v2704, 0.6931472
          %v2706 = vlog2.pop %v2672
          %v2707 = vmul.f32 %v2706, 0.6931472
          %v2708 = vlog2.pop %v2673
          %v2709 = vmul.f32 %v2708, 0.6931472
          %v2710 = vlog2.pop %v2674
          %v2711 = vmul.f32 %v2710, 0.6931472
          %v2712 = vlog2.pop %v2675
          %v2713 = vmul.f32 %v2712, 0.6931472
          %v2714 = vlog2.pop %v2676
          %v2715 = vmul.f32 %v2714, 0.6931472
          %v2716 = vlog2.pop %v2677
          %v2717 = vmul.f32 %v2716, 0.6931472
          %v2718 = vlog2.pop %v2678
          %v2719 = vmul.f32 %v2718, 0.6931472
          %v2720 = vlog2.pop %v2679
          %v2721 = vmul.f32 %v2720, 0.6931472
          %v2722 = vlog2.pop %v2680
          %v2723 = vmul.f32 %v2722, 0.6931472
          %v2724 = vlog2.pop %v2681
          %v2725 = vmul.f32 %v2724, 0.6931472
          %v2726 = vlog2.pop %v2682
          %v2727 = vmul.f32 %v2726, 0.6931472
          %v2728 = vlog2.pop %v2683
          %v2729 = vmul.f32 %v2728, 0.6931472
          %v2730 = vlog2.pop %v2684
          %v2731 = vmul.f32 %v2730, 0.6931472
          %v2732 = vlog2.pop %v2685
          %v2733 = vmul.f32 %v2732, 0.6931472
          %v2734 = vlog2.pop %v2686
          %v2735 = vmul.f32 %v2734, 0.6931472
          %v2736 = vlog2.pop %v2687
          %v2737 = vmul.f32 %v2736, 0.6931472
          %v2738 = vlog2.pop %v2688
          %v2739 = vmul.f32 %v2738, 0.6931472
          %v2740 = vlog2.pop %v2689
          %v2741 = vmul.f32 %v2740, 0.6931472
          %v2742 = vlog2.pop %v2690
          %v2743 = vmul.f32 %v2742, 0.6931472
          %v2744 = vlog2.pop %v2691
          %v2745 = vmul.f32 %v2744, 0.6931472
          %v2746 = vlog2.pop %v2692
          %v2747 = vmul.f32 %v2746, 0.6931472
          %v2748 = vlog2.pop %v2693
          %v2749 = vmul.f32 %v2748, 0.6931472
          %v2750 = vlog2.pop %v2694
          %v2751 = vmul.f32 %v2750, 0.6931472
          %v2752 = vlog2.pop %v2695
          %v2753 = vmul.f32 %v2752, 0.6931472
          %v2754 = vlog2.pop %v2696
          %v2755 = vmul.f32 %v2754, 0.6931472
          %v2756 = vlog2.pop %v2697
          %v2757 = vmul.f32 %v2756, 0.6931472
          %v2758 = vlog2.pop %v2698
          %v2759 = vmul.f32 %v2758, 0.6931472
          %v2760 = vlog2.pop %v2699
          %v2761 = vmul.f32 %v2760, 0.6931472
          %v2762 = vlog2.pop %v2700
          %v2763 = vmul.f32 %v2762, 0.6931472
          %v2764 = vlog2.pop %v2701
          %v2765 = vmul.f32 %v2764, 0.6931472
          %v2766 = vadd.f32 %v2638, %v2703
          %v2767 = vadd.f32 %v2639, %v2705
          %v2768 = vadd.f32 %v2640, %v2707
          %v2769 = vadd.f32 %v2641, %v2709
          %v2770 = vadd.f32 %v2642, %v2711
          %v2771 = vadd.f32 %v2643, %v2713
          %v2772 = vadd.f32 %v2644, %v2715
          %v2773 = vadd.f32 %v2645, %v2717
          %v2774 = vadd.f32 %v2646, %v2719
          %v2775 = vadd.f32 %v2647, %v2721
          %v2776 = vadd.f32 %v2648, %v2723
          %v2777 = vadd.f32 %v2649, %v2725
          %v2778 = vadd.f32 %v2650, %v2727
          %v2779 = vadd.f32 %v2651, %v2729
          %v2780 = vadd.f32 %v2652, %v2731
          %v2781 = vadd.f32 %v2653, %v2733
          %v2782 = vadd.f32 %v2654, %v2735
          %v2783 = vadd.f32 %v2655, %v2737
          %v2784 = vadd.f32 %v2656, %v2739
          %v2785 = vadd.f32 %v2657, %v2741
          %v2786 = vadd.f32 %v2658, %v2743
          %v2787 = vadd.f32 %v2659, %v2745
          %v2788 = vadd.f32 %v2660, %v2747
          %v2789 = vadd.f32 %v2661, %v2749
          %v2790 = vadd.f32 %v2662, %v2751
          %v2791 = vadd.f32 %v2663, %v2753
          %v2792 = vadd.f32 %v2664, %v2755
          %v2793 = vadd.f32 %v2665, %v2757
          %v2794 = vadd.f32 %v2666, %v2759
          %v2795 = vadd.f32 %v2667, %v2761
          %v2796 = vadd.f32 %v2668, %v2763
          %v2797 = vadd.f32 %v2669, %v2765
          %2799 = vset.pattern.permute.xlu0 0
          %2800 = vperm.xlu0 %2799, %v2766
          %v2801 = vpop.permute.xlu0 %2800
          %2804 = vset.pattern.permute.xlu0 0
          %2805 = vperm.xlu0 %2804, %v2767
          %v2806 = vpop.permute.xlu0 %2805
          %2809 = vset.pattern.permute.xlu0 0
          %2810 = vperm.xlu0 %2809, %v2768
          %v2811 = vpop.permute.xlu0 %2810
          %2814 = vset.pattern.permute.xlu0 0
          %2815 = vperm.xlu0 %2814, %v2769
          %v2816 = vpop.permute.xlu0 %2815
          %2819 = vset.pattern.permute.xlu0 0
          %2820 = vperm.xlu0 %2819, %v2770
          %v2821 = vpop.permute.xlu0 %2820
          %2824 = vset.pattern.permute.xlu0 0
          %2825 = vperm.xlu0 %2824, %v2771
          %v2826 = vpop.permute.xlu0 %2825
          %2829 = vset.pattern.permute.xlu0 0
          %2830 = vperm.xlu0 %2829, %v2772
          %v2831 = vpop.permute.xlu0 %2830
          %2834 = vset.pattern.permute.xlu0 0
          %2835 = vperm.xlu0 %2834, %v2773
          %v2836 = vpop.permute.xlu0 %2835
          %2839 = vset.pattern.permute.xlu0 0
          %2840 = vperm.xlu0 %2839, %v2774
          %v2841 = vpop.permute.xlu0 %2840
          %2844 = vset.pattern.permute.xlu0 0
          %2845 = vperm.xlu0 %2844, %v2775
          %v2846 = vpop.permute.xlu0 %2845
          %2849 = vset.pattern.permute.xlu0 0
          %2850 = vperm.xlu0 %2849, %v2776
          %v2851 = vpop.permute.xlu0 %2850
          %2854 = vset.pattern.permute.xlu0 0
          %2855 = vperm.xlu0 %2854, %v2777
          %v2856 = vpop.permute.xlu0 %2855
          %2859 = vset.pattern.permute.xlu0 0
          %2860 = vperm.xlu0 %2859, %v2778
          %v2861 = vpop.permute.xlu0 %2860
          %2864 = vset.pattern.permute.xlu0 0
          %2865 = vperm.xlu0 %2864, %v2779
          %v2866 = vpop.permute.xlu0 %2865
          %2869 = vset.pattern.permute.xlu0 0
          %2870 = vperm.xlu0 %2869, %v2780
          %v2871 = vpop.permute.xlu0 %2870
          %2874 = vset.pattern.permute.xlu0 0
          %2875 = vperm.xlu0 %2874, %v2781
          %v2876 = vpop.permute.xlu0 %2875
          %2879 = vset.pattern.permute.xlu0 0
          %2880 = vperm.xlu0 %2879, %v2782
          %v2881 = vpop.permute.xlu0 %2880
          %2884 = vset.pattern.permute.xlu0 0
          %2885 = vperm.xlu0 %2884, %v2783
          %v2886 = vpop.permute.xlu0 %2885
          %2889 = vset.pattern.permute.xlu0 0
          %2890 = vperm.xlu0 %2889, %v2784
          %v2891 = vpop.permute.xlu0 %2890
          %2894 = vset.pattern.permute.xlu0 0
          %2895 = vperm.xlu0 %2894, %v2785
          %v2896 = vpop.permute.xlu0 %2895
          %2899 = vset.pattern.permute.xlu0 0
          %2900 = vperm.xlu0 %2899, %v2786
          %v2901 = vpop.permute.xlu0 %2900
          %2904 = vset.pattern.permute.xlu0 0
          %2905 = vperm.xlu0 %2904, %v2787
          %v2906 = vpop.permute.xlu0 %2905
          %2909 = vset.pattern.permute.xlu0 0
          %2910 = vperm.xlu0 %2909, %v2788
          %v2911 = vpop.permute.xlu0 %2910
          %2914 = vset.pattern.permute.xlu0 0
          %2915 = vperm.xlu0 %2914, %v2789
          %v2916 = vpop.permute.xlu0 %2915
          %2919 = vset.pattern.permute.xlu0 0
          %2920 = vperm.xlu0 %2919, %v2790
          %v2921 = vpop.permute.xlu0 %2920
          %2924 = vset.pattern.permute.xlu0 0
          %2925 = vperm.xlu0 %2924, %v2791
          %v2926 = vpop.permute.xlu0 %2925
          %2929 = vset.pattern.permute.xlu0 0
          %2930 = vperm.xlu0 %2929, %v2792
          %v2931 = vpop.permute.xlu0 %2930
          %2934 = vset.pattern.permute.xlu0 0
          %2935 = vperm.xlu0 %2934, %v2793
          %v2936 = vpop.permute.xlu0 %2935
          %2939 = vset.pattern.permute.xlu0 0
          %2940 = vperm.xlu0 %2939, %v2794
          %v2941 = vpop.permute.xlu0 %2940
          %2944 = vset.pattern.permute.xlu0 0
          %2945 = vperm.xlu0 %2944, %v2795
          %v2946 = vpop.permute.xlu0 %2945
          %2949 = vset.pattern.permute.xlu0 0
          %2950 = vperm.xlu0 %2949, %v2796
          %v2951 = vpop.permute.xlu0 %2950
          %2954 = vset.pattern.permute.xlu0 0
          %2955 = vperm.xlu0 %2954, %v2797
          %v2956 = vpop.permute.xlu0 %2955
          %v2958 = vsub.f32 %v1750, %v2801
          %v2959 = vsub.f32 %v1752, %v2806
          %v2960 = vsub.f32 %v1755, %v2811
          %v2961 = vsub.f32 %v1757, %v2816
          %v2962 = vsub.f32 %v1760, %v2821
          %v2963 = vsub.f32 %v1762, %v2826
          %v2964 = vsub.f32 %v1765, %v2831
          %v2965 = vsub.f32 %v1767, %v2836
          %v2966 = vsub.f32 %v1770, %v2841
          %v2967 = vsub.f32 %v1772, %v2846
          %v2968 = vsub.f32 %v1775, %v2851
          %v2969 = vsub.f32 %v1777, %v2856
          %v2970 = vsub.f32 %v1780, %v2861
          %v2971 = vsub.f32 %v1782, %v2866
          %v2972 = vsub.f32 %v1785, %v2871
          %v2973 = vsub.f32 %v1787, %v2876
          %v2974 = vsub.f32 %v1790, %v2881
          %v2975 = vsub.f32 %v1792, %v2886
          %v2976 = vsub.f32 %v1795, %v2891
          %v2977 = vsub.f32 %v1797, %v2896
          %v2978 = vsub.f32 %v1800, %v2901
          %v2979 = vsub.f32 %v1802, %v2906
          %v2980 = vsub.f32 %v1805, %v2911
          %v2981 = vsub.f32 %v1807, %v2916
          %v2982 = vsub.f32 %v1810, %v2921
          %v2983 = vsub.f32 %v1812, %v2926
          %v2984 = vsub.f32 %v1815, %v2931
          %v2985 = vsub.f32 %v1817, %v2936
          %v2986 = vsub.f32 %v1820, %v2941
          %v2987 = vsub.f32 %v1822, %v2946
          %v2988 = vsub.f32 %v1825, %v2951
          %v2989 = vsub.f32 %v1827, %v2956
          %2990 = vst [vmem:[%s495] sm:$0xff] %v2958
          %2991 = vst [vmem:[%s495 + $0x8] sm:$0xff] %v2959
          %2992 = vst [vmem:[%s495 + $0x10] sm:$0xff] %v2960
          %2993 = vst [vmem:[%s495 + $0x18] sm:$0xff] %v2961
          %2994 = vst [vmem:[%s495 + $0x20] sm:$0xff] %v2962
          %2995 = vst [vmem:[%s495 + $0x28] sm:$0xff] %v2963
          %2996 = vst [vmem:[%s495 + $0x30] sm:$0xff] %v2964
          %2997 = vst [vmem:[%s495 + $0x38] sm:$0xff] %v2965
          %2998 = vst [vmem:[%s495 + $0x40] sm:$0xff] %v2966
          %2999 = vst [vmem:[%s495 + $0x48] sm:$0xff] %v2967
          %3000 = vst [vmem:[%s495 + $0x50] sm:$0xff] %v2968
          %3001 = vst [vmem:[%s495 + $0x58] sm:$0xff] %v2969
          %3002 = vst [vmem:[%s495 + $0x60] sm:$0xff] %v2970
          %3003 = vst [vmem:[%s495 + $0x68] sm:$0xff] %v2971
          %3004 = vst [vmem:[%s495 + $0x70] sm:$0xff] %v2972
          %3005 = vst [vmem:[%s495 + $0x78] sm:$0xff] %v2973
          %3006 = vst [vmem:[%s495 + $0x80] sm:$0xff] %v2974
          %3007 = vst [vmem:[%s495 + $0x88] sm:$0xff] %v2975
          %3008 = vst [vmem:[%s495 + $0x90] sm:$0xff] %v2976
          %3009 = vst [vmem:[%s495 + $0x98] sm:$0xff] %v2977
          %3010 = vst [vmem:[%s495 + $0xa0] sm:$0xff] %v2978
          %3011 = vst [vmem:[%s495 + $0xa8] sm:$0xff] %v2979
          %3012 = vst [vmem:[%s495 + $0xb0] sm:$0xff] %v2980
          %3013 = vst [vmem:[%s495 + $0xb8] sm:$0xff] %v2981
          %3014 = vst [vmem:[%s495 + $0xc0] sm:$0xff] %v2982
          %3015 = vst [vmem:[%s495 + $0xc8] sm:$0xff] %v2983
          %3016 = vst [vmem:[%s495 + $0xd0] sm:$0xff] %v2984
          %3017 = vst [vmem:[%s495 + $0xd8] sm:$0xff] %v2985
          %3018 = vst [vmem:[%s495 + $0xe0] sm:$0xff] %v2986
          %3019 = vst [vmem:[%s495 + $0xe8] sm:$0xff] %v2987
          %3020 = vst [vmem:[%s495 + $0xf0] sm:$0xff] %v2988
          %3021 = vst [vmem:[%s495 + $0xf8] sm:$0xff] %v2989
        $region97: #{tpu_custom_call.1} parent=80 // pred_fallthru
          _
        %s3022 = sand.u32 %s237, 1
        %s3023 = scalar_lea.sflag [#allocation7], %s3022
        %s3024 = sand.u32 %s237, 1
        %s3025 = smul.addr %s3024, 256
        %s3026 = scalar_lea.vmem [#allocation6], %s3025
        // Predicated region
        $region98: #{tpu_custom_call.1} parent=80 // pred_check
          %p3027 = pneg %p247
        $region99: #{tpu_custom_call.1} parent=80 // pred_check_branch
          %3029 = sbr.rel (%p3027) target = $region101
        $region100: #{tpu_custom_call.1} parent=80 // pred_region
          %s3030 = ssub.s32 %s25, 2
          %p3031 = scmp.gt.s32.totalorder %s3030, 0
          %s3032 = scalar_select %p3031, %s3030, 0
          %s3033 = smul.u32 32, %s24
          %3035 = vsyncadd %s3023, 0
          %s3036 = smul.addr %s3033, 2
          %s3037 = sadd.s32 %s3032, %s3036
          %s3038 = smul.addr %s3037, 8
          %s3039 = scalar_lea.hbm %s6, %s3038
          %s3040 = sshll.u32 %s3026, 4
          %s3041 = int_to_ptr.vmem [resolvable:$true] %s3040
          %s3042 = sshll.u32 %s3039, 4
          %s3043 = int_to_ptr.hbm [resolvable:$true] %s3042
          %3048 = dma.vmem_to_hbm [thread:$0]  %s3041, 4096, %s3043, %s3023, 128, 256, 8
        $region101: #{tpu_custom_call.1} parent=80 // pred_fallthru
          _
      $region81: #{tpu_custom_call.1} parent=5 // pred_fallthru
        _
      %p3049 = scmp.le.s32.totalorder 2, %s15
      // Predicated region
      $region102: #{tpu_custom_call.1} parent=5 // pred_check
        %p3050 = pneg %p3049
      $region103: #{tpu_custom_call.1} parent=5 // pred_check_branch
        %3052 = sbr.rel (%p3050) target = $region105
      $region104: #{tpu_custom_call.1} parent=5 // pred_region
        %s3053 = ssub.s32 %s15, 2
        // Predicated region
        $region106: #{tpu_custom_call.1} parent=104 // pred_check
          %p3054 = pneg %p253
        $region107: #{tpu_custom_call.1} parent=104 // pred_check_branch
          %3056 = sbr.rel (%p3054) target = $region109
        $region108: #{tpu_custom_call.1} parent=104 // pred_region
          %s3057 = sand.u32 %s238, 1
          %s3058 = scalar_lea.sflag [#allocation7], %s3057
          %s3059 = sand.u32 %s238, 1
          %s3060 = smul.addr %s3059, 256
          %s3061 = scalar_lea.vmem [#allocation6], %s3060
          %3063 = dma.done %s3058, 4096
        $region109: #{tpu_custom_call.1} parent=104 // pred_fallthru
          _
      $region105: #{tpu_custom_call.1} parent=5 // pred_fallthru
        _
    $region6: #{tpu_custom_call.1} parent=1 // loop_footer
      %s19 = sadd.s32 1, %s15
    $region7: #{tpu_custom_call.1} parent=1 // loop_footer_branch
      %14 = sbr.rel target = $region3
    $region8: #{tpu_custom_call.1} parent=1 // loop_exit
      _
    %3064 = vsyncpa [#allocation7], 1
    %s3065 = scalar_lea.sflag [#allocation7], 1
    %3066 = vsyncpa %s3065, 1

// kernel: tpu_custom_call.1
$region0: #{tpu_custom_call.1}
  #allocation0 [shape = 'u32[]', space=smem, size = 0x4, offset = 0x4, fixed_abs, tag = 'smem constant byte address 0x4 - core index']
  #allocation1 [shape = 'u32[72,128]{1,0:T(1,128)}', space=vmem, size = 0x9000, scoped, tag = 'internal scratch']
  #allocation2 [shape = 'bf16[256,128]{1,0:T(8,128)(2,1)}', space=vmem, size = 0x10000, scoped, tag = 'scratch operand']
  #allocation3 [shape = 'f32[256,1]{1,0:T(8,128)}', space=vmem, size = 0x20000, scoped, tag = 'scratch operand']
  #allocation4 [shape = 'f32[256,1]{1,0:T(8,128)}', space=vmem, size = 0x20000, scoped, tag = 'scratch operand']
  %s0 = inlined_call_operand.vmem [shape: s32[512,1], index: 0, kind: input, shape index: {}]
  %s1 = inlined_call_operand.vmem [shape: bf16[256,128], index: 1, kind: input, shape index: {}]
  %s2 = inlined_call_operand.vmem [shape: bf16[128,128], index: 2, kind: input, shape index: {}]
  %s3 = inlined_call_operand.vmem [shape: f32[1,128], index: 3, kind: input, shape index: {}]
  %s4 = inlined_call_operand.vmem [shape: bf16[128,256], index: 4, kind: input, shape index: {}]
  %s5 = inlined_call_operand.vmem [shape: f32[1,256], index: 5, kind: input, shape index: {}]
  %s6 = inlined_call_operand.hbm [shape: f32[512,256], index: 6, kind: output, shape index: {}]
  %s7 = sld [smem:[#allocation0]]
  $region110: #{tpu_custom_call.1} parent=0
    _
  %s9 = ssub.s32 1, %s7
  %s10 = scalar_select 0, %s9, %s7
  $region1: #{tpu_custom_call.1} parent=0
    #allocation5 [shape = 'u8[65536]{0}', space=vmem, size = 0x10000, scoped, tag = 'input window, operand 4']
    #allocation6 [shape = 'u8[262144]{0}', space=vmem, size = 0x40000, scoped, tag = 'output window, operand 0']
    #allocation7 [shape = 's32[2]{0}', space=sflag, size = 0x8, scoped, tag = 'scoped memory for tpu_custom_call.1']
    %11 = vsyncpa [#allocation7], 0
    %s12 = scalar_lea.sflag [#allocation7], 1
    %13 = vsyncpa %s12, 0
    loop: start=0, step=1, limit=10
    $region2: #{tpu_custom_call.1} parent=1 // loop_pre_header
      _
    $region3: #{tpu_custom_call.1} parent=1 // loop_header
      %s15 = sphi 0, %s19
      %p16 = scmp.ge.s32.totalorder %s15, 10
      %s22 = sphi 0, %s34
      %s23 = sphi 0, %s30
      %s24 = sphi 0, %s22
      %s25 = sphi 0, %s23
      %s26 = sphi 0, %s24
      %s27 = sphi 0, %s25
      %s37 = sphi 0, %s39
      %s40 = sphi 0, %s37
      %s41 = sphi 0, %s40
      %s57 = sphi 0, %s41
      %s61 = sphi 0, %s61
      %s63 = sphi 0, %s61
      %s64 = sphi 0, %s63
      %s78 = sphi 0, %s64
      %s82 = sphi 0, %s82
      %s84 = sphi 0, %s82
      %s85 = sphi 0, %s84
      %s99 = sphi 0, %s85
      %s103 = sphi 0, %s103
      %s105 = sphi 0, %s103
      %s106 = sphi 0, %s105
      %s120 = sphi 0, %s106
      %s150 = sphi 0, %s152
      %s153 = sphi 0, %s150
      %s154 = sphi 0, %s153
      %s170 = sphi 0, %s154
      %s200 = sphi 0, %s202
      %s203 = sphi 0, %s200
      %s204 = sphi 0, %s203
      %s220 = sphi 0, %s204
      %s234 = sphi 0, %s236
      %s237 = sphi 0, %s234
      %s238 = sphi 0, %s237
      %s254 = sphi 0, %s238
    $region4: #{tpu_custom_call.1} parent=1 // loop_header_branch
      %18 = sbr.rel (%p16) target = $region8
    $region5: #{tpu_custom_call.1} parent=1 // loop_body
      %s20 = ssub.s32 %s15, 1
      %s21 = ssub.s32 %s15, 2
      %s28 = sadd.s32 1, %s23
      %p29 = scmp.ge.s32.totalorder %s28, 4
      %s30 = scalar_select %p29, 0, %s28
      %s31 = sadd.s32 1, %s22
      %s32 = scalar_select %p29, %s31, %s22
      %p33 = scmp.ge.s32.totalorder %s32, 2
      %s34 = scalar_select %p33, 0, %s32
      %s35 = ssub.s32 %s22, %s34
      %p36 = scmp.eq.s32.totalorder %s35, 0
      %s38 = sadd.s32 %s37, 1
      %s39 = scalar_select %p36, %s37, %s38
      %p42 = pneg %p36
      %p43 = scmp.eq.s32.totalorder %s15, 7
      %p44 = por %p42, %p43
      %p45 = scmp.ne.s32.totalorder %s37, %s40
      %p46 = scmp.eq.s32.totalorder %s15, 0
      %p47 = por %p45, %p46
      %p48 = scmp.ne.s32.totalorder %s37, %s40
      %p49 = scmp.eq.s32.totalorder %s20, 7
      %p50 = por %p48, %p49
      %p51 = scmp.ne.s32.totalorder %s40, %s41
      %p52 = scmp.eq.s32.totalorder %s20, 0
      %p53 = por %p51, %p52
      %p54 = scmp.ne.s32.totalorder %s40, %s41
      %p55 = scmp.eq.s32.totalorder %s21, 7
      %p56 = por %p54, %p55
      %p58 = scmp.ne.s32.totalorder %s41, %s57
      %p59 = scmp.eq.s32.totalorder %s21, 0
      %p60 = por %p58, %p59
      %s62 = sadd.s32 %s61, 1
      %p65 = scmp.eq.s32.totalorder %s15, 7
      %p66 = scmp.ne.s32.totalorder %s61, %s63
      %p67 = scmp.eq.s32.totalorder %s15, 0
      %p68 = por %p66, %p67
      %p69 = scmp.ne.s32.totalorder %s61, %s63
      %p70 = scmp.eq.s32.totalorder %s20, 7
      %p71 = por %p69, %p70
      %p72 = scmp.ne.s32.totalorder %s63, %s64
      %p73 = scmp.eq.s32.totalorder %s20, 0
      %p74 = por %p72, %p73
      %p75 = scmp.ne.s32.totalorder %s63, %s64
      %p76 = scmp.eq.s32.totalorder %s21, 7
      %p77 = por %p75, %p76
      %p79 = scmp.ne.s32.totalorder %s64, %s78
      %p80 = scmp.eq.s32.totalorder %s21, 0
      %p81 = por %p79, %p80
      %s83 = sadd.s32 %s82, 1
      %p86 = scmp.eq.s32.totalorder %s15, 7
      %p87 = scmp.ne.s32.totalorder %s82, %s84
      %p88 = scmp.eq.s32.totalorder %s15, 0
      %p89 = por %p87, %p88
      %p90 = scmp.ne.s32.totalorder %s82, %s84
      %p91 = scmp.eq.s32.totalorder %s20, 7
      %p92 = por %p90, %p91
      %p93 = scmp.ne.s32.totalorder %s84, %s85
      %p94 = scmp.eq.s32.totalorder %s20, 0
      %p95 = por %p93, %p94
      %p96 = scmp.ne.s32.totalorder %s84, %s85
      %p97 = scmp.eq.s32.totalorder %s21, 7
      %p98 = por %p96, %p97
      %p100 = scmp.ne.s32.totalorder %s85, %s99
      %p101 = scmp.eq.s32.totalorder %s21, 0
      %p102 = por %p100, %p101
      %s104 = sadd.s32 %s103, 1
      %p107 = scmp.eq.s32.totalorder %s15, 7
      %p108 = scmp.ne.s32.totalorder %s103, %s105
      %p109 = scmp.eq.s32.totalorder %s15, 0
      %p110 = por %p108, %p109
      %p111 = scmp.ne.s32.totalorder %s103, %s105
      %p112 = scmp.eq.s32.totalorder %s20, 7
      %p113 = por %p111, %p112
      %p114 = scmp.ne.s32.totalorder %s105, %s106
      %p115 = scmp.eq.s32.totalorder %s20, 0
      %p116 = por %p114, %p115
      %p117 = scmp.ne.s32.totalorder %s105, %s106
      %p118 = scmp.eq.s32.totalorder %s21, 7
      %p119 = por %p117, %p118
      %p121 = scmp.ne.s32.totalorder %s106, %s120
      %p122 = scmp.eq.s32.totalorder %s21, 0
      %p123 = por %p121, %p122
      %p124 = scmp.lt.s32.totalorder %s23, 0
      %s125 = ssub.s32 0, %s23
      %s126 = scalar_select %p124, %s125, %s23
      %s127 = sand.u32 %s126, 1
      %s128 = ssub.s32 0, %s127
      %s129 = scalar_select %p124, %s128, %s127
      %p130 = scmp.ne.s32.totalorder %s129, 0
      %p131 = scmp.lt.s32.totalorder %s129, 0
      %p132 = pnand %p131, %p130
      %p133 = pneg %p132
      %s134 = sadd.s32 %s129, 2
      %s135 = scalar_select %p133, %s134, %s129
      %p136 = scmp.lt.s32.totalorder %s30, 0
      %s137 = ssub.s32 0, %s30
      %s138 = scalar_select %p136, %s137, %s30
      %s139 = sand.u32 %s138, 1
      %s140 = ssub.s32 0, %s139
      %s141 = scalar_select %p136, %s140, %s139
      %p142 = scmp.ne.s32.totalorder %s141, 0
      %p143 = scmp.lt.s32.totalorder %s141, 0
      %p144 = pnand %p143, %p142
      %p145 = pneg %p144
      %s146 = sadd.s32 %s141, 2
      %s147 = scalar_select %p145, %s146, %s141
      %s148 = ssub.s32 %s135, %s147
      %p149 = scmp.eq.s32.totalorder %s148, 0
      %s151 = sadd.s32 %s150, 1
      %s152 = scalar_select %p149, %s150, %s151
      %p155 = pneg %p149
      %p156 = scmp.eq.s32.totalorder %s15, 7
      %p157 = por %p155, %p156
      %p158 = scmp.ne.s32.totalorder %s150, %s153
      %p159 = scmp.eq.s32.totalorder %s15, 0
      %p160 = por %p158, %p159
      %p161 = scmp.ne.s32.totalorder %s150, %s153
      %p162 = scmp.eq.s32.totalorder %s20, 7
      %p163 = por %p161, %p162
      %p164 = scmp.ne.s32.totalorder %s153, %s154
      %p165 = scmp.eq.s32.totalorder %s20, 0
      %p166 = por %p164, %p165
      %p167 = scmp.ne.s32.totalorder %s153, %s154
      %p168 = scmp.eq.s32.totalorder %s21, 7
      %p169 = por %p167, %p168
      %p171 = scmp.ne.s32.totalorder %s154, %s170
      %p172 = scmp.eq.s32.totalorder %s21, 0
      %p173 = por %p171, %p172
      %p174 = scmp.lt.s32.totalorder %s23, 0
      %s175 = ssub.s32 0, %s23
      %s176 = scalar_select %p174, %s175, %s23
      %s177 = sand.u32 %s176, 1
      %s178 = ssub.s32 0, %s177
      %s179 = scalar_select %p174, %s178, %s177
      %p180 = scmp.ne.s32.totalorder %s179, 0
      %p181 = scmp.lt.s32.totalorder %s179, 0
      %p182 = pnand %p181, %p180
      %p183 = pneg %p182
      %s184 = sadd.s32 %s179, 2
      %s185 = scalar_select %p183, %s184, %s179
      %p186 = scmp.lt.s32.totalorder %s30, 0
      %s187 = ssub.s32 0, %s30
      %s188 = scalar_select %p186, %s187, %s30
      %s189 = sand.u32 %s188, 1
      %s190 = ssub.s32 0, %s189
      %s191 = scalar_select %p186, %s190, %s189
      %p192 = scmp.ne.s32.totalorder %s191, 0
      %p193 = scmp.lt.s32.totalorder %s191, 0
      %p194 = pnand %p193, %p192
      %p195 = pneg %p194
      %s196 = sadd.s32 %s191, 2
      %s197 = scalar_select %p195, %s196, %s191
      %s198 = ssub.s32 %s185, %s197
      %p199 = scmp.eq.s32.totalorder %s198, 0
      %s201 = sadd.s32 %s200, 1
      %s202 = scalar_select %p199, %s200, %s201
      %p205 = pneg %p199
      %p206 = scmp.eq.s32.totalorder %s15, 7
      %p207 = por %p205, %p206
      %p208 = scmp.ne.s32.totalorder %s200, %s203
      %p209 = scmp.eq.s32.totalorder %s15, 0
      %p210 = por %p208, %p209
      %p211 = scmp.ne.s32.totalorder %s200, %s203
      %p212 = scmp.eq.s32.totalorder %s20, 7
      %p213 = por %p211, %p212
      %p214 = scmp.ne.s32.totalorder %s203, %s204
      %p215 = scmp.eq.s32.totalorder %s20, 0
      %p216 = por %p214, %p215
      %p217 = scmp.ne.s32.totalorder %s203, %s204
      %p218 = scmp.eq.s32.totalorder %s21, 7
      %p219 = por %p217, %p218
      %p221 = scmp.ne.s32.totalorder %s204, %s220
      %p222 = scmp.eq.s32.totalorder %s21, 0
      %p223 = por %p221, %p222
      %s224 = ssub.s32 %s23, 2
      %p225 = scmp.gt.s32.totalorder %s224, 0
      %s226 = scalar_select %p225, %s224, 0
      %s227 = ssub.s32 %s30, 2
      %p228 = scmp.gt.s32.totalorder %s227, 0
      %s229 = scalar_select %p228, %s227, 0
      %s230 = ssub.s32 %s22, %s34
      %s231 = ssub.s32 %s226, %s229
      %s232 = sor.u32 %s230, %s231
      %p233 = scmp.eq.s32.totalorder %s232, 0
      %s235 = sadd.s32 %s234, 1
      %s236 = scalar_select %p233, %s234, %s235
      %p239 = pneg %p233
      %p240 = scmp.eq.s32.totalorder %s15, 7
      %p241 = por %p239, %p240
      %p242 = scmp.ne.s32.totalorder %s234, %s237
      %p243 = scmp.eq.s32.totalorder %s15, 0
      %p244 = por %p242, %p243
      %p245 = scmp.ne.s32.totalorder %s234, %s237
      %p246 = scmp.eq.s32.totalorder %s20, 7
      %p247 = por %p245, %p246
      %p248 = scmp.ne.s32.totalorder %s237, %s238
      %p249 = scmp.eq.s32.totalorder %s20, 0
      %p250 = por %p248, %p249
      %p251 = scmp.ne.s32.totalorder %s237, %s238
      %p252 = scmp.eq.s32.totalorder %s21, 7
      %p253 = por %p251, %p252
      %p255 = scmp.ne.s32.totalorder %s238, %s254
      %p256 = scmp.eq.s32.totalorder %s21, 0
      %p257 = por %p255, %p256
      %p258 = scmp.le.s32.totalorder 1, %s15
      %p259 = scmp.lt.s32.totalorder %s15, 9
      %p260 = pnand %p258, %p259
      %p261 = pneg %p260
      // Predicated region
      $region9: #{tpu_custom_call.1} parent=5 // pred_check
        _
      $region10: #{tpu_custom_call.1} parent=5 // pred_check_branch
        %263 = sbr.rel (%p260) target = $region12
      $region11: #{tpu_custom_call.1} parent=5 // pred_region
        %s264 = ssub.s32 %s15, 1
        // Predicated region
        $region13: #{tpu_custom_call.1} parent=11 // pred_check
          %p265 = pneg %p74
        $region14: #{tpu_custom_call.1} parent=11 // pred_check_branch
          %267 = sbr.rel (%p265) target = $region16
        $region15: #{tpu_custom_call.1} parent=11 // pred_region
          _
        $region16: #{tpu_custom_call.1} parent=11 // pred_fallthru
          _
        // Predicated region
        $region17: #{tpu_custom_call.1} parent=11 // pred_check
          %p268 = pneg %p95
        $region18: #{tpu_custom_call.1} parent=11 // pred_check_branch
          %270 = sbr.rel (%p268) target = $region20
        $region19: #{tpu_custom_call.1} parent=11 // pred_region
          _
        $region20: #{tpu_custom_call.1} parent=11 // pred_fallthru
          _
        // Predicated region
        $region21: #{tpu_custom_call.1} parent=11 // pred_check
          %p271 = pneg %p116
        $region22: #{tpu_custom_call.1} parent=11 // pred_check_branch
          %273 = sbr.rel (%p271) target = $region24
        $region23: #{tpu_custom_call.1} parent=11 // pred_region
          _
        $region24: #{tpu_custom_call.1} parent=11 // pred_fallthru
          _
      $region12: #{tpu_custom_call.1} parent=5 // pred_fallthru
        _
      %p274 = scmp.lt.s32.totalorder %s15, 8
      // Predicated region
      $region25: #{tpu_custom_call.1} parent=5 // pred_check
        %p275 = pneg %p274
      $region26: #{tpu_custom_call.1} parent=5 // pred_check_branch
        %277 = sbr.rel (%p275) target = $region28
      $region27: #{tpu_custom_call.1} parent=5 // pred_region
        // Predicated region
        $region29: #{tpu_custom_call.1} parent=27 // pred_check
          %p278 = pneg %p47
        $region30: #{tpu_custom_call.1} parent=27 // pred_check_branch
          %280 = sbr.rel (%p278) target = $region32
        $region31: #{tpu_custom_call.1} parent=27 // pred_region
          %s281 = smul.u32 32, %s22
          %p282 = scmp.lt.s32.totalorder %s281, 63
          %s283 = scalar_select %p282, %s281, 63
          %s284 = smul.addr %s283, 8
          %s285 = scalar_lea.vmem %s0, %s284
          %s286 = smul.u32 32, %s22
        $region32: #{tpu_custom_call.1} parent=27 // pred_fallthru
          _
        // Predicated region
        $region33: #{tpu_custom_call.1} parent=27 // pred_check
          %p287 = pneg %p160
        $region34: #{tpu_custom_call.1} parent=27 // pred_check_branch
          %289 = sbr.rel (%p287) target = $region36
        $region35: #{tpu_custom_call.1} parent=27 // pred_region
          %s290 = sand.u32 %s150, 1
          %s291 = sand.u32 %s150, 1
          %s292 = smul.addr %s291, 64
          %s293 = scalar_lea.vmem [#allocation5], %s292
          %p294 = scmp.lt.s32.totalorder %s23, 0
          %s295 = ssub.s32 0, %s23
          %s296 = scalar_select %p294, %s295, %s23
          %s297 = sand.u32 %s296, 1
          %s298 = ssub.s32 0, %s297
          %s299 = scalar_select %p294, %s298, %s297
          %p300 = scmp.ne.s32.totalorder %s299, 0
          %p301 = scmp.lt.s32.totalorder %s299, 0
          %p302 = pnand %p301, %p300
          %p303 = pneg %p302
          %s304 = sadd.s32 %s299, 2
          %s305 = scalar_select %p303, %s304, %s299
          %s306 = smul.addr %s305, 4
          %s307 = scalar_lea.vmem %s4, %s306
          // Predicated region
          $region37: #{tpu_custom_call.1} parent=35 // pred_check
            _
          $region38: #{tpu_custom_call.1} parent=35 // pred_check_branch
            %309 = sbr.rel (0) target = $region40
          $region39: #{tpu_custom_call.1} parent=35 // pred_region
            // Predicated region
            $region41: #{tpu_custom_call.1} parent=39 // pred_check
              _
            $region42: #{tpu_custom_call.1} parent=39 // pred_check_branch
              %311 = sbr.rel target = $region44
            $region43: #{tpu_custom_call.1} parent=39 // pred_region
              // Predicated region
              $region56: #{tpu_custom_call.1} parent=43 // pred_check
                _
              $region57: #{tpu_custom_call.1} parent=43 // pred_check_branch
                %357 = sbr.rel (0) target = $region59
              $region58: #{tpu_custom_call.1} parent=43 // pred_region
                loop: start=0, step=1, limit=1
                $region60: #{tpu_custom_call.1} parent=58 // loop_pre_header
                  _
                $region61: #{tpu_custom_call.1} parent=58 // loop_header
                  %s359 = sphi 0, %s363
                  %p360 = scmp.ge.s32.totalorder %s359, 1
                  %s364 = sphi %s307, %s307
                  %s365 = sphi %s293, %s293
                $region62: #{tpu_custom_call.1} parent=58 // loop_header_branch
                  %362 = sbr.rel (%p360) target = $region66
                $region63: #{tpu_custom_call.1} parent=58 // loop_body
                  _
                $region64: #{tpu_custom_call.1} parent=58 // loop_footer
                  %s363 = sadd.s32 1, %s359
                $region65: #{tpu_custom_call.1} parent=58 // loop_footer_branch
                  %358 = sbr.rel target = $region61
                $region66: #{tpu_custom_call.1} parent=58 // loop_exit
                  _
                %s367 = ssub.s32 16, 1
                loop: start=0, step=1, limit=1
                $region67: #{tpu_custom_call.1} parent=58 // loop_pre_header
                  _
                $region68: #{tpu_custom_call.1} parent=58 // loop_header
                  %s369 = sphi 0, %s373
                  %p370 = scmp.ge.s32.totalorder %s369, 1
                  %s374 = sphi %s307, %s307
                  %s375 = sphi %s293, %s293
                $region69: #{tpu_custom_call.1} parent=58 // loop_header_branch
                  %372 = sbr.rel (%p370) target = $region73
                $region70: #{tpu_custom_call.1} parent=58 // loop_body
                  %v376 = vld [vmem:[%s374] sm:%s367]
                  %377 = vst [vmem:[%s375] sm:%s367] %v376
                  %v378 = vld [vmem:[%s374 + $0x8] sm:%s367]
                  %379 = vst [vmem:[%s375 + $0x4] sm:%s367] %v378
                  %v380 = vld [vmem:[%s374 + $0x10] sm:%s367]
                  %381 = vst [vmem:[%s375 + $0x8] sm:%s367] %v380
                  %v382 = vld [vmem:[%s374 + $0x18] sm:%s367]
                  %383 = vst [vmem:[%s375 + $0xc] sm:%s367] %v382
                  %v384 = vld [vmem:[%s374 + $0x20] sm:%s367]
                  %385 = vst [vmem:[%s375 + $0x10] sm:%s367] %v384
                  %v386 = vld [vmem:[%s374 + $0x28] sm:%s367]
                  %387 = vst [vmem:[%s375 + $0x14] sm:%s367] %v386
                  %v388 = vld [vmem:[%s374 + $0x30] sm:%s367]
                  %389 = vst [vmem:[%s375 + $0x18] sm:%s367] %v388
                  %v390 = vld [vmem:[%s374 + $0x38] sm:%s367]
                  %391 = vst [vmem:[%s375 + $0x1c] sm:%s367] %v390
                  %v392 = vld [vmem:[%s374 + $0x40] sm:%s367]
                  %393 = vst [vmem:[%s375 + $0x20] sm:%s367] %v392
                  %v394 = vld [vmem:[%s374 + $0x48] sm:%s367]
                  %395 = vst [vmem:[%s375 + $0x24] sm:%s367] %v394
                  %v396 = vld [vmem:[%s374 + $0x50] sm:%s367]
                  %397 = vst [vmem:[%s375 + $0x28] sm:%s367] %v396
                  %v398 = vld [vmem:[%s374 + $0x58] sm:%s367]
                  %399 = vst [vmem:[%s375 + $0x2c] sm:%s367] %v398
                  %v400 = vld [vmem:[%s374 + $0x60] sm:%s367]
                  %401 = vst [vmem:[%s375 + $0x30] sm:%s367] %v400
                  %v402 = vld [vmem:[%s374 + $0x68] sm:%s367]
                  %403 = vst [vmem:[%s375 + $0x34] sm:%s367] %v402
                  %v404 = vld [vmem:[%s374 + $0x70] sm:%s367]
                  %405 = vst [vmem:[%s375 + $0x38] sm:%s367] %v404
                  %v406 = vld [vmem:[%s374 + $0x78] sm:%s367]
                  %407 = vst [vmem:[%s375 + $0x3c] sm:%s367] %v406
                $region71: #{tpu_custom_call.1} parent=58 // loop_footer
                  %s373 = sadd.s32 1, %s369
                $region72: #{tpu_custom_call.1} parent=58 // loop_footer_branch
                  %368 = sbr.rel target = $region68
                $region73: #{tpu_custom_call.1} parent=58 // loop_exit
                  _
              $region59: #{tpu_custom_call.1} parent=43 // pred_fallthru
                _
            $region44: #{tpu_custom_call.1} parent=39 // pred_fallthru
              _
            // Predicated region
            $region45: #{tpu_custom_call.1} parent=39 // pred_check
              _
            $region46: #{tpu_custom_call.1} parent=39 // pred_check_branch
              %313 = sbr.rel (0) target = $region48
            $region47: #{tpu_custom_call.1} parent=39 // pred_region
              %s315 = ssub.s32 16, 1
              loop: start=0, step=1, limit=1
              $region49: #{tpu_custom_call.1} parent=47 // loop_pre_header
                _
              $region50: #{tpu_custom_call.1} parent=47 // loop_header
                %s317 = sphi 0, %s321
                %p318 = scmp.ge.s32.totalorder %s317, 1
                %s322 = sphi %s307, %s307
                %s323 = sphi %s293, %s293
              $region51: #{tpu_custom_call.1} parent=47 // loop_header_branch
                %320 = sbr.rel (%p318) target = $region55
              $region52: #{tpu_custom_call.1} parent=47 // loop_body
                %v324 = vld [vmem:[%s322] sm:%s315]
                %325 = vst [vmem:[%s323] sm:%s315] %v324
                %v326 = vld [vmem:[%s322 + $0x8] sm:%s315]
                %327 = vst [vmem:[%s323 + $0x4] sm:%s315] %v326
                %v328 = vld [vmem:[%s322 + $0x10] sm:%s315]
                %329 = vst [vmem:[%s323 + $0x8] sm:%s315] %v328
                %v330 = vld [vmem:[%s322 + $0x18] sm:%s315]
                %331 = vst [vmem:[%s323 + $0xc] sm:%s315] %v330
                %v332 = vld [vmem:[%s322 + $0x20] sm:%s315]
                %333 = vst [vmem:[%s323 + $0x10] sm:%s315] %v332
                %v334 = vld [vmem:[%s322 + $0x28] sm:%s315]
                %335 = vst [vmem:[%s323 + $0x14] sm:%s315] %v334
                %v336 = vld [vmem:[%s322 + $0x30] sm:%s315]
                %337 = vst [vmem:[%s323 + $0x18] sm:%s315] %v336
                %v338 = vld [vmem:[%s322 + $0x38] sm:%s315]
                %339 = vst [vmem:[%s323 + $0x1c] sm:%s315] %v338
                %v340 = vld [vmem:[%s322 + $0x40] sm:%s315]
                %341 = vst [vmem:[%s323 + $0x20] sm:%s315] %v340
                %v342 = vld [vmem:[%s322 + $0x48] sm:%s315]
                %343 = vst [vmem:[%s323 + $0x24] sm:%s315] %v342
                %v344 = vld [vmem:[%s322 + $0x50] sm:%s315]
                %345 = vst [vmem:[%s323 + $0x28] sm:%s315] %v344
                %v346 = vld [vmem:[%s322 + $0x58] sm:%s315]
                %347 = vst [vmem:[%s323 + $0x2c] sm:%s315] %v346
                %v348 = vld [vmem:[%s322 + $0x60] sm:%s315]
                %349 = vst [vmem:[%s323 + $0x30] sm:%s315] %v348
                %v350 = vld [vmem:[%s322 + $0x68] sm:%s315]
                %351 = vst [vmem:[%s323 + $0x34] sm:%s315] %v350
                %v352 = vld [vmem:[%s322 + $0x70] sm:%s315]
                %353 = vst [vmem:[%s323 + $0x38] sm:%s315] %v352
                %v354 = vld [vmem:[%s322 + $0x78] sm:%s315]
                %355 = vst [vmem:[%s323 + $0x3c] sm:%s315] %v354
              $region53: #{tpu_custom_call.1} parent=47 // loop_footer
                %s321 = sadd.s32 1, %s317
              $region54: #{tpu_custom_call.1} parent=47 // loop_footer_branch
                %316 = sbr.rel target = $region50
              $region55: #{tpu_custom_call.1} parent=47 // loop_exit
                _
            $region48: #{tpu_custom_call.1} parent=39 // pred_fallthru
              _
          $region40: #{tpu_custom_call.1} parent=35 // pred_fallthru
            _
          %408 = vnop
        $region36: #{tpu_custom_call.1} parent=27 // pred_fallthru
          _
        // Predicated region
        $region74: #{tpu_custom_call.1} parent=27 // pred_check
          %p409 = pneg %p210
        $region75: #{tpu_custom_call.1} parent=27 // pred_check_branch
          %411 = sbr.rel (%p409) target = $region77
        $region76: #{tpu_custom_call.1} parent=27 // pred_region
          %p412 = scmp.lt.s32.totalorder %s23, 0
          %s413 = ssub.s32 0, %s23
          %s414 = scalar_select %p412, %s413, %s23
          %s415 = sand.u32 %s414, 1
          %s416 = ssub.s32 0, %s415
          %s417 = scalar_select %p412, %s416, %s415
          %p418 = scmp.ne.s32.totalorder %s417, 0
          %p419 = scmp.lt.s32.totalorder %s417, 0
          %p420 = pnand %p419, %p418
          %p421 = pneg %p420
          %s422 = sadd.s32 %s417, 2
          %s423 = scalar_select %p421, %s422, %s417
          %p424 = scmp.lt.s32.totalorder %s423, 1
          %s425 = scalar_select %p424, %s423, 1
          %s426 = scalar_lea.vmem %s5, %s425
          %p427 = scmp.lt.s32.totalorder %s23, 0
          %s428 = ssub.s32 0, %s23
          %s429 = scalar_select %p427, %s428, %s23
          %s430 = sand.u32 %s429, 1
          %s431 = ssub.s32 0, %s430
          %s432 = scalar_select %p427, %s431, %s430
          %p433 = scmp.ne.s32.totalorder %s432, 0
          %p434 = scmp.lt.s32.totalorder %s432, 0
          %p435 = pnand %p434, %p433
          %p436 = pneg %p435
          %s437 = sadd.s32 %s432, 2
          %s438 = scalar_select %p436, %s437, %s432
        $region77: #{tpu_custom_call.1} parent=27 // pred_fallthru
          _
      $region28: #{tpu_custom_call.1} parent=5 // pred_fallthru
        _
      %p439 = scmp.le.s32.totalorder 1, %s15
      %p440 = scmp.lt.s32.totalorder %s15, 9
      %p441 = pnand %p439, %p440
      %p442 = pneg %p441
      // Predicated region
      $region78: #{tpu_custom_call.1} parent=5 // pred_check
        _
      $region79: #{tpu_custom_call.1} parent=5 // pred_check_branch
        %444 = sbr.rel (%p441) target = $region81
      $region80: #{tpu_custom_call.1} parent=5 // pred_region
        %s445 = ssub.s32 %s15, 1
        %s446 = sand.u32 %s153, 1
        %s447 = sand.u32 %s153, 1
        %s448 = smul.addr %s447, 64
        %s449 = scalar_lea.vmem [#allocation5], %s448
        // Predicated region
        $region82: #{tpu_custom_call.1} parent=80 // pred_check
          %p450 = pneg %p166
        $region83: #{tpu_custom_call.1} parent=80 // pred_check_branch
          %452 = sbr.rel (%p450) target = $region85
        $region84: #{tpu_custom_call.1} parent=80 // pred_region
          _
        $region85: #{tpu_custom_call.1} parent=80 // pred_fallthru
          _
        %s453 = smul.u32 32, %s24
        %p454 = scmp.lt.s32.totalorder %s453, 63
        %s455 = scalar_select %p454, %s453, 63
        %s456 = smul.addr %s455, 8
        %s457 = scalar_lea.vmem %s0, %s456
        %p458 = pneg %p53
        %p459 = pneg %p50
        %p460 = pneg %p74
        %p461 = pneg %p71
        %p462 = pneg %p95
        %p463 = pneg %p92
        %p464 = pneg %p116
        %p465 = pneg %p113
        %s466 = sand.u32 %s153, 1
        %s467 = sand.u32 %s153, 1
        %s468 = smul.addr %s467, 64
        %s469 = scalar_lea.vmem [#allocation5], %s468
        %p470 = pneg %p166
        %p471 = pneg %p163
        %p472 = scmp.lt.s32.totalorder %s25, 0
        %s473 = ssub.s32 0, %s25
        %s474 = scalar_select %p472, %s473, %s25
        %s475 = sand.u32 %s474, 1
        %s476 = ssub.s32 0, %s475
        %s477 = scalar_select %p472, %s476, %s475
        %p478 = scmp.ne.s32.totalorder %s477, 0
        %p479 = scmp.lt.s32.totalorder %s477, 0
        %p480 = pnand %p479, %p478
        %p481 = pneg %p480
        %s482 = sadd.s32 %s477, 2
        %s483 = scalar_select %p481, %s482, %s477
        %p484 = scmp.lt.s32.totalorder %s483, 1
        %s485 = scalar_select %p484, %s483, 1
        %s486 = scalar_lea.vmem %s5, %s485
        %p487 = pneg %p216
        %p488 = pneg %p213
        %p489 = pneg %p250
        %p490 = pneg %p247
        %s491 = sand.u32 %s237, 1
        %s492 = scalar_lea.sflag [#allocation7], %s491
        %s493 = sand.u32 %s237, 1
        %s494 = smul.addr %s493, 256
        %s495 = scalar_lea.vmem [#allocation6], %s494
        %s496 = smul.u32 32, %s24
        %p497 = scmp.lt.s32.totalorder %s496, 63
        %s498 = scalar_select %p497, %s496, 63
        %s499 = smul.addr %s498, 8
        %s500 = scalar_lea.vmem %s0, %s499
        %s501 = smul.u32 32, %s24
        %p502 = scmp.lt.s32.totalorder %s25, 0
        %s503 = ssub.s32 0, %s25
        %s504 = scalar_select %p502, %s503, %s25
        %s505 = sand.u32 %s504, 1
        %s506 = ssub.s32 0, %s505
        %s507 = scalar_select %p502, %s506, %s505
        %p508 = scmp.ne.s32.totalorder %s507, 0
        %p509 = scmp.lt.s32.totalorder %s507, 0
        %p510 = pnand %p509, %p508
        %p511 = pneg %p510
        %s512 = sadd.s32 %s507, 2
        %s513 = scalar_select %p511, %s512, %s507
        %p514 = scmp.lt.s32.totalorder %s25, 0
        %s515 = ssub.s32 0, %s25
        %s516 = scalar_select %p514, %s515, %s25
        %s517 = sand.u32 %s516, 1
        %s518 = ssub.s32 0, %s517
        %s519 = scalar_select %p514, %s518, %s517
        %p520 = scmp.ne.s32.totalorder %s519, 0
        %p521 = scmp.lt.s32.totalorder %s519, 0
        %p522 = pnand %p521, %p520
        %p523 = pneg %p522
        %s524 = sadd.s32 %s519, 2
        %s525 = scalar_select %p523, %s524, %s519
        %p526 = scmp.lt.s32.totalorder %s525, 1
        %s527 = scalar_select %p526, %s525, 1
        %s528 = scalar_lea.vmem %s5, %s527
        %p529 = scmp.lt.s32.totalorder %s25, 0
        %s530 = ssub.s32 0, %s25
        %s531 = scalar_select %p529, %s530, %s25
        %s532 = sand.u32 %s531, 1
        %s533 = ssub.s32 0, %s532
        %s534 = scalar_select %p529, %s533, %s532
        %p535 = scmp.ne.s32.totalorder %s534, 0
        %p536 = scmp.lt.s32.totalorder %s534, 0
        %p537 = pnand %p536, %p535
        %p538 = pneg %p537
        %s539 = sadd.s32 %s534, 2
        %s540 = scalar_select %p538, %s539, %s534
        %s541 = ssub.s32 %s25, 2
        %p542 = scmp.gt.s32.totalorder %s541, 0
        %s543 = scalar_select %p542, %s541, 0
        %s544 = smul.u32 32, %s24
        %p545 = scmp.eq.s32.totalorder %s25, 0
        // Predicated region
        $region86: #{tpu_custom_call.1} parent=80 // pred_check
          %p546 = pneg %p545
        $region87: #{tpu_custom_call.1} parent=80 // pred_check_branch
          %548 = sbr.rel (%p546) target = $region89
        $region88: #{tpu_custom_call.1} parent=80 // pred_region
          %v549 = vlaneseq
          %v550 = vand.u32 %v549, 127
          %v551 = vadd.s32 %v550, 128
          %v552 = vld [vmem:[%s500] sm:$0xff]
          %v553 = vld [vmem:[%s500 + $0x8] sm:$0xff]
          %v554 = vld [vmem:[%s500 + $0x10] sm:$0xff]
          %v555 = vld [vmem:[%s500 + $0x18] sm:$0xff]
          %v556 = vld [vmem:[%s500 + $0x20] sm:$0xff]
          %v557 = vld [vmem:[%s500 + $0x28] sm:$0xff]
          %v558 = vld [vmem:[%s500 + $0x30] sm:$0xff]
          %v559 = vld [vmem:[%s500 + $0x38] sm:$0xff]
          %v560 = vld [vmem:[%s500 + $0x40] sm:$0xff]
          %v561 = vld [vmem:[%s500 + $0x48] sm:$0xff]
          %v562 = vld [vmem:[%s500 + $0x50] sm:$0xff]
          %v563 = vld [vmem:[%s500 + $0x58] sm:$0xff]
          %v564 = vld [vmem:[%s500 + $0x60] sm:$0xff]
          %v565 = vld [vmem:[%s500 + $0x68] sm:$0xff]
          %v566 = vld [vmem:[%s500 + $0x70] sm:$0xff]
          %v567 = vld [vmem:[%s500 + $0x78] sm:$0xff]
          %v568 = vld [vmem:[%s500 + $0x80] sm:$0xff]
          %v569 = vld [vmem:[%s500 + $0x88] sm:$0xff]
          %v570 = vld [vmem:[%s500 + $0x90] sm:$0xff]
          %v571 = vld [vmem:[%s500 + $0x98] sm:$0xff]
          %v572 = vld [vmem:[%s500 + $0xa0] sm:$0xff]
          %v573 = vld [vmem:[%s500 + $0xa8] sm:$0xff]
          %v574 = vld [vmem:[%s500 + $0xb0] sm:$0xff]
          %v575 = vld [vmem:[%s500 + $0xb8] sm:$0xff]
          %v576 = vld [vmem:[%s500 + $0xc0] sm:$0xff]
          %v577 = vld [vmem:[%s500 + $0xc8] sm:$0xff]
          %v578 = vld [vmem:[%s500 + $0xd0] sm:$0xff]
          %v579 = vld [vmem:[%s500 + $0xd8] sm:$0xff]
          %v580 = vld [vmem:[%s500 + $0xe0] sm:$0xff]
          %v581 = vld [vmem:[%s500 + $0xe8] sm:$0xff]
          %v582 = vld [vmem:[%s500 + $0xf0] sm:$0xff]
          %v583 = vld [vmem:[%s500 + $0xf8] sm:$0xff]
          %584 = vset.pattern.permute.xlu0 0
          %585 = vperm.xlu0 %584, %v552
          %v586 = vpop.permute.xlu0 %585
          %587 = vset.pattern.permute.xlu0 0
          %588 = vperm.xlu0 %587, %v553
          %v589 = vpop.permute.xlu0 %588
          %590 = vset.pattern.permute.xlu0 0
          %591 = vperm.xlu0 %590, %v554
          %v592 = vpop.permute.xlu0 %591
          %593 = vset.pattern.permute.xlu0 0
          %594 = vperm.xlu0 %593, %v555
          %v595 = vpop.permute.xlu0 %594
          %596 = vset.pattern.permute.xlu0 0
          %597 = vperm.xlu0 %596, %v556
          %v598 = vpop.permute.xlu0 %597
          %599 = vset.pattern.permute.xlu0 0
          %600 = vperm.xlu0 %599, %v557
          %v601 = vpop.permute.xlu0 %600
          %602 = vset.pattern.permute.xlu0 0
          %603 = vperm.xlu0 %602, %v558
          %v604 = vpop.permute.xlu0 %603
          %605 = vset.pattern.permute.xlu0 0
          %606 = vperm.xlu0 %605, %v559
          %v607 = vpop.permute.xlu0 %606
          %608 = vset.pattern.permute.xlu0 0
          %609 = vperm.xlu0 %608, %v560
          %v610 = vpop.permute.xlu0 %609
          %611 = vset.pattern.permute.xlu0 0
          %612 = vperm.xlu0 %611, %v561
          %v613 = vpop.permute.xlu0 %612
          %614 = vset.pattern.permute.xlu0 0
          %615 = vperm.xlu0 %614, %v562
          %v616 = vpop.permute.xlu0 %615
          %617 = vset.pattern.permute.xlu0 0
          %618 = vperm.xlu0 %617, %v563
          %v619 = vpop.permute.xlu0 %618
          %620 = vset.pattern.permute.xlu0 0
          %621 = vperm.xlu0 %620, %v564
          %v622 = vpop.permute.xlu0 %621
          %623 = vset.pattern.permute.xlu0 0
          %624 = vperm.xlu0 %623, %v565
          %v625 = vpop.permute.xlu0 %624
          %626 = vset.pattern.permute.xlu0 0
          %627 = vperm.xlu0 %626, %v566
          %v628 = vpop.permute.xlu0 %627
          %629 = vset.pattern.permute.xlu0 0
          %630 = vperm.xlu0 %629, %v567
          %v631 = vpop.permute.xlu0 %630
          %632 = vset.pattern.permute.xlu0 0
          %633 = vperm.xlu0 %632, %v568
          %v634 = vpop.permute.xlu0 %633
          %635 = vset.pattern.permute.xlu0 0
          %636 = vperm.xlu0 %635, %v569
          %v637 = vpop.permute.xlu0 %636
          %638 = vset.pattern.permute.xlu0 0
          %639 = vperm.xlu0 %638, %v570
          %v640 = vpop.permute.xlu0 %639
          %641 = vset.pattern.permute.xlu0 0
          %642 = vperm.xlu0 %641, %v571
          %v643 = vpop.permute.xlu0 %642
          %644 = vset.pattern.permute.xlu0 0
          %645 = vperm.xlu0 %644, %v572
          %v646 = vpop.permute.xlu0 %645
          %647 = vset.pattern.permute.xlu0 0
          %648 = vperm.xlu0 %647, %v573
          %v649 = vpop.permute.xlu0 %648
          %650 = vset.pattern.permute.xlu0 0
          %651 = vperm.xlu0 %650, %v574
          %v652 = vpop.permute.xlu0 %651
          %653 = vset.pattern.permute.xlu0 0
          %654 = vperm.xlu0 %653, %v575
          %v655 = vpop.permute.xlu0 %654
          %656 = vset.pattern.permute.xlu0 0
          %657 = vperm.xlu0 %656, %v576
          %v658 = vpop.permute.xlu0 %657
          %659 = vset.pattern.permute.xlu0 0
          %660 = vperm.xlu0 %659, %v577
          %v661 = vpop.permute.xlu0 %660
          %662 = vset.pattern.permute.xlu0 0
          %663 = vperm.xlu0 %662, %v578
          %v664 = vpop.permute.xlu0 %663
          %665 = vset.pattern.permute.xlu0 0
          %666 = vperm.xlu0 %665, %v579
          %v667 = vpop.permute.xlu0 %666
          %668 = vset.pattern.permute.xlu0 0
          %669 = vperm.xlu0 %668, %v580
          %v670 = vpop.permute.xlu0 %669
          %671 = vset.pattern.permute.xlu0 0
          %672 = vperm.xlu0 %671, %v581
          %v673 = vpop.permute.xlu0 %672
          %674 = vset.pattern.permute.xlu0 0
          %675 = vperm.xlu0 %674, %v582
          %v676 = vpop.permute.xlu0 %675
          %677 = vset.pattern.permute.xlu0 0
          %678 = vperm.xlu0 %677, %v583
          %v679 = vpop.permute.xlu0 %678
          %vm680 = vcmp.eq.s32.totalorder %v550, %v586
          %vm681 = vcmp.eq.s32.totalorder %v551, %v586
          %vm682 = vcmp.eq.s32.totalorder %v550, %v589
          %vm683 = vcmp.eq.s32.totalorder %v551, %v589
          %vm684 = vcmp.eq.s32.totalorder %v550, %v592
          %vm685 = vcmp.eq.s32.totalorder %v551, %v592
          %vm686 = vcmp.eq.s32.totalorder %v550, %v595
          %vm687 = vcmp.eq.s32.totalorder %v551, %v595
          %vm688 = vcmp.eq.s32.totalorder %v550, %v598
          %vm689 = vcmp.eq.s32.totalorder %v551, %v598
          %vm690 = vcmp.eq.s32.totalorder %v550, %v601
          %vm691 = vcmp.eq.s32.totalorder %v551, %v601
          %vm692 = vcmp.eq.s32.totalorder %v550, %v604
          %vm693 = vcmp.eq.s32.totalorder %v551, %v604
          %vm694 = vcmp.eq.s32.totalorder %v550, %v607
          %vm695 = vcmp.eq.s32.totalorder %v551, %v607
          %vm696 = vcmp.eq.s32.totalorder %v550, %v610
          %vm697 = vcmp.eq.s32.totalorder %v551, %v610
          %vm698 = vcmp.eq.s32.totalorder %v550, %v613
          %vm699 = vcmp.eq.s32.totalorder %v551, %v613
          %vm700 = vcmp.eq.s32.totalorder %v550, %v616
          %vm701 = vcmp.eq.s32.totalorder %v551, %v616
          %vm702 = vcmp.eq.s32.totalorder %v550, %v619
          %vm703 = vcmp.eq.s32.totalorder %v551, %v619
          %vm704 = vcmp.eq.s32.totalorder %v550, %v622
          %vm705 = vcmp.eq.s32.totalorder %v551, %v622
          %vm706 = vcmp.eq.s32.totalorder %v550, %v625
          %vm707 = vcmp.eq.s32.totalorder %v551, %v625
          %vm708 = vcmp.eq.s32.totalorder %v550, %v628
          %vm709 = vcmp.eq.s32.totalorder %v551, %v628
          %vm710 = vcmp.eq.s32.totalorder %v550, %v631
          %vm711 = vcmp.eq.s32.totalorder %v551, %v631
          %vm712 = vcmp.eq.s32.totalorder %v550, %v634
          %vm713 = vcmp.eq.s32.totalorder %v551, %v634
          %vm714 = vcmp.eq.s32.totalorder %v550, %v637
          %vm715 = vcmp.eq.s32.totalorder %v551, %v637
          %vm716 = vcmp.eq.s32.totalorder %v550, %v640
          %vm717 = vcmp.eq.s32.totalorder %v551, %v640
          %vm718 = vcmp.eq.s32.totalorder %v550, %v643
          %vm719 = vcmp.eq.s32.totalorder %v551, %v643
          %vm720 = vcmp.eq.s32.totalorder %v550, %v646
          %vm721 = vcmp.eq.s32.totalorder %v551, %v646
          %vm722 = vcmp.eq.s32.totalorder %v550, %v649
          %vm723 = vcmp.eq.s32.totalorder %v551, %v649
          %vm724 = vcmp.eq.s32.totalorder %v550, %v652
          %vm725 = vcmp.eq.s32.totalorder %v551, %v652
          %vm726 = vcmp.eq.s32.totalorder %v550, %v655
          %vm727 = vcmp.eq.s32.totalorder %v551, %v655
          %vm728 = vcmp.eq.s32.totalorder %v550, %v658
          %vm729 = vcmp.eq.s32.totalorder %v551, %v658
          %vm730 = vcmp.eq.s32.totalorder %v550, %v661
          %vm731 = vcmp.eq.s32.totalorder %v551, %v661
          %vm732 = vcmp.eq.s32.totalorder %v550, %v664
          %vm733 = vcmp.eq.s32.totalorder %v551, %v664
          %vm734 = vcmp.eq.s32.totalorder %v550, %v667
          %vm735 = vcmp.eq.s32.totalorder %v551, %v667
          %vm736 = vcmp.eq.s32.totalorder %v550, %v670
          %vm737 = vcmp.eq.s32.totalorder %v551, %v670
          %vm738 = vcmp.eq.s32.totalorder %v550, %v673
          %vm739 = vcmp.eq.s32.totalorder %v551, %v673
          %vm740 = vcmp.eq.s32.totalorder %v550, %v676
          %vm741 = vcmp.eq.s32.totalorder %v551, %v676
          %vm742 = vcmp.eq.s32.totalorder %v550, %v679
          %vm743 = vcmp.eq.s32.totalorder %v551, %v679
          %v744 = vsel %vm680, 1, 0
          %v745 = vsel %vm681, 1, 0
          %v746 = vsel %vm682, 1, 0
          %v747 = vsel %vm683, 1, 0
          %v748 = vsel %vm684, 1, 0
          %v749 = vsel %vm685, 1, 0
          %v750 = vsel %vm686, 1, 0
          %v751 = vsel %vm687, 1, 0
          %v752 = vsel %vm688, 1, 0
          %v753 = vsel %vm689, 1, 0
          %v754 = vsel %vm690, 1, 0
          %v755 = vsel %vm691, 1, 0
          %v756 = vsel %vm692, 1, 0
          %v757 = vsel %vm693, 1, 0
          %v758 = vsel %vm694, 1, 0
          %v759 = vsel %vm695, 1, 0
          %v760 = vsel %vm696, 1, 0
          %v761 = vsel %vm697, 1, 0
          %v762 = vsel %vm698, 1, 0
          %v763 = vsel %vm699, 1, 0
          %v764 = vsel %vm700, 1, 0
          %v765 = vsel %vm701, 1, 0
          %v766 = vsel %vm702, 1, 0
          %v767 = vsel %vm703, 1, 0
          %v768 = vsel %vm704, 1, 0
          %v769 = vsel %vm705, 1, 0
          %v770 = vsel %vm706, 1, 0
          %v771 = vsel %vm707, 1, 0
          %v772 = vsel %vm708, 1, 0
          %v773 = vsel %vm709, 1, 0
          %v774 = vsel %vm710, 1, 0
          %v775 = vsel %vm711, 1, 0
          %v776 = vsel %vm712, 1, 0
          %v777 = vsel %vm713, 1, 0
          %v778 = vsel %vm714, 1, 0
          %v779 = vsel %vm715, 1, 0
          %v780 = vsel %vm716, 1, 0
          %v781 = vsel %vm717, 1, 0
          %v782 = vsel %vm718, 1, 0
          %v783 = vsel %vm719, 1, 0
          %v784 = vsel %vm720, 1, 0
          %v785 = vsel %vm721, 1, 0
          %v786 = vsel %vm722, 1, 0
          %v787 = vsel %vm723, 1, 0
          %v788 = vsel %vm724, 1, 0
          %v789 = vsel %vm725, 1, 0
          %v790 = vsel %vm726, 1, 0
          %v791 = vsel %vm727, 1, 0
          %v792 = vsel %vm728, 1, 0
          %v793 = vsel %vm729, 1, 0
          %v794 = vsel %vm730, 1, 0
          %v795 = vsel %vm731, 1, 0
          %v796 = vsel %vm732, 1, 0
          %v797 = vsel %vm733, 1, 0
          %v798 = vsel %vm734, 1, 0
          %v799 = vsel %vm735, 1, 0
          %v800 = vsel %vm736, 1, 0
          %v801 = vsel %vm737, 1, 0
          %v802 = vsel %vm738, 1, 0
          %v803 = vsel %vm739, 1, 0
          %v804 = vsel %vm740, 1, 0
          %v805 = vsel %vm741, 1, 0
          %v806 = vsel %vm742, 1, 0
          %v807 = vsel %vm743, 1, 0
          %v808 = vcvt.s32.f32 %v744
          %v809 = vcvt.s32.f32 %v745
          %v810 = vcvt.s32.f32 %v746
          %v811 = vcvt.s32.f32 %v747
          %v812 = vcvt.s32.f32 %v748
          %v813 = vcvt.s32.f32 %v749
          %v814 = vcvt.s32.f32 %v750
          %v815 = vcvt.s32.f32 %v751
          %v816 = vcvt.s32.f32 %v752
          %v817 = vcvt.s32.f32 %v753
          %v818 = vcvt.s32.f32 %v754
          %v819 = vcvt.s32.f32 %v755
          %v820 = vcvt.s32.f32 %v756
          %v821 = vcvt.s32.f32 %v757
          %v822 = vcvt.s32.f32 %v758
          %v823 = vcvt.s32.f32 %v759
          %v824 = vcvt.s32.f32 %v760
          %v825 = vcvt.s32.f32 %v761
          %v826 = vcvt.s32.f32 %v762
          %v827 = vcvt.s32.f32 %v763
          %v828 = vcvt.s32.f32 %v764
          %v829 = vcvt.s32.f32 %v765
          %v830 = vcvt.s32.f32 %v766
          %v831 = vcvt.s32.f32 %v767
          %v832 = vcvt.s32.f32 %v768
          %v833 = vcvt.s32.f32 %v769
          %v834 = vcvt.s32.f32 %v770
          %v835 = vcvt.s32.f32 %v771
          %v836 = vcvt.s32.f32 %v772
          %v837 = vcvt.s32.f32 %v773
          %v838 = vcvt.s32.f32 %v774
          %v839 = vcvt.s32.f32 %v775
          %v840 = vcvt.s32.f32 %v776
          %v841 = vcvt.s32.f32 %v777
          %v842 = vcvt.s32.f32 %v778
          %v843 = vcvt.s32.f32 %v779
          %v844 = vcvt.s32.f32 %v780
          %v845 = vcvt.s32.f32 %v781
          %v846 = vcvt.s32.f32 %v782
          %v847 = vcvt.s32.f32 %v783
          %v848 = vcvt.s32.f32 %v784
          %v849 = vcvt.s32.f32 %v785
          %v850 = vcvt.s32.f32 %v786
          %v851 = vcvt.s32.f32 %v787
          %v852 = vcvt.s32.f32 %v788
          %v853 = vcvt.s32.f32 %v789
          %v854 = vcvt.s32.f32 %v790
          %v855 = vcvt.s32.f32 %v791
          %v856 = vcvt.s32.f32 %v792
          %v857 = vcvt.s32.f32 %v793
          %v858 = vcvt.s32.f32 %v794
          %v859 = vcvt.s32.f32 %v795
          %v860 = vcvt.s32.f32 %v796
          %v861 = vcvt.s32.f32 %v797
          %v862 = vcvt.s32.f32 %v798
          %v863 = vcvt.s32.f32 %v799
          %v864 = vcvt.s32.f32 %v800
          %v865 = vcvt.s32.f32 %v801
          %v866 = vcvt.s32.f32 %v802
          %v867 = vcvt.s32.f32 %v803
          %v868 = vcvt.s32.f32 %v804
          %v869 = vcvt.s32.f32 %v805
          %v870 = vcvt.s32.f32 %v806
          %v871 = vcvt.s32.f32 %v807
          %v872 = vpack.c.bf16 %v810, %v808
          %v873 = vpack.c.bf16 %v811, %v809
          %v874 = vpack.c.bf16 %v814, %v812
          %v875 = vpack.c.bf16 %v815, %v813
          %v876 = vpack.c.bf16 %v818, %v816
          %v877 = vpack.c.bf16 %v819, %v817
          %v878 = vpack.c.bf16 %v822, %v820
          %v879 = vpack.c.bf16 %v823, %v821
          %v880 = vpack.c.bf16 %v826, %v824
          %v881 = vpack.c.bf16 %v827, %v825
          %v882 = vpack.c.bf16 %v830, %v828
          %v883 = vpack.c.bf16 %v831, %v829
          %v884 = vpack.c.bf16 %v834, %v832
          %v885 = vpack.c.bf16 %v835, %v833
          %v886 = vpack.c.bf16 %v838, %v836
          %v887 = vpack.c.bf16 %v839, %v837
          %v888 = vpack.c.bf16 %v842, %v840
          %v889 = vpack.c.bf16 %v843, %v841
          %v890 = vpack.c.bf16 %v846, %v844
          %v891 = vpack.c.bf16 %v847, %v845
          %v892 = vpack.c.bf16 %v850, %v848
          %v893 = vpack.c.bf16 %v851, %v849
          %v894 = vpack.c.bf16 %v854, %v852
          %v895 = vpack.c.bf16 %v855, %v853
          %v896 = vpack.c.bf16 %v858, %v856
          %v897 = vpack.c.bf16 %v859, %v857
          %v898 = vpack.c.bf16 %v862, %v860
          %v899 = vpack.c.bf16 %v863, %v861
          %v900 = vpack.c.bf16 %v866, %v864
          %v901 = vpack.c.bf16 %v867, %v865
          %v902 = vpack.c.bf16 %v870, %v868
          %v903 = vpack.c.bf16 %v871, %v869
          %v904 = vld [vmem:[%s1] sm:$0xf]
          %v905 = vld [vmem:[%s1 + $0x4] sm:$0xf]
          %v906 = vld [vmem:[%s1 + $0x8] sm:$0xf]
          %v907 = vld [vmem:[%s1 + $0xc] sm:$0xf]
          %v908 = vld [vmem:[%s1 + $0x10] sm:$0xf]
          %v909 = vld [vmem:[%s1 + $0x14] sm:$0xf]
          %v910 = vld [vmem:[%s1 + $0x18] sm:$0xf]
          %v911 = vld [vmem:[%s1 + $0x1c] sm:$0xf]
          %v912 = vld [vmem:[%s1 + $0x20] sm:$0xf]
          %v913 = vld [vmem:[%s1 + $0x24] sm:$0xf]
          %v914 = vld [vmem:[%s1 + $0x28] sm:$0xf]
          %v915 = vld [vmem:[%s1 + $0x2c] sm:$0xf]
          %v916 = vld [vmem:[%s1 + $0x30] sm:$0xf]
          %v917 = vld [vmem:[%s1 + $0x34] sm:$0xf]
          %v918 = vld [vmem:[%s1 + $0x38] sm:$0xf]
          %v919 = vld [vmem:[%s1 + $0x3c] sm:$0xf]
          %v920 = vld [vmem:[%s1 + $0x40] sm:$0xf]
          %v921 = vld [vmem:[%s1 + $0x44] sm:$0xf]
          %v922 = vld [vmem:[%s1 + $0x48] sm:$0xf]
          %v923 = vld [vmem:[%s1 + $0x4c] sm:$0xf]
          %v924 = vld [vmem:[%s1 + $0x50] sm:$0xf]
          %v925 = vld [vmem:[%s1 + $0x54] sm:$0xf]
          %v926 = vld [vmem:[%s1 + $0x58] sm:$0xf]
          %v927 = vld [vmem:[%s1 + $0x5c] sm:$0xf]
          %v928 = vld [vmem:[%s1 + $0x60] sm:$0xf]
          %v929 = vld [vmem:[%s1 + $0x64] sm:$0xf]
          %v930 = vld [vmem:[%s1 + $0x68] sm:$0xf]
          %v931 = vld [vmem:[%s1 + $0x6c] sm:$0xf]
          %v932 = vld [vmem:[%s1 + $0x70] sm:$0xf]
          %v933 = vld [vmem:[%s1 + $0x74] sm:$0xf]
          %v934 = vld [vmem:[%s1 + $0x78] sm:$0xf]
          %v935 = vld [vmem:[%s1 + $0x7c] sm:$0xf]
          %v968 = vunpack.c.l.b16 %v904
          %v969 = vunpack.c.l.b16 %v905
          %v970 = vunpack.c.l.b16 %v906
          %v971 = vunpack.c.l.b16 %v907
          %v972 = vunpack.c.l.b16 %v908
          %v973 = vunpack.c.l.b16 %v909
          %v974 = vunpack.c.l.b16 %v910
          %v975 = vunpack.c.l.b16 %v911
          %v976 = vunpack.c.l.b16 %v912
          %v977 = vunpack.c.l.b16 %v913
          %v978 = vunpack.c.l.b16 %v914
          %v979 = vunpack.c.l.b16 %v915
          %v980 = vunpack.c.l.b16 %v916
          %v981 = vunpack.c.l.b16 %v917
          %v982 = vunpack.c.l.b16 %v918
          %v983 = vunpack.c.l.b16 %v919
          %v984 = vunpack.c.l.b16 %v920
          %v985 = vunpack.c.l.b16 %v921
          %v986 = vunpack.c.l.b16 %v922
          %v987 = vunpack.c.l.b16 %v923
          %v988 = vunpack.c.l.b16 %v924
          %v989 = vunpack.c.l.b16 %v925
          %v990 = vunpack.c.l.b16 %v926
          %v991 = vunpack.c.l.b16 %v927
          %v992 = vunpack.c.l.b16 %v928
          %v993 = vunpack.c.l.b16 %v929
          %v994 = vunpack.c.l.b16 %v930
          %v995 = vunpack.c.l.b16 %v931
          %v996 = vunpack.c.l.b16 %v932
          %v997 = vunpack.c.l.b16 %v933
          %v998 = vunpack.c.l.b16 %v934
          %v999 = vunpack.c.l.b16 %v935
          %v1000 = vpack.c.b16 %v969, %v968
          %v1001 = vpack.c.b16 %v971, %v970
          %v1002 = vpack.c.b16 %v973, %v972
          %v1003 = vpack.c.b16 %v975, %v974
          %v1004 = vpack.c.b16 %v977, %v976
          %v1005 = vpack.c.b16 %v979, %v978
          %v1006 = vpack.c.b16 %v981, %v980
          %v1007 = vpack.c.b16 %v983, %v982
          %v1008 = vpack.c.b16 %v985, %v984
          %v1009 = vpack.c.b16 %v987, %v986
          %v1010 = vpack.c.b16 %v989, %v988
          %v1011 = vpack.c.b16 %v991, %v990
          %v1012 = vpack.c.b16 %v993, %v992
          %v1013 = vpack.c.b16 %v995, %v994
          %v1014 = vpack.c.b16 %v997, %v996
          %v1015 = vpack.c.b16 %v999, %v998
          %1032 = vmatpush.bf16.msra.mxu0 %v1007
          %1033 = vmatpush.bf16.msra.mxu0 %v1006
          %1034 = vmatpush.bf16.msra.mxu0 %v1005
          %1035 = vmatpush.bf16.msra.mxu0 %v1004
          %1036 = vmatpush.bf16.msra.mxu0 %v1003
          %1037 = vmatpush.bf16.msra.mxu0 %v1002
          %1038 = vmatpush.bf16.msra.mxu0 %v1001
          %1039 = vmatpush.bf16.msra.mxu0 %v1000
          %1040 = vmatmul.bf16.gmra.mxu0 %v872
          %v1041 = vpop.f32.mrf.mxu0
          %v1042 = vadd.f32 0.0, %v1041
          %v1043 = vpop.f32.mrf.mxu0
          %v1044 = vadd.f32 0.0, %v1043
          %1045 = vmatmul.bf16.gmra.mxu0 %v874
          %v1046 = vpop.f32.mrf.mxu0
          %v1047 = vadd.f32 0.0, %v1046
          %v1048 = vpop.f32.mrf.mxu0
          %v1049 = vadd.f32 0.0, %v1048
          %1050 = vmatmul.bf16.gmra.mxu0 %v876
          %v1051 = vpop.f32.mrf.mxu0
          %v1052 = vadd.f32 0.0, %v1051
          %v1053 = vpop.f32.mrf.mxu0
          %v1054 = vadd.f32 0.0, %v1053
          %1055 = vmatmul.bf16.gmra.mxu0 %v878
          %v1056 = vpop.f32.mrf.mxu0
          %v1057 = vadd.f32 0.0, %v1056
          %v1058 = vpop.f32.mrf.mxu0
          %v1059 = vadd.f32 0.0, %v1058
          %1060 = vmatmul.bf16.gmra.mxu0 %v880
          %v1061 = vpop.f32.mrf.mxu0
          %v1062 = vadd.f32 0.0, %v1061
          %v1063 = vpop.f32.mrf.mxu0
          %v1064 = vadd.f32 0.0, %v1063
          %1065 = vmatmul.bf16.gmra.mxu0 %v882
          %v1066 = vpop.f32.mrf.mxu0
          %v1067 = vadd.f32 0.0, %v1066
          %v1068 = vpop.f32.mrf.mxu0
          %v1069 = vadd.f32 0.0, %v1068
          %1070 = vmatmul.bf16.gmra.mxu0 %v884
          %v1071 = vpop.f32.mrf.mxu0
          %v1072 = vadd.f32 0.0, %v1071
          %v1073 = vpop.f32.mrf.mxu0
          %v1074 = vadd.f32 0.0, %v1073
          %1075 = vmatmul.bf16.gmra.mxu0 %v886
          %v1076 = vpop.f32.mrf.mxu0
          %v1077 = vadd.f32 0.0, %v1076
          %v1078 = vpop.f32.mrf.mxu0
          %v1079 = vadd.f32 0.0, %v1078
          %1080 = vmatmul.bf16.gmra.mxu0 %v888
          %v1081 = vpop.f32.mrf.mxu0
          %v1082 = vadd.f32 0.0, %v1081
          %v1083 = vpop.f32.mrf.mxu0
          %v1084 = vadd.f32 0.0, %v1083
          %1085 = vmatmul.bf16.gmra.mxu0 %v890
          %v1086 = vpop.f32.mrf.mxu0
          %v1087 = vadd.f32 0.0, %v1086
          %v1088 = vpop.f32.mrf.mxu0
          %v1089 = vadd.f32 0.0, %v1088
          %1090 = vmatmul.bf16.gmra.mxu0 %v892
          %v1091 = vpop.f32.mrf.mxu0
          %v1092 = vadd.f32 0.0, %v1091
          %v1093 = vpop.f32.mrf.mxu0
          %v1094 = vadd.f32 0.0, %v1093
          %1095 = vmatmul.bf16.gmra.mxu0 %v894
          %v1096 = vpop.f32.mrf.mxu0
          %v1097 = vadd.f32 0.0, %v1096
          %v1098 = vpop.f32.mrf.mxu0
          %v1099 = vadd.f32 0.0, %v1098
          %1100 = vmatmul.bf16.gmra.mxu0 %v896
          %v1101 = vpop.f32.mrf.mxu0
          %v1102 = vadd.f32 0.0, %v1101
          %v1103 = vpop.f32.mrf.mxu0
          %v1104 = vadd.f32 0.0, %v1103
          %1105 = vmatmul.bf16.gmra.mxu0 %v898
          %v1106 = vpop.f32.mrf.mxu0
          %v1107 = vadd.f32 0.0, %v1106
          %v1108 = vpop.f32.mrf.mxu0
          %v1109 = vadd.f32 0.0, %v1108
          %1110 = vmatmul.bf16.gmra.mxu0 %v900
          %v1111 = vpop.f32.mrf.mxu0
          %v1112 = vadd.f32 0.0, %v1111
          %v1113 = vpop.f32.mrf.mxu0
          %v1114 = vadd.f32 0.0, %v1113
          %1115 = vmatmul.bf16.gmra.mxu0 %v902
          %v1116 = vpop.f32.mrf.mxu0
          %v1117 = vadd.f32 0.0, %v1116
          %v1118 = vpop.f32.mrf.mxu0
          %v1119 = vadd.f32 0.0, %v1118
          %1120 = vdwg.mxu0
          %1121 = vmatpush.bf16.msra.mxu0 %v1015
          %1122 = vmatpush.bf16.msra.mxu0 %v1014
          %1123 = vmatpush.bf16.msra.mxu0 %v1013
          %1124 = vmatpush.bf16.msra.mxu0 %v1012
          %1125 = vmatpush.bf16.msra.mxu0 %v1011
          %1126 = vmatpush.bf16.msra.mxu0 %v1010
          %1127 = vmatpush.bf16.msra.mxu0 %v1009
          %1128 = vmatpush.bf16.msra.mxu0 %v1008
          %1129 = vmatmul.bf16.gmra.mxu0 %v873
          %v1130 = vpop.f32.mrf.mxu0
          %v1131 = vadd.f32 %v1042, %v1130
          %v1132 = vpop.f32.mrf.mxu0
          %v1133 = vadd.f32 %v1044, %v1132
          %1134 = vmatmul.bf16.gmra.mxu0 %v875
          %v1135 = vpop.f32.mrf.mxu0
          %v1136 = vadd.f32 %v1047, %v1135
          %v1137 = vpop.f32.mrf.mxu0
          %v1138 = vadd.f32 %v1049, %v1137
          %1139 = vmatmul.bf16.gmra.mxu0 %v877
          %v1140 = vpop.f32.mrf.mxu0
          %v1141 = vadd.f32 %v1052, %v1140
          %v1142 = vpop.f32.mrf.mxu0
          %v1143 = vadd.f32 %v1054, %v1142
          %1144 = vmatmul.bf16.gmra.mxu0 %v879
          %v1145 = vpop.f32.mrf.mxu0
          %v1146 = vadd.f32 %v1057, %v1145
          %v1147 = vpop.f32.mrf.mxu0
          %v1148 = vadd.f32 %v1059, %v1147
          %1149 = vmatmul.bf16.gmra.mxu0 %v881
          %v1150 = vpop.f32.mrf.mxu0
          %v1151 = vadd.f32 %v1062, %v1150
          %v1152 = vpop.f32.mrf.mxu0
          %v1153 = vadd.f32 %v1064, %v1152
          %1154 = vmatmul.bf16.gmra.mxu0 %v883
          %v1155 = vpop.f32.mrf.mxu0
          %v1156 = vadd.f32 %v1067, %v1155
          %v1157 = vpop.f32.mrf.mxu0
          %v1158 = vadd.f32 %v1069, %v1157
          %1159 = vmatmul.bf16.gmra.mxu0 %v885
          %v1160 = vpop.f32.mrf.mxu0
          %v1161 = vadd.f32 %v1072, %v1160
          %v1162 = vpop.f32.mrf.mxu0
          %v1163 = vadd.f32 %v1074, %v1162
          %1164 = vmatmul.bf16.gmra.mxu0 %v887
          %v1165 = vpop.f32.mrf.mxu0
          %v1166 = vadd.f32 %v1077, %v1165
          %v1167 = vpop.f32.mrf.mxu0
          %v1168 = vadd.f32 %v1079, %v1167
          %1169 = vmatmul.bf16.gmra.mxu0 %v889
          %v1170 = vpop.f32.mrf.mxu0
          %v1171 = vadd.f32 %v1082, %v1170
          %v1172 = vpop.f32.mrf.mxu0
          %v1173 = vadd.f32 %v1084, %v1172
          %1174 = vmatmul.bf16.gmra.mxu0 %v891
          %v1175 = vpop.f32.mrf.mxu0
          %v1176 = vadd.f32 %v1087, %v1175
          %v1177 = vpop.f32.mrf.mxu0
          %v1178 = vadd.f32 %v1089, %v1177
          %1179 = vmatmul.bf16.gmra.mxu0 %v893
          %v1180 = vpop.f32.mrf.mxu0
          %v1181 = vadd.f32 %v1092, %v1180
          %v1182 = vpop.f32.mrf.mxu0
          %v1183 = vadd.f32 %v1094, %v1182
          %1184 = vmatmul.bf16.gmra.mxu0 %v895
          %v1185 = vpop.f32.mrf.mxu0
          %v1186 = vadd.f32 %v1097, %v1185
          %v1187 = vpop.f32.mrf.mxu0
          %v1188 = vadd.f32 %v1099, %v1187
          %1189 = vmatmul.bf16.gmra.mxu0 %v897
          %v1190 = vpop.f32.mrf.mxu0
          %v1191 = vadd.f32 %v1102, %v1190
          %v1192 = vpop.f32.mrf.mxu0
          %v1193 = vadd.f32 %v1104, %v1192
          %1194 = vmatmul.bf16.gmra.mxu0 %v899
          %v1195 = vpop.f32.mrf.mxu0
          %v1196 = vadd.f32 %v1107, %v1195
          %v1197 = vpop.f32.mrf.mxu0
          %v1198 = vadd.f32 %v1109, %v1197
          %1199 = vmatmul.bf16.gmra.mxu0 %v901
          %v1200 = vpop.f32.mrf.mxu0
          %v1201 = vadd.f32 %v1112, %v1200
          %v1202 = vpop.f32.mrf.mxu0
          %v1203 = vadd.f32 %v1114, %v1202
          %1204 = vmatmul.bf16.gmra.mxu0 %v903
          %v1205 = vpop.f32.mrf.mxu0
          %v1206 = vadd.f32 %v1117, %v1205
          %v1207 = vpop.f32.mrf.mxu0
          %v1208 = vadd.f32 %v1119, %v1207
          %1209 = vdwg.mxu0
          %v1210 = vpack.c.bf16 %v1133, %v1131
          %v1211 = vpack.c.bf16 %v1138, %v1136
          %v1212 = vpack.c.bf16 %v1143, %v1141
          %v1213 = vpack.c.bf16 %v1148, %v1146
          %v1214 = vpack.c.bf16 %v1153, %v1151
          %v1215 = vpack.c.bf16 %v1158, %v1156
          %v1216 = vpack.c.bf16 %v1163, %v1161
          %v1217 = vpack.c.bf16 %v1168, %v1166
          %v1218 = vpack.c.bf16 %v1173, %v1171
          %v1219 = vpack.c.bf16 %v1178, %v1176
          %v1220 = vpack.c.bf16 %v1183, %v1181
          %v1221 = vpack.c.bf16 %v1188, %v1186
          %v1222 = vpack.c.bf16 %v1193, %v1191
          %v1223 = vpack.c.bf16 %v1198, %v1196
          %v1224 = vpack.c.bf16 %v1203, %v1201
          %v1225 = vpack.c.bf16 %v1208, %v1206
          %v1226 = vld [vmem:[%s2] sm:$0xf]
          %v1227 = vld [vmem:[%s2 + $0x4] sm:$0xf]
          %v1228 = vld [vmem:[%s2 + $0x8] sm:$0xf]
          %v1229 = vld [vmem:[%s2 + $0xc] sm:$0xf]
          %v1230 = vld [vmem:[%s2 + $0x10] sm:$0xf]
          %v1231 = vld [vmem:[%s2 + $0x14] sm:$0xf]
          %v1232 = vld [vmem:[%s2 + $0x18] sm:$0xf]
          %v1233 = vld [vmem:[%s2 + $0x1c] sm:$0xf]
          %v1234 = vld [vmem:[%s2 + $0x20] sm:$0xf]
          %v1235 = vld [vmem:[%s2 + $0x24] sm:$0xf]
          %v1236 = vld [vmem:[%s2 + $0x28] sm:$0xf]
          %v1237 = vld [vmem:[%s2 + $0x2c] sm:$0xf]
          %v1238 = vld [vmem:[%s2 + $0x30] sm:$0xf]
          %v1239 = vld [vmem:[%s2 + $0x34] sm:$0xf]
          %v1240 = vld [vmem:[%s2 + $0x38] sm:$0xf]
          %v1241 = vld [vmem:[%s2 + $0x3c] sm:$0xf]
          %v1242 = vld [vmem:[%s3] sm:$0x1]
          %v1244 = vperm.slane %v1242, 0
          %v1262 = vunpack.c.l.b16 %v1226
          %v1263 = vunpack.c.l.b16 %v1227
          %v1264 = vunpack.c.l.b16 %v1228
          %v1265 = vunpack.c.l.b16 %v1229
          %v1266 = vunpack.c.l.b16 %v1230
          %v1267 = vunpack.c.l.b16 %v1231
          %v1268 = vunpack.c.l.b16 %v1232
          %v1269 = vunpack.c.l.b16 %v1233
          %v1270 = vunpack.c.l.b16 %v1234
          %v1271 = vunpack.c.l.b16 %v1235
          %v1272 = vunpack.c.l.b16 %v1236
          %v1273 = vunpack.c.l.b16 %v1237
          %v1274 = vunpack.c.l.b16 %v1238
          %v1275 = vunpack.c.l.b16 %v1239
          %v1276 = vunpack.c.l.b16 %v1240
          %v1277 = vunpack.c.l.b16 %v1241
          %v1278 = vpack.c.b16 %v1263, %v1262
          %v1279 = vpack.c.b16 %v1265, %v1264
          %v1280 = vpack.c.b16 %v1267, %v1266
          %v1281 = vpack.c.b16 %v1269, %v1268
          %v1282 = vpack.c.b16 %v1271, %v1270
          %v1283 = vpack.c.b16 %v1273, %v1272
          %v1284 = vpack.c.b16 %v1275, %v1274
          %v1285 = vpack.c.b16 %v1277, %v1276
          %1294 = vmatpush.bf16.msra.mxu0 %v1285
          %1295 = vmatpush.bf16.msra.mxu0 %v1284
          %1296 = vmatpush.bf16.msra.mxu0 %v1283
          %1297 = vmatpush.bf16.msra.mxu0 %v1282
          %1298 = vmatpush.bf16.msra.mxu0 %v1281
          %1299 = vmatpush.bf16.msra.mxu0 %v1280
          %1300 = vmatpush.bf16.msra.mxu0 %v1279
          %1301 = vmatpush.bf16.msra.mxu0 %v1278
          %1302 = vmatmul.bf16.gmra.mxu0 %v1210
          %v1303 = vpop.f32.mrf.mxu0
          %v1304 = vadd.f32 %v1244, %v1303
          %v1305 = vpop.f32.mrf.mxu0
          %v1306 = vadd.f32 %v1244, %v1305
          %1307 = vmatmul.bf16.gmra.mxu0 %v1211
          %v1308 = vpop.f32.mrf.mxu0
          %v1309 = vadd.f32 %v1244, %v1308
          %v1310 = vpop.f32.mrf.mxu0
          %v1311 = vadd.f32 %v1244, %v1310
          %1312 = vmatmul.bf16.gmra.mxu0 %v1212
          %v1313 = vpop.f32.mrf.mxu0
          %v1314 = vadd.f32 %v1244, %v1313
          %v1315 = vpop.f32.mrf.mxu0
          %v1316 = vadd.f32 %v1244, %v1315
          %1317 = vmatmul.bf16.gmra.mxu0 %v1213
          %v1318 = vpop.f32.mrf.mxu0
          %v1319 = vadd.f32 %v1244, %v1318
          %v1320 = vpop.f32.mrf.mxu0
          %v1321 = vadd.f32 %v1244, %v1320
          %1322 = vmatmul.bf16.gmra.mxu0 %v1214
          %v1323 = vpop.f32.mrf.mxu0
          %v1324 = vadd.f32 %v1244, %v1323
          %v1325 = vpop.f32.mrf.mxu0
          %v1326 = vadd.f32 %v1244, %v1325
          %1327 = vmatmul.bf16.gmra.mxu0 %v1215
          %v1328 = vpop.f32.mrf.mxu0
          %v1329 = vadd.f32 %v1244, %v1328
          %v1330 = vpop.f32.mrf.mxu0
          %v1331 = vadd.f32 %v1244, %v1330
          %1332 = vmatmul.bf16.gmra.mxu0 %v1216
          %v1333 = vpop.f32.mrf.mxu0
          %v1334 = vadd.f32 %v1244, %v1333
          %v1335 = vpop.f32.mrf.mxu0
          %v1336 = vadd.f32 %v1244, %v1335
          %1337 = vmatmul.bf16.gmra.mxu0 %v1217
          %v1338 = vpop.f32.mrf.mxu0
          %v1339 = vadd.f32 %v1244, %v1338
          %v1340 = vpop.f32.mrf.mxu0
          %v1341 = vadd.f32 %v1244, %v1340
          %1342 = vmatmul.bf16.gmra.mxu0 %v1218
          %v1343 = vpop.f32.mrf.mxu0
          %v1344 = vadd.f32 %v1244, %v1343
          %v1345 = vpop.f32.mrf.mxu0
          %v1346 = vadd.f32 %v1244, %v1345
          %1347 = vmatmul.bf16.gmra.mxu0 %v1219
          %v1348 = vpop.f32.mrf.mxu0
          %v1349 = vadd.f32 %v1244, %v1348
          %v1350 = vpop.f32.mrf.mxu0
          %v1351 = vadd.f32 %v1244, %v1350
          %1352 = vmatmul.bf16.gmra.mxu0 %v1220
          %v1353 = vpop.f32.mrf.mxu0
          %v1354 = vadd.f32 %v1244, %v1353
          %v1355 = vpop.f32.mrf.mxu0
          %v1356 = vadd.f32 %v1244, %v1355
          %1357 = vmatmul.bf16.gmra.mxu0 %v1221
          %v1358 = vpop.f32.mrf.mxu0
          %v1359 = vadd.f32 %v1244, %v1358
          %v1360 = vpop.f32.mrf.mxu0
          %v1361 = vadd.f32 %v1244, %v1360
          %1362 = vmatmul.bf16.gmra.mxu0 %v1222
          %v1363 = vpop.f32.mrf.mxu0
          %v1364 = vadd.f32 %v1244, %v1363
          %v1365 = vpop.f32.mrf.mxu0
          %v1366 = vadd.f32 %v1244, %v1365
          %1367 = vmatmul.bf16.gmra.mxu0 %v1223
          %v1368 = vpop.f32.mrf.mxu0
          %v1369 = vadd.f32 %v1244, %v1368
          %v1370 = vpop.f32.mrf.mxu0
          %v1371 = vadd.f32 %v1244, %v1370
          %1372 = vmatmul.bf16.gmra.mxu0 %v1224
          %v1373 = vpop.f32.mrf.mxu0
          %v1374 = vadd.f32 %v1244, %v1373
          %v1375 = vpop.f32.mrf.mxu0
          %v1376 = vadd.f32 %v1244, %v1375
          %1377 = vmatmul.bf16.gmra.mxu0 %v1225
          %v1378 = vpop.f32.mrf.mxu0
          %v1379 = vadd.f32 %v1244, %v1378
          %v1380 = vpop.f32.mrf.mxu0
          %v1381 = vadd.f32 %v1244, %v1380
          %1382 = vdwg.mxu0
          %v1383 = vmax.f32 %v1304, 0.0
          %v1384 = vmax.f32 %v1306, 0.0
          %v1385 = vmax.f32 %v1309, 0.0
          %v1386 = vmax.f32 %v1311, 0.0
          %v1387 = vmax.f32 %v1314, 0.0
          %v1388 = vmax.f32 %v1316, 0.0
          %v1389 = vmax.f32 %v1319, 0.0
          %v1390 = vmax.f32 %v1321, 0.0
          %v1391 = vmax.f32 %v1324, 0.0
          %v1392 = vmax.f32 %v1326, 0.0
          %v1393 = vmax.f32 %v1329, 0.0
          %v1394 = vmax.f32 %v1331, 0.0
          %v1395 = vmax.f32 %v1334, 0.0
          %v1396 = vmax.f32 %v1336, 0.0
          %v1397 = vmax.f32 %v1339, 0.0
          %v1398 = vmax.f32 %v1341, 0.0
          %v1399 = vmax.f32 %v1344, 0.0
          %v1400 = vmax.f32 %v1346, 0.0
          %v1401 = vmax.f32 %v1349, 0.0
          %v1402 = vmax.f32 %v1351, 0.0
          %v1403 = vmax.f32 %v1354, 0.0
          %v1404 = vmax.f32 %v1356, 0.0
          %v1405 = vmax.f32 %v1359, 0.0
          %v1406 = vmax.f32 %v1361, 0.0
          %v1407 = vmax.f32 %v1364, 0.0
          %v1408 = vmax.f32 %v1366, 0.0
          %v1409 = vmax.f32 %v1369, 0.0
          %v1410 = vmax.f32 %v1371, 0.0
          %v1411 = vmax.f32 %v1374, 0.0
          %v1412 = vmax.f32 %v1376, 0.0
          %v1413 = vmax.f32 %v1379, 0.0
          %v1414 = vmax.f32 %v1381, 0.0
          %v1415 = vpack.c.bf16 %v1383, %v1383
          %v1416 = vpack.c.bf16 %v1384, %v1384
          %v1417 = vpack.c.bf16 %v1385, %v1385
          %v1418 = vpack.c.bf16 %v1386, %v1386
          %v1419 = vpack.c.bf16 %v1387, %v1387
          %v1420 = vpack.c.bf16 %v1388, %v1388
          %v1421 = vpack.c.bf16 %v1389, %v1389
          %v1422 = vpack.c.bf16 %v1390, %v1390
          %v1423 = vpack.c.bf16 %v1391, %v1391
          %v1424 = vpack.c.bf16 %v1392, %v1392
          %v1425 = vpack.c.bf16 %v1393, %v1393
          %v1426 = vpack.c.bf16 %v1394, %v1394
          %v1427 = vpack.c.bf16 %v1395, %v1395
          %v1428 = vpack.c.bf16 %v1396, %v1396
          %v1429 = vpack.c.bf16 %v1397, %v1397
          %v1430 = vpack.c.bf16 %v1398, %v1398
          %v1431 = vpack.c.bf16 %v1399, %v1399
          %v1432 = vpack.c.bf16 %v1400, %v1400
          %v1433 = vpack.c.bf16 %v1401, %v1401
          %v1434 = vpack.c.bf16 %v1402, %v1402
          %v1435 = vpack.c.bf16 %v1403, %v1403
          %v1436 = vpack.c.bf16 %v1404, %v1404
          %v1437 = vpack.c.bf16 %v1405, %v1405
          %v1438 = vpack.c.bf16 %v1406, %v1406
          %v1439 = vpack.c.bf16 %v1407, %v1407
          %v1440 = vpack.c.bf16 %v1408, %v1408
          %v1441 = vpack.c.bf16 %v1409, %v1409
          %v1442 = vpack.c.bf16 %v1410, %v1410
          %v1443 = vpack.c.bf16 %v1411, %v1411
          %v1444 = vpack.c.bf16 %v1412, %v1412
          %v1445 = vpack.c.bf16 %v1413, %v1413
          %v1446 = vpack.c.bf16 %v1414, %v1414
          %1447 = vst [vmem:[#allocation2] sm:$0xf] %v1415
          %1448 = vst [vmem:[#allocation2 + $0x4] sm:$0xf] %v1416
          %1449 = vst [vmem:[#allocation2 + $0x8] sm:$0xf] %v1417
          %1450 = vst [vmem:[#allocation2 + $0xc] sm:$0xf] %v1418
          %1451 = vst [vmem:[#allocation2 + $0x10] sm:$0xf] %v1419
          %1452 = vst [vmem:[#allocation2 + $0x14] sm:$0xf] %v1420
          %1453 = vst [vmem:[#allocation2 + $0x18] sm:$0xf] %v1421
          %1454 = vst [vmem:[#allocation2 + $0x1c] sm:$0xf] %v1422
          %1455 = vst [vmem:[#allocation2 + $0x20] sm:$0xf] %v1423
          %1456 = vst [vmem:[#allocation2 + $0x24] sm:$0xf] %v1424
          %1457 = vst [vmem:[#allocation2 + $0x28] sm:$0xf] %v1425
          %1458 = vst [vmem:[#allocation2 + $0x2c] sm:$0xf] %v1426
          %1459 = vst [vmem:[#allocation2 + $0x30] sm:$0xf] %v1427
          %1460 = vst [vmem:[#allocation2 + $0x34] sm:$0xf] %v1428
          %1461 = vst [vmem:[#allocation2 + $0x38] sm:$0xf] %v1429
          %1462 = vst [vmem:[#allocation2 + $0x3c] sm:$0xf] %v1430
          %1463 = vst [vmem:[#allocation2 + $0x40] sm:$0xf] %v1431
          %1464 = vst [vmem:[#allocation2 + $0x44] sm:$0xf] %v1432
          %1465 = vst [vmem:[#allocation2 + $0x48] sm:$0xf] %v1433
          %1466 = vst [vmem:[#allocation2 + $0x4c] sm:$0xf] %v1434
          %1467 = vst [vmem:[#allocation2 + $0x50] sm:$0xf] %v1435
          %1468 = vst [vmem:[#allocation2 + $0x54] sm:$0xf] %v1436
          %1469 = vst [vmem:[#allocation2 + $0x58] sm:$0xf] %v1437
          %1470 = vst [vmem:[#allocation2 + $0x5c] sm:$0xf] %v1438
          %1471 = vst [vmem:[#allocation2 + $0x60] sm:$0xf] %v1439
          %1472 = vst [vmem:[#allocation2 + $0x64] sm:$0xf] %v1440
          %1473 = vst [vmem:[#allocation2 + $0x68] sm:$0xf] %v1441
          %1474 = vst [vmem:[#allocation2 + $0x6c] sm:$0xf] %v1442
          %1475 = vst [vmem:[#allocation2 + $0x70] sm:$0xf] %v1443
          %1476 = vst [vmem:[#allocation2 + $0x74] sm:$0xf] %v1444
          %1477 = vst [vmem:[#allocation2 + $0x78] sm:$0xf] %v1445
          %1478 = vst [vmem:[#allocation2 + $0x7c] sm:$0xf] %v1446
          %vm1479 = vcmask 7168
          %1480 = vst.msk [vmem:[#allocation3] sm:$0xff] %vm1479, -inf
          %1481 = vst.msk [vmem:[#allocation3 + $0x8] sm:$0xff] %vm1479, -inf
          %1482 = vst.msk [vmem:[#allocation3 + $0x10] sm:$0xff] %vm1479, -inf
          %1483 = vst.msk [vmem:[#allocation3 + $0x18] sm:$0xff] %vm1479, -inf
          %1484 = vst.msk [vmem:[#allocation3 + $0x20] sm:$0xff] %vm1479, -inf
          %1485 = vst.msk [vmem:[#allocation3 + $0x28] sm:$0xff] %vm1479, -inf
          %1486 = vst.msk [vmem:[#allocation3 + $0x30] sm:$0xff] %vm1479, -inf
          %1487 = vst.msk [vmem:[#allocation3 + $0x38] sm:$0xff] %vm1479, -inf
          %1488 = vst.msk [vmem:[#allocation3 + $0x40] sm:$0xff] %vm1479, -inf
          %1489 = vst.msk [vmem:[#allocation3 + $0x48] sm:$0xff] %vm1479, -inf
          %1490 = vst.msk [vmem:[#allocation3 + $0x50] sm:$0xff] %vm1479, -inf
          %1491 = vst.msk [vmem:[#allocation3 + $0x58] sm:$0xff] %vm1479, -inf
          %1492 = vst.msk [vmem:[#allocation3 + $0x60] sm:$0xff] %vm1479, -inf
          %1493 = vst.msk [vmem:[#allocation3 + $0x68] sm:$0xff] %vm1479, -inf
          %1494 = vst.msk [vmem:[#allocation3 + $0x70] sm:$0xff] %vm1479, -inf
          %1495 = vst.msk [vmem:[#allocation3 + $0x78] sm:$0xff] %vm1479, -inf
          %1496 = vst.msk [vmem:[#allocation3 + $0x80] sm:$0xff] %vm1479, -inf
          %1497 = vst.msk [vmem:[#allocation3 + $0x88] sm:$0xff] %vm1479, -inf
          %1498 = vst.msk [vmem:[#allocation3 + $0x90] sm:$0xff] %vm1479, -inf
          %1499 = vst.msk [vmem:[#allocation3 + $0x98] sm:$0xff] %vm1479, -inf
          %1500 = vst.msk [vmem:[#allocation3 + $0xa0] sm:$0xff] %vm1479, -inf
          %1501 = vst.msk [vmem:[#allocation3 + $0xa8] sm:$0xff] %vm1479, -inf
          %1502 = vst.msk [vmem:[#allocation3 + $0xb0] sm:$0xff] %vm1479, -inf
          %1503 = vst.msk [vmem:[#allocation3 + $0xb8] sm:$0xff] %vm1479, -inf
          %1504 = vst.msk [vmem:[#allocation3 + $0xc0] sm:$0xff] %vm1479, -inf
          %1505 = vst.msk [vmem:[#allocation3 + $0xc8] sm:$0xff] %vm1479, -inf
          %1506 = vst.msk [vmem:[#allocation3 + $0xd0] sm:$0xff] %vm1479, -inf
          %1507 = vst.msk [vmem:[#allocation3 + $0xd8] sm:$0xff] %vm1479, -inf
          %1508 = vst.msk [vmem:[#allocation3 + $0xe0] sm:$0xff] %vm1479, -inf
          %1509 = vst.msk [vmem:[#allocation3 + $0xe8] sm:$0xff] %vm1479, -inf
          %1510 = vst.msk [vmem:[#allocation3 + $0xf0] sm:$0xff] %vm1479, -inf
          %1511 = vst.msk [vmem:[#allocation3 + $0xf8] sm:$0xff] %vm1479, -inf
          %1512 = vst.msk [vmem:[#allocation4] sm:$0xff] %vm1479, 0.0
          %1513 = vst.msk [vmem:[#allocation4 + $0x8] sm:$0xff] %vm1479, 0.0
          %1514 = vst.msk [vmem:[#allocation4 + $0x10] sm:$0xff] %vm1479, 0.0
          %1515 = vst.msk [vmem:[#allocation4 + $0x18] sm:$0xff] %vm1479, 0.0
          %1516 = vst.msk [vmem:[#allocation4 + $0x20] sm:$0xff] %vm1479, 0.0
          %1517 = vst.msk [vmem:[#allocation4 + $0x28] sm:$0xff] %vm1479, 0.0
          %1518 = vst.msk [vmem:[#allocation4 + $0x30] sm:$0xff] %vm1479, 0.0
          %1519 = vst.msk [vmem:[#allocation4 + $0x38] sm:$0xff] %vm1479, 0.0
          %1520 = vst.msk [vmem:[#allocation4 + $0x40] sm:$0xff] %vm1479, 0.0
          %1521 = vst.msk [vmem:[#allocation4 + $0x48] sm:$0xff] %vm1479, 0.0
          %1522 = vst.msk [vmem:[#allocation4 + $0x50] sm:$0xff] %vm1479, 0.0
          %1523 = vst.msk [vmem:[#allocation4 + $0x58] sm:$0xff] %vm1479, 0.0
          %1524 = vst.msk [vmem:[#allocation4 + $0x60] sm:$0xff] %vm1479, 0.0
          %1525 = vst.msk [vmem:[#allocation4 + $0x68] sm:$0xff] %vm1479, 0.0
          %1526 = vst.msk [vmem:[#allocation4 + $0x70] sm:$0xff] %vm1479, 0.0
          %1527 = vst.msk [vmem:[#allocation4 + $0x78] sm:$0xff] %vm1479, 0.0
          %1528 = vst.msk [vmem:[#allocation4 + $0x80] sm:$0xff] %vm1479, 0.0
          %1529 = vst.msk [vmem:[#allocation4 + $0x88] sm:$0xff] %vm1479, 0.0
          %1530 = vst.msk [vmem:[#allocation4 + $0x90] sm:$0xff] %vm1479, 0.0
          %1531 = vst.msk [vmem:[#allocation4 + $0x98] sm:$0xff] %vm1479, 0.0
          %1532 = vst.msk [vmem:[#allocation4 + $0xa0] sm:$0xff] %vm1479, 0.0
          %1533 = vst.msk [vmem:[#allocation4 + $0xa8] sm:$0xff] %vm1479, 0.0
          %1534 = vst.msk [vmem:[#allocation4 + $0xb0] sm:$0xff] %vm1479, 0.0
          %1535 = vst.msk [vmem:[#allocation4 + $0xb8] sm:$0xff] %vm1479, 0.0
          %1536 = vst.msk [vmem:[#allocation4 + $0xc0] sm:$0xff] %vm1479, 0.0
          %1537 = vst.msk [vmem:[#allocation4 + $0xc8] sm:$0xff] %vm1479, 0.0
          %1538 = vst.msk [vmem:[#allocation4 + $0xd0] sm:$0xff] %vm1479, 0.0
          %1539 = vst.msk [vmem:[#allocation4 + $0xd8] sm:$0xff] %vm1479, 0.0
          %1540 = vst.msk [vmem:[#allocation4 + $0xe0] sm:$0xff] %vm1479, 0.0
          %1541 = vst.msk [vmem:[#allocation4 + $0xe8] sm:$0xff] %vm1479, 0.0
          %1542 = vst.msk [vmem:[#allocation4 + $0xf0] sm:$0xff] %vm1479, 0.0
          %1543 = vst.msk [vmem:[#allocation4 + $0xf8] sm:$0xff] %vm1479, 0.0
        $region89: #{tpu_custom_call.1} parent=80 // pred_fallthru
          _
        %v1544 = vld [vmem:[#allocation2] sm:$0xf]
        %v1545 = vld [vmem:[#allocation2 + $0x4] sm:$0xf]
        %v1546 = vld [vmem:[#allocation2 + $0x8] sm:$0xf]
        %v1547 = vld [vmem:[#allocation2 + $0xc] sm:$0xf]
        %v1548 = vld [vmem:[#allocation2 + $0x10] sm:$0xf]
        %v1549 = vld [vmem:[#allocation2 + $0x14] sm:$0xf]
        %v1550 = vld [vmem:[#allocation2 + $0x18] sm:$0xf]
        %v1551 = vld [vmem:[#allocation2 + $0x1c] sm:$0xf]
        %v1552 = vld [vmem:[#allocation2 + $0x20] sm:$0xf]
        %v1553 = vld [vmem:[#allocation2 + $0x24] sm:$0xf]
        %v1554 = vld [vmem:[#allocation2 + $0x28] sm:$0xf]
        %v1555 = vld [vmem:[#allocation2 + $0x2c] sm:$0xf]
        %v1556 = vld [vmem:[#allocation2 + $0x30] sm:$0xf]
        %v1557 = vld [vmem:[#allocation2 + $0x34] sm:$0xf]
        %v1558 = vld [vmem:[#allocation2 + $0x38] sm:$0xf]
        %v1559 = vld [vmem:[#allocation2 + $0x3c] sm:$0xf]
        %v1560 = vld [vmem:[#allocation2 + $0x40] sm:$0xf]
        %v1561 = vld [vmem:[#allocation2 + $0x44] sm:$0xf]
        %v1562 = vld [vmem:[#allocation2 + $0x48] sm:$0xf]
        %v1563 = vld [vmem:[#allocation2 + $0x4c] sm:$0xf]
        %v1564 = vld [vmem:[#allocation2 + $0x50] sm:$0xf]
        %v1565 = vld [vmem:[#allocation2 + $0x54] sm:$0xf]
        %v1566 = vld [vmem:[#allocation2 + $0x58] sm:$0xf]
        %v1567 = vld [vmem:[#allocation2 + $0x5c] sm:$0xf]
        %v1568 = vld [vmem:[#allocation2 + $0x60] sm:$0xf]
        %v1569 = vld [vmem:[#allocation2 + $0x64] sm:$0xf]
        %v1570 = vld [vmem:[#allocation2 + $0x68] sm:$0xf]
        %v1571 = vld [vmem:[#allocation2 + $0x6c] sm:$0xf]
        %v1572 = vld [vmem:[#allocation2 + $0x70] sm:$0xf]
        %v1573 = vld [vmem:[#allocation2 + $0x74] sm:$0xf]
        %v1574 = vld [vmem:[#allocation2 + $0x78] sm:$0xf]
        %v1575 = vld [vmem:[#allocation2 + $0x7c] sm:$0xf]
        %v1576 = vld [vmem:[%s449] sm:$0xf]
        %v1577 = vld [vmem:[%s449 + $0x4] sm:$0xf]
        %v1578 = vld [vmem:[%s449 + $0x8] sm:$0xf]
        %v1579 = vld [vmem:[%s449 + $0xc] sm:$0xf]
        %v1580 = vld [vmem:[%s449 + $0x10] sm:$0xf]
        %v1581 = vld [vmem:[%s449 + $0x14] sm:$0xf]
        %v1582 = vld [vmem:[%s449 + $0x18] sm:$0xf]
        %v1583 = vld [vmem:[%s449 + $0x1c] sm:$0xf]
        %v1584 = vld [vmem:[%s449 + $0x20] sm:$0xf]
        %v1585 = vld [vmem:[%s449 + $0x24] sm:$0xf]
        %v1586 = vld [vmem:[%s449 + $0x28] sm:$0xf]
        %v1587 = vld [vmem:[%s449 + $0x2c] sm:$0xf]
        %v1588 = vld [vmem:[%s449 + $0x30] sm:$0xf]
        %v1589 = vld [vmem:[%s449 + $0x34] sm:$0xf]
        %v1590 = vld [vmem:[%s449 + $0x38] sm:$0xf]
        %v1591 = vld [vmem:[%s449 + $0x3c] sm:$0xf]
        %v1592 = vld [vmem:[%s528] sm:$0x1]
        %v1594 = vperm.slane %v1592, 0
        %v1628 = vunpack.c.l.b16 %v1544
        %v1629 = vunpack.c.l.b16 %v1545
        %v1630 = vunpack.c.l.b16 %v1546
        %v1631 = vunpack.c.l.b16 %v1547
        %v1632 = vunpack.c.l.b16 %v1548
        %v1633 = vunpack.c.l.b16 %v1549
        %v1634 = vunpack.c.l.b16 %v1550
        %v1635 = vunpack.c.l.b16 %v1551
        %v1636 = vunpack.c.l.b16 %v1552
        %v1637 = vunpack.c.l.b16 %v1553
        %v1638 = vunpack.c.l.b16 %v1554
        %v1639 = vunpack.c.l.b16 %v1555
        %v1640 = vunpack.c.l.b16 %v1556
        %v1641 = vunpack.c.l.b16 %v1557
        %v1642 = vunpack.c.l.b16 %v1558
        %v1643 = vunpack.c.l.b16 %v1559
        %v1644 = vunpack.c.l.b16 %v1560
        %v1645 = vunpack.c.l.b16 %v1561
        %v1646 = vunpack.c.l.b16 %v1562
        %v1647 = vunpack.c.l.b16 %v1563
        %v1648 = vunpack.c.l.b16 %v1564
        %v1649 = vunpack.c.l.b16 %v1565
        %v1650 = vunpack.c.l.b16 %v1566
        %v1651 = vunpack.c.l.b16 %v1567
        %v1652 = vunpack.c.l.b16 %v1568
        %v1653 = vunpack.c.l.b16 %v1569
        %v1654 = vunpack.c.l.b16 %v1570
        %v1655 = vunpack.c.l.b16 %v1571
        %v1656 = vunpack.c.l.b16 %v1572
        %v1657 = vunpack.c.l.b16 %v1573
        %v1658 = vunpack.c.l.b16 %v1574
        %v1659 = vunpack.c.l.b16 %v1575
        %v1660 = vpack.c.b16 %v1629, %v1628
        %v1661 = vpack.c.b16 %v1631, %v1630
        %v1662 = vpack.c.b16 %v1633, %v1632
        %v1663 = vpack.c.b16 %v1635, %v1634
        %v1664 = vpack.c.b16 %v1637, %v1636
        %v1665 = vpack.c.b16 %v1639, %v1638
        %v1666 = vpack.c.b16 %v1641, %v1640
        %v1667 = vpack.c.b16 %v1643, %v1642
        %v1668 = vpack.c.b16 %v1645, %v1644
        %v1669 = vpack.c.b16 %v1647, %v1646
        %v1670 = vpack.c.b16 %v1649, %v1648
        %v1671 = vpack.c.b16 %v1651, %v1650
        %v1672 = vpack.c.b16 %v1653, %v1652
        %v1673 = vpack.c.b16 %v1655, %v1654
        %v1674 = vpack.c.b16 %v1657, %v1656
        %v1675 = vpack.c.b16 %v1659, %v1658
        %v1708 = vunpack.c.l.b16 %v1576
        %v1709 = vunpack.c.l.b16 %v1577
        %v1710 = vunpack.c.l.b16 %v1578
        %v1711 = vunpack.c.l.b16 %v1579
        %v1712 = vunpack.c.l.b16 %v1580
        %v1713 = vunpack.c.l.b16 %v1581
        %v1714 = vunpack.c.l.b16 %v1582
        %v1715 = vunpack.c.l.b16 %v1583
        %v1716 = vunpack.c.l.b16 %v1584
        %v1717 = vunpack.c.l.b16 %v1585
        %v1718 = vunpack.c.l.b16 %v1586
        %v1719 = vunpack.c.l.b16 %v1587
        %v1720 = vunpack.c.l.b16 %v1588
        %v1721 = vunpack.c.l.b16 %v1589
        %v1722 = vunpack.c.l.b16 %v1590
        %v1723 = vunpack.c.l.b16 %v1591
        %v1724 = vpack.c.b16 %v1709, %v1708
        %v1725 = vpack.c.b16 %v1711, %v1710
        %v1726 = vpack.c.b16 %v1713, %v1712
        %v1727 = vpack.c.b16 %v1715, %v1714
        %v1728 = vpack.c.b16 %v1717, %v1716
        %v1729 = vpack.c.b16 %v1719, %v1718
        %v1730 = vpack.c.b16 %v1721, %v1720
        %v1731 = vpack.c.b16 %v1723, %v1722
        %1740 = vmatpush.bf16.msra.mxu0 %v1731
        %1741 = vmatpush.bf16.msra.mxu0 %v1730
        %1742 = vmatpush.bf16.msra.mxu0 %v1729
        %1743 = vmatpush.bf16.msra.mxu0 %v1728
        %1744 = vmatpush.bf16.msra.mxu0 %v1727
        %1745 = vmatpush.bf16.msra.mxu0 %v1726
        %1746 = vmatpush.bf16.msra.mxu0 %v1725
        %1747 = vmatpush.bf16.msra.mxu0 %v1724
        %1748 = vmatmul.bf16.gmra.mxu0 %v1660
        %v1749 = vpop.f32.mrf.mxu0
        %v1750 = vadd.f32 %v1594, %v1749
        %v1751 = vpop.f32.mrf.mxu0
        %v1752 = vadd.f32 %v1594, %v1751
        %1753 = vmatmul.bf16.gmra.mxu0 %v1661
        %v1754 = vpop.f32.mrf.mxu0
        %v1755 = vadd.f32 %v1594, %v1754
        %v1756 = vpop.f32.mrf.mxu0
        %v1757 = vadd.f32 %v1594, %v1756
        %1758 = vmatmul.bf16.gmra.mxu0 %v1662
        %v1759 = vpop.f32.mrf.mxu0
        %v1760 = vadd.f32 %v1594, %v1759
        %v1761 = vpop.f32.mrf.mxu0
        %v1762 = vadd.f32 %v1594, %v1761
        %1763 = vmatmul.bf16.gmra.mxu0 %v1663
        %v1764 = vpop.f32.mrf.mxu0
        %v1765 = vadd.f32 %v1594, %v1764
        %v1766 = vpop.f32.mrf.mxu0
        %v1767 = vadd.f32 %v1594, %v1766
        %1768 = vmatmul.bf16.gmra.mxu0 %v1664
        %v1769 = vpop.f32.mrf.mxu0
        %v1770 = vadd.f32 %v1594, %v1769
        %v1771 = vpop.f32.mrf.mxu0
        %v1772 = vadd.f32 %v1594, %v1771
        %1773 = vmatmul.bf16.gmra.mxu0 %v1665
        %v1774 = vpop.f32.mrf.mxu0
        %v1775 = vadd.f32 %v1594, %v1774
        %v1776 = vpop.f32.mrf.mxu0
        %v1777 = vadd.f32 %v1594, %v1776
        %1778 = vmatmul.bf16.gmra.mxu0 %v1666
        %v1779 = vpop.f32.mrf.mxu0
        %v1780 = vadd.f32 %v1594, %v1779
        %v1781 = vpop.f32.mrf.mxu0
        %v1782 = vadd.f32 %v1594, %v1781
        %1783 = vmatmul.bf16.gmra.mxu0 %v1667
        %v1784 = vpop.f32.mrf.mxu0
        %v1785 = vadd.f32 %v1594, %v1784
        %v1786 = vpop.f32.mrf.mxu0
        %v1787 = vadd.f32 %v1594, %v1786
        %1788 = vmatmul.bf16.gmra.mxu0 %v1668
        %v1789 = vpop.f32.mrf.mxu0
        %v1790 = vadd.f32 %v1594, %v1789
        %v1791 = vpop.f32.mrf.mxu0
        %v1792 = vadd.f32 %v1594, %v1791
        %1793 = vmatmul.bf16.gmra.mxu0 %v1669
        %v1794 = vpop.f32.mrf.mxu0
        %v1795 = vadd.f32 %v1594, %v1794
        %v1796 = vpop.f32.mrf.mxu0
        %v1797 = vadd.f32 %v1594, %v1796
        %1798 = vmatmul.bf16.gmra.mxu0 %v1670
        %v1799 = vpop.f32.mrf.mxu0
        %v1800 = vadd.f32 %v1594, %v1799
        %v1801 = vpop.f32.mrf.mxu0
        %v1802 = vadd.f32 %v1594, %v1801
        %1803 = vmatmul.bf16.gmra.mxu0 %v1671
        %v1804 = vpop.f32.mrf.mxu0
        %v1805 = vadd.f32 %v1594, %v1804
        %v1806 = vpop.f32.mrf.mxu0
        %v1807 = vadd.f32 %v1594, %v1806
        %1808 = vmatmul.bf16.gmra.mxu0 %v1672
        %v1809 = vpop.f32.mrf.mxu0
        %v1810 = vadd.f32 %v1594, %v1809
        %v1811 = vpop.f32.mrf.mxu0
        %v1812 = vadd.f32 %v1594, %v1811
        %1813 = vmatmul.bf16.gmra.mxu0 %v1673
        %v1814 = vpop.f32.mrf.mxu0
        %v1815 = vadd.f32 %v1594, %v1814
        %v1816 = vpop.f32.mrf.mxu0
        %v1817 = vadd.f32 %v1594, %v1816
        %1818 = vmatmul.bf16.gmra.mxu0 %v1674
        %v1819 = vpop.f32.mrf.mxu0
        %v1820 = vadd.f32 %v1594, %v1819
        %v1821 = vpop.f32.mrf.mxu0
        %v1822 = vadd.f32 %v1594, %v1821
        %1823 = vmatmul.bf16.gmra.mxu0 %v1675
        %v1824 = vpop.f32.mrf.mxu0
        %v1825 = vadd.f32 %v1594, %v1824
        %v1826 = vpop.f32.mrf.mxu0
        %v1827 = vadd.f32 %v1594, %v1826
        %1828 = vdwg.mxu0
        %p1829 = scmp.lt.s32.totalorder %s25, 2
        // Predicated region
        $region90: #{tpu_custom_call.1} parent=80 // pred_check
          %p1830 = pneg %p1829
        $region91: #{tpu_custom_call.1} parent=80 // pred_check_branch
          %1832 = sbr.rel (%p1830) target = $region93
        $region92: #{tpu_custom_call.1} parent=80 // pred_region
          %v1833 = vld [vmem:[#allocation3] sm:$0xff]
          %v1834 = vld [vmem:[#allocation3 + $0x8] sm:$0xff]
          %v1835 = vld [vmem:[#allocation3 + $0x10] sm:$0xff]
          %v1836 = vld [vmem:[#allocation3 + $0x18] sm:$0xff]
          %v1837 = vld [vmem:[#allocation3 + $0x20] sm:$0xff]
          %v1838 = vld [vmem:[#allocation3 + $0x28] sm:$0xff]
          %v1839 = vld [vmem:[#allocation3 + $0x30] sm:$0xff]
          %v1840 = vld [vmem:[#allocation3 + $0x38] sm:$0xff]
          %v1841 = vld [vmem:[#allocation3 + $0x40] sm:$0xff]
          %v1842 = vld [vmem:[#allocation3 + $0x48] sm:$0xff]
          %v1843 = vld [vmem:[#allocation3 + $0x50] sm:$0xff]
          %v1844 = vld [vmem:[#allocation3 + $0x58] sm:$0xff]
          %v1845 = vld [vmem:[#allocation3 + $0x60] sm:$0xff]
          %v1846 = vld [vmem:[#allocation3 + $0x68] sm:$0xff]
          %v1847 = vld [vmem:[#allocation3 + $0x70] sm:$0xff]
          %v1848 = vld [vmem:[#allocation3 + $0x78] sm:$0xff]
          %v1849 = vld [vmem:[#allocation3 + $0x80] sm:$0xff]
          %v1850 = vld [vmem:[#allocation3 + $0x88] sm:$0xff]
          %v1851 = vld [vmem:[#allocation3 + $0x90] sm:$0xff]
          %v1852 = vld [vmem:[#allocation3 + $0x98] sm:$0xff]
          %v1853 = vld [vmem:[#allocation3 + $0xa0] sm:$0xff]
          %v1854 = vld [vmem:[#allocation3 + $0xa8] sm:$0xff]
          %v1855 = vld [vmem:[#allocation3 + $0xb0] sm:$0xff]
          %v1856 = vld [vmem:[#allocation3 + $0xb8] sm:$0xff]
          %v1857 = vld [vmem:[#allocation3 + $0xc0] sm:$0xff]
          %v1858 = vld [vmem:[#allocation3 + $0xc8] sm:$0xff]
          %v1859 = vld [vmem:[#allocation3 + $0xd0] sm:$0xff]
          %v1860 = vld [vmem:[#allocation3 + $0xd8] sm:$0xff]
          %v1861 = vld [vmem:[#allocation3 + $0xe0] sm:$0xff]
          %v1862 = vld [vmem:[#allocation3 + $0xe8] sm:$0xff]
          %v1863 = vld [vmem:[#allocation3 + $0xf0] sm:$0xff]
          %v1864 = vld [vmem:[#allocation3 + $0xf8] sm:$0xff]
          %1865 = vmax.xlane.f32.xlu0 %v1750
          %v1866 = vpop.xlane.xlu0 %1865
          %1867 = vmax.xlane.f32.xlu0 %v1752
          %v1868 = vpop.xlane.xlu0 %1867
          %1869 = vmax.xlane.f32.xlu0 %v1755
          %v1870 = vpop.xlane.xlu0 %1869
          %1871 = vmax.xlane.f32.xlu0 %v1757
          %v1872 = vpop.xlane.xlu0 %1871
          %1873 = vmax.xlane.f32.xlu0 %v1760
          %v1874 = vpop.xlane.xlu0 %1873
          %1875 = vmax.xlane.f32.xlu0 %v1762
          %v1876 = vpop.xlane.xlu0 %1875
          %1877 = vmax.xlane.f32.xlu0 %v1765
          %v1878 = vpop.xlane.xlu0 %1877
          %1879 = vmax.xlane.f32.xlu0 %v1767
          %v1880 = vpop.xlane.xlu0 %1879
          %1881 = vmax.xlane.f32.xlu0 %v1770
          %v1882 = vpop.xlane.xlu0 %1881
          %1883 = vmax.xlane.f32.xlu0 %v1772
          %v1884 = vpop.xlane.xlu0 %1883
          %1885 = vmax.xlane.f32.xlu0 %v1775
          %v1886 = vpop.xlane.xlu0 %1885
          %1887 = vmax.xlane.f32.xlu0 %v1777
          %v1888 = vpop.xlane.xlu0 %1887
          %1889 = vmax.xlane.f32.xlu0 %v1780
          %v1890 = vpop.xlane.xlu0 %1889
          %1891 = vmax.xlane.f32.xlu0 %v1782
          %v1892 = vpop.xlane.xlu0 %1891
          %1893 = vmax.xlane.f32.xlu0 %v1785
          %v1894 = vpop.xlane.xlu0 %1893
          %1895 = vmax.xlane.f32.xlu0 %v1787
          %v1896 = vpop.xlane.xlu0 %1895
          %1897 = vmax.xlane.f32.xlu0 %v1790
          %v1898 = vpop.xlane.xlu0 %1897
          %1899 = vmax.xlane.f32.xlu0 %v1792
          %v1900 = vpop.xlane.xlu0 %1899
          %1901 = vmax.xlane.f32.xlu0 %v1795
          %v1902 = vpop.xlane.xlu0 %1901
          %1903 = vmax.xlane.f32.xlu0 %v1797
          %v1904 = vpop.xlane.xlu0 %1903
          %1905 = vmax.xlane.f32.xlu0 %v1800
          %v1906 = vpop.xlane.xlu0 %1905
          %1907 = vmax.xlane.f32.xlu0 %v1802
          %v1908 = vpop.xlane.xlu0 %1907
          %1909 = vmax.xlane.f32.xlu0 %v1805
          %v1910 = vpop.xlane.xlu0 %1909
          %1911 = vmax.xlane.f32.xlu0 %v1807
          %v1912 = vpop.xlane.xlu0 %1911
          %1913 = vmax.xlane.f32.xlu0 %v1810
          %v1914 = vpop.xlane.xlu0 %1913
          %1915 = vmax.xlane.f32.xlu0 %v1812
          %v1916 = vpop.xlane.xlu0 %1915
          %1917 = vmax.xlane.f32.xlu0 %v1815
          %v1918 = vpop.xlane.xlu0 %1917
          %1919 = vmax.xlane.f32.xlu0 %v1817
          %v1920 = vpop.xlane.xlu0 %1919
          %1921 = vmax.xlane.f32.xlu0 %v1820
          %v1922 = vpop.xlane.xlu0 %1921
          %1923 = vmax.xlane.f32.xlu0 %v1822
          %v1924 = vpop.xlane.xlu0 %1923
          %1925 = vmax.xlane.f32.xlu0 %v1825
          %v1926 = vpop.xlane.xlu0 %1925
          %1927 = vmax.xlane.f32.xlu0 %v1827
          %v1928 = vpop.xlane.xlu0 %1927
          %v1929 = vmax.f32 %v1833, %v1866
          %v1930 = vmax.f32 %v1834, %v1868
          %v1931 = vmax.f32 %v1835, %v1870
          %v1932 = vmax.f32 %v1836, %v1872
          %v1933 = vmax.f32 %v1837, %v1874
          %v1934 = vmax.f32 %v1838, %v1876
          %v1935 = vmax.f32 %v1839, %v1878
          %v1936 = vmax.f32 %v1840, %v1880
          %v1937 = vmax.f32 %v1841, %v1882
          %v1938 = vmax.f32 %v1842, %v1884
          %v1939 = vmax.f32 %v1843, %v1886
          %v1940 = vmax.f32 %v1844, %v1888
          %v1941 = vmax.f32 %v1845, %v1890
          %v1942 = vmax.f32 %v1846, %v1892
          %v1943 = vmax.f32 %v1847, %v1894
          %v1944 = vmax.f32 %v1848, %v1896
          %v1945 = vmax.f32 %v1849, %v1898
          %v1946 = vmax.f32 %v1850, %v1900
          %v1947 = vmax.f32 %v1851, %v1902
          %v1948 = vmax.f32 %v1852, %v1904
          %v1949 = vmax.f32 %v1853, %v1906
          %v1950 = vmax.f32 %v1854, %v1908
          %v1951 = vmax.f32 %v1855, %v1910
          %v1952 = vmax.f32 %v1856, %v1912
          %v1953 = vmax.f32 %v1857, %v1914
          %v1954 = vmax.f32 %v1858, %v1916
          %v1955 = vmax.f32 %v1859, %v1918
          %v1956 = vmax.f32 %v1860, %v1920
          %v1957 = vmax.f32 %v1861, %v1922
          %v1958 = vmax.f32 %v1862, %v1924
          %v1959 = vmax.f32 %v1863, %v1926
          %v1960 = vmax.f32 %v1864, %v1928
          %1962 = vset.pattern.permute.xlu0 0
          %1963 = vperm.xlu0 %1962, %v1929
          %v1964 = vpop.permute.xlu0 %1963
          %1967 = vset.pattern.permute.xlu0 0
          %1968 = vperm.xlu0 %1967, %v1930
          %v1969 = vpop.permute.xlu0 %1968
          %1972 = vset.pattern.permute.xlu0 0
          %1973 = vperm.xlu0 %1972, %v1931
          %v1974 = vpop.permute.xlu0 %1973
          %1977 = vset.pattern.permute.xlu0 0
          %1978 = vperm.xlu0 %1977, %v1932
          %v1979 = vpop.permute.xlu0 %1978
          %1982 = vset.pattern.permute.xlu0 0
          %1983 = vperm.xlu0 %1982, %v1933
          %v1984 = vpop.permute.xlu0 %1983
          %1987 = vset.pattern.permute.xlu0 0
          %1988 = vperm.xlu0 %1987, %v1934
          %v1989 = vpop.permute.xlu0 %1988
          %1992 = vset.pattern.permute.xlu0 0
          %1993 = vperm.xlu0 %1992, %v1935
          %v1994 = vpop.permute.xlu0 %1993
          %1997 = vset.pattern.permute.xlu0 0
          %1998 = vperm.xlu0 %1997, %v1936
          %v1999 = vpop.permute.xlu0 %1998
          %2002 = vset.pattern.permute.xlu0 0
          %2003 = vperm.xlu0 %2002, %v1937
          %v2004 = vpop.permute.xlu0 %2003
          %2007 = vset.pattern.permute.xlu0 0
          %2008 = vperm.xlu0 %2007, %v1938
          %v2009 = vpop.permute.xlu0 %2008
          %2012 = vset.pattern.permute.xlu0 0
          %2013 = vperm.xlu0 %2012, %v1939
          %v2014 = vpop.permute.xlu0 %2013
          %2017 = vset.pattern.permute.xlu0 0
          %2018 = vperm.xlu0 %2017, %v1940
          %v2019 = vpop.permute.xlu0 %2018
          %2022 = vset.pattern.permute.xlu0 0
          %2023 = vperm.xlu0 %2022, %v1941
          %v2024 = vpop.permute.xlu0 %2023
          %2027 = vset.pattern.permute.xlu0 0
          %2028 = vperm.xlu0 %2027, %v1942
          %v2029 = vpop.permute.xlu0 %2028
          %2032 = vset.pattern.permute.xlu0 0
          %2033 = vperm.xlu0 %2032, %v1943
          %v2034 = vpop.permute.xlu0 %2033
          %2037 = vset.pattern.permute.xlu0 0
          %2038 = vperm.xlu0 %2037, %v1944
          %v2039 = vpop.permute.xlu0 %2038
          %2042 = vset.pattern.permute.xlu0 0
          %2043 = vperm.xlu0 %2042, %v1945
          %v2044 = vpop.permute.xlu0 %2043
          %2047 = vset.pattern.permute.xlu0 0
          %2048 = vperm.xlu0 %2047, %v1946
          %v2049 = vpop.permute.xlu0 %2048
          %2052 = vset.pattern.permute.xlu0 0
          %2053 = vperm.xlu0 %2052, %v1947
          %v2054 = vpop.permute.xlu0 %2053
          %2057 = vset.pattern.permute.xlu0 0
          %2058 = vperm.xlu0 %2057, %v1948
          %v2059 = vpop.permute.xlu0 %2058
          %2062 = vset.pattern.permute.xlu0 0
          %2063 = vperm.xlu0 %2062, %v1949
          %v2064 = vpop.permute.xlu0 %2063
          %2067 = vset.pattern.permute.xlu0 0
          %2068 = vperm.xlu0 %2067, %v1950
          %v2069 = vpop.permute.xlu0 %2068
          %2072 = vset.pattern.permute.xlu0 0
          %2073 = vperm.xlu0 %2072, %v1951
          %v2074 = vpop.permute.xlu0 %2073
          %2077 = vset.pattern.permute.xlu0 0
          %2078 = vperm.xlu0 %2077, %v1952
          %v2079 = vpop.permute.xlu0 %2078
          %2082 = vset.pattern.permute.xlu0 0
          %2083 = vperm.xlu0 %2082, %v1953
          %v2084 = vpop.permute.xlu0 %2083
          %2087 = vset.pattern.permute.xlu0 0
          %2088 = vperm.xlu0 %2087, %v1954
          %v2089 = vpop.permute.xlu0 %2088
          %2092 = vset.pattern.permute.xlu0 0
          %2093 = vperm.xlu0 %2092, %v1955
          %v2094 = vpop.permute.xlu0 %2093
          %2097 = vset.pattern.permute.xlu0 0
          %2098 = vperm.xlu0 %2097, %v1956
          %v2099 = vpop.permute.xlu0 %2098
          %2102 = vset.pattern.permute.xlu0 0
          %2103 = vperm.xlu0 %2102, %v1957
          %v2104 = vpop.permute.xlu0 %2103
          %2107 = vset.pattern.permute.xlu0 0
          %2108 = vperm.xlu0 %2107, %v1958
          %v2109 = vpop.permute.xlu0 %2108
          %2112 = vset.pattern.permute.xlu0 0
          %2113 = vperm.xlu0 %2112, %v1959
          %v2114 = vpop.permute.xlu0 %2113
          %2117 = vset.pattern.permute.xlu0 0
          %2118 = vperm.xlu0 %2117, %v1960
          %v2119 = vpop.permute.xlu0 %2118
          %v2121 = vsub.f32 %v1750, %v1964
          %v2122 = vsub.f32 %v1752, %v1969
          %v2123 = vsub.f32 %v1755, %v1974
          %v2124 = vsub.f32 %v1757, %v1979
          %v2125 = vsub.f32 %v1760, %v1984
          %v2126 = vsub.f32 %v1762, %v1989
          %v2127 = vsub.f32 %v1765, %v1994
          %v2128 = vsub.f32 %v1767, %v1999
          %v2129 = vsub.f32 %v1770, %v2004
          %v2130 = vsub.f32 %v1772, %v2009
          %v2131 = vsub.f32 %v1775, %v2014
          %v2132 = vsub.f32 %v1777, %v2019
          %v2133 = vsub.f32 %v1780, %v2024
          %v2134 = vsub.f32 %v1782, %v2029
          %v2135 = vsub.f32 %v1785, %v2034
          %v2136 = vsub.f32 %v1787, %v2039
          %v2137 = vsub.f32 %v1790, %v2044
          %v2138 = vsub.f32 %v1792, %v2049
          %v2139 = vsub.f32 %v1795, %v2054
          %v2140 = vsub.f32 %v1797, %v2059
          %v2141 = vsub.f32 %v1800, %v2064
          %v2142 = vsub.f32 %v1802, %v2069
          %v2143 = vsub.f32 %v1805, %v2074
          %v2144 = vsub.f32 %v1807, %v2079
          %v2145 = vsub.f32 %v1810, %v2084
          %v2146 = vsub.f32 %v1812, %v2089
          %v2147 = vsub.f32 %v1815, %v2094
          %v2148 = vsub.f32 %v1817, %v2099
          %v2149 = vsub.f32 %v1820, %v2104
          %v2150 = vsub.f32 %v1822, %v2109
          %v2151 = vsub.f32 %v1825, %v2114
          %v2152 = vsub.f32 %v1827, %v2119
          %v2153 = vpack.c.bf16 %v2122, %v2121
          %v2154 = vpack.c.bf16 %v2124, %v2123
          %v2155 = vpack.c.bf16 %v2126, %v2125
          %v2156 = vpack.c.bf16 %v2128, %v2127
          %v2157 = vpack.c.bf16 %v2130, %v2129
          %v2158 = vpack.c.bf16 %v2132, %v2131
          %v2159 = vpack.c.bf16 %v2134, %v2133
          %v2160 = vpack.c.bf16 %v2136, %v2135
          %v2161 = vpack.c.bf16 %v2138, %v2137
          %v2162 = vpack.c.bf16 %v2140, %v2139
          %v2163 = vpack.c.bf16 %v2142, %v2141
          %v2164 = vpack.c.bf16 %v2144, %v2143
          %v2165 = vpack.c.bf16 %v2146, %v2145
          %v2166 = vpack.c.bf16 %v2148, %v2147
          %v2167 = vpack.c.bf16 %v2150, %v2149
          %v2168 = vpack.c.bf16 %v2152, %v2151
          %v2169 = vunpack.c.l.bf16 %v2153
          %v2170 = vunpack.c.h.bf16 %v2153
          %v2171 = vunpack.c.l.bf16 %v2154
          %v2172 = vunpack.c.h.bf16 %v2154
          %v2173 = vunpack.c.l.bf16 %v2155
          %v2174 = vunpack.c.h.bf16 %v2155
          %v2175 = vunpack.c.l.bf16 %v2156
          %v2176 = vunpack.c.h.bf16 %v2156
          %v2177 = vunpack.c.l.bf16 %v2157
          %v2178 = vunpack.c.h.bf16 %v2157
          %v2179 = vunpack.c.l.bf16 %v2158
          %v2180 = vunpack.c.h.bf16 %v2158
          %v2181 = vunpack.c.l.bf16 %v2159
          %v2182 = vunpack.c.h.bf16 %v2159
          %v2183 = vunpack.c.l.bf16 %v2160
          %v2184 = vunpack.c.h.bf16 %v2160
          %v2185 = vunpack.c.l.bf16 %v2161
          %v2186 = vunpack.c.h.bf16 %v2161
          %v2187 = vunpack.c.l.bf16 %v2162
          %v2188 = vunpack.c.h.bf16 %v2162
          %v2189 = vunpack.c.l.bf16 %v2163
          %v2190 = vunpack.c.h.bf16 %v2163
          %v2191 = vunpack.c.l.bf16 %v2164
          %v2192 = vunpack.c.h.bf16 %v2164
          %v2193 = vunpack.c.l.bf16 %v2165
          %v2194 = vunpack.c.h.bf16 %v2165
          %v2195 = vunpack.c.l.bf16 %v2166
          %v2196 = vunpack.c.h.bf16 %v2166
          %v2197 = vunpack.c.l.bf16 %v2167
          %v2198 = vunpack.c.h.bf16 %v2167
          %v2199 = vunpack.c.l.bf16 %v2168
          %v2200 = vunpack.c.h.bf16 %v2168
          %v2201 = vmul.f32 %v2169, 1.442695
          %v2202 = vpow.pop %v2201
          %v2203 = vmul.f32 %v2170, 1.442695
          %v2204 = vpow.pop %v2203
          %v2205 = vmul.f32 %v2171, 1.442695
          %v2206 = vpow.pop %v2205
          %v2207 = vmul.f32 %v2172, 1.442695
          %v2208 = vpow.pop %v2207
          %v2209 = vmul.f32 %v2173, 1.442695
          %v2210 = vpow.pop %v2209
          %v2211 = vmul.f32 %v2174, 1.442695
          %v2212 = vpow.pop %v2211
          %v2213 = vmul.f32 %v2175, 1.442695
          %v2214 = vpow.pop %v2213
          %v2215 = vmul.f32 %v2176, 1.442695
          %v2216 = vpow.pop %v2215
          %v2217 = vmul.f32 %v2177, 1.442695
          %v2218 = vpow.pop %v2217
          %v2219 = vmul.f32 %v2178, 1.442695
          %v2220 = vpow.pop %v2219
          %v2221 = vmul.f32 %v2179, 1.442695
          %v2222 = vpow.pop %v2221
          %v2223 = vmul.f32 %v2180, 1.442695
          %v2224 = vpow.pop %v2223
          %v2225 = vmul.f32 %v2181, 1.442695
          %v2226 = vpow.pop %v2225
          %v2227 = vmul.f32 %v2182, 1.442695
          %v2228 = vpow.pop %v2227
          %v2229 = vmul.f32 %v2183, 1.442695
          %v2230 = vpow.pop %v2229
          %v2231 = vmul.f32 %v2184, 1.442695
          %v2232 = vpow.pop %v2231
          %v2233 = vmul.f32 %v2185, 1.442695
          %v2234 = vpow.pop %v2233
          %v2235 = vmul.f32 %v2186, 1.442695
          %v2236 = vpow.pop %v2235
          %v2237 = vmul.f32 %v2187, 1.442695
          %v2238 = vpow.pop %v2237
          %v2239 = vmul.f32 %v2188, 1.442695
          %v2240 = vpow.pop %v2239
          %v2241 = vmul.f32 %v2189, 1.442695
          %v2242 = vpow.pop %v2241
          %v2243 = vmul.f32 %v2190, 1.442695
          %v2244 = vpow.pop %v2243
          %v2245 = vmul.f32 %v2191, 1.442695
          %v2246 = vpow.pop %v2245
          %v2247 = vmul.f32 %v2192, 1.442695
          %v2248 = vpow.pop %v2247
          %v2249 = vmul.f32 %v2193, 1.442695
          %v2250 = vpow.pop %v2249
          %v2251 = vmul.f32 %v2194, 1.442695
          %v2252 = vpow.pop %v2251
          %v2253 = vmul.f32 %v2195, 1.442695
          %v2254 = vpow.pop %v2253
          %v2255 = vmul.f32 %v2196, 1.442695
          %v2256 = vpow.pop %v2255
          %v2257 = vmul.f32 %v2197, 1.442695
          %v2258 = vpow.pop %v2257
          %v2259 = vmul.f32 %v2198, 1.442695
          %v2260 = vpow.pop %v2259
          %v2261 = vmul.f32 %v2199, 1.442695
          %v2262 = vpow.pop %v2261
          %v2263 = vmul.f32 %v2200, 1.442695
          %v2264 = vpow.pop %v2263
          %v2265 = vpack.c.bf16 %v2204, %v2202
          %v2266 = vpack.c.bf16 %v2208, %v2206
          %v2267 = vpack.c.bf16 %v2212, %v2210
          %v2268 = vpack.c.bf16 %v2216, %v2214
          %v2269 = vpack.c.bf16 %v2220, %v2218
          %v2270 = vpack.c.bf16 %v2224, %v2222
          %v2271 = vpack.c.bf16 %v2228, %v2226
          %v2272 = vpack.c.bf16 %v2232, %v2230
          %v2273 = vpack.c.bf16 %v2236, %v2234
          %v2274 = vpack.c.bf16 %v2240, %v2238
          %v2275 = vpack.c.bf16 %v2244, %v2242
          %v2276 = vpack.c.bf16 %v2248, %v2246
          %v2277 = vpack.c.bf16 %v2252, %v2250
          %v2278 = vpack.c.bf16 %v2256, %v2254
          %v2279 = vpack.c.bf16 %v2260, %v2258
          %v2280 = vpack.c.bf16 %v2264, %v2262
          %v2281 = vunpack.c.l.bf16 %v2265
          %v2282 = vunpack.c.h.bf16 %v2265
          %v2283 = vunpack.c.l.bf16 %v2266
          %v2284 = vunpack.c.h.bf16 %v2266
          %v2285 = vunpack.c.l.bf16 %v2267
          %v2286 = vunpack.c.h.bf16 %v2267
          %v2287 = vunpack.c.l.bf16 %v2268
          %v2288 = vunpack.c.h.bf16 %v2268
          %v2289 = vunpack.c.l.bf16 %v2269
          %v2290 = vunpack.c.h.bf16 %v2269
          %v2291 = vunpack.c.l.bf16 %v2270
          %v2292 = vunpack.c.h.bf16 %v2270
          %v2293 = vunpack.c.l.bf16 %v2271
          %v2294 = vunpack.c.h.bf16 %v2271
          %v2295 = vunpack.c.l.bf16 %v2272
          %v2296 = vunpack.c.h.bf16 %v2272
          %v2297 = vunpack.c.l.bf16 %v2273
          %v2298 = vunpack.c.h.bf16 %v2273
          %v2299 = vunpack.c.l.bf16 %v2274
          %v2300 = vunpack.c.h.bf16 %v2274
          %v2301 = vunpack.c.l.bf16 %v2275
          %v2302 = vunpack.c.h.bf16 %v2275
          %v2303 = vunpack.c.l.bf16 %v2276
          %v2304 = vunpack.c.h.bf16 %v2276
          %v2305 = vunpack.c.l.bf16 %v2277
          %v2306 = vunpack.c.h.bf16 %v2277
          %v2307 = vunpack.c.l.bf16 %v2278
          %v2308 = vunpack.c.h.bf16 %v2278
          %v2309 = vunpack.c.l.bf16 %v2279
          %v2310 = vunpack.c.h.bf16 %v2279
          %v2311 = vunpack.c.l.bf16 %v2280
          %v2312 = vunpack.c.h.bf16 %v2280
          %2313 = vadd.xlane.f32.xlu0 %v2281
          %v2314 = vpop.xlane.xlu0 %2313
          %2315 = vadd.xlane.f32.xlu0 %v2282
          %v2316 = vpop.xlane.xlu0 %2315
          %2317 = vadd.xlane.f32.xlu0 %v2283
          %v2318 = vpop.xlane.xlu0 %2317
          %2319 = vadd.xlane.f32.xlu0 %v2284
          %v2320 = vpop.xlane.xlu0 %2319
          %2321 = vadd.xlane.f32.xlu0 %v2285
          %v2322 = vpop.xlane.xlu0 %2321
          %2323 = vadd.xlane.f32.xlu0 %v2286
          %v2324 = vpop.xlane.xlu0 %2323
          %2325 = vadd.xlane.f32.xlu0 %v2287
          %v2326 = vpop.xlane.xlu0 %2325
          %2327 = vadd.xlane.f32.xlu0 %v2288
          %v2328 = vpop.xlane.xlu0 %2327
          %2329 = vadd.xlane.f32.xlu0 %v2289
          %v2330 = vpop.xlane.xlu0 %2329
          %2331 = vadd.xlane.f32.xlu0 %v2290
          %v2332 = vpop.xlane.xlu0 %2331
          %2333 = vadd.xlane.f32.xlu0 %v2291
          %v2334 = vpop.xlane.xlu0 %2333
          %2335 = vadd.xlane.f32.xlu0 %v2292
          %v2336 = vpop.xlane.xlu0 %2335
          %2337 = vadd.xlane.f32.xlu0 %v2293
          %v2338 = vpop.xlane.xlu0 %2337
          %2339 = vadd.xlane.f32.xlu0 %v2294
          %v2340 = vpop.xlane.xlu0 %2339
          %2341 = vadd.xlane.f32.xlu0 %v2295
          %v2342 = vpop.xlane.xlu0 %2341
          %2343 = vadd.xlane.f32.xlu0 %v2296
          %v2344 = vpop.xlane.xlu0 %2343
          %2345 = vadd.xlane.f32.xlu0 %v2297
          %v2346 = vpop.xlane.xlu0 %2345
          %2347 = vadd.xlane.f32.xlu0 %v2298
          %v2348 = vpop.xlane.xlu0 %2347
          %2349 = vadd.xlane.f32.xlu0 %v2299
          %v2350 = vpop.xlane.xlu0 %2349
          %2351 = vadd.xlane.f32.xlu0 %v2300
          %v2352 = vpop.xlane.xlu0 %2351
          %2353 = vadd.xlane.f32.xlu0 %v2301
          %v2354 = vpop.xlane.xlu0 %2353
          %2355 = vadd.xlane.f32.xlu0 %v2302
          %v2356 = vpop.xlane.xlu0 %2355
          %2357 = vadd.xlane.f32.xlu0 %v2303
          %v2358 = vpop.xlane.xlu0 %2357
          %2359 = vadd.xlane.f32.xlu0 %v2304
          %v2360 = vpop.xlane.xlu0 %2359
          %2361 = vadd.xlane.f32.xlu0 %v2305
          %v2362 = vpop.xlane.xlu0 %2361
          %2363 = vadd.xlane.f32.xlu0 %v2306
          %v2364 = vpop.xlane.xlu0 %2363
          %2365 = vadd.xlane.f32.xlu0 %v2307
          %v2366 = vpop.xlane.xlu0 %2365
          %2367 = vadd.xlane.f32.xlu0 %v2308
          %v2368 = vpop.xlane.xlu0 %2367
          %2369 = vadd.xlane.f32.xlu0 %v2309
          %v2370 = vpop.xlane.xlu0 %2369
          %2371 = vadd.xlane.f32.xlu0 %v2310
          %v2372 = vpop.xlane.xlu0 %2371
          %2373 = vadd.xlane.f32.xlu0 %v2311
          %v2374 = vpop.xlane.xlu0 %2373
          %2375 = vadd.xlane.f32.xlu0 %v2312
          %v2376 = vpop.xlane.xlu0 %2375
          %v2377 = vld [vmem:[#allocation4] sm:$0xff]
          %v2378 = vld [vmem:[#allocation4 + $0x8] sm:$0xff]
          %v2379 = vld [vmem:[#allocation4 + $0x10] sm:$0xff]
          %v2380 = vld [vmem:[#allocation4 + $0x18] sm:$0xff]
          %v2381 = vld [vmem:[#allocation4 + $0x20] sm:$0xff]
          %v2382 = vld [vmem:[#allocation4 + $0x28] sm:$0xff]
          %v2383 = vld [vmem:[#allocation4 + $0x30] sm:$0xff]
          %v2384 = vld [vmem:[#allocation4 + $0x38] sm:$0xff]
          %v2385 = vld [vmem:[#allocation4 + $0x40] sm:$0xff]
          %v2386 = vld [vmem:[#allocation4 + $0x48] sm:$0xff]
          %v2387 = vld [vmem:[#allocation4 + $0x50] sm:$0xff]
          %v2388 = vld [vmem:[#allocation4 + $0x58] sm:$0xff]
          %v2389 = vld [vmem:[#allocation4 + $0x60] sm:$0xff]
          %v2390 = vld [vmem:[#allocation4 + $0x68] sm:$0xff]
          %v2391 = vld [vmem:[#allocation4 + $0x70] sm:$0xff]
          %v2392 = vld [vmem:[#allocation4 + $0x78] sm:$0xff]
          %v2393 = vld [vmem:[#allocation4 + $0x80] sm:$0xff]
          %v2394 = vld [vmem:[#allocation4 + $0x88] sm:$0xff]
          %v2395 = vld [vmem:[#allocation4 + $0x90] sm:$0xff]
          %v2396 = vld [vmem:[#allocation4 + $0x98] sm:$0xff]
          %v2397 = vld [vmem:[#allocation4 + $0xa0] sm:$0xff]
          %v2398 = vld [vmem:[#allocation4 + $0xa8] sm:$0xff]
          %v2399 = vld [vmem:[#allocation4 + $0xb0] sm:$0xff]
          %v2400 = vld [vmem:[#allocation4 + $0xb8] sm:$0xff]
          %v2401 = vld [vmem:[#allocation4 + $0xc0] sm:$0xff]
          %v2402 = vld [vmem:[#allocation4 + $0xc8] sm:$0xff]
          %v2403 = vld [vmem:[#allocation4 + $0xd0] sm:$0xff]
          %v2404 = vld [vmem:[#allocation4 + $0xd8] sm:$0xff]
          %v2405 = vld [vmem:[#allocation4 + $0xe0] sm:$0xff]
          %v2406 = vld [vmem:[#allocation4 + $0xe8] sm:$0xff]
          %v2407 = vld [vmem:[#allocation4 + $0xf0] sm:$0xff]
          %v2408 = vld [vmem:[#allocation4 + $0xf8] sm:$0xff]
          %v2409 = vsub.f32 %v1833, %v1929
          %v2410 = vsub.f32 %v1834, %v1930
          %v2411 = vsub.f32 %v1835, %v1931
          %v2412 = vsub.f32 %v1836, %v1932
          %v2413 = vsub.f32 %v1837, %v1933
          %v2414 = vsub.f32 %v1838, %v1934
          %v2415 = vsub.f32 %v1839, %v1935
          %v2416 = vsub.f32 %v1840, %v1936
          %v2417 = vsub.f32 %v1841, %v1937
          %v2418 = vsub.f32 %v1842, %v1938
          %v2419 = vsub.f32 %v1843, %v1939
          %v2420 = vsub.f32 %v1844, %v1940
          %v2421 = vsub.f32 %v1845, %v1941
          %v2422 = vsub.f32 %v1846, %v1942
          %v2423 = vsub.f32 %v1847, %v1943
          %v2424 = vsub.f32 %v1848, %v1944
          %v2425 = vsub.f32 %v1849, %v1945
          %v2426 = vsub.f32 %v1850, %v1946
          %v2427 = vsub.f32 %v1851, %v1947
          %v2428 = vsub.f32 %v1852, %v1948
          %v2429 = vsub.f32 %v1853, %v1949
          %v2430 = vsub.f32 %v1854, %v1950
          %v2431 = vsub.f32 %v1855, %v1951
          %v2432 = vsub.f32 %v1856, %v1952
          %v2433 = vsub.f32 %v1857, %v1953
          %v2434 = vsub.f32 %v1858, %v1954
          %v2435 = vsub.f32 %v1859, %v1955
          %v2436 = vsub.f32 %v1860, %v1956
          %v2437 = vsub.f32 %v1861, %v1957
          %v2438 = vsub.f32 %v1862, %v1958
          %v2439 = vsub.f32 %v1863, %v1959
          %v2440 = vsub.f32 %v1864, %v1960
          %v2441 = vmul.f32 %v2409, 1.442695
          %v2442 = vpow.pop %v2441
          %v2443 = vmul.f32 %v2410, 1.442695
          %v2444 = vpow.pop %v2443
          %v2445 = vmul.f32 %v2411, 1.442695
          %v2446 = vpow.pop %v2445
          %v2447 = vmul.f32 %v2412, 1.442695
          %v2448 = vpow.pop %v2447
          %v2449 = vmul.f32 %v2413, 1.442695
          %v2450 = vpow.pop %v2449
          %v2451 = vmul.f32 %v2414, 1.442695
          %v2452 = vpow.pop %v2451
          %v2453 = vmul.f32 %v2415, 1.442695
          %v2454 = vpow.pop %v2453
          %v2455 = vmul.f32 %v2416, 1.442695
          %v2456 = vpow.pop %v2455
          %v2457 = vmul.f32 %v2417, 1.442695
          %v2458 = vpow.pop %v2457
          %v2459 = vmul.f32 %v2418, 1.442695
          %v2460 = vpow.pop %v2459
          %v2461 = vmul.f32 %v2419, 1.442695
          %v2462 = vpow.pop %v2461
          %v2463 = vmul.f32 %v2420, 1.442695
          %v2464 = vpow.pop %v2463
          %v2465 = vmul.f32 %v2421, 1.442695
          %v2466 = vpow.pop %v2465
          %v2467 = vmul.f32 %v2422, 1.442695
          %v2468 = vpow.pop %v2467
          %v2469 = vmul.f32 %v2423, 1.442695
          %v2470 = vpow.pop %v2469
          %v2471 = vmul.f32 %v2424, 1.442695
          %v2472 = vpow.pop %v2471
          %v2473 = vmul.f32 %v2425, 1.442695
          %v2474 = vpow.pop %v2473
          %v2475 = vmul.f32 %v2426, 1.442695
          %v2476 = vpow.pop %v2475
          %v2477 = vmul.f32 %v2427, 1.442695
          %v2478 = vpow.pop %v2477
          %v2479 = vmul.f32 %v2428, 1.442695
          %v2480 = vpow.pop %v2479
          %v2481 = vmul.f32 %v2429, 1.442695
          %v2482 = vpow.pop %v2481
          %v2483 = vmul.f32 %v2430, 1.442695
          %v2484 = vpow.pop %v2483
          %v2485 = vmul.f32 %v2431, 1.442695
          %v2486 = vpow.pop %v2485
          %v2487 = vmul.f32 %v2432, 1.442695
          %v2488 = vpow.pop %v2487
          %v2489 = vmul.f32 %v2433, 1.442695
          %v2490 = vpow.pop %v2489
          %v2491 = vmul.f32 %v2434, 1.442695
          %v2492 = vpow.pop %v2491
          %v2493 = vmul.f32 %v2435, 1.442695
          %v2494 = vpow.pop %v2493
          %v2495 = vmul.f32 %v2436, 1.442695
          %v2496 = vpow.pop %v2495
          %v2497 = vmul.f32 %v2437, 1.442695
          %v2498 = vpow.pop %v2497
          %v2499 = vmul.f32 %v2438, 1.442695
          %v2500 = vpow.pop %v2499
          %v2501 = vmul.f32 %v2439, 1.442695
          %v2502 = vpow.pop %v2501
          %v2503 = vmul.f32 %v2440, 1.442695
          %v2504 = vpow.pop %v2503
          %v2505 = vmul.f32 %v2377, %v2442
          %v2506 = vmul.f32 %v2378, %v2444
          %v2507 = vmul.f32 %v2379, %v2446
          %v2508 = vmul.f32 %v2380, %v2448
          %v2509 = vmul.f32 %v2381, %v2450
          %v2510 = vmul.f32 %v2382, %v2452
          %v2511 = vmul.f32 %v2383, %v2454
          %v2512 = vmul.f32 %v2384, %v2456
          %v2513 = vmul.f32 %v2385, %v2458
          %v2514 = vmul.f32 %v2386, %v2460
          %v2515 = vmul.f32 %v2387, %v2462
          %v2516 = vmul.f32 %v2388, %v2464
          %v2517 = vmul.f32 %v2389, %v2466
          %v2518 = vmul.f32 %v2390, %v2468
          %v2519 = vmul.f32 %v2391, %v2470
          %v2520 = vmul.f32 %v2392, %v2472
          %v2521 = vmul.f32 %v2393, %v2474
          %v2522 = vmul.f32 %v2394, %v2476
          %v2523 = vmul.f32 %v2395, %v2478
          %v2524 = vmul.f32 %v2396, %v2480
          %v2525 = vmul.f32 %v2397, %v2482
          %v2526 = vmul.f32 %v2398, %v2484
          %v2527 = vmul.f32 %v2399, %v2486
          %v2528 = vmul.f32 %v2400, %v2488
          %v2529 = vmul.f32 %v2401, %v2490
          %v2530 = vmul.f32 %v2402, %v2492
          %v2531 = vmul.f32 %v2403, %v2494
          %v2532 = vmul.f32 %v2404, %v2496
          %v2533 = vmul.f32 %v2405, %v2498
          %v2534 = vmul.f32 %v2406, %v2500
          %v2535 = vmul.f32 %v2407, %v2502
          %v2536 = vmul.f32 %v2408, %v2504
          %v2537 = vadd.f32 %v2505, %v2314
          %v2538 = vadd.f32 %v2506, %v2316
          %v2539 = vadd.f32 %v2507, %v2318
          %v2540 = vadd.f32 %v2508, %v2320
          %v2541 = vadd.f32 %v2509, %v2322
          %v2542 = vadd.f32 %v2510, %v2324
          %v2543 = vadd.f32 %v2511, %v2326
          %v2544 = vadd.f32 %v2512, %v2328
          %v2545 = vadd.f32 %v2513, %v2330
          %v2546 = vadd.f32 %v2514, %v2332
          %v2547 = vadd.f32 %v2515, %v2334
          %v2548 = vadd.f32 %v2516, %v2336
          %v2549 = vadd.f32 %v2517, %v2338
          %v2550 = vadd.f32 %v2518, %v2340
          %v2551 = vadd.f32 %v2519, %v2342
          %v2552 = vadd.f32 %v2520, %v2344
          %v2553 = vadd.f32 %v2521, %v2346
          %v2554 = vadd.f32 %v2522, %v2348
          %v2555 = vadd.f32 %v2523, %v2350
          %v2556 = vadd.f32 %v2524, %v2352
          %v2557 = vadd.f32 %v2525, %v2354
          %v2558 = vadd.f32 %v2526, %v2356
          %v2559 = vadd.f32 %v2527, %v2358
          %v2560 = vadd.f32 %v2528, %v2360
          %v2561 = vadd.f32 %v2529, %v2362
          %v2562 = vadd.f32 %v2530, %v2364
          %v2563 = vadd.f32 %v2531, %v2366
          %v2564 = vadd.f32 %v2532, %v2368
          %v2565 = vadd.f32 %v2533, %v2370
          %v2566 = vadd.f32 %v2534, %v2372
          %v2567 = vadd.f32 %v2535, %v2374
          %v2568 = vadd.f32 %v2536, %v2376
          %vm2569 = vcmask 7168
          %2570 = vst.msk [vmem:[#allocation4] sm:$0xff] %vm2569, %v2537
          %2571 = vst.msk [vmem:[#allocation4 + $0x8] sm:$0xff] %vm2569, %v2538
          %2572 = vst.msk [vmem:[#allocation4 + $0x10] sm:$0xff] %vm2569, %v2539
          %2573 = vst.msk [vmem:[#allocation4 + $0x18] sm:$0xff] %vm2569, %v2540
          %2574 = vst.msk [vmem:[#allocation4 + $0x20] sm:$0xff] %vm2569, %v2541
          %2575 = vst.msk [vmem:[#allocation4 + $0x28] sm:$0xff] %vm2569, %v2542
          %2576 = vst.msk [vmem:[#allocation4 + $0x30] sm:$0xff] %vm2569, %v2543
          %2577 = vst.msk [vmem:[#allocation4 + $0x38] sm:$0xff] %vm2569, %v2544
          %2578 = vst.msk [vmem:[#allocation4 + $0x40] sm:$0xff] %vm2569, %v2545
          %2579 = vst.msk [vmem:[#allocation4 + $0x48] sm:$0xff] %vm2569, %v2546
          %2580 = vst.msk [vmem:[#allocation4 + $0x50] sm:$0xff] %vm2569, %v2547
          %2581 = vst.msk [vmem:[#allocation4 + $0x58] sm:$0xff] %vm2569, %v2548
          %2582 = vst.msk [vmem:[#allocation4 + $0x60] sm:$0xff] %vm2569, %v2549
          %2583 = vst.msk [vmem:[#allocation4 + $0x68] sm:$0xff] %vm2569, %v2550
          %2584 = vst.msk [vmem:[#allocation4 + $0x70] sm:$0xff] %vm2569, %v2551
          %2585 = vst.msk [vmem:[#allocation4 + $0x78] sm:$0xff] %vm2569, %v2552
          %2586 = vst.msk [vmem:[#allocation4 + $0x80] sm:$0xff] %vm2569, %v2553
          %2587 = vst.msk [vmem:[#allocation4 + $0x88] sm:$0xff] %vm2569, %v2554
          %2588 = vst.msk [vmem:[#allocation4 + $0x90] sm:$0xff] %vm2569, %v2555
          %2589 = vst.msk [vmem:[#allocation4 + $0x98] sm:$0xff] %vm2569, %v2556
          %2590 = vst.msk [vmem:[#allocation4 + $0xa0] sm:$0xff] %vm2569, %v2557
          %2591 = vst.msk [vmem:[#allocation4 + $0xa8] sm:$0xff] %vm2569, %v2558
          %2592 = vst.msk [vmem:[#allocation4 + $0xb0] sm:$0xff] %vm2569, %v2559
          %2593 = vst.msk [vmem:[#allocation4 + $0xb8] sm:$0xff] %vm2569, %v2560
          %2594 = vst.msk [vmem:[#allocation4 + $0xc0] sm:$0xff] %vm2569, %v2561
          %2595 = vst.msk [vmem:[#allocation4 + $0xc8] sm:$0xff] %vm2569, %v2562
          %2596 = vst.msk [vmem:[#allocation4 + $0xd0] sm:$0xff] %vm2569, %v2563
          %2597 = vst.msk [vmem:[#allocation4 + $0xd8] sm:$0xff] %vm2569, %v2564
          %2598 = vst.msk [vmem:[#allocation4 + $0xe0] sm:$0xff] %vm2569, %v2565
          %2599 = vst.msk [vmem:[#allocation4 + $0xe8] sm:$0xff] %vm2569, %v2566
          %2600 = vst.msk [vmem:[#allocation4 + $0xf0] sm:$0xff] %vm2569, %v2567
          %2601 = vst.msk [vmem:[#allocation4 + $0xf8] sm:$0xff] %vm2569, %v2568
          %2602 = vst.msk [vmem:[#allocation3] sm:$0xff] %vm2569, %v1929
          %2603 = vst.msk [vmem:[#allocation3 + $0x8] sm:$0xff] %vm2569, %v1930
          %2604 = vst.msk [vmem:[#allocation3 + $0x10] sm:$0xff] %vm2569, %v1931
          %2605 = vst.msk [vmem:[#allocation3 + $0x18] sm:$0xff] %vm2569, %v1932
          %2606 = vst.msk [vmem:[#allocation3 + $0x20] sm:$0xff] %vm2569, %v1933
          %2607 = vst.msk [vmem:[#allocation3 + $0x28] sm:$0xff] %vm2569, %v1934
          %2608 = vst.msk [vmem:[#allocation3 + $0x30] sm:$0xff] %vm2569, %v1935
          %2609 = vst.msk [vmem:[#allocation3 + $0x38] sm:$0xff] %vm2569, %v1936
          %2610 = vst.msk [vmem:[#allocation3 + $0x40] sm:$0xff] %vm2569, %v1937
          %2611 = vst.msk [vmem:[#allocation3 + $0x48] sm:$0xff] %vm2569, %v1938
          %2612 = vst.msk [vmem:[#allocation3 + $0x50] sm:$0xff] %vm2569, %v1939
          %2613 = vst.msk [vmem:[#allocation3 + $0x58] sm:$0xff] %vm2569, %v1940
          %2614 = vst.msk [vmem:[#allocation3 + $0x60] sm:$0xff] %vm2569, %v1941
          %2615 = vst.msk [vmem:[#allocation3 + $0x68] sm:$0xff] %vm2569, %v1942
          %2616 = vst.msk [vmem:[#allocation3 + $0x70] sm:$0xff] %vm2569, %v1943
          %2617 = vst.msk [vmem:[#allocation3 + $0x78] sm:$0xff] %vm2569, %v1944
          %2618 = vst.msk [vmem:[#allocation3 + $0x80] sm:$0xff] %vm2569, %v1945
          %2619 = vst.msk [vmem:[#allocation3 + $0x88] sm:$0xff] %vm2569, %v1946
          %2620 = vst.msk [vmem:[#allocation3 + $0x90] sm:$0xff] %vm2569, %v1947
          %2621 = vst.msk [vmem:[#allocation3 + $0x98] sm:$0xff] %vm2569, %v1948
          %2622 = vst.msk [vmem:[#allocation3 + $0xa0] sm:$0xff] %vm2569, %v1949
          %2623 = vst.msk [vmem:[#allocation3 + $0xa8] sm:$0xff] %vm2569, %v1950
          %2624 = vst.msk [vmem:[#allocation3 + $0xb0] sm:$0xff] %vm2569, %v1951
          %2625 = vst.msk [vmem:[#allocation3 + $0xb8] sm:$0xff] %vm2569, %v1952
          %2626 = vst.msk [vmem:[#allocation3 + $0xc0] sm:$0xff] %vm2569, %v1953
          %2627 = vst.msk [vmem:[#allocation3 + $0xc8] sm:$0xff] %vm2569, %v1954
          %2628 = vst.msk [vmem:[#allocation3 + $0xd0] sm:$0xff] %vm2569, %v1955
          %2629 = vst.msk [vmem:[#allocation3 + $0xd8] sm:$0xff] %vm2569, %v1956
          %2630 = vst.msk [vmem:[#allocation3 + $0xe0] sm:$0xff] %vm2569, %v1957
          %2631 = vst.msk [vmem:[#allocation3 + $0xe8] sm:$0xff] %vm2569, %v1958
          %2632 = vst.msk [vmem:[#allocation3 + $0xf0] sm:$0xff] %vm2569, %v1959
          %2633 = vst.msk [vmem:[#allocation3 + $0xf8] sm:$0xff] %vm2569, %v1960
        $region93: #{tpu_custom_call.1} parent=80 // pred_fallthru
          _
        %p2634 = scmp.ge.s32.totalorder %s25, 2
        // Predicated region
        $region94: #{tpu_custom_call.1} parent=80 // pred_check
          %p2635 = pneg %p2634
        $region95: #{tpu_custom_call.1} parent=80 // pred_check_branch
          %2637 = sbr.rel (%p2635) target = $region97
        $region96: #{tpu_custom_call.1} parent=80 // pred_region
          %v2638 = vld [vmem:[#allocation3] sm:$0xff]
          %v2639 = vld [vmem:[#allocation3 + $0x8] sm:$0xff]
          %v2640 = vld [vmem:[#allocation3 + $0x10] sm:$0xff]
          %v2641 = vld [vmem:[#allocation3 + $0x18] sm:$0xff]
          %v2642 = vld [vmem:[#allocation3 + $0x20] sm:$0xff]
          %v2643 = vld [vmem:[#allocation3 + $0x28] sm:$0xff]
          %v2644 = vld [vmem:[#allocation3 + $0x30] sm:$0xff]
          %v2645 = vld [vmem:[#allocation3 + $0x38] sm:$0xff]
          %v2646 = vld [vmem:[#allocation3 + $0x40] sm:$0xff]
          %v2647 = vld [vmem:[#allocation3 + $0x48] sm:$0xff]
          %v2648 = vld [vmem:[#allocation3 + $0x50] sm:$0xff]
          %v2649 = vld [vmem:[#allocation3 + $0x58] sm:$0xff]
          %v2650 = vld [vmem:[#allocation3 + $0x60] sm:$0xff]
          %v2651 = vld [vmem:[#allocation3 + $0x68] sm:$0xff]
          %v2652 = vld [vmem:[#allocation3 + $0x70] sm:$0xff]
          %v2653 = vld [vmem:[#allocation3 + $0x78] sm:$0xff]
          %v2654 = vld [vmem:[#allocation3 + $0x80] sm:$0xff]
          %v2655 = vld [vmem:[#allocation3 + $0x88] sm:$0xff]
          %v2656 = vld [vmem:[#allocation3 + $0x90] sm:$0xff]
          %v2657 = vld [vmem:[#allocation3 + $0x98] sm:$0xff]
          %v2658 = vld [vmem:[#allocation3 + $0xa0] sm:$0xff]
          %v2659 = vld [vmem:[#allocation3 + $0xa8] sm:$0xff]
          %v2660 = vld [vmem:[#allocation3 + $0xb0] sm:$0xff]
          %v2661 = vld [vmem:[#allocation3 + $0xb8] sm:$0xff]
          %v2662 = vld [vmem:[#allocation3 + $0xc0] sm:$0xff]
          %v2663 = vld [vmem:[#allocation3 + $0xc8] sm:$0xff]
          %v2664 = vld [vmem:[#allocation3 + $0xd0] sm:$0xff]
          %v2665 = vld [vmem:[#allocation3 + $0xd8] sm:$0xff]
          %v2666 = vld [vmem:[#allocation3 + $0xe0] sm:$0xff]
          %v2667 = vld [vmem:[#allocation3 + $0xe8] sm:$0xff]
          %v2668 = vld [vmem:[#allocation3 + $0xf0] sm:$0xff]
          %v2669 = vld [vmem:[#allocation3 + $0xf8] sm:$0xff]
          %v2670 = vld [vmem:[#allocation4] sm:$0xff]
          %v2671 = vld [vmem:[#allocation4 + $0x8] sm:$0xff]
          %v2672 = vld [vmem:[#allocation4 + $0x10] sm:$0xff]
          %v2673 = vld [vmem:[#allocation4 + $0x18] sm:$0xff]
          %v2674 = vld [vmem:[#allocation4 + $0x20] sm:$0xff]
          %v2675 = vld [vmem:[#allocation4 + $0x28] sm:$0xff]
          %v2676 = vld [vmem:[#allocation4 + $0x30] sm:$0xff]
          %v2677 = vld [vmem:[#allocation4 + $0x38] sm:$0xff]
          %v2678 = vld [vmem:[#allocation4 + $0x40] sm:$0xff]
          %v2679 = vld [vmem:[#allocation4 + $0x48] sm:$0xff]
          %v2680 = vld [vmem:[#allocation4 + $0x50] sm:$0xff]
          %v2681 = vld [vmem:[#allocation4 + $0x58] sm:$0xff]
          %v2682 = vld [vmem:[#allocation4 + $0x60] sm:$0xff]
          %v2683 = vld [vmem:[#allocation4 + $0x68] sm:$0xff]
          %v2684 = vld [vmem:[#allocation4 + $0x70] sm:$0xff]
          %v2685 = vld [vmem:[#allocation4 + $0x78] sm:$0xff]
          %v2686 = vld [vmem:[#allocation4 + $0x80] sm:$0xff]
          %v2687 = vld [vmem:[#allocation4 + $0x88] sm:$0xff]
          %v2688 = vld [vmem:[#allocation4 + $0x90] sm:$0xff]
          %v2689 = vld [vmem:[#allocation4 + $0x98] sm:$0xff]
          %v2690 = vld [vmem:[#allocation4 + $0xa0] sm:$0xff]
          %v2691 = vld [vmem:[#allocation4 + $0xa8] sm:$0xff]
          %v2692 = vld [vmem:[#allocation4 + $0xb0] sm:$0xff]
          %v2693 = vld [vmem:[#allocation4 + $0xb8] sm:$0xff]
          %v2694 = vld [vmem:[#allocation4 + $0xc0] sm:$0xff]
          %v2695 = vld [vmem:[#allocation4 + $0xc8] sm:$0xff]
          %v2696 = vld [vmem:[#allocation4 + $0xd0] sm:$0xff]
          %v2697 = vld [vmem:[#allocation4 + $0xd8] sm:$0xff]
          %v2698 = vld [vmem:[#allocation4 + $0xe0] sm:$0xff]
          %v2699 = vld [vmem:[#allocation4 + $0xe8] sm:$0xff]
          %v2700 = vld [vmem:[#allocation4 + $0xf0] sm:$0xff]
          %v2701 = vld [vmem:[#allocation4 + $0xf8] sm:$0xff]
          %v2702 = vlog2.pop %v2670
          %v2703 = vmul.f32 %v2702, 0.6931472
          %v2704 = vlog2.pop %v2671
          %v2705 = vmul.f32 %v2704, 0.6931472
          %v2706 = vlog2.pop %v2672
          %v2707 = vmul.f32 %v2706, 0.6931472
          %v2708 = vlog2.pop %v2673
          %v2709 = vmul.f32 %v2708, 0.6931472
          %v2710 = vlog2.pop %v2674
          %v2711 = vmul.f32 %v2710, 0.6931472
          %v2712 = vlog2.pop %v2675
          %v2713 = vmul.f32 %v2712, 0.6931472
          %v2714 = vlog2.pop %v2676
          %v2715 = vmul.f32 %v2714, 0.6931472
          %v2716 = vlog2.pop %v2677
          %v2717 = vmul.f32 %v2716, 0.6931472
          %v2718 = vlog2.pop %v2678
          %v2719 = vmul.f32 %v2718, 0.6931472
          %v2720 = vlog2.pop %v2679
          %v2721 = vmul.f32 %v2720, 0.6931472
          %v2722 = vlog2.pop %v2680
          %v2723 = vmul.f32 %v2722, 0.6931472
          %v2724 = vlog2.pop %v2681
          %v2725 = vmul.f32 %v2724, 0.6931472
          %v2726 = vlog2.pop %v2682
          %v2727 = vmul.f32 %v2726, 0.6931472
          %v2728 = vlog2.pop %v2683
          %v2729 = vmul.f32 %v2728, 0.6931472
          %v2730 = vlog2.pop %v2684
          %v2731 = vmul.f32 %v2730, 0.6931472
          %v2732 = vlog2.pop %v2685
          %v2733 = vmul.f32 %v2732, 0.6931472
          %v2734 = vlog2.pop %v2686
          %v2735 = vmul.f32 %v2734, 0.6931472
          %v2736 = vlog2.pop %v2687
          %v2737 = vmul.f32 %v2736, 0.6931472
          %v2738 = vlog2.pop %v2688
          %v2739 = vmul.f32 %v2738, 0.6931472
          %v2740 = vlog2.pop %v2689
          %v2741 = vmul.f32 %v2740, 0.6931472
          %v2742 = vlog2.pop %v2690
          %v2743 = vmul.f32 %v2742, 0.6931472
          %v2744 = vlog2.pop %v2691
          %v2745 = vmul.f32 %v2744, 0.6931472
          %v2746 = vlog2.pop %v2692
          %v2747 = vmul.f32 %v2746, 0.6931472
          %v2748 = vlog2.pop %v2693
          %v2749 = vmul.f32 %v2748, 0.6931472
          %v2750 = vlog2.pop %v2694
          %v2751 = vmul.f32 %v2750, 0.6931472
          %v2752 = vlog2.pop %v2695
          %v2753 = vmul.f32 %v2752, 0.6931472
          %v2754 = vlog2.pop %v2696
          %v2755 = vmul.f32 %v2754, 0.6931472
          %v2756 = vlog2.pop %v2697
          %v2757 = vmul.f32 %v2756, 0.6931472
          %v2758 = vlog2.pop %v2698
          %v2759 = vmul.f32 %v2758, 0.6931472
          %v2760 = vlog2.pop %v2699
          %v2761 = vmul.f32 %v2760, 0.6931472
          %v2762 = vlog2.pop %v2700
          %v2763 = vmul.f32 %v2762, 0.6931472
          %v2764 = vlog2.pop %v2701
          %v2765 = vmul.f32 %v2764, 0.6931472
          %v2766 = vadd.f32 %v2638, %v2703
          %v2767 = vadd.f32 %v2639, %v2705
          %v2768 = vadd.f32 %v2640, %v2707
          %v2769 = vadd.f32 %v2641, %v2709
          %v2770 = vadd.f32 %v2642, %v2711
          %v2771 = vadd.f32 %v2643, %v2713
          %v2772 = vadd.f32 %v2644, %v2715
          %v2773 = vadd.f32 %v2645, %v2717
          %v2774 = vadd.f32 %v2646, %v2719
          %v2775 = vadd.f32 %v2647, %v2721
          %v2776 = vadd.f32 %v2648, %v2723
          %v2777 = vadd.f32 %v2649, %v2725
          %v2778 = vadd.f32 %v2650, %v2727
          %v2779 = vadd.f32 %v2651, %v2729
          %v2780 = vadd.f32 %v2652, %v2731
          %v2781 = vadd.f32 %v2653, %v2733
          %v2782 = vadd.f32 %v2654, %v2735
          %v2783 = vadd.f32 %v2655, %v2737
          %v2784 = vadd.f32 %v2656, %v2739
          %v2785 = vadd.f32 %v2657, %v2741
          %v2786 = vadd.f32 %v2658, %v2743
          %v2787 = vadd.f32 %v2659, %v2745
          %v2788 = vadd.f32 %v2660, %v2747
          %v2789 = vadd.f32 %v2661, %v2749
          %v2790 = vadd.f32 %v2662, %v2751
          %v2791 = vadd.f32 %v2663, %v2753
          %v2792 = vadd.f32 %v2664, %v2755
          %v2793 = vadd.f32 %v2665, %v2757
          %v2794 = vadd.f32 %v2666, %v2759
          %v2795 = vadd.f32 %v2667, %v2761
          %v2796 = vadd.f32 %v2668, %v2763
          %v2797 = vadd.f32 %v2669, %v2765
          %2799 = vset.pattern.permute.xlu0 0
          %2800 = vperm.xlu0 %2799, %v2766
          %v2801 = vpop.permute.xlu0 %2800
          %2804 = vset.pattern.permute.xlu0 0
          %2805 = vperm.xlu0 %2804, %v2767
          %v2806 = vpop.permute.xlu0 %2805
          %2809 = vset.pattern.permute.xlu0 0
          %2810 = vperm.xlu0 %2809, %v2768
          %v2811 = vpop.permute.xlu0 %2810
          %2814 = vset.pattern.permute.xlu0 0
          %2815 = vperm.xlu0 %2814, %v2769
          %v2816 = vpop.permute.xlu0 %2815
          %2819 = vset.pattern.permute.xlu0 0
          %2820 = vperm.xlu0 %2819, %v2770
          %v2821 = vpop.permute.xlu0 %2820
          %2824 = vset.pattern.permute.xlu0 0
          %2825 = vperm.xlu0 %2824, %v2771
          %v2826 = vpop.permute.xlu0 %2825
          %2829 = vset.pattern.permute.xlu0 0
          %2830 = vperm.xlu0 %2829, %v2772
          %v2831 = vpop.permute.xlu0 %2830
          %2834 = vset.pattern.permute.xlu0 0
          %2835 = vperm.xlu0 %2834, %v2773
          %v2836 = vpop.permute.xlu0 %2835
          %2839 = vset.pattern.permute.xlu0 0
          %2840 = vperm.xlu0 %2839, %v2774
          %v2841 = vpop.permute.xlu0 %2840
          %2844 = vset.pattern.permute.xlu0 0
          %2845 = vperm.xlu0 %2844, %v2775
          %v2846 = vpop.permute.xlu0 %2845
          %2849 = vset.pattern.permute.xlu0 0
          %2850 = vperm.xlu0 %2849, %v2776
          %v2851 = vpop.permute.xlu0 %2850
          %2854 = vset.pattern.permute.xlu0 0
          %2855 = vperm.xlu0 %2854, %v2777
          %v2856 = vpop.permute.xlu0 %2855
          %2859 = vset.pattern.permute.xlu0 0
          %2860 = vperm.xlu0 %2859, %v2778
          %v2861 = vpop.permute.xlu0 %2860
          %2864 = vset.pattern.permute.xlu0 0
          %2865 = vperm.xlu0 %2864, %v2779
          %v2866 = vpop.permute.xlu0 %2865
          %2869 = vset.pattern.permute.xlu0 0
          %2870 = vperm.xlu0 %2869, %v2780
          %v2871 = vpop.permute.xlu0 %2870
          %2874 = vset.pattern.permute.xlu0 0
          %2875 = vperm.xlu0 %2874, %v2781
          %v2876 = vpop.permute.xlu0 %2875
          %2879 = vset.pattern.permute.xlu0 0
          %2880 = vperm.xlu0 %2879, %v2782
          %v2881 = vpop.permute.xlu0 %2880
          %2884 = vset.pattern.permute.xlu0 0
          %2885 = vperm.xlu0 %2884, %v2783
          %v2886 = vpop.permute.xlu0 %2885
          %2889 = vset.pattern.permute.xlu0 0
          %2890 = vperm.xlu0 %2889, %v2784
          %v2891 = vpop.permute.xlu0 %2890
          %2894 = vset.pattern.permute.xlu0 0
          %2895 = vperm.xlu0 %2894, %v2785
          %v2896 = vpop.permute.xlu0 %2895
          %2899 = vset.pattern.permute.xlu0 0
          %2900 = vperm.xlu0 %2899, %v2786
          %v2901 = vpop.permute.xlu0 %2900
          %2904 = vset.pattern.permute.xlu0 0
          %2905 = vperm.xlu0 %2904, %v2787
          %v2906 = vpop.permute.xlu0 %2905
          %2909 = vset.pattern.permute.xlu0 0
          %2910 = vperm.xlu0 %2909, %v2788
          %v2911 = vpop.permute.xlu0 %2910
          %2914 = vset.pattern.permute.xlu0 0
          %2915 = vperm.xlu0 %2914, %v2789
          %v2916 = vpop.permute.xlu0 %2915
          %2919 = vset.pattern.permute.xlu0 0
          %2920 = vperm.xlu0 %2919, %v2790
          %v2921 = vpop.permute.xlu0 %2920
          %2924 = vset.pattern.permute.xlu0 0
          %2925 = vperm.xlu0 %2924, %v2791
          %v2926 = vpop.permute.xlu0 %2925
          %2929 = vset.pattern.permute.xlu0 0
          %2930 = vperm.xlu0 %2929, %v2792
          %v2931 = vpop.permute.xlu0 %2930
          %2934 = vset.pattern.permute.xlu0 0
          %2935 = vperm.xlu0 %2934, %v2793
          %v2936 = vpop.permute.xlu0 %2935
          %2939 = vset.pattern.permute.xlu0 0
          %2940 = vperm.xlu0 %2939, %v2794
          %v2941 = vpop.permute.xlu0 %2940
          %2944 = vset.pattern.permute.xlu0 0
          %2945 = vperm.xlu0 %2944, %v2795
          %v2946 = vpop.permute.xlu0 %2945
          %2949 = vset.pattern.permute.xlu0 0
          %2950 = vperm.xlu0 %2949, %v2796
          %v2951 = vpop.permute.xlu0 %2950
          %2954 = vset.pattern.permute.xlu0 0
          %2955 = vperm.xlu0 %2954, %v2797
          %v2956 = vpop.permute.xlu0 %2955
          %v2958 = vsub.f32 %v1750, %v2801
          %v2959 = vsub.f32 %v1752, %v2806
          %v2960 = vsub.f32 %v1755, %v2811
          %v2961 = vsub.f32 %v1757, %v2816
          %v2962 = vsub.f32 %v1760, %v2821
          %v2963 = vsub.f32 %v1762, %v2826
          %v2964 = vsub.f32 %v1765, %v2831
          %v2965 = vsub.f32 %v1767, %v2836
          %v2966 = vsub.f32 %v1770, %v2841
          %v2967 = vsub.f32 %v1772, %v2846
          %v2968 = vsub.f32 %v1775, %v2851
          %v2969 = vsub.f32 %v1777, %v2856
          %v2970 = vsub.f32 %v1780, %v2861
          %v2971 = vsub.f32 %v1782, %v2866
          %v2972 = vsub.f32 %v1785, %v2871
          %v2973 = vsub.f32 %v1787, %v2876
          %v2974 = vsub.f32 %v1790, %v2881
          %v2975 = vsub.f32 %v1792, %v2886
          %v2976 = vsub.f32 %v1795, %v2891
          %v2977 = vsub.f32 %v1797, %v2896
          %v2978 = vsub.f32 %v1800, %v2901
          %v2979 = vsub.f32 %v1802, %v2906
          %v2980 = vsub.f32 %v1805, %v2911
          %v2981 = vsub.f32 %v1807, %v2916
          %v2982 = vsub.f32 %v1810, %v2921
          %v2983 = vsub.f32 %v1812, %v2926
          %v2984 = vsub.f32 %v1815, %v2931
          %v2985 = vsub.f32 %v1817, %v2936
          %v2986 = vsub.f32 %v1820, %v2941
          %v2987 = vsub.f32 %v1822, %v2946
          %v2988 = vsub.f32 %v1825, %v2951
          %v2989 = vsub.f32 %v1827, %v2956
          %2990 = vst [vmem:[%s495] sm:$0xff] %v2958
          %2991 = vst [vmem:[%s495 + $0x8] sm:$0xff] %v2959
          %2992 = vst [vmem:[%s495 + $0x10] sm:$0xff] %v2960
          %2993 = vst [vmem:[%s495 + $0x18] sm:$0xff] %v2961
          %2994 = vst [vmem:[%s495 + $0x20] sm:$0xff] %v2962
          %2995 = vst [vmem:[%s495 + $0x28] sm:$0xff] %v2963
          %2996 = vst [vmem:[%s495 + $0x30] sm:$0xff] %v2964
          %2997 = vst [vmem:[%s495 + $0x38] sm:$0xff] %v2965
          %2998 = vst [vmem:[%s495 + $0x40] sm:$0xff] %v2966
          %2999 = vst [vmem:[%s495 + $0x48] sm:$0xff] %v2967
          %3000 = vst [vmem:[%s495 + $0x50] sm:$0xff] %v2968
          %3001 = vst [vmem:[%s495 + $0x58] sm:$0xff] %v2969
          %3002 = vst [vmem:[%s495 + $0x60] sm:$0xff] %v2970
          %3003 = vst [vmem:[%s495 + $0x68] sm:$0xff] %v2971
          %3004 = vst [vmem:[%s495 + $0x70] sm:$0xff] %v2972
          %3005 = vst [vmem:[%s495 + $0x78] sm:$0xff] %v2973
          %3006 = vst [vmem:[%s495 + $0x80] sm:$0xff] %v2974
          %3007 = vst [vmem:[%s495 + $0x88] sm:$0xff] %v2975
          %3008 = vst [vmem:[%s495 + $0x90] sm:$0xff] %v2976
          %3009 = vst [vmem:[%s495 + $0x98] sm:$0xff] %v2977
          %3010 = vst [vmem:[%s495 + $0xa0] sm:$0xff] %v2978
          %3011 = vst [vmem:[%s495 + $0xa8] sm:$0xff] %v2979
          %3012 = vst [vmem:[%s495 + $0xb0] sm:$0xff] %v2980
          %3013 = vst [vmem:[%s495 + $0xb8] sm:$0xff] %v2981
          %3014 = vst [vmem:[%s495 + $0xc0] sm:$0xff] %v2982
          %3015 = vst [vmem:[%s495 + $0xc8] sm:$0xff] %v2983
          %3016 = vst [vmem:[%s495 + $0xd0] sm:$0xff] %v2984
          %3017 = vst [vmem:[%s495 + $0xd8] sm:$0xff] %v2985
          %3018 = vst [vmem:[%s495 + $0xe0] sm:$0xff] %v2986
          %3019 = vst [vmem:[%s495 + $0xe8] sm:$0xff] %v2987
          %3020 = vst [vmem:[%s495 + $0xf0] sm:$0xff] %v2988
          %3021 = vst [vmem:[%s495 + $0xf8] sm:$0xff] %v2989
        $region97: #{tpu_custom_call.1} parent=80 // pred_fallthru
          _
        %s3022 = sand.u32 %s237, 1
        %s3023 = scalar_lea.sflag [#allocation7], %s3022
        %s3024 = sand.u32 %s237, 1
        %s3025 = smul.addr %s3024, 256
        %s3026 = scalar_lea.vmem [#allocation6], %s3025
        // Predicated region
        $region98: #{tpu_custom_call.1} parent=80 // pred_check
          %p3027 = pneg %p247
        $region99: #{tpu_custom_call.1} parent=80 // pred_check_branch
          %3029 = sbr.rel (%p3027) target = $region101
        $region100: #{tpu_custom_call.1} parent=80 // pred_region
          %s3030 = ssub.s32 %s25, 2
          %p3031 = scmp.gt.s32.totalorder %s3030, 0
          %s3032 = scalar_select %p3031, %s3030, 0
          %s3033 = smul.u32 32, %s24
          %3035 = vsyncadd %s3023, 0
          %s3036 = smul.addr %s3033, 2
          %s3037 = sadd.s32 %s3032, %s3036
          %s3038 = smul.addr %s3037, 8
          %s3039 = scalar_lea.hbm %s6, %s3038
          %s3040 = sshll.u32 %s3026, 4
          %s3041 = int_to_ptr.vmem [resolvable:$true] %s3040
          %s3042 = sshll.u32 %s3039, 4
          %s3043 = int_to_ptr.hbm [resolvable:$true] %s3042
          %3048 = dma.vmem_to_hbm [thread:$0]  %s3041, 4096, %s3043, %s3023, 128, 256, 8
        $region101: #{tpu_custom_call.1} parent=80 // pred_fallthru
          _
      $region81: #{tpu_custom_call.1} parent=5 // pred_fallthru
        _
      %p3049 = scmp.le.s32.totalorder 2, %s15
      // Predicated region
      $region102: #{tpu_custom_call.1} parent=5 // pred_check
        %p3050 = pneg %p3049
      $region103: #{tpu_custom_call.1} parent=5 // pred_check_branch
        %3052 = sbr.rel (%p3050) target = $region105
      $region104: #{tpu_custom_call.1} parent=5 // pred_region
        %s3053 = ssub.s32 %s15, 2
        // Predicated region
        $region106: #{tpu_custom_call.1} parent=104 // pred_check
          %p3054 = pneg %p253
        $region107: #{tpu_custom_call.1} parent=104 // pred_check_branch
          %3056 = sbr.rel (%p3054) target = $region109
        $region108: #{tpu_custom_call.1} parent=104 // pred_region
          %s3057 = sand.u32 %s238, 1
          %s3058 = scalar_lea.sflag [#allocation7], %s3057
          %s3059 = sand.u32 %s238, 1
          %s3060 = smul.addr %s3059, 256
          %s3061 = scalar_lea.vmem [#allocation6], %s3060
          %3063 = dma.done %s3058, 4096
        $region109: #{tpu_custom_call.1} parent=104 // pred_fallthru
          _
      $region105: #{tpu_custom_call.1} parent=5 // pred_fallthru
        _
    $region6: #{tpu_custom_call.1} parent=1 // loop_footer
      %s19 = sadd.s32 1, %s15
    $region7: #{tpu_custom_call.1} parent=1 // loop_footer_branch
      %14 = sbr.rel target = $region3
    $region8: #{tpu_custom_call.1} parent=1 // loop_exit
      _
    %3064 = vsyncpa [#allocation7], 1
    %s3065 = scalar_lea.sflag [#allocation7], 1
    %3066 = vsyncpa %s3065, 1

</llo_original>
